<compile_context>
chip_gen: v7x
topology: tpu7x:2x2x1
jax: 0.10.0
libtpu: 0.0.40
codegen_flags: <defaults>
</compile_context>

<pallas_src>
import math
from functools import partial

import jax
import jax.numpy as jnp
from jax.experimental import pallas as pl
from jax.experimental.pallas import tpu as pltpu  # noqa: F401  (TPU backend)

# ---------------- model config (small, consistent with the module) ----------------
VOCAB = 64
VOCAB_PAD = 128          # logits padded to a full 128-lane vreg for a dense store
D_MODEL = 32
N_HEADS = 4
D_K = D_MODEL // N_HEADS
D_FF = 64
N_ENC = 2
N_DEC = 2
MAX_LEN = 64
PAD_IDX = 0
EPS = 1e-5               # nn.LayerNorm default eps


# ---------------- slab index registries (shared by init packing and the kernel) -------------
def _build_registries():
    w96, w32, w64, wf2 = {}, {}, {}, {}
    v96, v64, v32 = {}, {}, {}

    def add(d, name):
        d[name] = len(d)

    for l in range(N_ENC):
        add(w96, f'enc{l}_wqkv')
    for l in range(N_DEC):
        add(w96, f'dec{l}_sa_wqkv')

    for l in range(N_ENC):
        add(w32, f'enc{l}_wo')
    for l in range(N_DEC):
        for n in ('sa_wo', 'ca_wq', 'ca_wo'):
            add(w32, f'dec{l}_{n}')

    for l in range(N_ENC):
        add(w64, f'enc{l}_w1')
    for l in range(N_DEC):
        for n in ('w1', 'ca_wkv'):
            add(w64, f'dec{l}_{n}')

    for l in range(N_ENC):
        add(wf2, f'enc{l}_w2')
    for l in range(N_DEC):
        add(wf2, f'dec{l}_w2')

    for l in range(N_ENC):
        add(v96, f'enc{l}_bqkv')
    for l in range(N_DEC):
        add(v96, f'dec{l}_sa_bqkv')

    for l in range(N_ENC):
        add(v64, f'enc{l}_b1')
    for l in range(N_DEC):
        for n in ('b1', 'ca_bkv'):
            add(v64, f'dec{l}_{n}')

    for l in range(N_ENC):
        for n in ('bo', 'b2', 'ln1_g', 'ln1_b', 'ln2_g', 'ln2_b'):
            add(v32, f'enc{l}_{n}')
    for l in range(N_DEC):
        for n in ('sa_bo', 'ca_bq', 'ca_bo', 'b2',
                  'ln1_g', 'ln1_b', 'ln2_g', 'ln2_b', 'ln3_g', 'ln3_b'):
            add(v32, f'dec{l}_{n}')
    for n in ('enc_ln_g', 'enc_ln_b', 'dec_ln_g', 'dec_ln_b'):
        add(v32, n)

    return w96, w32, w64, wf2, v96, v64, v32


W96_IDX, W32_IDX, W64_IDX, WF2_IDX, V96_IDX, V64_IDX, V32_IDX = _build_registries()


# ---------------- the fused kernel ----------------

def _kernel(x_ref, pad_ref, w96, w32, w64, wf2, wout, v96, v64, v32, bout,
            out_ref, *, B, S):
    M = B * S
    x = x_ref[...]                                      # [B*S, D] f32 (emb*sqrt(d) + PE)
    pad = pad_ref[...]                                  # [B, S]   f32 (1 keep / 0 pad)

    # Masks built in-kernel (no [B,S,S] f32 mask shipped through HBM).
    key_keep = (pad > 0.0)[:, None, :]                  # [B, 1, S]  keep depends on key pos
    src_keep = jnp.broadcast_to(key_keep, (B, S, S))    # [B, S, S]
    row = jax.lax.broadcasted_iota(jnp.int32, (S, S), 0)
    col = jax.lax.broadcasted_iota(jnp.int32, (S, S), 1)
    tgt_keep = jnp.logical_and(src_keep, (col <= row)[None])

    def matmul(a_f32, w_bf16, b_f32):
        # bf16 MXU operands, f32 accumulation, f32 bias add.
        return jnp.dot(a_f32.astype(jnp.bfloat16), w_bf16,
                       preferred_element_type=jnp.float32) + b_f32

    def layer_norm(a, g, b):
        mu = jnp.mean(a, axis=-1, keepdims=True)
        var = jnp.mean(jnp.square(a - mu), axis=-1, keepdims=True)
        return (a - mu) * jax.lax.rsqrt(var + EPS) * g + b

    def attention(q, k, v, keep):
        # q,k,v: [B*S, D] f32 (scale already folded into Wq); keep: [B, S, S] bool.
        # Batched over B with one-batch-dim dot_generals; per-head loop over D_K=8 slices.
        q3 = q.reshape(B, S, D_MODEL).astype(jnp.bfloat16)
        k3 = k.reshape(B, S, D_MODEL).astype(jnp.bfloat16)
        v3 = v.reshape(B, S, D_MODEL).astype(jnp.bfloat16)
        outs = []
        for h in range(N_HEADS):
            lo, hi = h * D_K, (h + 1) * D_K
            s = jax.lax.dot_general(q3[:, :, lo:hi], k3[:, :, lo:hi],
                                    (((2,), (2,)), ((0,), (0,))),
                                    preferred_element_type=jnp.float32)      # [B,S,S]
            s = jnp.where(keep, s, -1e9)                                     # masked_fill
            m = jnp.max(s, axis=-1, keepdims=True)
            e = jnp.exp(s - m)
            p = e * pl.reciprocal(jnp.sum(e, axis=-1, keepdims=True), approx=True)
            outs.append(jax.lax.dot_general(p.astype(jnp.bfloat16), v3[:, :, lo:hi],
                                            (((2,), (1,)), ((0,), (0,))),
                                            preferred_element_type=jnp.float32))  # [B,S,Dk]
        return jnp.concatenate(outs, axis=-1).reshape(M, D_MODEL)

    def ffn(a, w1, b1, w2, b2):
        h = matmul(a, w1, b1)
        h = 0.5 * h * (1.0 + jax.lax.erf(h * 0.7071067811865476))           # exact GELU
        return matmul(h, w2, b2)

    def enc_layer(a, l):
        p = f'enc{l}_'
        qkv = matmul(a, w96[W96_IDX[p + 'wqkv']], v96[V96_IDX[p + 'bqkv']])
        att = attention(qkv[:, :D_MODEL], qkv[:, D_MODEL:2 * D_MODEL],
                        qkv[:, 2 * D_MODEL:], src_keep)
        att = matmul(att, w32[W32_IDX[p + 'wo']], v32[V32_IDX[p + 'bo']])
        a = layer_norm(a + att, v32[V32_IDX[p + 'ln1_g']], v32[V32_IDX[p + 'ln1_b']])
        f = ffn(a, w64[W64_IDX[p + 'w1']], v64[V64_IDX[p + 'b1']],
                wf2[WF2_IDX[p + 'w2']], v32[V32_IDX[p + 'b2']])
        return layer_norm(a + f, v32[V32_IDX[p + 'ln2_g']], v32[V32_IDX[p + 'ln2_b']])

    def dec_layer(a, enc_out, l):
        p = f'dec{l}_'
        qkv = matmul(a, w96[W96_IDX[p + 'sa_wqkv']], v96[V96_IDX[p + 'sa_bqkv']])
        att = attention(qkv[:, :D_MODEL], qkv[:, D_MODEL:2 * D_MODEL],
                        qkv[:, 2 * D_MODEL:], tgt_keep)
        att = matmul(att, w32[W32_IDX[p + 'sa_wo']], v32[V32_IDX[p + 'sa_bo']])
        a = layer_norm(a + att, v32[V32_IDX[p + 'ln1_g']], v32[V32_IDX[p + 'ln1_b']])

        q = matmul(a, w32[W32_IDX[p + 'ca_wq']], v32[V32_IDX[p + 'ca_bq']])
        kv = matmul(enc_out, w64[W64_IDX[p + 'ca_wkv']], v64[V64_IDX[p + 'ca_bkv']])
        att = attention(q, kv[:, :D_MODEL], kv[:, D_MODEL:], src_keep)
        att = matmul(att, w32[W32_IDX[p + 'ca_wo']], v32[V32_IDX[p + 'ca_bo']])
        a = layer_norm(a + att, v32[V32_IDX[p + 'ln2_g']], v32[V32_IDX[p + 'ln2_b']])

        f = ffn(a, w64[W64_IDX[p + 'w1']], v64[V64_IDX[p + 'b1']],
                wf2[WF2_IDX[p + 'w2']], v32[V32_IDX[p + 'b2']])
        return layer_norm(a + f, v32[V32_IDX[p + 'ln3_g']], v32[V32_IDX[p + 'ln3_b']])

    # ---- encoder ----
    h = x
    for l in range(N_ENC):
        h = enc_layer(h, l)
    enc_out = layer_norm(h, v32[V32_IDX['enc_ln_g']], v32[V32_IDX['enc_ln_b']])

    # ---- decoder (reference forward feeds src_embedded into the decoder too) ----
    y = x
    for l in range(N_DEC):
        y = dec_layer(y, enc_out, l)
    y = layer_norm(y, v32[V32_IDX['dec_ln_g']], v32[V32_IDX['dec_ln_b']])

    # single lane-dense [B*S, 128] f32 store
    out_ref[...] = matmul(y, wout[...], bout[...])


# ---------------- forward (glue + the one pallas_call) ----------------

def prometheus_forward(params, input_ids):
    B, S = input_ids.shape
    pad = (input_ids != PAD_IDX).astype(jnp.float32)                       # [B, S]
    x = (params['src_emb'][input_ids] * math.sqrt(D_MODEL)
         + params['pe'][:S][None]).reshape(B * S, D_MODEL)

    out = pl.pallas_call(
        partial(_kernel, B=B, S=S),
        out_shape=jax.ShapeDtypeStruct((B * S, VOCAB_PAD), jnp.float32),
    )(x, pad,
      params['w96'], params['w32'], params['w64'], params['wf2'], params['wout'],
      params['v96'], params['v64'], params['v32'], params['bout'])

    return out[:, :VOCAB].reshape(B, S, VOCAB)


# ---------------- deterministic parameter init + slab packing ----------------

def _xavier(key, shape):
    fan_in, fan_out = shape
    limit = math.sqrt(6.0 / (fan_in + fan_out))
    return jax.random.uniform(key, shape, jnp.float32, -limit, limit)


class _KeyGen:
    def __init__(self, key):
        self.key = key

    def __call__(self):
        self.key, sub = jax.random.split(self.key)
        return sub


def positional_encoding():
    pos = jnp.arange(MAX_LEN, dtype=jnp.float32)[:, None]
    div = jnp.exp(jnp.arange(0, D_MODEL, 2, dtype=jnp.float32)
                  * (-math.log(10000.0) / D_MODEL))
    pe = jnp.zeros((MAX_LEN, D_MODEL), jnp.float32)
    pe = pe.at[:, 0::2].set(jnp.sin(pos * div))
    pe = pe.at[:, 1::2].set(jnp.cos(pos * div))
    return pe


def init_params(key):
    kg = _KeyGen(key)
    scale = 1.0 / math.sqrt(D_K)         # attention scale folded into Wq / ca_wq at init

    w96d, w32d, w64d, wf2d = {}, {}, {}, {}
    v96d, v64d, v32d = {}, {}, {}

    def self_attn(prefix):
        wq = _xavier(kg(), (D_MODEL, D_MODEL)) * scale     # scale folded into Wq
        wk = _xavier(kg(), (D_MODEL, D_MODEL))
        wv = _xavier(kg(), (D_MODEL, D_MODEL))
        wo = _xavier(kg(), (D_MODEL, D_MODEL))
        w96d[prefix + 'wqkv'] = jnp.concatenate([wq, wk, wv], axis=1)
        # biases are zero; if non-zero, the q-part would need the same scale factor.
        v96d[prefix + 'bqkv'] = jnp.zeros((1, 3 * D_MODEL), jnp.float32)
        w32d[prefix + 'wo'] = wo
        v32d[prefix + 'bo'] = jnp.zeros((1, D_MODEL), jnp.float32)

    def ffn_p(prefix):
        w64d[prefix + 'w1'] = _xavier(kg(), (D_MODEL, D_FF))
        v64d[prefix + 'b1'] = jnp.zeros((1, D_FF), jnp.float32)
        wf2d[prefix + 'w2'] = _xavier(kg(), (D_FF, D_MODEL))
        v32d[prefix + 'b2'] = jnp.zeros((1, D_MODEL), jnp.float32)

    def ln_p(prefix, name):
        v32d[prefix + name + '_g'] = jnp.ones((1, D_MODEL), jnp.float32)
        v32d[prefix + name + '_b'] = jnp.zeros((1, D_MODEL), jnp.float32)

    for l in range(N_ENC):
        p = f'enc{l}_'
        self_attn(p)
        ffn_p(p)
        ln_p(p, 'ln1')
        ln_p(p, 'ln2')

    for l in range(N_DEC):
        p = f'dec{l}_'
        self_attn(p + 'sa_')
        ca_wq = _xavier(kg(), (D_MODEL, D_MODEL)) * scale
        ca_wk = _xavier(kg(), (D_MODEL, D_MODEL))
        ca_wv = _xavier(kg(), (D_MODEL, D_MODEL))
        ca_wo = _xavier(kg(), (D_MODEL, D_MODEL))
        w32d[p + 'ca_wq'] = ca_wq
        v32d[p + 'ca_bq'] = jnp.zeros((1, D_MODEL), jnp.float32)
        w64d[p + 'ca_wkv'] = jnp.concatenate([ca_wk, ca_wv], axis=1)
        v64d[p + 'ca_bkv'] = jnp.zeros((1, 2 * D_MODEL), jnp.float32)
        w32d[p + 'ca_wo'] = ca_wo
        v32d[p + 'ca_bo'] = jnp.zeros((1, D_MODEL), jnp.float32)
        ffn_p(p)
        ln_p(p, 'ln1')
        ln_p(p, 'ln2')
        ln_p(p, 'ln3')

    for n in ('enc_ln_g', 'dec_ln_g'):
        v32d[n] = jnp.ones((1, D_MODEL), jnp.float32)
    for n in ('enc_ln_b', 'dec_ln_b'):
        v32d[n] = jnp.zeros((1, D_MODEL), jnp.float32)

    w_out = _xavier(kg(), (D_MODEL, VOCAB))
    w_out_pad = jnp.zeros((D_MODEL, VOCAB_PAD), jnp.float32).at[:, :VOCAB].set(w_out)
    b_out = jnp.zeros((1, VOCAB_PAD), jnp.float32)

    def stack(d, idx, dtype):
        names = [n for n, _ in sorted(idx.items(), key=lambda kv: kv[1])]
        return jnp.stack([d[n] for n in names], axis=0).astype(dtype)

    return {
        'src_emb': _xavier(kg(), (VOCAB, D_MODEL)),
        'pe': positional_encoding(),
        'w96': stack(w96d, W96_IDX, jnp.bfloat16),   # [4, 32, 96]
        'w32': stack(w32d, W32_IDX, jnp.bfloat16),   # [8, 32, 32]
        'w64': stack(w64d, W64_IDX, jnp.bfloat16),   # [6, 32, 64]
        'wf2': stack(wf2d, WF2_IDX, jnp.bfloat16),   # [4, 64, 32]
        'wout': w_out_pad.astype(jnp.bfloat16),      # [32, 128]
        'v96': stack(v96d, V96_IDX, jnp.float32),    # [4, 1, 96]
        'v64': stack(v64d, V64_IDX, jnp.float32),    # [6, 1, 64]
        'v32': stack(v32d, V32_IDX, jnp.float32),    # [36, 1, 32]
        'bout': b_out,                               # [1, 128]
    }


if __name__ == "__main__":
    key = jax.random.PRNGKey(0)
    pkey, dkey = jax.random.split(key)
    params = init_params(pkey)

    B, S = 2, 8
    input_ids = jax.random.randint(dkey, (B, S), 0, VOCAB, dtype=jnp.int32)

    logits = jax.jit(prometheus_forward)(params, input_ids)
    logits = jax.block_until_ready(logits)
    assert logits.shape == (B, S, VOCAB)
    assert bool(jnp.all(jnp.isfinite(logits)))
    print("KERNEL_OK")
</pallas_src>

<mosaic_0001>
module attributes {stable_mosaic.version = 11 : i64} {
  func.func @_kernel(%arg0: memref<16x32xf32, #tpu.memory_space<vmem>>, %arg1: memref<2x8xf32, #tpu.memory_space<vmem>>, %arg2: memref<4x32x96xbf16, #tpu.memory_space<vmem>>, %arg3: memref<8x32x32xbf16, #tpu.memory_space<vmem>>, %arg4: memref<6x32x64xbf16, #tpu.memory_space<vmem>>, %arg5: memref<4x64x32xbf16, #tpu.memory_space<vmem>>, %arg6: memref<32x128xbf16, #tpu.memory_space<vmem>>, %arg7: memref<4x1x96xf32, #tpu.memory_space<vmem>>, %arg8: memref<6x1x64xf32, #tpu.memory_space<vmem>>, %arg9: memref<36x1x32xf32, #tpu.memory_space<vmem>>, %arg10: memref<1x128xf32, #tpu.memory_space<vmem>>, %arg11: memref<16x128xf32, #tpu.memory_space<vmem>>) attributes {dimension_semantics = [], scalar_prefetch = 0 : i64, scratch_operands = 0 : i64, tpu.core_type = #tpu.core_type<tc>} {
    %c0 = arith.constant 0 : index
    %c0_0 = arith.constant 0 : index
    %0 = vector.load %arg0[%c0, %c0_0] : memref<16x32xf32, #tpu.memory_space<vmem>>, vector<16x32xf32>
    %c0_1 = arith.constant 0 : index
    %c0_2 = arith.constant 0 : index
    %1 = vector.load %arg1[%c0_1, %c0_2] : memref<2x8xf32, #tpu.memory_space<vmem>>, vector<2x8xf32>
    %cst = arith.constant 0.000000e+00 : f32
    %2 = vector.broadcast %cst : f32 to vector<2x8xf32>
    %3 = arith.cmpf ogt, %1, %2 : vector<2x8xf32>
    %4 = vector.shape_cast %3 : vector<2x8xi1> to vector<2x1x8xi1>
    %5 = vector.shape_cast %4 : vector<2x1x8xi1> to vector<2x1x8xi1>
    %6 = vector.broadcast %5 : vector<2x1x8xi1> to vector<2x8x8xi1>
    %7 = tpu.iota {dimensions = array<i32: 0>} : vector<8x8xi32>
    %8 = tpu.iota {dimensions = array<i32: 1>} : vector<8x8xi32>
    %9 = arith.cmpi sle, %8, %7 : vector<8x8xi32>
    %10 = vector.shape_cast %9 : vector<8x8xi1> to vector<1x8x8xi1>
    %11 = vector.broadcast %10 : vector<1x8x8xi1> to vector<2x8x8xi1>
    %12 = arith.andi %6, %11 : vector<2x8x8xi1>
    %c0_3 = arith.constant 0 : index
    %c0_4 = arith.constant 0 : index
    %c0_5 = arith.constant 0 : index
    %13 = vector.load %arg2[%c0_3, %c0_4, %c0_5] : memref<4x32x96xbf16, #tpu.memory_space<vmem>>, vector<1x32x96xbf16>
    %14 = vector.shape_cast %13 : vector<1x32x96xbf16> to vector<32x96xbf16>
    %c0_6 = arith.constant 0 : index
    %c0_7 = arith.constant 0 : index
    %c0_8 = arith.constant 0 : index
    %15 = vector.load %arg7[%c0_6, %c0_7, %c0_8] : memref<4x1x96xf32, #tpu.memory_space<vmem>>, vector<1x1x96xf32>
    %16 = vector.shape_cast %15 : vector<1x1x96xf32> to vector<1x96xf32>
    %17 = arith.truncf %0 : vector<16x32xf32> to vector<16x32xbf16>
    %cst_9 = arith.constant dense<0.000000e+00> : vector<16x96xf32>
    %18 = tpu.matmul %17, %14, %cst_9 {dimension_numbers = #tpu.dot_dimension_numbers<[1], [0], [0], [1], [0, 0, 1, 1], [], []>} : vector<16x32xbf16>, vector<32x96xbf16>, vector<16x96xf32> -> vector<16x96xf32>
    %19 = vector.broadcast %16 : vector<1x96xf32> to vector<16x96xf32>
    %20 = arith.addf %18, %19 : vector<16x96xf32>
    %21 = vector.extract_strided_slice %20 {offsets = [0, 0], sizes = [16, 32], strides = [1, 1]} : vector<16x96xf32> to vector<16x32xf32>
    %22 = vector.extract_strided_slice %20 {offsets = [0, 32], sizes = [16, 32], strides = [1, 1]} : vector<16x96xf32> to vector<16x32xf32>
    %23 = vector.extract_strided_slice %20 {offsets = [0, 64], sizes = [16, 32], strides = [1, 1]} : vector<16x96xf32> to vector<16x32xf32>
    %24 = vector.shape_cast %21 : vector<16x32xf32> to vector<2x8x32xf32>
    %25 = arith.truncf %24 : vector<2x8x32xf32> to vector<2x8x32xbf16>
    %26 = vector.shape_cast %22 : vector<16x32xf32> to vector<2x8x32xf32>
    %27 = arith.truncf %26 : vector<2x8x32xf32> to vector<2x8x32xbf16>
    %28 = vector.shape_cast %23 : vector<16x32xf32> to vector<2x8x32xf32>
    %29 = arith.truncf %28 : vector<2x8x32xf32> to vector<2x8x32xbf16>
    %30 = vector.extract_strided_slice %25 {offsets = [0, 0, 0], sizes = [2, 8, 8], strides = [1, 1, 1]} : vector<2x8x32xbf16> to vector<2x8x8xbf16>
    %31 = vector.extract_strided_slice %27 {offsets = [0, 0, 0], sizes = [2, 8, 8], strides = [1, 1, 1]} : vector<2x8x32xbf16> to vector<2x8x8xbf16>
    %cst_10 = arith.constant dense<0.000000e+00> : vector<2x8x8xf32>
    %32 = tpu.matmul %30, %31, %cst_10 {dimension_numbers = #tpu.dot_dimension_numbers<[2], [2], [1], [1], [0, 0, 0, 1, 1, 1], [0], [0]>} : vector<2x8x8xbf16>, vector<2x8x8xbf16>, vector<2x8x8xf32> -> vector<2x8x8xf32>
    %cst_11 = arith.constant -1.000000e+09 : f32
    %33 = vector.broadcast %cst_11 : f32 to vector<2x8x8xf32>
    %34 = arith.select %6, %32, %33 : vector<2x8x8xi1>, vector<2x8x8xf32>
    %cst_12 = arith.constant dense<0xFF800000> : vector<2x8xf32>
    %35 = vector.multi_reduction <maximumf>, %34, %cst_12 [2] : vector<2x8x8xf32> to vector<2x8xf32>
    %36 = vector.shape_cast %35 : vector<2x8xf32> to vector<2x8x1xf32>
    %37 = vector.broadcast %36 : vector<2x8x1xf32> to vector<2x8x8xf32>
    %38 = arith.subf %34, %37 : vector<2x8x8xf32>
    %39 = math.exp %38 : vector<2x8x8xf32>
    %cst_13 = arith.constant dense<0.000000e+00> : vector<2x8xf32>
    %40 = vector.multi_reduction <add>, %39, %cst_13 [2] : vector<2x8x8xf32> to vector<2x8xf32>
    %41 = vector.shape_cast %40 : vector<2x8xf32> to vector<2x8x1xf32>
    %42 = tpu.reciprocal %41 {approx = true} : vector<2x8x1xf32> -> vector<2x8x1xf32>
    %43 = vector.broadcast %42 : vector<2x8x1xf32> to vector<2x8x8xf32>
    %44 = arith.mulf %39, %43 : vector<2x8x8xf32>
    %45 = arith.truncf %44 : vector<2x8x8xf32> to vector<2x8x8xbf16>
    %46 = vector.extract_strided_slice %29 {offsets = [0, 0, 0], sizes = [2, 8, 8], strides = [1, 1, 1]} : vector<2x8x32xbf16> to vector<2x8x8xbf16>
    %cst_14 = arith.constant dense<0.000000e+00> : vector<2x8x8xf32>
    %47 = tpu.matmul %45, %46, %cst_14 {dimension_numbers = #tpu.dot_dimension_numbers<[2], [1], [1], [2], [0, 0, 0, 1, 1, 2], [0], [0]>} : vector<2x8x8xbf16>, vector<2x8x8xbf16>, vector<2x8x8xf32> -> vector<2x8x8xf32>
    %48 = vector.extract_strided_slice %25 {offsets = [0, 0, 8], sizes = [2, 8, 8], strides = [1, 1, 1]} : vector<2x8x32xbf16> to vector<2x8x8xbf16>
    %49 = vector.extract_strided_slice %27 {offsets = [0, 0, 8], sizes = [2, 8, 8], strides = [1, 1, 1]} : vector<2x8x32xbf16> to vector<2x8x8xbf16>
    %cst_15 = arith.constant dense<0.000000e+00> : vector<2x8x8xf32>
    %50 = tpu.matmul %48, %49, %cst_15 {dimension_numbers = #tpu.dot_dimension_numbers<[2], [2], [1], [1], [0, 0, 0, 1, 1, 1], [0], [0]>} : vector<2x8x8xbf16>, vector<2x8x8xbf16>, vector<2x8x8xf32> -> vector<2x8x8xf32>
    %cst_16 = arith.constant -1.000000e+09 : f32
    %51 = vector.broadcast %cst_16 : f32 to vector<2x8x8xf32>
    %52 = arith.select %6, %50, %51 : vector<2x8x8xi1>, vector<2x8x8xf32>
    %cst_17 = arith.constant dense<0xFF800000> : vector<2x8xf32>
    %53 = vector.multi_reduction <maximumf>, %52, %cst_17 [2] : vector<2x8x8xf32> to vector<2x8xf32>
    %54 = vector.shape_cast %53 : vector<2x8xf32> to vector<2x8x1xf32>
    %55 = vector.broadcast %54 : vector<2x8x1xf32> to vector<2x8x8xf32>
    %56 = arith.subf %52, %55 : vector<2x8x8xf32>
    %57 = math.exp %56 : vector<2x8x8xf32>
    %cst_18 = arith.constant dense<0.000000e+00> : vector<2x8xf32>
    %58 = vector.multi_reduction <add>, %57, %cst_18 [2] : vector<2x8x8xf32> to vector<2x8xf32>
    %59 = vector.shape_cast %58 : vector<2x8xf32> to vector<2x8x1xf32>
    %60 = tpu.reciprocal %59 {approx = true} : vector<2x8x1xf32> -> vector<2x8x1xf32>
    %61 = vector.broadcast %60 : vector<2x8x1xf32> to vector<2x8x8xf32>
    %62 = arith.mulf %57, %61 : vector<2x8x8xf32>
    %63 = arith.truncf %62 : vector<2x8x8xf32> to vector<2x8x8xbf16>
    %64 = vector.extract_strided_slice %29 {offsets = [0, 0, 8], sizes = [2, 8, 8], strides = [1, 1, 1]} : vector<2x8x32xbf16> to vector<2x8x8xbf16>
    %cst_19 = arith.constant dense<0.000000e+00> : vector<2x8x8xf32>
    %65 = tpu.matmul %63, %64, %cst_19 {dimension_numbers = #tpu.dot_dimension_numbers<[2], [1], [1], [2], [0, 0, 0, 1, 1, 2], [0], [0]>} : vector<2x8x8xbf16>, vector<2x8x8xbf16>, vector<2x8x8xf32> -> vector<2x8x8xf32>
    %66 = vector.extract_strided_slice %25 {offsets = [0, 0, 16], sizes = [2, 8, 8], strides = [1, 1, 1]} : vector<2x8x32xbf16> to vector<2x8x8xbf16>
    %67 = vector.extract_strided_slice %27 {offsets = [0, 0, 16], sizes = [2, 8, 8], strides = [1, 1, 1]} : vector<2x8x32xbf16> to vector<2x8x8xbf16>
    %cst_20 = arith.constant dense<0.000000e+00> : vector<2x8x8xf32>
    %68 = tpu.matmul %66, %67, %cst_20 {dimension_numbers = #tpu.dot_dimension_numbers<[2], [2], [1], [1], [0, 0, 0, 1, 1, 1], [0], [0]>} : vector<2x8x8xbf16>, vector<2x8x8xbf16>, vector<2x8x8xf32> -> vector<2x8x8xf32>
    %cst_21 = arith.constant -1.000000e+09 : f32
    %69 = vector.broadcast %cst_21 : f32 to vector<2x8x8xf32>
    %70 = arith.select %6, %68, %69 : vector<2x8x8xi1>, vector<2x8x8xf32>
    %cst_22 = arith.constant dense<0xFF800000> : vector<2x8xf32>
    %71 = vector.multi_reduction <maximumf>, %70, %cst_22 [2] : vector<2x8x8xf32> to vector<2x8xf32>
    %72 = vector.shape_cast %71 : vector<2x8xf32> to vector<2x8x1xf32>
    %73 = vector.broadcast %72 : vector<2x8x1xf32> to vector<2x8x8xf32>
    %74 = arith.subf %70, %73 : vector<2x8x8xf32>
    %75 = math.exp %74 : vector<2x8x8xf32>
    %cst_23 = arith.constant dense<0.000000e+00> : vector<2x8xf32>
    %76 = vector.multi_reduction <add>, %75, %cst_23 [2] : vector<2x8x8xf32> to vector<2x8xf32>
    %77 = vector.shape_cast %76 : vector<2x8xf32> to vector<2x8x1xf32>
    %78 = tpu.reciprocal %77 {approx = true} : vector<2x8x1xf32> -> vector<2x8x1xf32>
    %79 = vector.broadcast %78 : vector<2x8x1xf32> to vector<2x8x8xf32>
    %80 = arith.mulf %75, %79 : vector<2x8x8xf32>
    %81 = arith.truncf %80 : vector<2x8x8xf32> to vector<2x8x8xbf16>
    %82 = vector.extract_strided_slice %29 {offsets = [0, 0, 16], sizes = [2, 8, 8], strides = [1, 1, 1]} : vector<2x8x32xbf16> to vector<2x8x8xbf16>
    %cst_24 = arith.constant dense<0.000000e+00> : vector<2x8x8xf32>
    %83 = tpu.matmul %81, %82, %cst_24 {dimension_numbers = #tpu.dot_dimension_numbers<[2], [1], [1], [2], [0, 0, 0, 1, 1, 2], [0], [0]>} : vector<2x8x8xbf16>, vector<2x8x8xbf16>, vector<2x8x8xf32> -> vector<2x8x8xf32>
    %84 = vector.extract_strided_slice %25 {offsets = [0, 0, 24], sizes = [2, 8, 8], strides = [1, 1, 1]} : vector<2x8x32xbf16> to vector<2x8x8xbf16>
    %85 = vector.extract_strided_slice %27 {offsets = [0, 0, 24], sizes = [2, 8, 8], strides = [1, 1, 1]} : vector<2x8x32xbf16> to vector<2x8x8xbf16>
    %cst_25 = arith.constant dense<0.000000e+00> : vector<2x8x8xf32>
    %86 = tpu.matmul %84, %85, %cst_25 {dimension_numbers = #tpu.dot_dimension_numbers<[2], [2], [1], [1], [0, 0, 0, 1, 1, 1], [0], [0]>} : vector<2x8x8xbf16>, vector<2x8x8xbf16>, vector<2x8x8xf32> -> vector<2x8x8xf32>
    %cst_26 = arith.constant -1.000000e+09 : f32
    %87 = vector.broadcast %cst_26 : f32 to vector<2x8x8xf32>
    %88 = arith.select %6, %86, %87 : vector<2x8x8xi1>, vector<2x8x8xf32>
    %cst_27 = arith.constant dense<0xFF800000> : vector<2x8xf32>
    %89 = vector.multi_reduction <maximumf>, %88, %cst_27 [2] : vector<2x8x8xf32> to vector<2x8xf32>
    %90 = vector.shape_cast %89 : vector<2x8xf32> to vector<2x8x1xf32>
    %91 = vector.broadcast %90 : vector<2x8x1xf32> to vector<2x8x8xf32>
    %92 = arith.subf %88, %91 : vector<2x8x8xf32>
    %93 = math.exp %92 : vector<2x8x8xf32>
    %cst_28 = arith.constant dense<0.000000e+00> : vector<2x8xf32>
    %94 = vector.multi_reduction <add>, %93, %cst_28 [2] : vector<2x8x8xf32> to vector<2x8xf32>
    %95 = vector.shape_cast %94 : vector<2x8xf32> to vector<2x8x1xf32>
    %96 = tpu.reciprocal %95 {approx = true} : vector<2x8x1xf32> -> vector<2x8x1xf32>
    %97 = vector.broadcast %96 : vector<2x8x1xf32> to vector<2x8x8xf32>
    %98 = arith.mulf %93, %97 : vector<2x8x8xf32>
    %99 = arith.truncf %98 : vector<2x8x8xf32> to vector<2x8x8xbf16>
    %100 = vector.extract_strided_slice %29 {offsets = [0, 0, 24], sizes = [2, 8, 8], strides = [1, 1, 1]} : vector<2x8x32xbf16> to vector<2x8x8xbf16>
    %cst_29 = arith.constant dense<0.000000e+00> : vector<2x8x8xf32>
    %101 = tpu.matmul %99, %100, %cst_29 {dimension_numbers = #tpu.dot_dimension_numbers<[2], [1], [1], [2], [0, 0, 0, 1, 1, 2], [0], [0]>} : vector<2x8x8xbf16>, vector<2x8x8xbf16>, vector<2x8x8xf32> -> vector<2x8x8xf32>
    %102 = tpu.concatenate %47, %65, %83, %101 in 2 : vector<2x8x8xf32>, vector<2x8x8xf32>, vector<2x8x8xf32>, vector<2x8x8xf32> -> vector<2x8x32xf32>
    %103 = vector.shape_cast %102 : vector<2x8x32xf32> to vector<16x32xf32>
    %c0_30 = arith.constant 0 : index
    %c0_31 = arith.constant 0 : index
    %c0_32 = arith.constant 0 : index
    %104 = vector.load %arg3[%c0_30, %c0_31, %c0_32] : memref<8x32x32xbf16, #tpu.memory_space<vmem>>, vector<1x32x32xbf16>
    %105 = vector.shape_cast %104 : vector<1x32x32xbf16> to vector<32x32xbf16>
    %c0_33 = arith.constant 0 : index
    %c0_34 = arith.constant 0 : index
    %c0_35 = arith.constant 0 : index
    %106 = vector.load %arg9[%c0_33, %c0_34, %c0_35] : memref<36x1x32xf32, #tpu.memory_space<vmem>>, vector<1x1x32xf32>
    %107 = vector.shape_cast %106 : vector<1x1x32xf32> to vector<1x32xf32>
    %108 = arith.truncf %103 : vector<16x32xf32> to vector<16x32xbf16>
    %cst_36 = arith.constant dense<0.000000e+00> : vector<16x32xf32>
    %109 = tpu.matmul %108, %105, %cst_36 {dimension_numbers = #tpu.dot_dimension_numbers<[1], [0], [0], [1], [0, 0, 1, 1], [], []>} : vector<16x32xbf16>, vector<32x32xbf16>, vector<16x32xf32> -> vector<16x32xf32>
    %110 = vector.broadcast %107 : vector<1x32xf32> to vector<16x32xf32>
    %111 = arith.addf %109, %110 : vector<16x32xf32>
    %112 = arith.addf %0, %111 : vector<16x32xf32>
    %c2 = arith.constant 2 : index
    %c0_37 = arith.constant 0 : index
    %c0_38 = arith.constant 0 : index
    %113 = vector.load %arg9[%c2, %c0_37, %c0_38] : memref<36x1x32xf32, #tpu.memory_space<vmem>>, vector<1x1x32xf32>
    %114 = vector.shape_cast %113 : vector<1x1x32xf32> to vector<1x32xf32>
    %c3 = arith.constant 3 : index
    %c0_39 = arith.constant 0 : index
    %c0_40 = arith.constant 0 : index
    %115 = vector.load %arg9[%c3, %c0_39, %c0_40] : memref<36x1x32xf32, #tpu.memory_space<vmem>>, vector<1x1x32xf32>
    %116 = vector.shape_cast %115 : vector<1x1x32xf32> to vector<1x32xf32>
    %cst_41 = arith.constant dense<0.000000e+00> : vector<16xf32>
    %117 = vector.multi_reduction <add>, %112, %cst_41 [1] : vector<16x32xf32> to vector<16xf32>
    %118 = vector.shape_cast %117 : vector<16xf32> to vector<16x1xf32>
    %cst_42 = arith.constant 3.200000e+01 : f32
    %119 = vector.broadcast %cst_42 : f32 to vector<16x1xf32>
    %120 = arith.divf %118, %119 : vector<16x1xf32>
    %121 = vector.broadcast %120 : vector<16x1xf32> to vector<16x32xf32>
    %122 = arith.subf %112, %121 : vector<16x32xf32>
    %123 = arith.mulf %122, %122 : vector<16x32xf32>
    %cst_43 = arith.constant dense<0.000000e+00> : vector<16xf32>
    %124 = vector.multi_reduction <add>, %123, %cst_43 [1] : vector<16x32xf32> to vector<16xf32>
    %125 = vector.shape_cast %124 : vector<16xf32> to vector<16x1xf32>
    %cst_44 = arith.constant 3.200000e+01 : f32
    %126 = vector.broadcast %cst_44 : f32 to vector<16x1xf32>
    %127 = arith.divf %125, %126 : vector<16x1xf32>
    %128 = vector.broadcast %120 : vector<16x1xf32> to vector<16x32xf32>
    %129 = arith.subf %112, %128 : vector<16x32xf32>
    %cst_45 = arith.constant 9.99999974E-6 : f32
    %130 = vector.broadcast %cst_45 : f32 to vector<16x1xf32>
    %131 = arith.addf %127, %130 : vector<16x1xf32>
    %132 = math.rsqrt %131 : vector<16x1xf32>
    %133 = vector.broadcast %132 : vector<16x1xf32> to vector<16x32xf32>
    %134 = arith.mulf %129, %133 : vector<16x32xf32>
    %135 = vector.broadcast %114 : vector<1x32xf32> to vector<16x32xf32>
    %136 = arith.mulf %134, %135 : vector<16x32xf32>
    %137 = vector.broadcast %116 : vector<1x32xf32> to vector<16x32xf32>
    %138 = arith.addf %136, %137 : vector<16x32xf32>
    %c0_46 = arith.constant 0 : index
    %c0_47 = arith.constant 0 : index
    %c0_48 = arith.constant 0 : index
    %139 = vector.load %arg4[%c0_46, %c0_47, %c0_48] : memref<6x32x64xbf16, #tpu.memory_space<vmem>>, vector<1x32x64xbf16>
    %140 = vector.shape_cast %139 : vector<1x32x64xbf16> to vector<32x64xbf16>
    %c0_49 = arith.constant 0 : index
    %c0_50 = arith.constant 0 : index
    %c0_51 = arith.constant 0 : index
    %141 = vector.load %arg8[%c0_49, %c0_50, %c0_51] : memref<6x1x64xf32, #tpu.memory_space<vmem>>, vector<1x1x64xf32>
    %142 = vector.shape_cast %141 : vector<1x1x64xf32> to vector<1x64xf32>
    %c0_52 = arith.constant 0 : index
    %c0_53 = arith.constant 0 : index
    %c0_54 = arith.constant 0 : index
    %143 = vector.load %arg5[%c0_52, %c0_53, %c0_54] : memref<4x64x32xbf16, #tpu.memory_space<vmem>>, vector<1x64x32xbf16>
    %144 = vector.shape_cast %143 : vector<1x64x32xbf16> to vector<64x32xbf16>
    %c1 = arith.constant 1 : index
    %c0_55 = arith.constant 0 : index
    %c0_56 = arith.constant 0 : index
    %145 = vector.load %arg9[%c1, %c0_55, %c0_56] : memref<36x1x32xf32, #tpu.memory_space<vmem>>, vector<1x1x32xf32>
    %146 = vector.shape_cast %145 : vector<1x1x32xf32> to vector<1x32xf32>
    %147 = arith.truncf %138 : vector<16x32xf32> to vector<16x32xbf16>
    %cst_57 = arith.constant dense<0.000000e+00> : vector<16x64xf32>
    %148 = tpu.matmul %147, %140, %cst_57 {dimension_numbers = #tpu.dot_dimension_numbers<[1], [0], [0], [1], [0, 0, 1, 1], [], []>} : vector<16x32xbf16>, vector<32x64xbf16>, vector<16x64xf32> -> vector<16x64xf32>
    %149 = vector.broadcast %142 : vector<1x64xf32> to vector<16x64xf32>
    %150 = arith.addf %148, %149 : vector<16x64xf32>
    %cst_58 = arith.constant 5.000000e-01 : f32
    %151 = vector.broadcast %cst_58 : f32 to vector<16x64xf32>
    %152 = arith.mulf %151, %150 : vector<16x64xf32>
    %cst_59 = arith.constant 0.707106769 : f32
    %153 = vector.broadcast %cst_59 : f32 to vector<16x64xf32>
    %154 = arith.mulf %150, %153 : vector<16x64xf32>
    %155 = math.erf %154 : vector<16x64xf32>
    %cst_60 = arith.constant 1.000000e+00 : f32
    %156 = vector.broadcast %cst_60 : f32 to vector<16x64xf32>
    %157 = arith.addf %156, %155 : vector<16x64xf32>
    %158 = arith.mulf %152, %157 : vector<16x64xf32>
    %159 = arith.truncf %158 : vector<16x64xf32> to vector<16x64xbf16>
    %cst_61 = arith.constant dense<0.000000e+00> : vector<16x32xf32>
    %160 = tpu.matmul %159, %144, %cst_61 {dimension_numbers = #tpu.dot_dimension_numbers<[1], [0], [0], [1], [0, 0, 1, 1], [], []>} : vector<16x64xbf16>, vector<64x32xbf16>, vector<16x32xf32> -> vector<16x32xf32>
    %161 = vector.broadcast %146 : vector<1x32xf32> to vector<16x32xf32>
    %162 = arith.addf %160, %161 : vector<16x32xf32>
    %163 = arith.addf %138, %162 : vector<16x32xf32>
    %c4 = arith.constant 4 : index
    %c0_62 = arith.constant 0 : index
    %c0_63 = arith.constant 0 : index
    %164 = vector.load %arg9[%c4, %c0_62, %c0_63] : memref<36x1x32xf32, #tpu.memory_space<vmem>>, vector<1x1x32xf32>
    %165 = vector.shape_cast %164 : vector<1x1x32xf32> to vector<1x32xf32>
    %c5 = arith.constant 5 : index
    %c0_64 = arith.constant 0 : index
    %c0_65 = arith.constant 0 : index
    %166 = vector.load %arg9[%c5, %c0_64, %c0_65] : memref<36x1x32xf32, #tpu.memory_space<vmem>>, vector<1x1x32xf32>
    %167 = vector.shape_cast %166 : vector<1x1x32xf32> to vector<1x32xf32>
    %cst_66 = arith.constant dense<0.000000e+00> : vector<16xf32>
    %168 = vector.multi_reduction <add>, %163, %cst_66 [1] : vector<16x32xf32> to vector<16xf32>
    %169 = vector.shape_cast %168 : vector<16xf32> to vector<16x1xf32>
    %cst_67 = arith.constant 3.200000e+01 : f32
    %170 = vector.broadcast %cst_67 : f32 to vector<16x1xf32>
    %171 = arith.divf %169, %170 : vector<16x1xf32>
    %172 = vector.broadcast %171 : vector<16x1xf32> to vector<16x32xf32>
    %173 = arith.subf %163, %172 : vector<16x32xf32>
    %174 = arith.mulf %173, %173 : vector<16x32xf32>
    %cst_68 = arith.constant dense<0.000000e+00> : vector<16xf32>
    %175 = vector.multi_reduction <add>, %174, %cst_68 [1] : vector<16x32xf32> to vector<16xf32>
    %176 = vector.shape_cast %175 : vector<16xf32> to vector<16x1xf32>
    %cst_69 = arith.constant 3.200000e+01 : f32
    %177 = vector.broadcast %cst_69 : f32 to vector<16x1xf32>
    %178 = arith.divf %176, %177 : vector<16x1xf32>
    %179 = vector.broadcast %171 : vector<16x1xf32> to vector<16x32xf32>
    %180 = arith.subf %163, %179 : vector<16x32xf32>
    %cst_70 = arith.constant 9.99999974E-6 : f32
    %181 = vector.broadcast %cst_70 : f32 to vector<16x1xf32>
    %182 = arith.addf %178, %181 : vector<16x1xf32>
    %183 = math.rsqrt %182 : vector<16x1xf32>
    %184 = vector.broadcast %183 : vector<16x1xf32> to vector<16x32xf32>
    %185 = arith.mulf %180, %184 : vector<16x32xf32>
    %186 = vector.broadcast %165 : vector<1x32xf32> to vector<16x32xf32>
    %187 = arith.mulf %185, %186 : vector<16x32xf32>
    %188 = vector.broadcast %167 : vector<1x32xf32> to vector<16x32xf32>
    %189 = arith.addf %187, %188 : vector<16x32xf32>
    %c1_71 = arith.constant 1 : index
    %c0_72 = arith.constant 0 : index
    %c0_73 = arith.constant 0 : index
    %190 = vector.load %arg2[%c1_71, %c0_72, %c0_73] : memref<4x32x96xbf16, #tpu.memory_space<vmem>>, vector<1x32x96xbf16>
    %191 = vector.shape_cast %190 : vector<1x32x96xbf16> to vector<32x96xbf16>
    %c1_74 = arith.constant 1 : index
    %c0_75 = arith.constant 0 : index
    %c0_76 = arith.constant 0 : index
    %192 = vector.load %arg7[%c1_74, %c0_75, %c0_76] : memref<4x1x96xf32, #tpu.memory_space<vmem>>, vector<1x1x96xf32>
    %193 = vector.shape_cast %192 : vector<1x1x96xf32> to vector<1x96xf32>
    %194 = arith.truncf %189 : vector<16x32xf32> to vector<16x32xbf16>
    %cst_77 = arith.constant dense<0.000000e+00> : vector<16x96xf32>
    %195 = tpu.matmul %194, %191, %cst_77 {dimension_numbers = #tpu.dot_dimension_numbers<[1], [0], [0], [1], [0, 0, 1, 1], [], []>} : vector<16x32xbf16>, vector<32x96xbf16>, vector<16x96xf32> -> vector<16x96xf32>
    %196 = vector.broadcast %193 : vector<1x96xf32> to vector<16x96xf32>
    %197 = arith.addf %195, %196 : vector<16x96xf32>
    %198 = vector.extract_strided_slice %197 {offsets = [0, 0], sizes = [16, 32], strides = [1, 1]} : vector<16x96xf32> to vector<16x32xf32>
    %199 = vector.extract_strided_slice %197 {offsets = [0, 32], sizes = [16, 32], strides = [1, 1]} : vector<16x96xf32> to vector<16x32xf32>
    %200 = vector.extract_strided_slice %197 {offsets = [0, 64], sizes = [16, 32], strides = [1, 1]} : vector<16x96xf32> to vector<16x32xf32>
    %201 = vector.shape_cast %198 : vector<16x32xf32> to vector<2x8x32xf32>
    %202 = arith.truncf %201 : vector<2x8x32xf32> to vector<2x8x32xbf16>
    %203 = vector.shape_cast %199 : vector<16x32xf32> to vector<2x8x32xf32>
    %204 = arith.truncf %203 : vector<2x8x32xf32> to vector<2x8x32xbf16>
    %205 = vector.shape_cast %200 : vector<16x32xf32> to vector<2x8x32xf32>
    %206 = arith.truncf %205 : vector<2x8x32xf32> to vector<2x8x32xbf16>
    %207 = vector.extract_strided_slice %202 {offsets = [0, 0, 0], sizes = [2, 8, 8], strides = [1, 1, 1]} : vector<2x8x32xbf16> to vector<2x8x8xbf16>
    %208 = vector.extract_strided_slice %204 {offsets = [0, 0, 0], sizes = [2, 8, 8], strides = [1, 1, 1]} : vector<2x8x32xbf16> to vector<2x8x8xbf16>
    %cst_78 = arith.constant dense<0.000000e+00> : vector<2x8x8xf32>
    %209 = tpu.matmul %207, %208, %cst_78 {dimension_numbers = #tpu.dot_dimension_numbers<[2], [2], [1], [1], [0, 0, 0, 1, 1, 1], [0], [0]>} : vector<2x8x8xbf16>, vector<2x8x8xbf16>, vector<2x8x8xf32> -> vector<2x8x8xf32>
    %cst_79 = arith.constant -1.000000e+09 : f32
    %210 = vector.broadcast %cst_79 : f32 to vector<2x8x8xf32>
    %211 = arith.select %6, %209, %210 : vector<2x8x8xi1>, vector<2x8x8xf32>
    %cst_80 = arith.constant dense<0xFF800000> : vector<2x8xf32>
    %212 = vector.multi_reduction <maximumf>, %211, %cst_80 [2] : vector<2x8x8xf32> to vector<2x8xf32>
    %213 = vector.shape_cast %212 : vector<2x8xf32> to vector<2x8x1xf32>
    %214 = vector.broadcast %213 : vector<2x8x1xf32> to vector<2x8x8xf32>
    %215 = arith.subf %211, %214 : vector<2x8x8xf32>
    %216 = math.exp %215 : vector<2x8x8xf32>
    %cst_81 = arith.constant dense<0.000000e+00> : vector<2x8xf32>
    %217 = vector.multi_reduction <add>, %216, %cst_81 [2] : vector<2x8x8xf32> to vector<2x8xf32>
    %218 = vector.shape_cast %217 : vector<2x8xf32> to vector<2x8x1xf32>
    %219 = tpu.reciprocal %218 {approx = true} : vector<2x8x1xf32> -> vector<2x8x1xf32>
    %220 = vector.broadcast %219 : vector<2x8x1xf32> to vector<2x8x8xf32>
    %221 = arith.mulf %216, %220 : vector<2x8x8xf32>
    %222 = arith.truncf %221 : vector<2x8x8xf32> to vector<2x8x8xbf16>
    %223 = vector.extract_strided_slice %206 {offsets = [0, 0, 0], sizes = [2, 8, 8], strides = [1, 1, 1]} : vector<2x8x32xbf16> to vector<2x8x8xbf16>
    %cst_82 = arith.constant dense<0.000000e+00> : vector<2x8x8xf32>
    %224 = tpu.matmul %222, %223, %cst_82 {dimension_numbers = #tpu.dot_dimension_numbers<[2], [1], [1], [2], [0, 0, 0, 1, 1, 2], [0], [0]>} : vector<2x8x8xbf16>, vector<2x8x8xbf16>, vector<2x8x8xf32> -> vector<2x8x8xf32>
    %225 = vector.extract_strided_slice %202 {offsets = [0, 0, 8], sizes = [2, 8, 8], strides = [1, 1, 1]} : vector<2x8x32xbf16> to vector<2x8x8xbf16>
    %226 = vector.extract_strided_slice %204 {offsets = [0, 0, 8], sizes = [2, 8, 8], strides = [1, 1, 1]} : vector<2x8x32xbf16> to vector<2x8x8xbf16>
    %cst_83 = arith.constant dense<0.000000e+00> : vector<2x8x8xf32>
    %227 = tpu.matmul %225, %226, %cst_83 {dimension_numbers = #tpu.dot_dimension_numbers<[2], [2], [1], [1], [0, 0, 0, 1, 1, 1], [0], [0]>} : vector<2x8x8xbf16>, vector<2x8x8xbf16>, vector<2x8x8xf32> -> vector<2x8x8xf32>
    %cst_84 = arith.constant -1.000000e+09 : f32
    %228 = vector.broadcast %cst_84 : f32 to vector<2x8x8xf32>
    %229 = arith.select %6, %227, %228 : vector<2x8x8xi1>, vector<2x8x8xf32>
    %cst_85 = arith.constant dense<0xFF800000> : vector<2x8xf32>
    %230 = vector.multi_reduction <maximumf>, %229, %cst_85 [2] : vector<2x8x8xf32> to vector<2x8xf32>
    %231 = vector.shape_cast %230 : vector<2x8xf32> to vector<2x8x1xf32>
    %232 = vector.broadcast %231 : vector<2x8x1xf32> to vector<2x8x8xf32>
    %233 = arith.subf %229, %232 : vector<2x8x8xf32>
    %234 = math.exp %233 : vector<2x8x8xf32>
    %cst_86 = arith.constant dense<0.000000e+00> : vector<2x8xf32>
    %235 = vector.multi_reduction <add>, %234, %cst_86 [2] : vector<2x8x8xf32> to vector<2x8xf32>
    %236 = vector.shape_cast %235 : vector<2x8xf32> to vector<2x8x1xf32>
    %237 = tpu.reciprocal %236 {approx = true} : vector<2x8x1xf32> -> vector<2x8x1xf32>
    %238 = vector.broadcast %237 : vector<2x8x1xf32> to vector<2x8x8xf32>
    %239 = arith.mulf %234, %238 : vector<2x8x8xf32>
    %240 = arith.truncf %239 : vector<2x8x8xf32> to vector<2x8x8xbf16>
    %241 = vector.extract_strided_slice %206 {offsets = [0, 0, 8], sizes = [2, 8, 8], strides = [1, 1, 1]} : vector<2x8x32xbf16> to vector<2x8x8xbf16>
    %cst_87 = arith.constant dense<0.000000e+00> : vector<2x8x8xf32>
    %242 = tpu.matmul %240, %241, %cst_87 {dimension_numbers = #tpu.dot_dimension_numbers<[2], [1], [1], [2], [0, 0, 0, 1, 1, 2], [0], [0]>} : vector<2x8x8xbf16>, vector<2x8x8xbf16>, vector<2x8x8xf32> -> vector<2x8x8xf32>
    %243 = vector.extract_strided_slice %202 {offsets = [0, 0, 16], sizes = [2, 8, 8], strides = [1, 1, 1]} : vector<2x8x32xbf16> to vector<2x8x8xbf16>
    %244 = vector.extract_strided_slice %204 {offsets = [0, 0, 16], sizes = [2, 8, 8], strides = [1, 1, 1]} : vector<2x8x32xbf16> to vector<2x8x8xbf16>
    %cst_88 = arith.constant dense<0.000000e+00> : vector<2x8x8xf32>
    %245 = tpu.matmul %243, %244, %cst_88 {dimension_numbers = #tpu.dot_dimension_numbers<[2], [2], [1], [1], [0, 0, 0, 1, 1, 1], [0], [0]>} : vector<2x8x8xbf16>, vector<2x8x8xbf16>, vector<2x8x8xf32> -> vector<2x8x8xf32>
    %cst_89 = arith.constant -1.000000e+09 : f32
    %246 = vector.broadcast %cst_89 : f32 to vector<2x8x8xf32>
    %247 = arith.select %6, %245, %246 : vector<2x8x8xi1>, vector<2x8x8xf32>
    %cst_90 = arith.constant dense<0xFF800000> : vector<2x8xf32>
    %248 = vector.multi_reduction <maximumf>, %247, %cst_90 [2] : vector<2x8x8xf32> to vector<2x8xf32>
    %249 = vector.shape_cast %248 : vector<2x8xf32> to vector<2x8x1xf32>
    %250 = vector.broadcast %249 : vector<2x8x1xf32> to vector<2x8x8xf32>
    %251 = arith.subf %247, %250 : vector<2x8x8xf32>
    %252 = math.exp %251 : vector<2x8x8xf32>
    %cst_91 = arith.constant dense<0.000000e+00> : vector<2x8xf32>
    %253 = vector.multi_reduction <add>, %252, %cst_91 [2] : vector<2x8x8xf32> to vector<2x8xf32>
    %254 = vector.shape_cast %253 : vector<2x8xf32> to vector<2x8x1xf32>
    %255 = tpu.reciprocal %254 {approx = true} : vector<2x8x1xf32> -> vector<2x8x1xf32>
    %256 = vector.broadcast %255 : vector<2x8x1xf32> to vector<2x8x8xf32>
    %257 = arith.mulf %252, %256 : vector<2x8x8xf32>
    %258 = arith.truncf %257 : vector<2x8x8xf32> to vector<2x8x8xbf16>
    %259 = vector.extract_strided_slice %206 {offsets = [0, 0, 16], sizes = [2, 8, 8], strides = [1, 1, 1]} : vector<2x8x32xbf16> to vector<2x8x8xbf16>
    %cst_92 = arith.constant dense<0.000000e+00> : vector<2x8x8xf32>
    %260 = tpu.matmul %258, %259, %cst_92 {dimension_numbers = #tpu.dot_dimension_numbers<[2], [1], [1], [2], [0, 0, 0, 1, 1, 2], [0], [0]>} : vector<2x8x8xbf16>, vector<2x8x8xbf16>, vector<2x8x8xf32> -> vector<2x8x8xf32>
    %261 = vector.extract_strided_slice %202 {offsets = [0, 0, 24], sizes = [2, 8, 8], strides = [1, 1, 1]} : vector<2x8x32xbf16> to vector<2x8x8xbf16>
    %262 = vector.extract_strided_slice %204 {offsets = [0, 0, 24], sizes = [2, 8, 8], strides = [1, 1, 1]} : vector<2x8x32xbf16> to vector<2x8x8xbf16>
    %cst_93 = arith.constant dense<0.000000e+00> : vector<2x8x8xf32>
    %263 = tpu.matmul %261, %262, %cst_93 {dimension_numbers = #tpu.dot_dimension_numbers<[2], [2], [1], [1], [0, 0, 0, 1, 1, 1], [0], [0]>} : vector<2x8x8xbf16>, vector<2x8x8xbf16>, vector<2x8x8xf32> -> vector<2x8x8xf32>
    %cst_94 = arith.constant -1.000000e+09 : f32
    %264 = vector.broadcast %cst_94 : f32 to vector<2x8x8xf32>
    %265 = arith.select %6, %263, %264 : vector<2x8x8xi1>, vector<2x8x8xf32>
    %cst_95 = arith.constant dense<0xFF800000> : vector<2x8xf32>
    %266 = vector.multi_reduction <maximumf>, %265, %cst_95 [2] : vector<2x8x8xf32> to vector<2x8xf32>
    %267 = vector.shape_cast %266 : vector<2x8xf32> to vector<2x8x1xf32>
    %268 = vector.broadcast %267 : vector<2x8x1xf32> to vector<2x8x8xf32>
    %269 = arith.subf %265, %268 : vector<2x8x8xf32>
    %270 = math.exp %269 : vector<2x8x8xf32>
    %cst_96 = arith.constant dense<0.000000e+00> : vector<2x8xf32>
    %271 = vector.multi_reduction <add>, %270, %cst_96 [2] : vector<2x8x8xf32> to vector<2x8xf32>
    %272 = vector.shape_cast %271 : vector<2x8xf32> to vector<2x8x1xf32>
    %273 = tpu.reciprocal %272 {approx = true} : vector<2x8x1xf32> -> vector<2x8x1xf32>
    %274 = vector.broadcast %273 : vector<2x8x1xf32> to vector<2x8x8xf32>
    %275 = arith.mulf %270, %274 : vector<2x8x8xf32>
    %276 = arith.truncf %275 : vector<2x8x8xf32> to vector<2x8x8xbf16>
    %277 = vector.extract_strided_slice %206 {offsets = [0, 0, 24], sizes = [2, 8, 8], strides = [1, 1, 1]} : vector<2x8x32xbf16> to vector<2x8x8xbf16>
    %cst_97 = arith.constant dense<0.000000e+00> : vector<2x8x8xf32>
    %278 = tpu.matmul %276, %277, %cst_97 {dimension_numbers = #tpu.dot_dimension_numbers<[2], [1], [1], [2], [0, 0, 0, 1, 1, 2], [0], [0]>} : vector<2x8x8xbf16>, vector<2x8x8xbf16>, vector<2x8x8xf32> -> vector<2x8x8xf32>
    %279 = tpu.concatenate %224, %242, %260, %278 in 2 : vector<2x8x8xf32>, vector<2x8x8xf32>, vector<2x8x8xf32>, vector<2x8x8xf32> -> vector<2x8x32xf32>
    %280 = vector.shape_cast %279 : vector<2x8x32xf32> to vector<16x32xf32>
    %c1_98 = arith.constant 1 : index
    %c0_99 = arith.constant 0 : index
    %c0_100 = arith.constant 0 : index
    %281 = vector.load %arg3[%c1_98, %c0_99, %c0_100] : memref<8x32x32xbf16, #tpu.memory_space<vmem>>, vector<1x32x32xbf16>
    %282 = vector.shape_cast %281 : vector<1x32x32xbf16> to vector<32x32xbf16>
    %c6 = arith.constant 6 : index
    %c0_101 = arith.constant 0 : index
    %c0_102 = arith.constant 0 : index
    %283 = vector.load %arg9[%c6, %c0_101, %c0_102] : memref<36x1x32xf32, #tpu.memory_space<vmem>>, vector<1x1x32xf32>
    %284 = vector.shape_cast %283 : vector<1x1x32xf32> to vector<1x32xf32>
    %285 = arith.truncf %280 : vector<16x32xf32> to vector<16x32xbf16>
    %cst_103 = arith.constant dense<0.000000e+00> : vector<16x32xf32>
    %286 = tpu.matmul %285, %282, %cst_103 {dimension_numbers = #tpu.dot_dimension_numbers<[1], [0], [0], [1], [0, 0, 1, 1], [], []>} : vector<16x32xbf16>, vector<32x32xbf16>, vector<16x32xf32> -> vector<16x32xf32>
    %287 = vector.broadcast %284 : vector<1x32xf32> to vector<16x32xf32>
    %288 = arith.addf %286, %287 : vector<16x32xf32>
    %289 = arith.addf %189, %288 : vector<16x32xf32>
    %c8 = arith.constant 8 : index
    %c0_104 = arith.constant 0 : index
    %c0_105 = arith.constant 0 : index
    %290 = vector.load %arg9[%c8, %c0_104, %c0_105] : memref<36x1x32xf32, #tpu.memory_space<vmem>>, vector<1x1x32xf32>
    %291 = vector.shape_cast %290 : vector<1x1x32xf32> to vector<1x32xf32>
    %c9 = arith.constant 9 : index
    %c0_106 = arith.constant 0 : index
    %c0_107 = arith.constant 0 : index
    %292 = vector.load %arg9[%c9, %c0_106, %c0_107] : memref<36x1x32xf32, #tpu.memory_space<vmem>>, vector<1x1x32xf32>
    %293 = vector.shape_cast %292 : vector<1x1x32xf32> to vector<1x32xf32>
    %cst_108 = arith.constant dense<0.000000e+00> : vector<16xf32>
    %294 = vector.multi_reduction <add>, %289, %cst_108 [1] : vector<16x32xf32> to vector<16xf32>
    %295 = vector.shape_cast %294 : vector<16xf32> to vector<16x1xf32>
    %cst_109 = arith.constant 3.200000e+01 : f32
    %296 = vector.broadcast %cst_109 : f32 to vector<16x1xf32>
    %297 = arith.divf %295, %296 : vector<16x1xf32>
    %298 = vector.broadcast %297 : vector<16x1xf32> to vector<16x32xf32>
    %299 = arith.subf %289, %298 : vector<16x32xf32>
    %300 = arith.mulf %299, %299 : vector<16x32xf32>
    %cst_110 = arith.constant dense<0.000000e+00> : vector<16xf32>
    %301 = vector.multi_reduction <add>, %300, %cst_110 [1] : vector<16x32xf32> to vector<16xf32>
    %302 = vector.shape_cast %301 : vector<16xf32> to vector<16x1xf32>
    %cst_111 = arith.constant 3.200000e+01 : f32
    %303 = vector.broadcast %cst_111 : f32 to vector<16x1xf32>
    %304 = arith.divf %302, %303 : vector<16x1xf32>
    %305 = vector.broadcast %297 : vector<16x1xf32> to vector<16x32xf32>
    %306 = arith.subf %289, %305 : vector<16x32xf32>
    %cst_112 = arith.constant 9.99999974E-6 : f32
    %307 = vector.broadcast %cst_112 : f32 to vector<16x1xf32>
    %308 = arith.addf %304, %307 : vector<16x1xf32>
    %309 = math.rsqrt %308 : vector<16x1xf32>
    %310 = vector.broadcast %309 : vector<16x1xf32> to vector<16x32xf32>
    %311 = arith.mulf %306, %310 : vector<16x32xf32>
    %312 = vector.broadcast %291 : vector<1x32xf32> to vector<16x32xf32>
    %313 = arith.mulf %311, %312 : vector<16x32xf32>
    %314 = vector.broadcast %293 : vector<1x32xf32> to vector<16x32xf32>
    %315 = arith.addf %313, %314 : vector<16x32xf32>
    %c1_113 = arith.constant 1 : index
    %c0_114 = arith.constant 0 : index
    %c0_115 = arith.constant 0 : index
    %316 = vector.load %arg4[%c1_113, %c0_114, %c0_115] : memref<6x32x64xbf16, #tpu.memory_space<vmem>>, vector<1x32x64xbf16>
    %317 = vector.shape_cast %316 : vector<1x32x64xbf16> to vector<32x64xbf16>
    %c1_116 = arith.constant 1 : index
    %c0_117 = arith.constant 0 : index
    %c0_118 = arith.constant 0 : index
    %318 = vector.load %arg8[%c1_116, %c0_117, %c0_118] : memref<6x1x64xf32, #tpu.memory_space<vmem>>, vector<1x1x64xf32>
    %319 = vector.shape_cast %318 : vector<1x1x64xf32> to vector<1x64xf32>
    %c1_119 = arith.constant 1 : index
    %c0_120 = arith.constant 0 : index
    %c0_121 = arith.constant 0 : index
    %320 = vector.load %arg5[%c1_119, %c0_120, %c0_121] : memref<4x64x32xbf16, #tpu.memory_space<vmem>>, vector<1x64x32xbf16>
    %321 = vector.shape_cast %320 : vector<1x64x32xbf16> to vector<64x32xbf16>
    %c7 = arith.constant 7 : index
    %c0_122 = arith.constant 0 : index
    %c0_123 = arith.constant 0 : index
    %322 = vector.load %arg9[%c7, %c0_122, %c0_123] : memref<36x1x32xf32, #tpu.memory_space<vmem>>, vector<1x1x32xf32>
    %323 = vector.shape_cast %322 : vector<1x1x32xf32> to vector<1x32xf32>
    %324 = arith.truncf %315 : vector<16x32xf32> to vector<16x32xbf16>
    %cst_124 = arith.constant dense<0.000000e+00> : vector<16x64xf32>
    %325 = tpu.matmul %324, %317, %cst_124 {dimension_numbers = #tpu.dot_dimension_numbers<[1], [0], [0], [1], [0, 0, 1, 1], [], []>} : vector<16x32xbf16>, vector<32x64xbf16>, vector<16x64xf32> -> vector<16x64xf32>
    %326 = vector.broadcast %319 : vector<1x64xf32> to vector<16x64xf32>
    %327 = arith.addf %325, %326 : vector<16x64xf32>
    %cst_125 = arith.constant 5.000000e-01 : f32
    %328 = vector.broadcast %cst_125 : f32 to vector<16x64xf32>
    %329 = arith.mulf %328, %327 : vector<16x64xf32>
    %cst_126 = arith.constant 0.707106769 : f32
    %330 = vector.broadcast %cst_126 : f32 to vector<16x64xf32>
    %331 = arith.mulf %327, %330 : vector<16x64xf32>
    %332 = math.erf %331 : vector<16x64xf32>
    %cst_127 = arith.constant 1.000000e+00 : f32
    %333 = vector.broadcast %cst_127 : f32 to vector<16x64xf32>
    %334 = arith.addf %333, %332 : vector<16x64xf32>
    %335 = arith.mulf %329, %334 : vector<16x64xf32>
    %336 = arith.truncf %335 : vector<16x64xf32> to vector<16x64xbf16>
    %cst_128 = arith.constant dense<0.000000e+00> : vector<16x32xf32>
    %337 = tpu.matmul %336, %321, %cst_128 {dimension_numbers = #tpu.dot_dimension_numbers<[1], [0], [0], [1], [0, 0, 1, 1], [], []>} : vector<16x64xbf16>, vector<64x32xbf16>, vector<16x32xf32> -> vector<16x32xf32>
    %338 = vector.broadcast %323 : vector<1x32xf32> to vector<16x32xf32>
    %339 = arith.addf %337, %338 : vector<16x32xf32>
    %340 = arith.addf %315, %339 : vector<16x32xf32>
    %c10 = arith.constant 10 : index
    %c0_129 = arith.constant 0 : index
    %c0_130 = arith.constant 0 : index
    %341 = vector.load %arg9[%c10, %c0_129, %c0_130] : memref<36x1x32xf32, #tpu.memory_space<vmem>>, vector<1x1x32xf32>
    %342 = vector.shape_cast %341 : vector<1x1x32xf32> to vector<1x32xf32>
    %c11 = arith.constant 11 : index
    %c0_131 = arith.constant 0 : index
    %c0_132 = arith.constant 0 : index
    %343 = vector.load %arg9[%c11, %c0_131, %c0_132] : memref<36x1x32xf32, #tpu.memory_space<vmem>>, vector<1x1x32xf32>
    %344 = vector.shape_cast %343 : vector<1x1x32xf32> to vector<1x32xf32>
    %cst_133 = arith.constant dense<0.000000e+00> : vector<16xf32>
    %345 = vector.multi_reduction <add>, %340, %cst_133 [1] : vector<16x32xf32> to vector<16xf32>
    %346 = vector.shape_cast %345 : vector<16xf32> to vector<16x1xf32>
    %cst_134 = arith.constant 3.200000e+01 : f32
    %347 = vector.broadcast %cst_134 : f32 to vector<16x1xf32>
    %348 = arith.divf %346, %347 : vector<16x1xf32>
    %349 = vector.broadcast %348 : vector<16x1xf32> to vector<16x32xf32>
    %350 = arith.subf %340, %349 : vector<16x32xf32>
    %351 = arith.mulf %350, %350 : vector<16x32xf32>
    %cst_135 = arith.constant dense<0.000000e+00> : vector<16xf32>
    %352 = vector.multi_reduction <add>, %351, %cst_135 [1] : vector<16x32xf32> to vector<16xf32>
    %353 = vector.shape_cast %352 : vector<16xf32> to vector<16x1xf32>
    %cst_136 = arith.constant 3.200000e+01 : f32
    %354 = vector.broadcast %cst_136 : f32 to vector<16x1xf32>
    %355 = arith.divf %353, %354 : vector<16x1xf32>
    %356 = vector.broadcast %348 : vector<16x1xf32> to vector<16x32xf32>
    %357 = arith.subf %340, %356 : vector<16x32xf32>
    %cst_137 = arith.constant 9.99999974E-6 : f32
    %358 = vector.broadcast %cst_137 : f32 to vector<16x1xf32>
    %359 = arith.addf %355, %358 : vector<16x1xf32>
    %360 = math.rsqrt %359 : vector<16x1xf32>
    %361 = vector.broadcast %360 : vector<16x1xf32> to vector<16x32xf32>
    %362 = arith.mulf %357, %361 : vector<16x32xf32>
    %363 = vector.broadcast %342 : vector<1x32xf32> to vector<16x32xf32>
    %364 = arith.mulf %362, %363 : vector<16x32xf32>
    %365 = vector.broadcast %344 : vector<1x32xf32> to vector<16x32xf32>
    %366 = arith.addf %364, %365 : vector<16x32xf32>
    %c32 = arith.constant 32 : index
    %c0_138 = arith.constant 0 : index
    %c0_139 = arith.constant 0 : index
    %367 = vector.load %arg9[%c32, %c0_138, %c0_139] : memref<36x1x32xf32, #tpu.memory_space<vmem>>, vector<1x1x32xf32>
    %368 = vector.shape_cast %367 : vector<1x1x32xf32> to vector<1x32xf32>
    %c33 = arith.constant 33 : index
    %c0_140 = arith.constant 0 : index
    %c0_141 = arith.constant 0 : index
    %369 = vector.load %arg9[%c33, %c0_140, %c0_141] : memref<36x1x32xf32, #tpu.memory_space<vmem>>, vector<1x1x32xf32>
    %370 = vector.shape_cast %369 : vector<1x1x32xf32> to vector<1x32xf32>
    %cst_142 = arith.constant dense<0.000000e+00> : vector<16xf32>
    %371 = vector.multi_reduction <add>, %366, %cst_142 [1] : vector<16x32xf32> to vector<16xf32>
    %372 = vector.shape_cast %371 : vector<16xf32> to vector<16x1xf32>
    %cst_143 = arith.constant 3.200000e+01 : f32
    %373 = vector.broadcast %cst_143 : f32 to vector<16x1xf32>
    %374 = arith.divf %372, %373 : vector<16x1xf32>
    %375 = vector.broadcast %374 : vector<16x1xf32> to vector<16x32xf32>
    %376 = arith.subf %366, %375 : vector<16x32xf32>
    %377 = arith.mulf %376, %376 : vector<16x32xf32>
    %cst_144 = arith.constant dense<0.000000e+00> : vector<16xf32>
    %378 = vector.multi_reduction <add>, %377, %cst_144 [1] : vector<16x32xf32> to vector<16xf32>
    %379 = vector.shape_cast %378 : vector<16xf32> to vector<16x1xf32>
    %cst_145 = arith.constant 3.200000e+01 : f32
    %380 = vector.broadcast %cst_145 : f32 to vector<16x1xf32>
    %381 = arith.divf %379, %380 : vector<16x1xf32>
    %382 = vector.broadcast %374 : vector<16x1xf32> to vector<16x32xf32>
    %383 = arith.subf %366, %382 : vector<16x32xf32>
    %cst_146 = arith.constant 9.99999974E-6 : f32
    %384 = vector.broadcast %cst_146 : f32 to vector<16x1xf32>
    %385 = arith.addf %381, %384 : vector<16x1xf32>
    %386 = math.rsqrt %385 : vector<16x1xf32>
    %387 = vector.broadcast %386 : vector<16x1xf32> to vector<16x32xf32>
    %388 = arith.mulf %383, %387 : vector<16x32xf32>
    %389 = vector.broadcast %368 : vector<1x32xf32> to vector<16x32xf32>
    %390 = arith.mulf %388, %389 : vector<16x32xf32>
    %391 = vector.broadcast %370 : vector<1x32xf32> to vector<16x32xf32>
    %392 = arith.addf %390, %391 : vector<16x32xf32>
    %c2_147 = arith.constant 2 : index
    %c0_148 = arith.constant 0 : index
    %c0_149 = arith.constant 0 : index
    %393 = vector.load %arg2[%c2_147, %c0_148, %c0_149] : memref<4x32x96xbf16, #tpu.memory_space<vmem>>, vector<1x32x96xbf16>
    %394 = vector.shape_cast %393 : vector<1x32x96xbf16> to vector<32x96xbf16>
    %c2_150 = arith.constant 2 : index
    %c0_151 = arith.constant 0 : index
    %c0_152 = arith.constant 0 : index
    %395 = vector.load %arg7[%c2_150, %c0_151, %c0_152] : memref<4x1x96xf32, #tpu.memory_space<vmem>>, vector<1x1x96xf32>
    %396 = vector.shape_cast %395 : vector<1x1x96xf32> to vector<1x96xf32>
    %397 = arith.truncf %0 : vector<16x32xf32> to vector<16x32xbf16>
    %cst_153 = arith.constant dense<0.000000e+00> : vector<16x96xf32>
    %398 = tpu.matmul %397, %394, %cst_153 {dimension_numbers = #tpu.dot_dimension_numbers<[1], [0], [0], [1], [0, 0, 1, 1], [], []>} : vector<16x32xbf16>, vector<32x96xbf16>, vector<16x96xf32> -> vector<16x96xf32>
    %399 = vector.broadcast %396 : vector<1x96xf32> to vector<16x96xf32>
    %400 = arith.addf %398, %399 : vector<16x96xf32>
    %401 = vector.extract_strided_slice %400 {offsets = [0, 0], sizes = [16, 32], strides = [1, 1]} : vector<16x96xf32> to vector<16x32xf32>
    %402 = vector.extract_strided_slice %400 {offsets = [0, 32], sizes = [16, 32], strides = [1, 1]} : vector<16x96xf32> to vector<16x32xf32>
    %403 = vector.extract_strided_slice %400 {offsets = [0, 64], sizes = [16, 32], strides = [1, 1]} : vector<16x96xf32> to vector<16x32xf32>
    %404 = vector.shape_cast %401 : vector<16x32xf32> to vector<2x8x32xf32>
    %405 = arith.truncf %404 : vector<2x8x32xf32> to vector<2x8x32xbf16>
    %406 = vector.shape_cast %402 : vector<16x32xf32> to vector<2x8x32xf32>
    %407 = arith.truncf %406 : vector<2x8x32xf32> to vector<2x8x32xbf16>
    %408 = vector.shape_cast %403 : vector<16x32xf32> to vector<2x8x32xf32>
    %409 = arith.truncf %408 : vector<2x8x32xf32> to vector<2x8x32xbf16>
    %410 = vector.extract_strided_slice %405 {offsets = [0, 0, 0], sizes = [2, 8, 8], strides = [1, 1, 1]} : vector<2x8x32xbf16> to vector<2x8x8xbf16>
    %411 = vector.extract_strided_slice %407 {offsets = [0, 0, 0], sizes = [2, 8, 8], strides = [1, 1, 1]} : vector<2x8x32xbf16> to vector<2x8x8xbf16>
    %cst_154 = arith.constant dense<0.000000e+00> : vector<2x8x8xf32>
    %412 = tpu.matmul %410, %411, %cst_154 {dimension_numbers = #tpu.dot_dimension_numbers<[2], [2], [1], [1], [0, 0, 0, 1, 1, 1], [0], [0]>} : vector<2x8x8xbf16>, vector<2x8x8xbf16>, vector<2x8x8xf32> -> vector<2x8x8xf32>
    %cst_155 = arith.constant -1.000000e+09 : f32
    %413 = vector.broadcast %cst_155 : f32 to vector<2x8x8xf32>
    %414 = arith.select %12, %412, %413 : vector<2x8x8xi1>, vector<2x8x8xf32>
    %cst_156 = arith.constant dense<0xFF800000> : vector<2x8xf32>
    %415 = vector.multi_reduction <maximumf>, %414, %cst_156 [2] : vector<2x8x8xf32> to vector<2x8xf32>
    %416 = vector.shape_cast %415 : vector<2x8xf32> to vector<2x8x1xf32>
    %417 = vector.broadcast %416 : vector<2x8x1xf32> to vector<2x8x8xf32>
    %418 = arith.subf %414, %417 : vector<2x8x8xf32>
    %419 = math.exp %418 : vector<2x8x8xf32>
    %cst_157 = arith.constant dense<0.000000e+00> : vector<2x8xf32>
    %420 = vector.multi_reduction <add>, %419, %cst_157 [2] : vector<2x8x8xf32> to vector<2x8xf32>
    %421 = vector.shape_cast %420 : vector<2x8xf32> to vector<2x8x1xf32>
    %422 = tpu.reciprocal %421 {approx = true} : vector<2x8x1xf32> -> vector<2x8x1xf32>
    %423 = vector.broadcast %422 : vector<2x8x1xf32> to vector<2x8x8xf32>
    %424 = arith.mulf %419, %423 : vector<2x8x8xf32>
    %425 = arith.truncf %424 : vector<2x8x8xf32> to vector<2x8x8xbf16>
    %426 = vector.extract_strided_slice %409 {offsets = [0, 0, 0], sizes = [2, 8, 8], strides = [1, 1, 1]} : vector<2x8x32xbf16> to vector<2x8x8xbf16>
    %cst_158 = arith.constant dense<0.000000e+00> : vector<2x8x8xf32>
    %427 = tpu.matmul %425, %426, %cst_158 {dimension_numbers = #tpu.dot_dimension_numbers<[2], [1], [1], [2], [0, 0, 0, 1, 1, 2], [0], [0]>} : vector<2x8x8xbf16>, vector<2x8x8xbf16>, vector<2x8x8xf32> -> vector<2x8x8xf32>
    %428 = vector.extract_strided_slice %405 {offsets = [0, 0, 8], sizes = [2, 8, 8], strides = [1, 1, 1]} : vector<2x8x32xbf16> to vector<2x8x8xbf16>
    %429 = vector.extract_strided_slice %407 {offsets = [0, 0, 8], sizes = [2, 8, 8], strides = [1, 1, 1]} : vector<2x8x32xbf16> to vector<2x8x8xbf16>
    %cst_159 = arith.constant dense<0.000000e+00> : vector<2x8x8xf32>
    %430 = tpu.matmul %428, %429, %cst_159 {dimension_numbers = #tpu.dot_dimension_numbers<[2], [2], [1], [1], [0, 0, 0, 1, 1, 1], [0], [0]>} : vector<2x8x8xbf16>, vector<2x8x8xbf16>, vector<2x8x8xf32> -> vector<2x8x8xf32>
    %cst_160 = arith.constant -1.000000e+09 : f32
    %431 = vector.broadcast %cst_160 : f32 to vector<2x8x8xf32>
    %432 = arith.select %12, %430, %431 : vector<2x8x8xi1>, vector<2x8x8xf32>
    %cst_161 = arith.constant dense<0xFF800000> : vector<2x8xf32>
    %433 = vector.multi_reduction <maximumf>, %432, %cst_161 [2] : vector<2x8x8xf32> to vector<2x8xf32>
    %434 = vector.shape_cast %433 : vector<2x8xf32> to vector<2x8x1xf32>
    %435 = vector.broadcast %434 : vector<2x8x1xf32> to vector<2x8x8xf32>
    %436 = arith.subf %432, %435 : vector<2x8x8xf32>
    %437 = math.exp %436 : vector<2x8x8xf32>
    %cst_162 = arith.constant dense<0.000000e+00> : vector<2x8xf32>
    %438 = vector.multi_reduction <add>, %437, %cst_162 [2] : vector<2x8x8xf32> to vector<2x8xf32>
    %439 = vector.shape_cast %438 : vector<2x8xf32> to vector<2x8x1xf32>
    %440 = tpu.reciprocal %439 {approx = true} : vector<2x8x1xf32> -> vector<2x8x1xf32>
    %441 = vector.broadcast %440 : vector<2x8x1xf32> to vector<2x8x8xf32>
    %442 = arith.mulf %437, %441 : vector<2x8x8xf32>
    %443 = arith.truncf %442 : vector<2x8x8xf32> to vector<2x8x8xbf16>
    %444 = vector.extract_strided_slice %409 {offsets = [0, 0, 8], sizes = [2, 8, 8], strides = [1, 1, 1]} : vector<2x8x32xbf16> to vector<2x8x8xbf16>
    %cst_163 = arith.constant dense<0.000000e+00> : vector<2x8x8xf32>
    %445 = tpu.matmul %443, %444, %cst_163 {dimension_numbers = #tpu.dot_dimension_numbers<[2], [1], [1], [2], [0, 0, 0, 1, 1, 2], [0], [0]>} : vector<2x8x8xbf16>, vector<2x8x8xbf16>, vector<2x8x8xf32> -> vector<2x8x8xf32>
    %446 = vector.extract_strided_slice %405 {offsets = [0, 0, 16], sizes = [2, 8, 8], strides = [1, 1, 1]} : vector<2x8x32xbf16> to vector<2x8x8xbf16>
    %447 = vector.extract_strided_slice %407 {offsets = [0, 0, 16], sizes = [2, 8, 8], strides = [1, 1, 1]} : vector<2x8x32xbf16> to vector<2x8x8xbf16>
    %cst_164 = arith.constant dense<0.000000e+00> : vector<2x8x8xf32>
    %448 = tpu.matmul %446, %447, %cst_164 {dimension_numbers = #tpu.dot_dimension_numbers<[2], [2], [1], [1], [0, 0, 0, 1, 1, 1], [0], [0]>} : vector<2x8x8xbf16>, vector<2x8x8xbf16>, vector<2x8x8xf32> -> vector<2x8x8xf32>
    %cst_165 = arith.constant -1.000000e+09 : f32
    %449 = vector.broadcast %cst_165 : f32 to vector<2x8x8xf32>
    %450 = arith.select %12, %448, %449 : vector<2x8x8xi1>, vector<2x8x8xf32>
    %cst_166 = arith.constant dense<0xFF800000> : vector<2x8xf32>
    %451 = vector.multi_reduction <maximumf>, %450, %cst_166 [2] : vector<2x8x8xf32> to vector<2x8xf32>
    %452 = vector.shape_cast %451 : vector<2x8xf32> to vector<2x8x1xf32>
    %453 = vector.broadcast %452 : vector<2x8x1xf32> to vector<2x8x8xf32>
    %454 = arith.subf %450, %453 : vector<2x8x8xf32>
    %455 = math.exp %454 : vector<2x8x8xf32>
    %cst_167 = arith.constant dense<0.000000e+00> : vector<2x8xf32>
    %456 = vector.multi_reduction <add>, %455, %cst_167 [2] : vector<2x8x8xf32> to vector<2x8xf32>
    %457 = vector.shape_cast %456 : vector<2x8xf32> to vector<2x8x1xf32>
    %458 = tpu.reciprocal %457 {approx = true} : vector<2x8x1xf32> -> vector<2x8x1xf32>
    %459 = vector.broadcast %458 : vector<2x8x1xf32> to vector<2x8x8xf32>
    %460 = arith.mulf %455, %459 : vector<2x8x8xf32>
    %461 = arith.truncf %460 : vector<2x8x8xf32> to vector<2x8x8xbf16>
    %462 = vector.extract_strided_slice %409 {offsets = [0, 0, 16], sizes = [2, 8, 8], strides = [1, 1, 1]} : vector<2x8x32xbf16> to vector<2x8x8xbf16>
    %cst_168 = arith.constant dense<0.000000e+00> : vector<2x8x8xf32>
    %463 = tpu.matmul %461, %462, %cst_168 {dimension_numbers = #tpu.dot_dimension_numbers<[2], [1], [1], [2], [0, 0, 0, 1, 1, 2], [0], [0]>} : vector<2x8x8xbf16>, vector<2x8x8xbf16>, vector<2x8x8xf32> -> vector<2x8x8xf32>
    %464 = vector.extract_strided_slice %405 {offsets = [0, 0, 24], sizes = [2, 8, 8], strides = [1, 1, 1]} : vector<2x8x32xbf16> to vector<2x8x8xbf16>
    %465 = vector.extract_strided_slice %407 {offsets = [0, 0, 24], sizes = [2, 8, 8], strides = [1, 1, 1]} : vector<2x8x32xbf16> to vector<2x8x8xbf16>
    %cst_169 = arith.constant dense<0.000000e+00> : vector<2x8x8xf32>
    %466 = tpu.matmul %464, %465, %cst_169 {dimension_numbers = #tpu.dot_dimension_numbers<[2], [2], [1], [1], [0, 0, 0, 1, 1, 1], [0], [0]>} : vector<2x8x8xbf16>, vector<2x8x8xbf16>, vector<2x8x8xf32> -> vector<2x8x8xf32>
    %cst_170 = arith.constant -1.000000e+09 : f32
    %467 = vector.broadcast %cst_170 : f32 to vector<2x8x8xf32>
    %468 = arith.select %12, %466, %467 : vector<2x8x8xi1>, vector<2x8x8xf32>
    %cst_171 = arith.constant dense<0xFF800000> : vector<2x8xf32>
    %469 = vector.multi_reduction <maximumf>, %468, %cst_171 [2] : vector<2x8x8xf32> to vector<2x8xf32>
    %470 = vector.shape_cast %469 : vector<2x8xf32> to vector<2x8x1xf32>
    %471 = vector.broadcast %470 : vector<2x8x1xf32> to vector<2x8x8xf32>
    %472 = arith.subf %468, %471 : vector<2x8x8xf32>
    %473 = math.exp %472 : vector<2x8x8xf32>
    %cst_172 = arith.constant dense<0.000000e+00> : vector<2x8xf32>
    %474 = vector.multi_reduction <add>, %473, %cst_172 [2] : vector<2x8x8xf32> to vector<2x8xf32>
    %475 = vector.shape_cast %474 : vector<2x8xf32> to vector<2x8x1xf32>
    %476 = tpu.reciprocal %475 {approx = true} : vector<2x8x1xf32> -> vector<2x8x1xf32>
    %477 = vector.broadcast %476 : vector<2x8x1xf32> to vector<2x8x8xf32>
    %478 = arith.mulf %473, %477 : vector<2x8x8xf32>
    %479 = arith.truncf %478 : vector<2x8x8xf32> to vector<2x8x8xbf16>
    %480 = vector.extract_strided_slice %409 {offsets = [0, 0, 24], sizes = [2, 8, 8], strides = [1, 1, 1]} : vector<2x8x32xbf16> to vector<2x8x8xbf16>
    %cst_173 = arith.constant dense<0.000000e+00> : vector<2x8x8xf32>
    %481 = tpu.matmul %479, %480, %cst_173 {dimension_numbers = #tpu.dot_dimension_numbers<[2], [1], [1], [2], [0, 0, 0, 1, 1, 2], [0], [0]>} : vector<2x8x8xbf16>, vector<2x8x8xbf16>, vector<2x8x8xf32> -> vector<2x8x8xf32>
    %482 = tpu.concatenate %427, %445, %463, %481 in 2 : vector<2x8x8xf32>, vector<2x8x8xf32>, vector<2x8x8xf32>, vector<2x8x8xf32> -> vector<2x8x32xf32>
    %483 = vector.shape_cast %482 : vector<2x8x32xf32> to vector<16x32xf32>
    %c2_174 = arith.constant 2 : index
    %c0_175 = arith.constant 0 : index
    %c0_176 = arith.constant 0 : index
    %484 = vector.load %arg3[%c2_174, %c0_175, %c0_176] : memref<8x32x32xbf16, #tpu.memory_space<vmem>>, vector<1x32x32xbf16>
    %485 = vector.shape_cast %484 : vector<1x32x32xbf16> to vector<32x32xbf16>
    %c12 = arith.constant 12 : index
    %c0_177 = arith.constant 0 : index
    %c0_178 = arith.constant 0 : index
    %486 = vector.load %arg9[%c12, %c0_177, %c0_178] : memref<36x1x32xf32, #tpu.memory_space<vmem>>, vector<1x1x32xf32>
    %487 = vector.shape_cast %486 : vector<1x1x32xf32> to vector<1x32xf32>
    %488 = arith.truncf %483 : vector<16x32xf32> to vector<16x32xbf16>
    %cst_179 = arith.constant dense<0.000000e+00> : vector<16x32xf32>
    %489 = tpu.matmul %488, %485, %cst_179 {dimension_numbers = #tpu.dot_dimension_numbers<[1], [0], [0], [1], [0, 0, 1, 1], [], []>} : vector<16x32xbf16>, vector<32x32xbf16>, vector<16x32xf32> -> vector<16x32xf32>
    %490 = vector.broadcast %487 : vector<1x32xf32> to vector<16x32xf32>
    %491 = arith.addf %489, %490 : vector<16x32xf32>
    %492 = arith.addf %0, %491 : vector<16x32xf32>
    %c16 = arith.constant 16 : index
    %c0_180 = arith.constant 0 : index
    %c0_181 = arith.constant 0 : index
    %493 = vector.load %arg9[%c16, %c0_180, %c0_181] : memref<36x1x32xf32, #tpu.memory_space<vmem>>, vector<1x1x32xf32>
    %494 = vector.shape_cast %493 : vector<1x1x32xf32> to vector<1x32xf32>
    %c17 = arith.constant 17 : index
    %c0_182 = arith.constant 0 : index
    %c0_183 = arith.constant 0 : index
    %495 = vector.load %arg9[%c17, %c0_182, %c0_183] : memref<36x1x32xf32, #tpu.memory_space<vmem>>, vector<1x1x32xf32>
    %496 = vector.shape_cast %495 : vector<1x1x32xf32> to vector<1x32xf32>
    %cst_184 = arith.constant dense<0.000000e+00> : vector<16xf32>
    %497 = vector.multi_reduction <add>, %492, %cst_184 [1] : vector<16x32xf32> to vector<16xf32>
    %498 = vector.shape_cast %497 : vector<16xf32> to vector<16x1xf32>
    %cst_185 = arith.constant 3.200000e+01 : f32
    %499 = vector.broadcast %cst_185 : f32 to vector<16x1xf32>
    %500 = arith.divf %498, %499 : vector<16x1xf32>
    %501 = vector.broadcast %500 : vector<16x1xf32> to vector<16x32xf32>
    %502 = arith.subf %492, %501 : vector<16x32xf32>
    %503 = arith.mulf %502, %502 : vector<16x32xf32>
    %cst_186 = arith.constant dense<0.000000e+00> : vector<16xf32>
    %504 = vector.multi_reduction <add>, %503, %cst_186 [1] : vector<16x32xf32> to vector<16xf32>
    %505 = vector.shape_cast %504 : vector<16xf32> to vector<16x1xf32>
    %cst_187 = arith.constant 3.200000e+01 : f32
    %506 = vector.broadcast %cst_187 : f32 to vector<16x1xf32>
    %507 = arith.divf %505, %506 : vector<16x1xf32>
    %508 = vector.broadcast %500 : vector<16x1xf32> to vector<16x32xf32>
    %509 = arith.subf %492, %508 : vector<16x32xf32>
    %cst_188 = arith.constant 9.99999974E-6 : f32
    %510 = vector.broadcast %cst_188 : f32 to vector<16x1xf32>
    %511 = arith.addf %507, %510 : vector<16x1xf32>
    %512 = math.rsqrt %511 : vector<16x1xf32>
    %513 = vector.broadcast %512 : vector<16x1xf32> to vector<16x32xf32>
    %514 = arith.mulf %509, %513 : vector<16x32xf32>
    %515 = vector.broadcast %494 : vector<1x32xf32> to vector<16x32xf32>
    %516 = arith.mulf %514, %515 : vector<16x32xf32>
    %517 = vector.broadcast %496 : vector<1x32xf32> to vector<16x32xf32>
    %518 = arith.addf %516, %517 : vector<16x32xf32>
    %c3_189 = arith.constant 3 : index
    %c0_190 = arith.constant 0 : index
    %c0_191 = arith.constant 0 : index
    %519 = vector.load %arg3[%c3_189, %c0_190, %c0_191] : memref<8x32x32xbf16, #tpu.memory_space<vmem>>, vector<1x32x32xbf16>
    %520 = vector.shape_cast %519 : vector<1x32x32xbf16> to vector<32x32xbf16>
    %c13 = arith.constant 13 : index
    %c0_192 = arith.constant 0 : index
    %c0_193 = arith.constant 0 : index
    %521 = vector.load %arg9[%c13, %c0_192, %c0_193] : memref<36x1x32xf32, #tpu.memory_space<vmem>>, vector<1x1x32xf32>
    %522 = vector.shape_cast %521 : vector<1x1x32xf32> to vector<1x32xf32>
    %523 = arith.truncf %518 : vector<16x32xf32> to vector<16x32xbf16>
    %cst_194 = arith.constant dense<0.000000e+00> : vector<16x32xf32>
    %524 = tpu.matmul %523, %520, %cst_194 {dimension_numbers = #tpu.dot_dimension_numbers<[1], [0], [0], [1], [0, 0, 1, 1], [], []>} : vector<16x32xbf16>, vector<32x32xbf16>, vector<16x32xf32> -> vector<16x32xf32>
    %525 = vector.broadcast %522 : vector<1x32xf32> to vector<16x32xf32>
    %526 = arith.addf %524, %525 : vector<16x32xf32>
    %c3_195 = arith.constant 3 : index
    %c0_196 = arith.constant 0 : index
    %c0_197 = arith.constant 0 : index
    %527 = vector.load %arg4[%c3_195, %c0_196, %c0_197] : memref<6x32x64xbf16, #tpu.memory_space<vmem>>, vector<1x32x64xbf16>
    %528 = vector.shape_cast %527 : vector<1x32x64xbf16> to vector<32x64xbf16>
    %c3_198 = arith.constant 3 : index
    %c0_199 = arith.constant 0 : index
    %c0_200 = arith.constant 0 : index
    %529 = vector.load %arg8[%c3_198, %c0_199, %c0_200] : memref<6x1x64xf32, #tpu.memory_space<vmem>>, vector<1x1x64xf32>
    %530 = vector.shape_cast %529 : vector<1x1x64xf32> to vector<1x64xf32>
    %531 = arith.truncf %392 : vector<16x32xf32> to vector<16x32xbf16>
    %cst_201 = arith.constant dense<0.000000e+00> : vector<16x64xf32>
    %532 = tpu.matmul %531, %528, %cst_201 {dimension_numbers = #tpu.dot_dimension_numbers<[1], [0], [0], [1], [0, 0, 1, 1], [], []>} : vector<16x32xbf16>, vector<32x64xbf16>, vector<16x64xf32> -> vector<16x64xf32>
    %533 = vector.broadcast %530 : vector<1x64xf32> to vector<16x64xf32>
    %534 = arith.addf %532, %533 : vector<16x64xf32>
    %535 = vector.extract_strided_slice %534 {offsets = [0, 0], sizes = [16, 32], strides = [1, 1]} : vector<16x64xf32> to vector<16x32xf32>
    %536 = vector.extract_strided_slice %534 {offsets = [0, 32], sizes = [16, 32], strides = [1, 1]} : vector<16x64xf32> to vector<16x32xf32>
    %537 = vector.shape_cast %526 : vector<16x32xf32> to vector<2x8x32xf32>
    %538 = arith.truncf %537 : vector<2x8x32xf32> to vector<2x8x32xbf16>
    %539 = vector.shape_cast %535 : vector<16x32xf32> to vector<2x8x32xf32>
    %540 = arith.truncf %539 : vector<2x8x32xf32> to vector<2x8x32xbf16>
    %541 = vector.shape_cast %536 : vector<16x32xf32> to vector<2x8x32xf32>
    %542 = arith.truncf %541 : vector<2x8x32xf32> to vector<2x8x32xbf16>
    %543 = vector.extract_strided_slice %538 {offsets = [0, 0, 0], sizes = [2, 8, 8], strides = [1, 1, 1]} : vector<2x8x32xbf16> to vector<2x8x8xbf16>
    %544 = vector.extract_strided_slice %540 {offsets = [0, 0, 0], sizes = [2, 8, 8], strides = [1, 1, 1]} : vector<2x8x32xbf16> to vector<2x8x8xbf16>
    %cst_202 = arith.constant dense<0.000000e+00> : vector<2x8x8xf32>
    %545 = tpu.matmul %543, %544, %cst_202 {dimension_numbers = #tpu.dot_dimension_numbers<[2], [2], [1], [1], [0, 0, 0, 1, 1, 1], [0], [0]>} : vector<2x8x8xbf16>, vector<2x8x8xbf16>, vector<2x8x8xf32> -> vector<2x8x8xf32>
    %cst_203 = arith.constant -1.000000e+09 : f32
    %546 = vector.broadcast %cst_203 : f32 to vector<2x8x8xf32>
    %547 = arith.select %6, %545, %546 : vector<2x8x8xi1>, vector<2x8x8xf32>
    %cst_204 = arith.constant dense<0xFF800000> : vector<2x8xf32>
    %548 = vector.multi_reduction <maximumf>, %547, %cst_204 [2] : vector<2x8x8xf32> to vector<2x8xf32>
    %549 = vector.shape_cast %548 : vector<2x8xf32> to vector<2x8x1xf32>
    %550 = vector.broadcast %549 : vector<2x8x1xf32> to vector<2x8x8xf32>
    %551 = arith.subf %547, %550 : vector<2x8x8xf32>
    %552 = math.exp %551 : vector<2x8x8xf32>
    %cst_205 = arith.constant dense<0.000000e+00> : vector<2x8xf32>
    %553 = vector.multi_reduction <add>, %552, %cst_205 [2] : vector<2x8x8xf32> to vector<2x8xf32>
    %554 = vector.shape_cast %553 : vector<2x8xf32> to vector<2x8x1xf32>
    %555 = tpu.reciprocal %554 {approx = true} : vector<2x8x1xf32> -> vector<2x8x1xf32>
    %556 = vector.broadcast %555 : vector<2x8x1xf32> to vector<2x8x8xf32>
    %557 = arith.mulf %552, %556 : vector<2x8x8xf32>
    %558 = arith.truncf %557 : vector<2x8x8xf32> to vector<2x8x8xbf16>
    %559 = vector.extract_strided_slice %542 {offsets = [0, 0, 0], sizes = [2, 8, 8], strides = [1, 1, 1]} : vector<2x8x32xbf16> to vector<2x8x8xbf16>
    %cst_206 = arith.constant dense<0.000000e+00> : vector<2x8x8xf32>
    %560 = tpu.matmul %558, %559, %cst_206 {dimension_numbers = #tpu.dot_dimension_numbers<[2], [1], [1], [2], [0, 0, 0, 1, 1, 2], [0], [0]>} : vector<2x8x8xbf16>, vector<2x8x8xbf16>, vector<2x8x8xf32> -> vector<2x8x8xf32>
    %561 = vector.extract_strided_slice %538 {offsets = [0, 0, 8], sizes = [2, 8, 8], strides = [1, 1, 1]} : vector<2x8x32xbf16> to vector<2x8x8xbf16>
    %562 = vector.extract_strided_slice %540 {offsets = [0, 0, 8], sizes = [2, 8, 8], strides = [1, 1, 1]} : vector<2x8x32xbf16> to vector<2x8x8xbf16>
    %cst_207 = arith.constant dense<0.000000e+00> : vector<2x8x8xf32>
    %563 = tpu.matmul %561, %562, %cst_207 {dimension_numbers = #tpu.dot_dimension_numbers<[2], [2], [1], [1], [0, 0, 0, 1, 1, 1], [0], [0]>} : vector<2x8x8xbf16>, vector<2x8x8xbf16>, vector<2x8x8xf32> -> vector<2x8x8xf32>
    %cst_208 = arith.constant -1.000000e+09 : f32
    %564 = vector.broadcast %cst_208 : f32 to vector<2x8x8xf32>
    %565 = arith.select %6, %563, %564 : vector<2x8x8xi1>, vector<2x8x8xf32>
    %cst_209 = arith.constant dense<0xFF800000> : vector<2x8xf32>
    %566 = vector.multi_reduction <maximumf>, %565, %cst_209 [2] : vector<2x8x8xf32> to vector<2x8xf32>
    %567 = vector.shape_cast %566 : vector<2x8xf32> to vector<2x8x1xf32>
    %568 = vector.broadcast %567 : vector<2x8x1xf32> to vector<2x8x8xf32>
    %569 = arith.subf %565, %568 : vector<2x8x8xf32>
    %570 = math.exp %569 : vector<2x8x8xf32>
    %cst_210 = arith.constant dense<0.000000e+00> : vector<2x8xf32>
    %571 = vector.multi_reduction <add>, %570, %cst_210 [2] : vector<2x8x8xf32> to vector<2x8xf32>
    %572 = vector.shape_cast %571 : vector<2x8xf32> to vector<2x8x1xf32>
    %573 = tpu.reciprocal %572 {approx = true} : vector<2x8x1xf32> -> vector<2x8x1xf32>
    %574 = vector.broadcast %573 : vector<2x8x1xf32> to vector<2x8x8xf32>
    %575 = arith.mulf %570, %574 : vector<2x8x8xf32>
    %576 = arith.truncf %575 : vector<2x8x8xf32> to vector<2x8x8xbf16>
    %577 = vector.extract_strided_slice %542 {offsets = [0, 0, 8], sizes = [2, 8, 8], strides = [1, 1, 1]} : vector<2x8x32xbf16> to vector<2x8x8xbf16>
    %cst_211 = arith.constant dense<0.000000e+00> : vector<2x8x8xf32>
    %578 = tpu.matmul %576, %577, %cst_211 {dimension_numbers = #tpu.dot_dimension_numbers<[2], [1], [1], [2], [0, 0, 0, 1, 1, 2], [0], [0]>} : vector<2x8x8xbf16>, vector<2x8x8xbf16>, vector<2x8x8xf32> -> vector<2x8x8xf32>
    %579 = vector.extract_strided_slice %538 {offsets = [0, 0, 16], sizes = [2, 8, 8], strides = [1, 1, 1]} : vector<2x8x32xbf16> to vector<2x8x8xbf16>
    %580 = vector.extract_strided_slice %540 {offsets = [0, 0, 16], sizes = [2, 8, 8], strides = [1, 1, 1]} : vector<2x8x32xbf16> to vector<2x8x8xbf16>
    %cst_212 = arith.constant dense<0.000000e+00> : vector<2x8x8xf32>
    %581 = tpu.matmul %579, %580, %cst_212 {dimension_numbers = #tpu.dot_dimension_numbers<[2], [2], [1], [1], [0, 0, 0, 1, 1, 1], [0], [0]>} : vector<2x8x8xbf16>, vector<2x8x8xbf16>, vector<2x8x8xf32> -> vector<2x8x8xf32>
    %cst_213 = arith.constant -1.000000e+09 : f32
    %582 = vector.broadcast %cst_213 : f32 to vector<2x8x8xf32>
    %583 = arith.select %6, %581, %582 : vector<2x8x8xi1>, vector<2x8x8xf32>
    %cst_214 = arith.constant dense<0xFF800000> : vector<2x8xf32>
    %584 = vector.multi_reduction <maximumf>, %583, %cst_214 [2] : vector<2x8x8xf32> to vector<2x8xf32>
    %585 = vector.shape_cast %584 : vector<2x8xf32> to vector<2x8x1xf32>
    %586 = vector.broadcast %585 : vector<2x8x1xf32> to vector<2x8x8xf32>
    %587 = arith.subf %583, %586 : vector<2x8x8xf32>
    %588 = math.exp %587 : vector<2x8x8xf32>
    %cst_215 = arith.constant dense<0.000000e+00> : vector<2x8xf32>
    %589 = vector.multi_reduction <add>, %588, %cst_215 [2] : vector<2x8x8xf32> to vector<2x8xf32>
    %590 = vector.shape_cast %589 : vector<2x8xf32> to vector<2x8x1xf32>
    %591 = tpu.reciprocal %590 {approx = true} : vector<2x8x1xf32> -> vector<2x8x1xf32>
    %592 = vector.broadcast %591 : vector<2x8x1xf32> to vector<2x8x8xf32>
    %593 = arith.mulf %588, %592 : vector<2x8x8xf32>
    %594 = arith.truncf %593 : vector<2x8x8xf32> to vector<2x8x8xbf16>
    %595 = vector.extract_strided_slice %542 {offsets = [0, 0, 16], sizes = [2, 8, 8], strides = [1, 1, 1]} : vector<2x8x32xbf16> to vector<2x8x8xbf16>
    %cst_216 = arith.constant dense<0.000000e+00> : vector<2x8x8xf32>
    %596 = tpu.matmul %594, %595, %cst_216 {dimension_numbers = #tpu.dot_dimension_numbers<[2], [1], [1], [2], [0, 0, 0, 1, 1, 2], [0], [0]>} : vector<2x8x8xbf16>, vector<2x8x8xbf16>, vector<2x8x8xf32> -> vector<2x8x8xf32>
    %597 = vector.extract_strided_slice %538 {offsets = [0, 0, 24], sizes = [2, 8, 8], strides = [1, 1, 1]} : vector<2x8x32xbf16> to vector<2x8x8xbf16>
    %598 = vector.extract_strided_slice %540 {offsets = [0, 0, 24], sizes = [2, 8, 8], strides = [1, 1, 1]} : vector<2x8x32xbf16> to vector<2x8x8xbf16>
    %cst_217 = arith.constant dense<0.000000e+00> : vector<2x8x8xf32>
    %599 = tpu.matmul %597, %598, %cst_217 {dimension_numbers = #tpu.dot_dimension_numbers<[2], [2], [1], [1], [0, 0, 0, 1, 1, 1], [0], [0]>} : vector<2x8x8xbf16>, vector<2x8x8xbf16>, vector<2x8x8xf32> -> vector<2x8x8xf32>
    %cst_218 = arith.constant -1.000000e+09 : f32
    %600 = vector.broadcast %cst_218 : f32 to vector<2x8x8xf32>
    %601 = arith.select %6, %599, %600 : vector<2x8x8xi1>, vector<2x8x8xf32>
    %cst_219 = arith.constant dense<0xFF800000> : vector<2x8xf32>
    %602 = vector.multi_reduction <maximumf>, %601, %cst_219 [2] : vector<2x8x8xf32> to vector<2x8xf32>
    %603 = vector.shape_cast %602 : vector<2x8xf32> to vector<2x8x1xf32>
    %604 = vector.broadcast %603 : vector<2x8x1xf32> to vector<2x8x8xf32>
    %605 = arith.subf %601, %604 : vector<2x8x8xf32>
    %606 = math.exp %605 : vector<2x8x8xf32>
    %cst_220 = arith.constant dense<0.000000e+00> : vector<2x8xf32>
    %607 = vector.multi_reduction <add>, %606, %cst_220 [2] : vector<2x8x8xf32> to vector<2x8xf32>
    %608 = vector.shape_cast %607 : vector<2x8xf32> to vector<2x8x1xf32>
    %609 = tpu.reciprocal %608 {approx = true} : vector<2x8x1xf32> -> vector<2x8x1xf32>
    %610 = vector.broadcast %609 : vector<2x8x1xf32> to vector<2x8x8xf32>
    %611 = arith.mulf %606, %610 : vector<2x8x8xf32>
    %612 = arith.truncf %611 : vector<2x8x8xf32> to vector<2x8x8xbf16>
    %613 = vector.extract_strided_slice %542 {offsets = [0, 0, 24], sizes = [2, 8, 8], strides = [1, 1, 1]} : vector<2x8x32xbf16> to vector<2x8x8xbf16>
    %cst_221 = arith.constant dense<0.000000e+00> : vector<2x8x8xf32>
    %614 = tpu.matmul %612, %613, %cst_221 {dimension_numbers = #tpu.dot_dimension_numbers<[2], [1], [1], [2], [0, 0, 0, 1, 1, 2], [0], [0]>} : vector<2x8x8xbf16>, vector<2x8x8xbf16>, vector<2x8x8xf32> -> vector<2x8x8xf32>
    %615 = tpu.concatenate %560, %578, %596, %614 in 2 : vector<2x8x8xf32>, vector<2x8x8xf32>, vector<2x8x8xf32>, vector<2x8x8xf32> -> vector<2x8x32xf32>
    %616 = vector.shape_cast %615 : vector<2x8x32xf32> to vector<16x32xf32>
    %c4_222 = arith.constant 4 : index
    %c0_223 = arith.constant 0 : index
    %c0_224 = arith.constant 0 : index
    %617 = vector.load %arg3[%c4_222, %c0_223, %c0_224] : memref<8x32x32xbf16, #tpu.memory_space<vmem>>, vector<1x32x32xbf16>
    %618 = vector.shape_cast %617 : vector<1x32x32xbf16> to vector<32x32xbf16>
    %c14 = arith.constant 14 : index
    %c0_225 = arith.constant 0 : index
    %c0_226 = arith.constant 0 : index
    %619 = vector.load %arg9[%c14, %c0_225, %c0_226] : memref<36x1x32xf32, #tpu.memory_space<vmem>>, vector<1x1x32xf32>
    %620 = vector.shape_cast %619 : vector<1x1x32xf32> to vector<1x32xf32>
    %621 = arith.truncf %616 : vector<16x32xf32> to vector<16x32xbf16>
    %cst_227 = arith.constant dense<0.000000e+00> : vector<16x32xf32>
    %622 = tpu.matmul %621, %618, %cst_227 {dimension_numbers = #tpu.dot_dimension_numbers<[1], [0], [0], [1], [0, 0, 1, 1], [], []>} : vector<16x32xbf16>, vector<32x32xbf16>, vector<16x32xf32> -> vector<16x32xf32>
    %623 = vector.broadcast %620 : vector<1x32xf32> to vector<16x32xf32>
    %624 = arith.addf %622, %623 : vector<16x32xf32>
    %625 = arith.addf %518, %624 : vector<16x32xf32>
    %c18 = arith.constant 18 : index
    %c0_228 = arith.constant 0 : index
    %c0_229 = arith.constant 0 : index
    %626 = vector.load %arg9[%c18, %c0_228, %c0_229] : memref<36x1x32xf32, #tpu.memory_space<vmem>>, vector<1x1x32xf32>
    %627 = vector.shape_cast %626 : vector<1x1x32xf32> to vector<1x32xf32>
    %c19 = arith.constant 19 : index
    %c0_230 = arith.constant 0 : index
    %c0_231 = arith.constant 0 : index
    %628 = vector.load %arg9[%c19, %c0_230, %c0_231] : memref<36x1x32xf32, #tpu.memory_space<vmem>>, vector<1x1x32xf32>
    %629 = vector.shape_cast %628 : vector<1x1x32xf32> to vector<1x32xf32>
    %cst_232 = arith.constant dense<0.000000e+00> : vector<16xf32>
    %630 = vector.multi_reduction <add>, %625, %cst_232 [1] : vector<16x32xf32> to vector<16xf32>
    %631 = vector.shape_cast %630 : vector<16xf32> to vector<16x1xf32>
    %cst_233 = arith.constant 3.200000e+01 : f32
    %632 = vector.broadcast %cst_233 : f32 to vector<16x1xf32>
    %633 = arith.divf %631, %632 : vector<16x1xf32>
    %634 = vector.broadcast %633 : vector<16x1xf32> to vector<16x32xf32>
    %635 = arith.subf %625, %634 : vector<16x32xf32>
    %636 = arith.mulf %635, %635 : vector<16x32xf32>
    %cst_234 = arith.constant dense<0.000000e+00> : vector<16xf32>
    %637 = vector.multi_reduction <add>, %636, %cst_234 [1] : vector<16x32xf32> to vector<16xf32>
    %638 = vector.shape_cast %637 : vector<16xf32> to vector<16x1xf32>
    %cst_235 = arith.constant 3.200000e+01 : f32
    %639 = vector.broadcast %cst_235 : f32 to vector<16x1xf32>
    %640 = arith.divf %638, %639 : vector<16x1xf32>
    %641 = vector.broadcast %633 : vector<16x1xf32> to vector<16x32xf32>
    %642 = arith.subf %625, %641 : vector<16x32xf32>
    %cst_236 = arith.constant 9.99999974E-6 : f32
    %643 = vector.broadcast %cst_236 : f32 to vector<16x1xf32>
    %644 = arith.addf %640, %643 : vector<16x1xf32>
    %645 = math.rsqrt %644 : vector<16x1xf32>
    %646 = vector.broadcast %645 : vector<16x1xf32> to vector<16x32xf32>
    %647 = arith.mulf %642, %646 : vector<16x32xf32>
    %648 = vector.broadcast %627 : vector<1x32xf32> to vector<16x32xf32>
    %649 = arith.mulf %647, %648 : vector<16x32xf32>
    %650 = vector.broadcast %629 : vector<1x32xf32> to vector<16x32xf32>
    %651 = arith.addf %649, %650 : vector<16x32xf32>
    %c2_237 = arith.constant 2 : index
    %c0_238 = arith.constant 0 : index
    %c0_239 = arith.constant 0 : index
    %652 = vector.load %arg4[%c2_237, %c0_238, %c0_239] : memref<6x32x64xbf16, #tpu.memory_space<vmem>>, vector<1x32x64xbf16>
    %653 = vector.shape_cast %652 : vector<1x32x64xbf16> to vector<32x64xbf16>
    %c2_240 = arith.constant 2 : index
    %c0_241 = arith.constant 0 : index
    %c0_242 = arith.constant 0 : index
    %654 = vector.load %arg8[%c2_240, %c0_241, %c0_242] : memref<6x1x64xf32, #tpu.memory_space<vmem>>, vector<1x1x64xf32>
    %655 = vector.shape_cast %654 : vector<1x1x64xf32> to vector<1x64xf32>
    %c2_243 = arith.constant 2 : index
    %c0_244 = arith.constant 0 : index
    %c0_245 = arith.constant 0 : index
    %656 = vector.load %arg5[%c2_243, %c0_244, %c0_245] : memref<4x64x32xbf16, #tpu.memory_space<vmem>>, vector<1x64x32xbf16>
    %657 = vector.shape_cast %656 : vector<1x64x32xbf16> to vector<64x32xbf16>
    %c15 = arith.constant 15 : index
    %c0_246 = arith.constant 0 : index
    %c0_247 = arith.constant 0 : index
    %658 = vector.load %arg9[%c15, %c0_246, %c0_247] : memref<36x1x32xf32, #tpu.memory_space<vmem>>, vector<1x1x32xf32>
    %659 = vector.shape_cast %658 : vector<1x1x32xf32> to vector<1x32xf32>
    %660 = arith.truncf %651 : vector<16x32xf32> to vector<16x32xbf16>
    %cst_248 = arith.constant dense<0.000000e+00> : vector<16x64xf32>
    %661 = tpu.matmul %660, %653, %cst_248 {dimension_numbers = #tpu.dot_dimension_numbers<[1], [0], [0], [1], [0, 0, 1, 1], [], []>} : vector<16x32xbf16>, vector<32x64xbf16>, vector<16x64xf32> -> vector<16x64xf32>
    %662 = vector.broadcast %655 : vector<1x64xf32> to vector<16x64xf32>
    %663 = arith.addf %661, %662 : vector<16x64xf32>
    %cst_249 = arith.constant 5.000000e-01 : f32
    %664 = vector.broadcast %cst_249 : f32 to vector<16x64xf32>
    %665 = arith.mulf %664, %663 : vector<16x64xf32>
    %cst_250 = arith.constant 0.707106769 : f32
    %666 = vector.broadcast %cst_250 : f32 to vector<16x64xf32>
    %667 = arith.mulf %663, %666 : vector<16x64xf32>
    %668 = math.erf %667 : vector<16x64xf32>
    %cst_251 = arith.constant 1.000000e+00 : f32
    %669 = vector.broadcast %cst_251 : f32 to vector<16x64xf32>
    %670 = arith.addf %669, %668 : vector<16x64xf32>
    %671 = arith.mulf %665, %670 : vector<16x64xf32>
    %672 = arith.truncf %671 : vector<16x64xf32> to vector<16x64xbf16>
    %cst_252 = arith.constant dense<0.000000e+00> : vector<16x32xf32>
    %673 = tpu.matmul %672, %657, %cst_252 {dimension_numbers = #tpu.dot_dimension_numbers<[1], [0], [0], [1], [0, 0, 1, 1], [], []>} : vector<16x64xbf16>, vector<64x32xbf16>, vector<16x32xf32> -> vector<16x32xf32>
    %674 = vector.broadcast %659 : vector<1x32xf32> to vector<16x32xf32>
    %675 = arith.addf %673, %674 : vector<16x32xf32>
    %676 = arith.addf %651, %675 : vector<16x32xf32>
    %c20 = arith.constant 20 : index
    %c0_253 = arith.constant 0 : index
    %c0_254 = arith.constant 0 : index
    %677 = vector.load %arg9[%c20, %c0_253, %c0_254] : memref<36x1x32xf32, #tpu.memory_space<vmem>>, vector<1x1x32xf32>
    %678 = vector.shape_cast %677 : vector<1x1x32xf32> to vector<1x32xf32>
    %c21 = arith.constant 21 : index
    %c0_255 = arith.constant 0 : index
    %c0_256 = arith.constant 0 : index
    %679 = vector.load %arg9[%c21, %c0_255, %c0_256] : memref<36x1x32xf32, #tpu.memory_space<vmem>>, vector<1x1x32xf32>
    %680 = vector.shape_cast %679 : vector<1x1x32xf32> to vector<1x32xf32>
    %cst_257 = arith.constant dense<0.000000e+00> : vector<16xf32>
    %681 = vector.multi_reduction <add>, %676, %cst_257 [1] : vector<16x32xf32> to vector<16xf32>
    %682 = vector.shape_cast %681 : vector<16xf32> to vector<16x1xf32>
    %cst_258 = arith.constant 3.200000e+01 : f32
    %683 = vector.broadcast %cst_258 : f32 to vector<16x1xf32>
    %684 = arith.divf %682, %683 : vector<16x1xf32>
    %685 = vector.broadcast %684 : vector<16x1xf32> to vector<16x32xf32>
    %686 = arith.subf %676, %685 : vector<16x32xf32>
    %687 = arith.mulf %686, %686 : vector<16x32xf32>
    %cst_259 = arith.constant dense<0.000000e+00> : vector<16xf32>
    %688 = vector.multi_reduction <add>, %687, %cst_259 [1] : vector<16x32xf32> to vector<16xf32>
    %689 = vector.shape_cast %688 : vector<16xf32> to vector<16x1xf32>
    %cst_260 = arith.constant 3.200000e+01 : f32
    %690 = vector.broadcast %cst_260 : f32 to vector<16x1xf32>
    %691 = arith.divf %689, %690 : vector<16x1xf32>
    %692 = vector.broadcast %684 : vector<16x1xf32> to vector<16x32xf32>
    %693 = arith.subf %676, %692 : vector<16x32xf32>
    %cst_261 = arith.constant 9.99999974E-6 : f32
    %694 = vector.broadcast %cst_261 : f32 to vector<16x1xf32>
    %695 = arith.addf %691, %694 : vector<16x1xf32>
    %696 = math.rsqrt %695 : vector<16x1xf32>
    %697 = vector.broadcast %696 : vector<16x1xf32> to vector<16x32xf32>
    %698 = arith.mulf %693, %697 : vector<16x32xf32>
    %699 = vector.broadcast %678 : vector<1x32xf32> to vector<16x32xf32>
    %700 = arith.mulf %698, %699 : vector<16x32xf32>
    %701 = vector.broadcast %680 : vector<1x32xf32> to vector<16x32xf32>
    %702 = arith.addf %700, %701 : vector<16x32xf32>
    %c3_262 = arith.constant 3 : index
    %c0_263 = arith.constant 0 : index
    %c0_264 = arith.constant 0 : index
    %703 = vector.load %arg2[%c3_262, %c0_263, %c0_264] : memref<4x32x96xbf16, #tpu.memory_space<vmem>>, vector<1x32x96xbf16>
    %704 = vector.shape_cast %703 : vector<1x32x96xbf16> to vector<32x96xbf16>
    %c3_265 = arith.constant 3 : index
    %c0_266 = arith.constant 0 : index
    %c0_267 = arith.constant 0 : index
    %705 = vector.load %arg7[%c3_265, %c0_266, %c0_267] : memref<4x1x96xf32, #tpu.memory_space<vmem>>, vector<1x1x96xf32>
    %706 = vector.shape_cast %705 : vector<1x1x96xf32> to vector<1x96xf32>
    %707 = arith.truncf %702 : vector<16x32xf32> to vector<16x32xbf16>
    %cst_268 = arith.constant dense<0.000000e+00> : vector<16x96xf32>
    %708 = tpu.matmul %707, %704, %cst_268 {dimension_numbers = #tpu.dot_dimension_numbers<[1], [0], [0], [1], [0, 0, 1, 1], [], []>} : vector<16x32xbf16>, vector<32x96xbf16>, vector<16x96xf32> -> vector<16x96xf32>
    %709 = vector.broadcast %706 : vector<1x96xf32> to vector<16x96xf32>
    %710 = arith.addf %708, %709 : vector<16x96xf32>
    %711 = vector.extract_strided_slice %710 {offsets = [0, 0], sizes = [16, 32], strides = [1, 1]} : vector<16x96xf32> to vector<16x32xf32>
    %712 = vector.extract_strided_slice %710 {offsets = [0, 32], sizes = [16, 32], strides = [1, 1]} : vector<16x96xf32> to vector<16x32xf32>
    %713 = vector.extract_strided_slice %710 {offsets = [0, 64], sizes = [16, 32], strides = [1, 1]} : vector<16x96xf32> to vector<16x32xf32>
    %714 = vector.shape_cast %711 : vector<16x32xf32> to vector<2x8x32xf32>
    %715 = arith.truncf %714 : vector<2x8x32xf32> to vector<2x8x32xbf16>
    %716 = vector.shape_cast %712 : vector<16x32xf32> to vector<2x8x32xf32>
    %717 = arith.truncf %716 : vector<2x8x32xf32> to vector<2x8x32xbf16>
    %718 = vector.shape_cast %713 : vector<16x32xf32> to vector<2x8x32xf32>
    %719 = arith.truncf %718 : vector<2x8x32xf32> to vector<2x8x32xbf16>
    %720 = vector.extract_strided_slice %715 {offsets = [0, 0, 0], sizes = [2, 8, 8], strides = [1, 1, 1]} : vector<2x8x32xbf16> to vector<2x8x8xbf16>
    %721 = vector.extract_strided_slice %717 {offsets = [0, 0, 0], sizes = [2, 8, 8], strides = [1, 1, 1]} : vector<2x8x32xbf16> to vector<2x8x8xbf16>
    %cst_269 = arith.constant dense<0.000000e+00> : vector<2x8x8xf32>
    %722 = tpu.matmul %720, %721, %cst_269 {dimension_numbers = #tpu.dot_dimension_numbers<[2], [2], [1], [1], [0, 0, 0, 1, 1, 1], [0], [0]>} : vector<2x8x8xbf16>, vector<2x8x8xbf16>, vector<2x8x8xf32> -> vector<2x8x8xf32>
    %cst_270 = arith.constant -1.000000e+09 : f32
    %723 = vector.broadcast %cst_270 : f32 to vector<2x8x8xf32>
    %724 = arith.select %12, %722, %723 : vector<2x8x8xi1>, vector<2x8x8xf32>
    %cst_271 = arith.constant dense<0xFF800000> : vector<2x8xf32>
    %725 = vector.multi_reduction <maximumf>, %724, %cst_271 [2] : vector<2x8x8xf32> to vector<2x8xf32>
    %726 = vector.shape_cast %725 : vector<2x8xf32> to vector<2x8x1xf32>
    %727 = vector.broadcast %726 : vector<2x8x1xf32> to vector<2x8x8xf32>
    %728 = arith.subf %724, %727 : vector<2x8x8xf32>
    %729 = math.exp %728 : vector<2x8x8xf32>
    %cst_272 = arith.constant dense<0.000000e+00> : vector<2x8xf32>
    %730 = vector.multi_reduction <add>, %729, %cst_272 [2] : vector<2x8x8xf32> to vector<2x8xf32>
    %731 = vector.shape_cast %730 : vector<2x8xf32> to vector<2x8x1xf32>
    %732 = tpu.reciprocal %731 {approx = true} : vector<2x8x1xf32> -> vector<2x8x1xf32>
    %733 = vector.broadcast %732 : vector<2x8x1xf32> to vector<2x8x8xf32>
    %734 = arith.mulf %729, %733 : vector<2x8x8xf32>
    %735 = arith.truncf %734 : vector<2x8x8xf32> to vector<2x8x8xbf16>
    %736 = vector.extract_strided_slice %719 {offsets = [0, 0, 0], sizes = [2, 8, 8], strides = [1, 1, 1]} : vector<2x8x32xbf16> to vector<2x8x8xbf16>
    %cst_273 = arith.constant dense<0.000000e+00> : vector<2x8x8xf32>
    %737 = tpu.matmul %735, %736, %cst_273 {dimension_numbers = #tpu.dot_dimension_numbers<[2], [1], [1], [2], [0, 0, 0, 1, 1, 2], [0], [0]>} : vector<2x8x8xbf16>, vector<2x8x8xbf16>, vector<2x8x8xf32> -> vector<2x8x8xf32>
    %738 = vector.extract_strided_slice %715 {offsets = [0, 0, 8], sizes = [2, 8, 8], strides = [1, 1, 1]} : vector<2x8x32xbf16> to vector<2x8x8xbf16>
    %739 = vector.extract_strided_slice %717 {offsets = [0, 0, 8], sizes = [2, 8, 8], strides = [1, 1, 1]} : vector<2x8x32xbf16> to vector<2x8x8xbf16>
    %cst_274 = arith.constant dense<0.000000e+00> : vector<2x8x8xf32>
    %740 = tpu.matmul %738, %739, %cst_274 {dimension_numbers = #tpu.dot_dimension_numbers<[2], [2], [1], [1], [0, 0, 0, 1, 1, 1], [0], [0]>} : vector<2x8x8xbf16>, vector<2x8x8xbf16>, vector<2x8x8xf32> -> vector<2x8x8xf32>
    %cst_275 = arith.constant -1.000000e+09 : f32
    %741 = vector.broadcast %cst_275 : f32 to vector<2x8x8xf32>
    %742 = arith.select %12, %740, %741 : vector<2x8x8xi1>, vector<2x8x8xf32>
    %cst_276 = arith.constant dense<0xFF800000> : vector<2x8xf32>
    %743 = vector.multi_reduction <maximumf>, %742, %cst_276 [2] : vector<2x8x8xf32> to vector<2x8xf32>
    %744 = vector.shape_cast %743 : vector<2x8xf32> to vector<2x8x1xf32>
    %745 = vector.broadcast %744 : vector<2x8x1xf32> to vector<2x8x8xf32>
    %746 = arith.subf %742, %745 : vector<2x8x8xf32>
    %747 = math.exp %746 : vector<2x8x8xf32>
    %cst_277 = arith.constant dense<0.000000e+00> : vector<2x8xf32>
    %748 = vector.multi_reduction <add>, %747, %cst_277 [2] : vector<2x8x8xf32> to vector<2x8xf32>
    %749 = vector.shape_cast %748 : vector<2x8xf32> to vector<2x8x1xf32>
    %750 = tpu.reciprocal %749 {approx = true} : vector<2x8x1xf32> -> vector<2x8x1xf32>
    %751 = vector.broadcast %750 : vector<2x8x1xf32> to vector<2x8x8xf32>
    %752 = arith.mulf %747, %751 : vector<2x8x8xf32>
    %753 = arith.truncf %752 : vector<2x8x8xf32> to vector<2x8x8xbf16>
    %754 = vector.extract_strided_slice %719 {offsets = [0, 0, 8], sizes = [2, 8, 8], strides = [1, 1, 1]} : vector<2x8x32xbf16> to vector<2x8x8xbf16>
    %cst_278 = arith.constant dense<0.000000e+00> : vector<2x8x8xf32>
    %755 = tpu.matmul %753, %754, %cst_278 {dimension_numbers = #tpu.dot_dimension_numbers<[2], [1], [1], [2], [0, 0, 0, 1, 1, 2], [0], [0]>} : vector<2x8x8xbf16>, vector<2x8x8xbf16>, vector<2x8x8xf32> -> vector<2x8x8xf32>
    %756 = vector.extract_strided_slice %715 {offsets = [0, 0, 16], sizes = [2, 8, 8], strides = [1, 1, 1]} : vector<2x8x32xbf16> to vector<2x8x8xbf16>
    %757 = vector.extract_strided_slice %717 {offsets = [0, 0, 16], sizes = [2, 8, 8], strides = [1, 1, 1]} : vector<2x8x32xbf16> to vector<2x8x8xbf16>
    %cst_279 = arith.constant dense<0.000000e+00> : vector<2x8x8xf32>
    %758 = tpu.matmul %756, %757, %cst_279 {dimension_numbers = #tpu.dot_dimension_numbers<[2], [2], [1], [1], [0, 0, 0, 1, 1, 1], [0], [0]>} : vector<2x8x8xbf16>, vector<2x8x8xbf16>, vector<2x8x8xf32> -> vector<2x8x8xf32>
    %cst_280 = arith.constant -1.000000e+09 : f32
    %759 = vector.broadcast %cst_280 : f32 to vector<2x8x8xf32>
    %760 = arith.select %12, %758, %759 : vector<2x8x8xi1>, vector<2x8x8xf32>
    %cst_281 = arith.constant dense<0xFF800000> : vector<2x8xf32>
    %761 = vector.multi_reduction <maximumf>, %760, %cst_281 [2] : vector<2x8x8xf32> to vector<2x8xf32>
    %762 = vector.shape_cast %761 : vector<2x8xf32> to vector<2x8x1xf32>
    %763 = vector.broadcast %762 : vector<2x8x1xf32> to vector<2x8x8xf32>
    %764 = arith.subf %760, %763 : vector<2x8x8xf32>
    %765 = math.exp %764 : vector<2x8x8xf32>
    %cst_282 = arith.constant dense<0.000000e+00> : vector<2x8xf32>
    %766 = vector.multi_reduction <add>, %765, %cst_282 [2] : vector<2x8x8xf32> to vector<2x8xf32>
    %767 = vector.shape_cast %766 : vector<2x8xf32> to vector<2x8x1xf32>
    %768 = tpu.reciprocal %767 {approx = true} : vector<2x8x1xf32> -> vector<2x8x1xf32>
    %769 = vector.broadcast %768 : vector<2x8x1xf32> to vector<2x8x8xf32>
    %770 = arith.mulf %765, %769 : vector<2x8x8xf32>
    %771 = arith.truncf %770 : vector<2x8x8xf32> to vector<2x8x8xbf16>
    %772 = vector.extract_strided_slice %719 {offsets = [0, 0, 16], sizes = [2, 8, 8], strides = [1, 1, 1]} : vector<2x8x32xbf16> to vector<2x8x8xbf16>
    %cst_283 = arith.constant dense<0.000000e+00> : vector<2x8x8xf32>
    %773 = tpu.matmul %771, %772, %cst_283 {dimension_numbers = #tpu.dot_dimension_numbers<[2], [1], [1], [2], [0, 0, 0, 1, 1, 2], [0], [0]>} : vector<2x8x8xbf16>, vector<2x8x8xbf16>, vector<2x8x8xf32> -> vector<2x8x8xf32>
    %774 = vector.extract_strided_slice %715 {offsets = [0, 0, 24], sizes = [2, 8, 8], strides = [1, 1, 1]} : vector<2x8x32xbf16> to vector<2x8x8xbf16>
    %775 = vector.extract_strided_slice %717 {offsets = [0, 0, 24], sizes = [2, 8, 8], strides = [1, 1, 1]} : vector<2x8x32xbf16> to vector<2x8x8xbf16>
    %cst_284 = arith.constant dense<0.000000e+00> : vector<2x8x8xf32>
    %776 = tpu.matmul %774, %775, %cst_284 {dimension_numbers = #tpu.dot_dimension_numbers<[2], [2], [1], [1], [0, 0, 0, 1, 1, 1], [0], [0]>} : vector<2x8x8xbf16>, vector<2x8x8xbf16>, vector<2x8x8xf32> -> vector<2x8x8xf32>
    %cst_285 = arith.constant -1.000000e+09 : f32
    %777 = vector.broadcast %cst_285 : f32 to vector<2x8x8xf32>
    %778 = arith.select %12, %776, %777 : vector<2x8x8xi1>, vector<2x8x8xf32>
    %cst_286 = arith.constant dense<0xFF800000> : vector<2x8xf32>
    %779 = vector.multi_reduction <maximumf>, %778, %cst_286 [2] : vector<2x8x8xf32> to vector<2x8xf32>
    %780 = vector.shape_cast %779 : vector<2x8xf32> to vector<2x8x1xf32>
    %781 = vector.broadcast %780 : vector<2x8x1xf32> to vector<2x8x8xf32>
    %782 = arith.subf %778, %781 : vector<2x8x8xf32>
    %783 = math.exp %782 : vector<2x8x8xf32>
    %cst_287 = arith.constant dense<0.000000e+00> : vector<2x8xf32>
    %784 = vector.multi_reduction <add>, %783, %cst_287 [2] : vector<2x8x8xf32> to vector<2x8xf32>
    %785 = vector.shape_cast %784 : vector<2x8xf32> to vector<2x8x1xf32>
    %786 = tpu.reciprocal %785 {approx = true} : vector<2x8x1xf32> -> vector<2x8x1xf32>
    %787 = vector.broadcast %786 : vector<2x8x1xf32> to vector<2x8x8xf32>
    %788 = arith.mulf %783, %787 : vector<2x8x8xf32>
    %789 = arith.truncf %788 : vector<2x8x8xf32> to vector<2x8x8xbf16>
    %790 = vector.extract_strided_slice %719 {offsets = [0, 0, 24], sizes = [2, 8, 8], strides = [1, 1, 1]} : vector<2x8x32xbf16> to vector<2x8x8xbf16>
    %cst_288 = arith.constant dense<0.000000e+00> : vector<2x8x8xf32>
    %791 = tpu.matmul %789, %790, %cst_288 {dimension_numbers = #tpu.dot_dimension_numbers<[2], [1], [1], [2], [0, 0, 0, 1, 1, 2], [0], [0]>} : vector<2x8x8xbf16>, vector<2x8x8xbf16>, vector<2x8x8xf32> -> vector<2x8x8xf32>
    %792 = tpu.concatenate %737, %755, %773, %791 in 2 : vector<2x8x8xf32>, vector<2x8x8xf32>, vector<2x8x8xf32>, vector<2x8x8xf32> -> vector<2x8x32xf32>
    %793 = vector.shape_cast %792 : vector<2x8x32xf32> to vector<16x32xf32>
    %c5_289 = arith.constant 5 : index
    %c0_290 = arith.constant 0 : index
    %c0_291 = arith.constant 0 : index
    %794 = vector.load %arg3[%c5_289, %c0_290, %c0_291] : memref<8x32x32xbf16, #tpu.memory_space<vmem>>, vector<1x32x32xbf16>
    %795 = vector.shape_cast %794 : vector<1x32x32xbf16> to vector<32x32xbf16>
    %c22 = arith.constant 22 : index
    %c0_292 = arith.constant 0 : index
    %c0_293 = arith.constant 0 : index
    %796 = vector.load %arg9[%c22, %c0_292, %c0_293] : memref<36x1x32xf32, #tpu.memory_space<vmem>>, vector<1x1x32xf32>
    %797 = vector.shape_cast %796 : vector<1x1x32xf32> to vector<1x32xf32>
    %798 = arith.truncf %793 : vector<16x32xf32> to vector<16x32xbf16>
    %cst_294 = arith.constant dense<0.000000e+00> : vector<16x32xf32>
    %799 = tpu.matmul %798, %795, %cst_294 {dimension_numbers = #tpu.dot_dimension_numbers<[1], [0], [0], [1], [0, 0, 1, 1], [], []>} : vector<16x32xbf16>, vector<32x32xbf16>, vector<16x32xf32> -> vector<16x32xf32>
    %800 = vector.broadcast %797 : vector<1x32xf32> to vector<16x32xf32>
    %801 = arith.addf %799, %800 : vector<16x32xf32>
    %802 = arith.addf %702, %801 : vector<16x32xf32>
    %c26 = arith.constant 26 : index
    %c0_295 = arith.constant 0 : index
    %c0_296 = arith.constant 0 : index
    %803 = vector.load %arg9[%c26, %c0_295, %c0_296] : memref<36x1x32xf32, #tpu.memory_space<vmem>>, vector<1x1x32xf32>
    %804 = vector.shape_cast %803 : vector<1x1x32xf32> to vector<1x32xf32>
    %c27 = arith.constant 27 : index
    %c0_297 = arith.constant 0 : index
    %c0_298 = arith.constant 0 : index
    %805 = vector.load %arg9[%c27, %c0_297, %c0_298] : memref<36x1x32xf32, #tpu.memory_space<vmem>>, vector<1x1x32xf32>
    %806 = vector.shape_cast %805 : vector<1x1x32xf32> to vector<1x32xf32>
    %cst_299 = arith.constant dense<0.000000e+00> : vector<16xf32>
    %807 = vector.multi_reduction <add>, %802, %cst_299 [1] : vector<16x32xf32> to vector<16xf32>
    %808 = vector.shape_cast %807 : vector<16xf32> to vector<16x1xf32>
    %cst_300 = arith.constant 3.200000e+01 : f32
    %809 = vector.broadcast %cst_300 : f32 to vector<16x1xf32>
    %810 = arith.divf %808, %809 : vector<16x1xf32>
    %811 = vector.broadcast %810 : vector<16x1xf32> to vector<16x32xf32>
    %812 = arith.subf %802, %811 : vector<16x32xf32>
    %813 = arith.mulf %812, %812 : vector<16x32xf32>
    %cst_301 = arith.constant dense<0.000000e+00> : vector<16xf32>
    %814 = vector.multi_reduction <add>, %813, %cst_301 [1] : vector<16x32xf32> to vector<16xf32>
    %815 = vector.shape_cast %814 : vector<16xf32> to vector<16x1xf32>
    %cst_302 = arith.constant 3.200000e+01 : f32
    %816 = vector.broadcast %cst_302 : f32 to vector<16x1xf32>
    %817 = arith.divf %815, %816 : vector<16x1xf32>
    %818 = vector.broadcast %810 : vector<16x1xf32> to vector<16x32xf32>
    %819 = arith.subf %802, %818 : vector<16x32xf32>
    %cst_303 = arith.constant 9.99999974E-6 : f32
    %820 = vector.broadcast %cst_303 : f32 to vector<16x1xf32>
    %821 = arith.addf %817, %820 : vector<16x1xf32>
    %822 = math.rsqrt %821 : vector<16x1xf32>
    %823 = vector.broadcast %822 : vector<16x1xf32> to vector<16x32xf32>
    %824 = arith.mulf %819, %823 : vector<16x32xf32>
    %825 = vector.broadcast %804 : vector<1x32xf32> to vector<16x32xf32>
    %826 = arith.mulf %824, %825 : vector<16x32xf32>
    %827 = vector.broadcast %806 : vector<1x32xf32> to vector<16x32xf32>
    %828 = arith.addf %826, %827 : vector<16x32xf32>
    %c6_304 = arith.constant 6 : index
    %c0_305 = arith.constant 0 : index
    %c0_306 = arith.constant 0 : index
    %829 = vector.load %arg3[%c6_304, %c0_305, %c0_306] : memref<8x32x32xbf16, #tpu.memory_space<vmem>>, vector<1x32x32xbf16>
    %830 = vector.shape_cast %829 : vector<1x32x32xbf16> to vector<32x32xbf16>
    %c23 = arith.constant 23 : index
    %c0_307 = arith.constant 0 : index
    %c0_308 = arith.constant 0 : index
    %831 = vector.load %arg9[%c23, %c0_307, %c0_308] : memref<36x1x32xf32, #tpu.memory_space<vmem>>, vector<1x1x32xf32>
    %832 = vector.shape_cast %831 : vector<1x1x32xf32> to vector<1x32xf32>
    %833 = arith.truncf %828 : vector<16x32xf32> to vector<16x32xbf16>
    %cst_309 = arith.constant dense<0.000000e+00> : vector<16x32xf32>
    %834 = tpu.matmul %833, %830, %cst_309 {dimension_numbers = #tpu.dot_dimension_numbers<[1], [0], [0], [1], [0, 0, 1, 1], [], []>} : vector<16x32xbf16>, vector<32x32xbf16>, vector<16x32xf32> -> vector<16x32xf32>
    %835 = vector.broadcast %832 : vector<1x32xf32> to vector<16x32xf32>
    %836 = arith.addf %834, %835 : vector<16x32xf32>
    %c5_310 = arith.constant 5 : index
    %c0_311 = arith.constant 0 : index
    %c0_312 = arith.constant 0 : index
    %837 = vector.load %arg4[%c5_310, %c0_311, %c0_312] : memref<6x32x64xbf16, #tpu.memory_space<vmem>>, vector<1x32x64xbf16>
    %838 = vector.shape_cast %837 : vector<1x32x64xbf16> to vector<32x64xbf16>
    %c5_313 = arith.constant 5 : index
    %c0_314 = arith.constant 0 : index
    %c0_315 = arith.constant 0 : index
    %839 = vector.load %arg8[%c5_313, %c0_314, %c0_315] : memref<6x1x64xf32, #tpu.memory_space<vmem>>, vector<1x1x64xf32>
    %840 = vector.shape_cast %839 : vector<1x1x64xf32> to vector<1x64xf32>
    %841 = arith.truncf %392 : vector<16x32xf32> to vector<16x32xbf16>
    %cst_316 = arith.constant dense<0.000000e+00> : vector<16x64xf32>
    %842 = tpu.matmul %841, %838, %cst_316 {dimension_numbers = #tpu.dot_dimension_numbers<[1], [0], [0], [1], [0, 0, 1, 1], [], []>} : vector<16x32xbf16>, vector<32x64xbf16>, vector<16x64xf32> -> vector<16x64xf32>
    %843 = vector.broadcast %840 : vector<1x64xf32> to vector<16x64xf32>
    %844 = arith.addf %842, %843 : vector<16x64xf32>
    %845 = vector.extract_strided_slice %844 {offsets = [0, 0], sizes = [16, 32], strides = [1, 1]} : vector<16x64xf32> to vector<16x32xf32>
    %846 = vector.extract_strided_slice %844 {offsets = [0, 32], sizes = [16, 32], strides = [1, 1]} : vector<16x64xf32> to vector<16x32xf32>
    %847 = vector.shape_cast %836 : vector<16x32xf32> to vector<2x8x32xf32>
    %848 = arith.truncf %847 : vector<2x8x32xf32> to vector<2x8x32xbf16>
    %849 = vector.shape_cast %845 : vector<16x32xf32> to vector<2x8x32xf32>
    %850 = arith.truncf %849 : vector<2x8x32xf32> to vector<2x8x32xbf16>
    %851 = vector.shape_cast %846 : vector<16x32xf32> to vector<2x8x32xf32>
    %852 = arith.truncf %851 : vector<2x8x32xf32> to vector<2x8x32xbf16>
    %853 = vector.extract_strided_slice %848 {offsets = [0, 0, 0], sizes = [2, 8, 8], strides = [1, 1, 1]} : vector<2x8x32xbf16> to vector<2x8x8xbf16>
    %854 = vector.extract_strided_slice %850 {offsets = [0, 0, 0], sizes = [2, 8, 8], strides = [1, 1, 1]} : vector<2x8x32xbf16> to vector<2x8x8xbf16>
    %cst_317 = arith.constant dense<0.000000e+00> : vector<2x8x8xf32>
    %855 = tpu.matmul %853, %854, %cst_317 {dimension_numbers = #tpu.dot_dimension_numbers<[2], [2], [1], [1], [0, 0, 0, 1, 1, 1], [0], [0]>} : vector<2x8x8xbf16>, vector<2x8x8xbf16>, vector<2x8x8xf32> -> vector<2x8x8xf32>
    %cst_318 = arith.constant -1.000000e+09 : f32
    %856 = vector.broadcast %cst_318 : f32 to vector<2x8x8xf32>
    %857 = arith.select %6, %855, %856 : vector<2x8x8xi1>, vector<2x8x8xf32>
    %cst_319 = arith.constant dense<0xFF800000> : vector<2x8xf32>
    %858 = vector.multi_reduction <maximumf>, %857, %cst_319 [2] : vector<2x8x8xf32> to vector<2x8xf32>
    %859 = vector.shape_cast %858 : vector<2x8xf32> to vector<2x8x1xf32>
    %860 = vector.broadcast %859 : vector<2x8x1xf32> to vector<2x8x8xf32>
    %861 = arith.subf %857, %860 : vector<2x8x8xf32>
    %862 = math.exp %861 : vector<2x8x8xf32>
    %cst_320 = arith.constant dense<0.000000e+00> : vector<2x8xf32>
    %863 = vector.multi_reduction <add>, %862, %cst_320 [2] : vector<2x8x8xf32> to vector<2x8xf32>
    %864 = vector.shape_cast %863 : vector<2x8xf32> to vector<2x8x1xf32>
    %865 = tpu.reciprocal %864 {approx = true} : vector<2x8x1xf32> -> vector<2x8x1xf32>
    %866 = vector.broadcast %865 : vector<2x8x1xf32> to vector<2x8x8xf32>
    %867 = arith.mulf %862, %866 : vector<2x8x8xf32>
    %868 = arith.truncf %867 : vector<2x8x8xf32> to vector<2x8x8xbf16>
    %869 = vector.extract_strided_slice %852 {offsets = [0, 0, 0], sizes = [2, 8, 8], strides = [1, 1, 1]} : vector<2x8x32xbf16> to vector<2x8x8xbf16>
    %cst_321 = arith.constant dense<0.000000e+00> : vector<2x8x8xf32>
    %870 = tpu.matmul %868, %869, %cst_321 {dimension_numbers = #tpu.dot_dimension_numbers<[2], [1], [1], [2], [0, 0, 0, 1, 1, 2], [0], [0]>} : vector<2x8x8xbf16>, vector<2x8x8xbf16>, vector<2x8x8xf32> -> vector<2x8x8xf32>
    %871 = vector.extract_strided_slice %848 {offsets = [0, 0, 8], sizes = [2, 8, 8], strides = [1, 1, 1]} : vector<2x8x32xbf16> to vector<2x8x8xbf16>
    %872 = vector.extract_strided_slice %850 {offsets = [0, 0, 8], sizes = [2, 8, 8], strides = [1, 1, 1]} : vector<2x8x32xbf16> to vector<2x8x8xbf16>
    %cst_322 = arith.constant dense<0.000000e+00> : vector<2x8x8xf32>
    %873 = tpu.matmul %871, %872, %cst_322 {dimension_numbers = #tpu.dot_dimension_numbers<[2], [2], [1], [1], [0, 0, 0, 1, 1, 1], [0], [0]>} : vector<2x8x8xbf16>, vector<2x8x8xbf16>, vector<2x8x8xf32> -> vector<2x8x8xf32>
    %cst_323 = arith.constant -1.000000e+09 : f32
    %874 = vector.broadcast %cst_323 : f32 to vector<2x8x8xf32>
    %875 = arith.select %6, %873, %874 : vector<2x8x8xi1>, vector<2x8x8xf32>
    %cst_324 = arith.constant dense<0xFF800000> : vector<2x8xf32>
    %876 = vector.multi_reduction <maximumf>, %875, %cst_324 [2] : vector<2x8x8xf32> to vector<2x8xf32>
    %877 = vector.shape_cast %876 : vector<2x8xf32> to vector<2x8x1xf32>
    %878 = vector.broadcast %877 : vector<2x8x1xf32> to vector<2x8x8xf32>
    %879 = arith.subf %875, %878 : vector<2x8x8xf32>
    %880 = math.exp %879 : vector<2x8x8xf32>
    %cst_325 = arith.constant dense<0.000000e+00> : vector<2x8xf32>
    %881 = vector.multi_reduction <add>, %880, %cst_325 [2] : vector<2x8x8xf32> to vector<2x8xf32>
    %882 = vector.shape_cast %881 : vector<2x8xf32> to vector<2x8x1xf32>
    %883 = tpu.reciprocal %882 {approx = true} : vector<2x8x1xf32> -> vector<2x8x1xf32>
    %884 = vector.broadcast %883 : vector<2x8x1xf32> to vector<2x8x8xf32>
    %885 = arith.mulf %880, %884 : vector<2x8x8xf32>
    %886 = arith.truncf %885 : vector<2x8x8xf32> to vector<2x8x8xbf16>
    %887 = vector.extract_strided_slice %852 {offsets = [0, 0, 8], sizes = [2, 8, 8], strides = [1, 1, 1]} : vector<2x8x32xbf16> to vector<2x8x8xbf16>
    %cst_326 = arith.constant dense<0.000000e+00> : vector<2x8x8xf32>
    %888 = tpu.matmul %886, %887, %cst_326 {dimension_numbers = #tpu.dot_dimension_numbers<[2], [1], [1], [2], [0, 0, 0, 1, 1, 2], [0], [0]>} : vector<2x8x8xbf16>, vector<2x8x8xbf16>, vector<2x8x8xf32> -> vector<2x8x8xf32>
    %889 = vector.extract_strided_slice %848 {offsets = [0, 0, 16], sizes = [2, 8, 8], strides = [1, 1, 1]} : vector<2x8x32xbf16> to vector<2x8x8xbf16>
    %890 = vector.extract_strided_slice %850 {offsets = [0, 0, 16], sizes = [2, 8, 8], strides = [1, 1, 1]} : vector<2x8x32xbf16> to vector<2x8x8xbf16>
    %cst_327 = arith.constant dense<0.000000e+00> : vector<2x8x8xf32>
    %891 = tpu.matmul %889, %890, %cst_327 {dimension_numbers = #tpu.dot_dimension_numbers<[2], [2], [1], [1], [0, 0, 0, 1, 1, 1], [0], [0]>} : vector<2x8x8xbf16>, vector<2x8x8xbf16>, vector<2x8x8xf32> -> vector<2x8x8xf32>
    %cst_328 = arith.constant -1.000000e+09 : f32
    %892 = vector.broadcast %cst_328 : f32 to vector<2x8x8xf32>
    %893 = arith.select %6, %891, %892 : vector<2x8x8xi1>, vector<2x8x8xf32>
    %cst_329 = arith.constant dense<0xFF800000> : vector<2x8xf32>
    %894 = vector.multi_reduction <maximumf>, %893, %cst_329 [2] : vector<2x8x8xf32> to vector<2x8xf32>
    %895 = vector.shape_cast %894 : vector<2x8xf32> to vector<2x8x1xf32>
    %896 = vector.broadcast %895 : vector<2x8x1xf32> to vector<2x8x8xf32>
    %897 = arith.subf %893, %896 : vector<2x8x8xf32>
    %898 = math.exp %897 : vector<2x8x8xf32>
    %cst_330 = arith.constant dense<0.000000e+00> : vector<2x8xf32>
    %899 = vector.multi_reduction <add>, %898, %cst_330 [2] : vector<2x8x8xf32> to vector<2x8xf32>
    %900 = vector.shape_cast %899 : vector<2x8xf32> to vector<2x8x1xf32>
    %901 = tpu.reciprocal %900 {approx = true} : vector<2x8x1xf32> -> vector<2x8x1xf32>
    %902 = vector.broadcast %901 : vector<2x8x1xf32> to vector<2x8x8xf32>
    %903 = arith.mulf %898, %902 : vector<2x8x8xf32>
    %904 = arith.truncf %903 : vector<2x8x8xf32> to vector<2x8x8xbf16>
    %905 = vector.extract_strided_slice %852 {offsets = [0, 0, 16], sizes = [2, 8, 8], strides = [1, 1, 1]} : vector<2x8x32xbf16> to vector<2x8x8xbf16>
    %cst_331 = arith.constant dense<0.000000e+00> : vector<2x8x8xf32>
    %906 = tpu.matmul %904, %905, %cst_331 {dimension_numbers = #tpu.dot_dimension_numbers<[2], [1], [1], [2], [0, 0, 0, 1, 1, 2], [0], [0]>} : vector<2x8x8xbf16>, vector<2x8x8xbf16>, vector<2x8x8xf32> -> vector<2x8x8xf32>
    %907 = vector.extract_strided_slice %848 {offsets = [0, 0, 24], sizes = [2, 8, 8], strides = [1, 1, 1]} : vector<2x8x32xbf16> to vector<2x8x8xbf16>
    %908 = vector.extract_strided_slice %850 {offsets = [0, 0, 24], sizes = [2, 8, 8], strides = [1, 1, 1]} : vector<2x8x32xbf16> to vector<2x8x8xbf16>
    %cst_332 = arith.constant dense<0.000000e+00> : vector<2x8x8xf32>
    %909 = tpu.matmul %907, %908, %cst_332 {dimension_numbers = #tpu.dot_dimension_numbers<[2], [2], [1], [1], [0, 0, 0, 1, 1, 1], [0], [0]>} : vector<2x8x8xbf16>, vector<2x8x8xbf16>, vector<2x8x8xf32> -> vector<2x8x8xf32>
    %cst_333 = arith.constant -1.000000e+09 : f32
    %910 = vector.broadcast %cst_333 : f32 to vector<2x8x8xf32>
    %911 = arith.select %6, %909, %910 : vector<2x8x8xi1>, vector<2x8x8xf32>
    %cst_334 = arith.constant dense<0xFF800000> : vector<2x8xf32>
    %912 = vector.multi_reduction <maximumf>, %911, %cst_334 [2] : vector<2x8x8xf32> to vector<2x8xf32>
    %913 = vector.shape_cast %912 : vector<2x8xf32> to vector<2x8x1xf32>
    %914 = vector.broadcast %913 : vector<2x8x1xf32> to vector<2x8x8xf32>
    %915 = arith.subf %911, %914 : vector<2x8x8xf32>
    %916 = math.exp %915 : vector<2x8x8xf32>
    %cst_335 = arith.constant dense<0.000000e+00> : vector<2x8xf32>
    %917 = vector.multi_reduction <add>, %916, %cst_335 [2] : vector<2x8x8xf32> to vector<2x8xf32>
    %918 = vector.shape_cast %917 : vector<2x8xf32> to vector<2x8x1xf32>
    %919 = tpu.reciprocal %918 {approx = true} : vector<2x8x1xf32> -> vector<2x8x1xf32>
    %920 = vector.broadcast %919 : vector<2x8x1xf32> to vector<2x8x8xf32>
    %921 = arith.mulf %916, %920 : vector<2x8x8xf32>
    %922 = arith.truncf %921 : vector<2x8x8xf32> to vector<2x8x8xbf16>
    %923 = vector.extract_strided_slice %852 {offsets = [0, 0, 24], sizes = [2, 8, 8], strides = [1, 1, 1]} : vector<2x8x32xbf16> to vector<2x8x8xbf16>
    %cst_336 = arith.constant dense<0.000000e+00> : vector<2x8x8xf32>
    %924 = tpu.matmul %922, %923, %cst_336 {dimension_numbers = #tpu.dot_dimension_numbers<[2], [1], [1], [2], [0, 0, 0, 1, 1, 2], [0], [0]>} : vector<2x8x8xbf16>, vector<2x8x8xbf16>, vector<2x8x8xf32> -> vector<2x8x8xf32>
    %925 = tpu.concatenate %870, %888, %906, %924 in 2 : vector<2x8x8xf32>, vector<2x8x8xf32>, vector<2x8x8xf32>, vector<2x8x8xf32> -> vector<2x8x32xf32>
    %926 = vector.shape_cast %925 : vector<2x8x32xf32> to vector<16x32xf32>
    %c7_337 = arith.constant 7 : index
    %c0_338 = arith.constant 0 : index
    %c0_339 = arith.constant 0 : index
    %927 = vector.load %arg3[%c7_337, %c0_338, %c0_339] : memref<8x32x32xbf16, #tpu.memory_space<vmem>>, vector<1x32x32xbf16>
    %928 = vector.shape_cast %927 : vector<1x32x32xbf16> to vector<32x32xbf16>
    %c24 = arith.constant 24 : index
    %c0_340 = arith.constant 0 : index
    %c0_341 = arith.constant 0 : index
    %929 = vector.load %arg9[%c24, %c0_340, %c0_341] : memref<36x1x32xf32, #tpu.memory_space<vmem>>, vector<1x1x32xf32>
    %930 = vector.shape_cast %929 : vector<1x1x32xf32> to vector<1x32xf32>
    %931 = arith.truncf %926 : vector<16x32xf32> to vector<16x32xbf16>
    %cst_342 = arith.constant dense<0.000000e+00> : vector<16x32xf32>
    %932 = tpu.matmul %931, %928, %cst_342 {dimension_numbers = #tpu.dot_dimension_numbers<[1], [0], [0], [1], [0, 0, 1, 1], [], []>} : vector<16x32xbf16>, vector<32x32xbf16>, vector<16x32xf32> -> vector<16x32xf32>
    %933 = vector.broadcast %930 : vector<1x32xf32> to vector<16x32xf32>
    %934 = arith.addf %932, %933 : vector<16x32xf32>
    %935 = arith.addf %828, %934 : vector<16x32xf32>
    %c28 = arith.constant 28 : index
    %c0_343 = arith.constant 0 : index
    %c0_344 = arith.constant 0 : index
    %936 = vector.load %arg9[%c28, %c0_343, %c0_344] : memref<36x1x32xf32, #tpu.memory_space<vmem>>, vector<1x1x32xf32>
    %937 = vector.shape_cast %936 : vector<1x1x32xf32> to vector<1x32xf32>
    %c29 = arith.constant 29 : index
    %c0_345 = arith.constant 0 : index
    %c0_346 = arith.constant 0 : index
    %938 = vector.load %arg9[%c29, %c0_345, %c0_346] : memref<36x1x32xf32, #tpu.memory_space<vmem>>, vector<1x1x32xf32>
    %939 = vector.shape_cast %938 : vector<1x1x32xf32> to vector<1x32xf32>
    %cst_347 = arith.constant dense<0.000000e+00> : vector<16xf32>
    %940 = vector.multi_reduction <add>, %935, %cst_347 [1] : vector<16x32xf32> to vector<16xf32>
    %941 = vector.shape_cast %940 : vector<16xf32> to vector<16x1xf32>
    %cst_348 = arith.constant 3.200000e+01 : f32
    %942 = vector.broadcast %cst_348 : f32 to vector<16x1xf32>
    %943 = arith.divf %941, %942 : vector<16x1xf32>
    %944 = vector.broadcast %943 : vector<16x1xf32> to vector<16x32xf32>
    %945 = arith.subf %935, %944 : vector<16x32xf32>
    %946 = arith.mulf %945, %945 : vector<16x32xf32>
    %cst_349 = arith.constant dense<0.000000e+00> : vector<16xf32>
    %947 = vector.multi_reduction <add>, %946, %cst_349 [1] : vector<16x32xf32> to vector<16xf32>
    %948 = vector.shape_cast %947 : vector<16xf32> to vector<16x1xf32>
    %cst_350 = arith.constant 3.200000e+01 : f32
    %949 = vector.broadcast %cst_350 : f32 to vector<16x1xf32>
    %950 = arith.divf %948, %949 : vector<16x1xf32>
    %951 = vector.broadcast %943 : vector<16x1xf32> to vector<16x32xf32>
    %952 = arith.subf %935, %951 : vector<16x32xf32>
    %cst_351 = arith.constant 9.99999974E-6 : f32
    %953 = vector.broadcast %cst_351 : f32 to vector<16x1xf32>
    %954 = arith.addf %950, %953 : vector<16x1xf32>
    %955 = math.rsqrt %954 : vector<16x1xf32>
    %956 = vector.broadcast %955 : vector<16x1xf32> to vector<16x32xf32>
    %957 = arith.mulf %952, %956 : vector<16x32xf32>
    %958 = vector.broadcast %937 : vector<1x32xf32> to vector<16x32xf32>
    %959 = arith.mulf %957, %958 : vector<16x32xf32>
    %960 = vector.broadcast %939 : vector<1x32xf32> to vector<16x32xf32>
    %961 = arith.addf %959, %960 : vector<16x32xf32>
    %c4_352 = arith.constant 4 : index
    %c0_353 = arith.constant 0 : index
    %c0_354 = arith.constant 0 : index
    %962 = vector.load %arg4[%c4_352, %c0_353, %c0_354] : memref<6x32x64xbf16, #tpu.memory_space<vmem>>, vector<1x32x64xbf16>
    %963 = vector.shape_cast %962 : vector<1x32x64xbf16> to vector<32x64xbf16>
    %c4_355 = arith.constant 4 : index
    %c0_356 = arith.constant 0 : index
    %c0_357 = arith.constant 0 : index
    %964 = vector.load %arg8[%c4_355, %c0_356, %c0_357] : memref<6x1x64xf32, #tpu.memory_space<vmem>>, vector<1x1x64xf32>
    %965 = vector.shape_cast %964 : vector<1x1x64xf32> to vector<1x64xf32>
    %c3_358 = arith.constant 3 : index
    %c0_359 = arith.constant 0 : index
    %c0_360 = arith.constant 0 : index
    %966 = vector.load %arg5[%c3_358, %c0_359, %c0_360] : memref<4x64x32xbf16, #tpu.memory_space<vmem>>, vector<1x64x32xbf16>
    %967 = vector.shape_cast %966 : vector<1x64x32xbf16> to vector<64x32xbf16>
    %c25 = arith.constant 25 : index
    %c0_361 = arith.constant 0 : index
    %c0_362 = arith.constant 0 : index
    %968 = vector.load %arg9[%c25, %c0_361, %c0_362] : memref<36x1x32xf32, #tpu.memory_space<vmem>>, vector<1x1x32xf32>
    %969 = vector.shape_cast %968 : vector<1x1x32xf32> to vector<1x32xf32>
    %970 = arith.truncf %961 : vector<16x32xf32> to vector<16x32xbf16>
    %cst_363 = arith.constant dense<0.000000e+00> : vector<16x64xf32>
    %971 = tpu.matmul %970, %963, %cst_363 {dimension_numbers = #tpu.dot_dimension_numbers<[1], [0], [0], [1], [0, 0, 1, 1], [], []>} : vector<16x32xbf16>, vector<32x64xbf16>, vector<16x64xf32> -> vector<16x64xf32>
    %972 = vector.broadcast %965 : vector<1x64xf32> to vector<16x64xf32>
    %973 = arith.addf %971, %972 : vector<16x64xf32>
    %cst_364 = arith.constant 5.000000e-01 : f32
    %974 = vector.broadcast %cst_364 : f32 to vector<16x64xf32>
    %975 = arith.mulf %974, %973 : vector<16x64xf32>
    %cst_365 = arith.constant 0.707106769 : f32
    %976 = vector.broadcast %cst_365 : f32 to vector<16x64xf32>
    %977 = arith.mulf %973, %976 : vector<16x64xf32>
    %978 = math.erf %977 : vector<16x64xf32>
    %cst_366 = arith.constant 1.000000e+00 : f32
    %979 = vector.broadcast %cst_366 : f32 to vector<16x64xf32>
    %980 = arith.addf %979, %978 : vector<16x64xf32>
    %981 = arith.mulf %975, %980 : vector<16x64xf32>
    %982 = arith.truncf %981 : vector<16x64xf32> to vector<16x64xbf16>
    %cst_367 = arith.constant dense<0.000000e+00> : vector<16x32xf32>
    %983 = tpu.matmul %982, %967, %cst_367 {dimension_numbers = #tpu.dot_dimension_numbers<[1], [0], [0], [1], [0, 0, 1, 1], [], []>} : vector<16x64xbf16>, vector<64x32xbf16>, vector<16x32xf32> -> vector<16x32xf32>
    %984 = vector.broadcast %969 : vector<1x32xf32> to vector<16x32xf32>
    %985 = arith.addf %983, %984 : vector<16x32xf32>
    %986 = arith.addf %961, %985 : vector<16x32xf32>
    %c30 = arith.constant 30 : index
    %c0_368 = arith.constant 0 : index
    %c0_369 = arith.constant 0 : index
    %987 = vector.load %arg9[%c30, %c0_368, %c0_369] : memref<36x1x32xf32, #tpu.memory_space<vmem>>, vector<1x1x32xf32>
    %988 = vector.shape_cast %987 : vector<1x1x32xf32> to vector<1x32xf32>
    %c31 = arith.constant 31 : index
    %c0_370 = arith.constant 0 : index
    %c0_371 = arith.constant 0 : index
    %989 = vector.load %arg9[%c31, %c0_370, %c0_371] : memref<36x1x32xf32, #tpu.memory_space<vmem>>, vector<1x1x32xf32>
    %990 = vector.shape_cast %989 : vector<1x1x32xf32> to vector<1x32xf32>
    %cst_372 = arith.constant dense<0.000000e+00> : vector<16xf32>
    %991 = vector.multi_reduction <add>, %986, %cst_372 [1] : vector<16x32xf32> to vector<16xf32>
    %992 = vector.shape_cast %991 : vector<16xf32> to vector<16x1xf32>
    %cst_373 = arith.constant 3.200000e+01 : f32
    %993 = vector.broadcast %cst_373 : f32 to vector<16x1xf32>
    %994 = arith.divf %992, %993 : vector<16x1xf32>
    %995 = vector.broadcast %994 : vector<16x1xf32> to vector<16x32xf32>
    %996 = arith.subf %986, %995 : vector<16x32xf32>
    %997 = arith.mulf %996, %996 : vector<16x32xf32>
    %cst_374 = arith.constant dense<0.000000e+00> : vector<16xf32>
    %998 = vector.multi_reduction <add>, %997, %cst_374 [1] : vector<16x32xf32> to vector<16xf32>
    %999 = vector.shape_cast %998 : vector<16xf32> to vector<16x1xf32>
    %cst_375 = arith.constant 3.200000e+01 : f32
    %1000 = vector.broadcast %cst_375 : f32 to vector<16x1xf32>
    %1001 = arith.divf %999, %1000 : vector<16x1xf32>
    %1002 = vector.broadcast %994 : vector<16x1xf32> to vector<16x32xf32>
    %1003 = arith.subf %986, %1002 : vector<16x32xf32>
    %cst_376 = arith.constant 9.99999974E-6 : f32
    %1004 = vector.broadcast %cst_376 : f32 to vector<16x1xf32>
    %1005 = arith.addf %1001, %1004 : vector<16x1xf32>
    %1006 = math.rsqrt %1005 : vector<16x1xf32>
    %1007 = vector.broadcast %1006 : vector<16x1xf32> to vector<16x32xf32>
    %1008 = arith.mulf %1003, %1007 : vector<16x32xf32>
    %1009 = vector.broadcast %988 : vector<1x32xf32> to vector<16x32xf32>
    %1010 = arith.mulf %1008, %1009 : vector<16x32xf32>
    %1011 = vector.broadcast %990 : vector<1x32xf32> to vector<16x32xf32>
    %1012 = arith.addf %1010, %1011 : vector<16x32xf32>
    %c34 = arith.constant 34 : index
    %c0_377 = arith.constant 0 : index
    %c0_378 = arith.constant 0 : index
    %1013 = vector.load %arg9[%c34, %c0_377, %c0_378] : memref<36x1x32xf32, #tpu.memory_space<vmem>>, vector<1x1x32xf32>
    %1014 = vector.shape_cast %1013 : vector<1x1x32xf32> to vector<1x32xf32>
    %c35 = arith.constant 35 : index
    %c0_379 = arith.constant 0 : index
    %c0_380 = arith.constant 0 : index
    %1015 = vector.load %arg9[%c35, %c0_379, %c0_380] : memref<36x1x32xf32, #tpu.memory_space<vmem>>, vector<1x1x32xf32>
    %1016 = vector.shape_cast %1015 : vector<1x1x32xf32> to vector<1x32xf32>
    %cst_381 = arith.constant dense<0.000000e+00> : vector<16xf32>
    %1017 = vector.multi_reduction <add>, %1012, %cst_381 [1] : vector<16x32xf32> to vector<16xf32>
    %1018 = vector.shape_cast %1017 : vector<16xf32> to vector<16x1xf32>
    %cst_382 = arith.constant 3.200000e+01 : f32
    %1019 = vector.broadcast %cst_382 : f32 to vector<16x1xf32>
    %1020 = arith.divf %1018, %1019 : vector<16x1xf32>
    %1021 = vector.broadcast %1020 : vector<16x1xf32> to vector<16x32xf32>
    %1022 = arith.subf %1012, %1021 : vector<16x32xf32>
    %1023 = arith.mulf %1022, %1022 : vector<16x32xf32>
    %cst_383 = arith.constant dense<0.000000e+00> : vector<16xf32>
    %1024 = vector.multi_reduction <add>, %1023, %cst_383 [1] : vector<16x32xf32> to vector<16xf32>
    %1025 = vector.shape_cast %1024 : vector<16xf32> to vector<16x1xf32>
    %cst_384 = arith.constant 3.200000e+01 : f32
    %1026 = vector.broadcast %cst_384 : f32 to vector<16x1xf32>
    %1027 = arith.divf %1025, %1026 : vector<16x1xf32>
    %1028 = vector.broadcast %1020 : vector<16x1xf32> to vector<16x32xf32>
    %1029 = arith.subf %1012, %1028 : vector<16x32xf32>
    %cst_385 = arith.constant 9.99999974E-6 : f32
    %1030 = vector.broadcast %cst_385 : f32 to vector<16x1xf32>
    %1031 = arith.addf %1027, %1030 : vector<16x1xf32>
    %1032 = math.rsqrt %1031 : vector<16x1xf32>
    %1033 = vector.broadcast %1032 : vector<16x1xf32> to vector<16x32xf32>
    %1034 = arith.mulf %1029, %1033 : vector<16x32xf32>
    %1035 = vector.broadcast %1014 : vector<1x32xf32> to vector<16x32xf32>
    %1036 = arith.mulf %1034, %1035 : vector<16x32xf32>
    %1037 = vector.broadcast %1016 : vector<1x32xf32> to vector<16x32xf32>
    %1038 = arith.addf %1036, %1037 : vector<16x32xf32>
    %c0_386 = arith.constant 0 : index
    %c0_387 = arith.constant 0 : index
    %1039 = vector.load %arg6[%c0_386, %c0_387] : memref<32x128xbf16, #tpu.memory_space<vmem>>, vector<32x128xbf16>
    %c0_388 = arith.constant 0 : index
    %c0_389 = arith.constant 0 : index
    %1040 = vector.load %arg10[%c0_388, %c0_389] : memref<1x128xf32, #tpu.memory_space<vmem>>, vector<1x128xf32>
    %1041 = arith.truncf %1038 : vector<16x32xf32> to vector<16x32xbf16>
    %cst_390 = arith.constant dense<0.000000e+00> : vector<16x128xf32>
    %1042 = tpu.matmul %1041, %1039, %cst_390 {dimension_numbers = #tpu.dot_dimension_numbers<[1], [0], [0], [1], [0, 0, 1, 1], [], []>} : vector<16x32xbf16>, vector<32x128xbf16>, vector<16x128xf32> -> vector<16x128xf32>
    %1043 = vector.broadcast %1040 : vector<1x128xf32> to vector<16x128xf32>
    %1044 = arith.addf %1042, %1043 : vector<16x128xf32>
    %c0_391 = arith.constant 0 : index
    %c0_392 = arith.constant 0 : index
    %1045 = vector.load %arg11[%c0_391, %c0_392] : memref<16x128xf32, #tpu.memory_space<vmem>>, vector<16x128xf32>
    tpu.vector_store %arg11[%c0_391, %c0_392], %1044 {strides = array<i32>} : memref<16x128xf32, #tpu.memory_space<vmem>>, vector<16x128xf32>,
    return
  }
}

</mosaic_0001>

<llo_original>
// kernel: prometheus_forward.1
$region0: #{prometheus_forward.1}
  #allocation0 [shape = 'u32[]', space=smem, size = 0x4, offset = 0x4, fixed_abs, tag = 'smem constant byte address 0x4 - core index']
  #allocation1 [shape = 'u32[144,128]{1,0:T(1,128)}', space=vmem, size = 0x12000, scoped, tag = 'internal scratch']
  %s0 = inlined_call_operand.vmem [shape: f32[16,32], index: 0, kind: input, shape index: {}]
  %s1 = inlined_call_operand.vmem [shape: f32[2,8], index: 1, kind: input, shape index: {}]
  %s2 = inlined_call_operand.vmem [shape: bf16[4,32,96], index: 2, kind: input, shape index: {}]
  %s3 = inlined_call_operand.vmem [shape: bf16[8,32,32], index: 3, kind: input, shape index: {}]
  %s4 = inlined_call_operand.vmem [shape: bf16[6,32,64], index: 4, kind: input, shape index: {}]
  %s5 = inlined_call_operand.vmem [shape: bf16[4,64,32], index: 5, kind: input, shape index: {}]
  %s6 = inlined_call_operand.vmem [shape: bf16[32,128], index: 6, kind: input, shape index: {}]
  %s7 = inlined_call_operand.vmem [shape: f32[4,1,96], index: 7, kind: input, shape index: {}]
  %s8 = inlined_call_operand.vmem [shape: f32[6,1,64], index: 8, kind: input, shape index: {}]
  %s9 = inlined_call_operand.vmem [shape: f32[36,1,32], index: 9, kind: input, shape index: {}]
  %s10 = inlined_call_operand.vmem [shape: f32[1,128], index: 10, kind: input, shape index: {}]
  %s11 = inlined_call_operand.vmem [shape: f32[16,128], index: 11, kind: output, shape index: {}]
  %s12 = sld [smem:[#allocation0]]
  $region54: #{prometheus_forward.1} parent=0
    _
  %s14 = ssub.s32 1, %s12
  %s15 = scalar_select 0, %s14, %s12
  // Predicated region
  $region2: #{prometheus_forward.1} parent=0 // pred_check
    _
  $region3: #{prometheus_forward.1} parent=0 // pred_check_branch
    %17 = sbr.rel (0) target = $region5
  $region4: #{prometheus_forward.1} parent=0 // pred_region
    _
  $region5: #{prometheus_forward.1} parent=0 // pred_fallthru
    _
  // Predicated region
  $region6: #{prometheus_forward.1} parent=0 // pred_check
    _
  $region7: #{prometheus_forward.1} parent=0 // pred_check_branch
    %19 = sbr.rel (0) target = $region9
  $region8: #{prometheus_forward.1} parent=0 // pred_region
    _
  $region9: #{prometheus_forward.1} parent=0 // pred_fallthru
    _
  // Predicated region
  $region10: #{prometheus_forward.1} parent=0 // pred_check
    _
  $region11: #{prometheus_forward.1} parent=0 // pred_check_branch
    %21 = sbr.rel (0) target = $region13
  $region12: #{prometheus_forward.1} parent=0 // pred_region
    _
  $region13: #{prometheus_forward.1} parent=0 // pred_fallthru
    _
  // Predicated region
  $region14: #{prometheus_forward.1} parent=0 // pred_check
    _
  $region15: #{prometheus_forward.1} parent=0 // pred_check_branch
    %23 = sbr.rel (0) target = $region17
  $region16: #{prometheus_forward.1} parent=0 // pred_region
    _
  $region17: #{prometheus_forward.1} parent=0 // pred_fallthru
    _
  // Predicated region
  $region18: #{prometheus_forward.1} parent=0 // pred_check
    _
  $region19: #{prometheus_forward.1} parent=0 // pred_check_branch
    %25 = sbr.rel (0) target = $region21
  $region20: #{prometheus_forward.1} parent=0 // pred_region
    _
  $region21: #{prometheus_forward.1} parent=0 // pred_fallthru
    _
  // Predicated region
  $region22: #{prometheus_forward.1} parent=0 // pred_check
    _
  $region23: #{prometheus_forward.1} parent=0 // pred_check_branch
    %27 = sbr.rel (0) target = $region25
  $region24: #{prometheus_forward.1} parent=0 // pred_region
    _
  $region25: #{prometheus_forward.1} parent=0 // pred_fallthru
    _
  // Predicated region
  $region26: #{prometheus_forward.1} parent=0 // pred_check
    _
  $region27: #{prometheus_forward.1} parent=0 // pred_check_branch
    %29 = sbr.rel (0) target = $region29
  $region28: #{prometheus_forward.1} parent=0 // pred_region
    _
  $region29: #{prometheus_forward.1} parent=0 // pred_fallthru
    _
  // Predicated region
  $region30: #{prometheus_forward.1} parent=0 // pred_check
    _
  $region31: #{prometheus_forward.1} parent=0 // pred_check_branch
    %31 = sbr.rel (0) target = $region33
  $region32: #{prometheus_forward.1} parent=0 // pred_region
    _
  $region33: #{prometheus_forward.1} parent=0 // pred_fallthru
    _
  // Predicated region
  $region34: #{prometheus_forward.1} parent=0 // pred_check
    _
  $region35: #{prometheus_forward.1} parent=0 // pred_check_branch
    %33 = sbr.rel (0) target = $region37
  $region36: #{prometheus_forward.1} parent=0 // pred_region
    _
  $region37: #{prometheus_forward.1} parent=0 // pred_fallthru
    _
  // Predicated region
  $region38: #{prometheus_forward.1} parent=0 // pred_check
    _
  $region39: #{prometheus_forward.1} parent=0 // pred_check_branch
    %35 = sbr.rel (0) target = $region41
  $region40: #{prometheus_forward.1} parent=0 // pred_region
    _
  $region41: #{prometheus_forward.1} parent=0 // pred_fallthru
    _
  // Predicated region
  $region42: #{prometheus_forward.1} parent=0 // pred_check
    _
  $region43: #{prometheus_forward.1} parent=0 // pred_check_branch
    %37 = sbr.rel (0) target = $region45
  $region44: #{prometheus_forward.1} parent=0 // pred_region
    _
  $region45: #{prometheus_forward.1} parent=0 // pred_fallthru
    _
  %v39 = vld [vmem:[%s0] sm:$0xff]
  %v40 = vld [vmem:[%s0 + $0x8] sm:$0xff]
  %v41 = vld [vmem:[%s1] sm:$0x3]
  %vm42 = vcmp.gt.f32.partialorder %v41, 0.0
  %v43 = vsel %vm42, 1, 0
  %v45 = vunpack.c.l.s4 1966171168
  %v46 = vunpack.c.0.s8 %v45
  %v47 = vlaneseq
  %v48 = vshrl.u32 %v47, 7
  %v49 = vsub.s32 %v46, %v48
  %v50 = vrot.slane %v43, %v49
  %v51 = vcombine.high %v50, %v50
  %v53 = vunpack.c.l.s4 1966171168
  %v54 = vunpack.c.0.s8 %v53
  %v55 = vlaneseq
  %v56 = vshrl.u32 %v55, 7
  %v57 = vsub.s32 %v54, %v56
  %v58 = vrot.slane %v50, %v57
  %v60 = vunpack.c.l.s4 1966171168
  %v61 = vunpack.c.0.s8 %v60
  %v62 = vlaneseq
  %v63 = vshrl.u32 %v62, 7
  %v64 = vsub.s32 %v61, %v63
  %v65 = vrot.slane %v51, %v64
  %vm66 = vcmp.ne.s32.totalorder %v58, 0
  %vm67 = vcmp.ne.s32.totalorder %v65, 0
  %v68 = vsel %vm66, 1, 0
  %v69 = vsel %vm67, 1, 0
  %v70 = vlaneseq
  %v71 = vshrl.u32 %v70, 7
  %v72 = vsub.s32 0, %v71
  %v73 = vrot.slane %v68, %v72
  %v74 = vlaneseq
  %v75 = vshrl.u32 %v74, 7
  %v76 = vsub.s32 0, %v75
  %v77 = vrot.slane %v69, %v76
  %vm78 = vcmp.eq.s32.totalorder %v73, 1
  %vm79 = vcmp.eq.s32.totalorder %v77, 1
  %v80 = vlaneseq
  %v81 = vshrl.u32 %v80, 7
  %v82 = vlaneseq
  %v83 = vand.u32 %v82, 127
  %vm84 = vcmp.le.s32.totalorder %v83, %v81
  %v85 = vsel %vm84, 1, 0
  %vm86 = vcmp.eq.s32.totalorder %v85, 1
  %vm87 = vmand %vm78, %vm86
  %vm88 = vmand %vm79, %vm86
  %v89 = vld [vmem:[%s2] sm:$0xf]
  %v90 = vld [vmem:[%s2 + $0x4] sm:$0xf]
  %v91 = vld [vmem:[%s2 + $0x8] sm:$0xf]
  %v92 = vld [vmem:[%s2 + $0xc] sm:$0xf]
  %v93 = vld [vmem:[%s7] sm:$0x1]
  %v94 = vpack.c.bf16 %v40, %v39
  %v96 = vlaneseq
  %v97 = vshrl.u32 %v96, 7
  %v98 = vsub.s32 0, %v97
  %v99 = vrot.slane %v93, %v98
  %v105 = vunpack.c.l.b16 %v89
  %v106 = vunpack.c.l.b16 %v90
  %v107 = vunpack.c.l.b16 %v91
  %v108 = vunpack.c.l.b16 %v92
  %v109 = vpack.c.b16 %v106, %v105
  %v110 = vpack.c.b16 %v108, %v107
  %vm113 = vcmask 261120
  %v115 = vsel %vm113, %v94, 0
  %117 = vmatprep.subr.bf16.mxu0 0
  %118 = vmatpush1.bf16.msra.mxu0 %v109
  %119 = vmatprep.subr.bf16.mxu0 0
  %120 = vmatpush1.bf16.msra.mxu0 %v110
  %121 = vmatprep.subr.bf16.mxu0 0
  %122 = vmatpush1.bf16.msra.mxu0 0
  %123 = vmatprep.subr.bf16.mxu0 0
  %124 = vmatpush1.bf16.msra.mxu0 0
  %125 = vmatprep.subr.bf16.mxu0 0
  %126 = vmatpush1.bf16.msra.mxu0 0
  %127 = vmatprep.subr.bf16.mxu0 0
  %128 = vmatpush1.bf16.msra.mxu0 0
  %129 = vmatprep.subr.bf16.mxu0 0
  %130 = vmatpush1.bf16.msra.mxu0 0
  %131 = vmatprep.subr.bf16.mxu0 0
  %132 = vmatpush1.bf16.msra.mxu0 0
  %133 = vmatprep.subr.bf16.mxu0 0
  %134 = vmatpush1.bf16.msra.mxu0 0
  %135 = vmatprep.subr.bf16.mxu0 0
  %136 = vmatpush1.bf16.msra.mxu0 0
  %137 = vmatprep.subr.bf16.mxu0 0
  %138 = vmatpush1.bf16.msra.mxu0 0
  %139 = vmatprep.subr.bf16.mxu0 0
  %140 = vmatpush1.bf16.msra.mxu0 0
  %141 = vmatprep.subr.bf16.mxu0 0
  %142 = vmatpush1.bf16.msra.mxu0 0
  %143 = vmatprep.subr.bf16.mxu0 0
  %144 = vmatpush1.bf16.msra.mxu0 0
  %145 = vmatprep.subr.bf16.mxu0 0
  %146 = vmatpush1.bf16.msra.mxu0 0
  %147 = vmatprep.subr.bf16.mxu0 0
  %148 = vmatpush1.bf16.msra.mxu0 0
  %149 = vmatprep.mubr.bf16.mxu0 0
  %150 = vmatmul.mubr.bf16.gmra.mrb[0].mxu0 %v115
  %v151 = vpop.f32.mrb[0].mxu0
  %v152 = vadd.f32 %v99, %v151
  %v153 = vpop.f32.mrb[0].mxu0
  %v154 = vpop.f32.mrb[0].mxu0
  %v155 = vadd.f32 %v99, %v154
  %v156 = vpop.f32.mrb[0].mxu0
  %157 = vdwg.mxu0
  %v158 = vpack.c.bf16 %v152, %v152
  %v159 = vpack.c.bf16 %v155, %v155
  %161 = vrot.lane.b32.xlu0 %v158, 96
  %v162 = vpop.permute.xlu0 %161
  %vm163 = vcmask 64512
  %v165 = vsel %vm163, %v158, 0
  %v168 = vsel %vm163, %v162, 0
  %170 = vmatprep.subr.bf16.mxu0 0
  %171 = vmatpush1.bf16.xpose.msra.mxu0 %v168
  %172 = vmatprep.subr.bf16.mxu0 0
  %173 = vmatpush1.bf16.xpose.msra.mxu0 0
  %174 = vmatprep.subr.bf16.mxu0 0
  %175 = vmatpush1.bf16.xpose.msra.mxu0 0
  %176 = vmatprep.subr.bf16.mxu0 0
  %177 = vmatpush1.bf16.xpose.msra.mxu0 0
  %178 = vmatprep.subr.bf16.mxu0 0
  %179 = vmatpush1.bf16.xpose.msra.mxu0 0
  %180 = vmatprep.subr.bf16.mxu0 0
  %181 = vmatpush1.bf16.xpose.msra.mxu0 0
  %182 = vmatprep.subr.bf16.mxu0 0
  %183 = vmatpush1.bf16.xpose.msra.mxu0 0
  %184 = vmatprep.subr.bf16.mxu0 0
  %185 = vmatpush1.bf16.xpose.msra.mxu0 0
  %186 = vmatprep.subr.bf16.mxu0 0
  %187 = vmatpush1.bf16.xpose.msra.mxu0 0
  %188 = vmatprep.subr.bf16.mxu0 0
  %189 = vmatpush1.bf16.xpose.msra.mxu0 0
  %190 = vmatprep.subr.bf16.mxu0 0
  %191 = vmatpush1.bf16.xpose.msra.mxu0 0
  %192 = vmatprep.subr.bf16.mxu0 0
  %193 = vmatpush1.bf16.xpose.msra.mxu0 0
  %194 = vmatprep.subr.bf16.mxu0 0
  %195 = vmatpush1.bf16.xpose.msra.mxu0 0
  %196 = vmatprep.subr.bf16.mxu0 0
  %197 = vmatpush1.bf16.xpose.msra.mxu0 0
  %198 = vmatprep.subr.bf16.mxu0 0
  %199 = vmatpush1.bf16.xpose.msra.mxu0 0
  %200 = vmatprep.subr.bf16.mxu0 0
  %201 = vmatpush1.bf16.xpose.msra.mxu0 0
  %202 = vmatprep.mubr.bf16.mxu0 0
  %203 = vmatmul.mubr.bf16.gmra.mrb[0].mxu0 %v165
  %v204 = vpop.f32.mrb[0].mxu0
  %v205 = vadd.f32 0.0, %v204
  %v206 = vpop.f32.mrb[0].mxu0
  %v207 = vpop.f32.mrb[0].mxu0
  %v208 = vpop.f32.mrb[0].mxu0
  %209 = vdwg.mxu0
  %211 = vrot.lane.b32.xlu0 %v159, 96
  %v212 = vpop.permute.xlu0 %211
  %v214 = vsel %vm163, %v159, 0
  %v217 = vsel %vm163, %v212, 0
  %219 = vmatprep.subr.bf16.mxu0 0
  %220 = vmatpush1.bf16.xpose.msra.mxu0 %v217
  %221 = vmatprep.subr.bf16.mxu0 0
  %222 = vmatpush1.bf16.xpose.msra.mxu0 0
  %223 = vmatprep.subr.bf16.mxu0 0
  %224 = vmatpush1.bf16.xpose.msra.mxu0 0
  %225 = vmatprep.subr.bf16.mxu0 0
  %226 = vmatpush1.bf16.xpose.msra.mxu0 0
  %227 = vmatprep.subr.bf16.mxu0 0
  %228 = vmatpush1.bf16.xpose.msra.mxu0 0
  %229 = vmatprep.subr.bf16.mxu0 0
  %230 = vmatpush1.bf16.xpose.msra.mxu0 0
  %231 = vmatprep.subr.bf16.mxu0 0
  %232 = vmatpush1.bf16.xpose.msra.mxu0 0
  %233 = vmatprep.subr.bf16.mxu0 0
  %234 = vmatpush1.bf16.xpose.msra.mxu0 0
  %235 = vmatprep.subr.bf16.mxu0 0
  %236 = vmatpush1.bf16.xpose.msra.mxu0 0
  %237 = vmatprep.subr.bf16.mxu0 0
  %238 = vmatpush1.bf16.xpose.msra.mxu0 0
  %239 = vmatprep.subr.bf16.mxu0 0
  %240 = vmatpush1.bf16.xpose.msra.mxu0 0
  %241 = vmatprep.subr.bf16.mxu0 0
  %242 = vmatpush1.bf16.xpose.msra.mxu0 0
  %243 = vmatprep.subr.bf16.mxu0 0
  %244 = vmatpush1.bf16.xpose.msra.mxu0 0
  %245 = vmatprep.subr.bf16.mxu0 0
  %246 = vmatpush1.bf16.xpose.msra.mxu0 0
  %247 = vmatprep.subr.bf16.mxu0 0
  %248 = vmatpush1.bf16.xpose.msra.mxu0 0
  %249 = vmatprep.subr.bf16.mxu0 0
  %250 = vmatpush1.bf16.xpose.msra.mxu0 0
  %251 = vmatprep.mubr.bf16.mxu0 0
  %252 = vmatmul.mubr.bf16.gmra.mrb[0].mxu0 %v214
  %v253 = vpop.f32.mrb[0].mxu0
  %v254 = vadd.f32 0.0, %v253
  %v255 = vpop.f32.mrb[0].mxu0
  %v256 = vpop.f32.mrb[0].mxu0
  %v257 = vpop.f32.mrb[0].mxu0
  %258 = vdwg.mxu0
  %v259 = vsel %vm78, %v205, -1e+09
  %v260 = vsel %vm79, %v254, -1e+09
  %v261 = vsel %vm163, %v259, -inf
  %262 = vmax.xlane.f32.xlu0 %v261
  %v263 = vpop.xlane.xlu0 %262
  %v264 = vsel %vm163, %v260, -inf
  %265 = vmax.xlane.f32.xlu0 %v264
  %v266 = vpop.xlane.xlu0 %265
  %v267 = vsub.f32 %v259, %v263
  %v268 = vsub.f32 %v260, %v266
  %v269 = vmul.f32 %v267, 1.442695
  %v270 = vpow.pop %v269
  %v271 = vmul.f32 %v268, 1.442695
  %v272 = vpow.pop %v271
  %v273 = vsel %vm163, %v270, 0.0
  %274 = vadd.xlane.f32.xlu0 %v273
  %v275 = vpop.xlane.xlu0 %274
  %v276 = vsel %vm163, %v272, 0.0
  %277 = vadd.xlane.f32.xlu0 %v276
  %v278 = vpop.xlane.xlu0 %277
  %v279 = vrcp.pop %v275
  %v280 = vrcp.pop %v278
  %v281 = vmul.f32 %v270, %v279
  %v282 = vmul.f32 %v272, %v280
  %v283 = vpack.c.bf16 %v281, %v281
  %v284 = vpack.c.bf16 %v282, %v282
  %285 = vrot.lane.b32.xlu0 %v158, 64
  %v286 = vpop.permute.xlu0 %285
  %v288 = vsel %vm163, %v283, 0
  %vm290 = vcmask 1043456
  %v292 = vsel %vm290, %v286, 0
  %294 = vmatprep.subr.bf16.mxu0 0
  %295 = vmatpush1.bf16.msra.mxu0 %v292
  %296 = vmatprep.subr.bf16.mxu0 0
  %297 = vmatpush1.bf16.msra.mxu0 0
  %298 = vmatprep.subr.bf16.mxu0 0
  %299 = vmatpush1.bf16.msra.mxu0 0
  %300 = vmatprep.subr.bf16.mxu0 0
  %301 = vmatpush1.bf16.msra.mxu0 0
  %302 = vmatprep.subr.bf16.mxu0 0
  %303 = vmatpush1.bf16.msra.mxu0 0
  %304 = vmatprep.subr.bf16.mxu0 0
  %305 = vmatpush1.bf16.msra.mxu0 0
  %306 = vmatprep.subr.bf16.mxu0 0
  %307 = vmatpush1.bf16.msra.mxu0 0
  %308 = vmatprep.subr.bf16.mxu0 0
  %309 = vmatpush1.bf16.msra.mxu0 0
  %310 = vmatprep.subr.bf16.mxu0 0
  %311 = vmatpush1.bf16.msra.mxu0 0
  %312 = vmatprep.subr.bf16.mxu0 0
  %313 = vmatpush1.bf16.msra.mxu0 0
  %314 = vmatprep.subr.bf16.mxu0 0
  %315 = vmatpush1.bf16.msra.mxu0 0
  %316 = vmatprep.subr.bf16.mxu0 0
  %317 = vmatpush1.bf16.msra.mxu0 0
  %318 = vmatprep.subr.bf16.mxu0 0
  %319 = vmatpush1.bf16.msra.mxu0 0
  %320 = vmatprep.subr.bf16.mxu0 0
  %321 = vmatpush1.bf16.msra.mxu0 0
  %322 = vmatprep.subr.bf16.mxu0 0
  %323 = vmatpush1.bf16.msra.mxu0 0
  %324 = vmatprep.subr.bf16.mxu0 0
  %325 = vmatpush1.bf16.msra.mxu0 0
  %326 = vmatprep.mubr.bf16.mxu0 0
  %327 = vmatmul.mubr.bf16.gmra.mrb[0].mxu0 %v288
  %v328 = vpop.f32.mrb[0].mxu0
  %v329 = vadd.f32 0.0, %v328
  %v330 = vpop.f32.mrb[0].mxu0
  %v331 = vpop.f32.mrb[0].mxu0
  %v332 = vpop.f32.mrb[0].mxu0
  %333 = vdwg.mxu0
  %334 = vrot.lane.b32.xlu0 %v159, 64
  %v335 = vpop.permute.xlu0 %334
  %v337 = vsel %vm163, %v284, 0
  %v340 = vsel %vm290, %v335, 0
  %342 = vmatprep.subr.bf16.mxu0 0
  %343 = vmatpush1.bf16.msra.mxu0 %v340
  %344 = vmatprep.subr.bf16.mxu0 0
  %345 = vmatpush1.bf16.msra.mxu0 0
  %346 = vmatprep.subr.bf16.mxu0 0
  %347 = vmatpush1.bf16.msra.mxu0 0
  %348 = vmatprep.subr.bf16.mxu0 0
  %349 = vmatpush1.bf16.msra.mxu0 0
  %350 = vmatprep.subr.bf16.mxu0 0
  %351 = vmatpush1.bf16.msra.mxu0 0
  %352 = vmatprep.subr.bf16.mxu0 0
  %353 = vmatpush1.bf16.msra.mxu0 0
  %354 = vmatprep.subr.bf16.mxu0 0
  %355 = vmatpush1.bf16.msra.mxu0 0
  %356 = vmatprep.subr.bf16.mxu0 0
  %357 = vmatpush1.bf16.msra.mxu0 0
  %358 = vmatprep.subr.bf16.mxu0 0
  %359 = vmatpush1.bf16.msra.mxu0 0
  %360 = vmatprep.subr.bf16.mxu0 0
  %361 = vmatpush1.bf16.msra.mxu0 0
  %362 = vmatprep.subr.bf16.mxu0 0
  %363 = vmatpush1.bf16.msra.mxu0 0
  %364 = vmatprep.subr.bf16.mxu0 0
  %365 = vmatpush1.bf16.msra.mxu0 0
  %366 = vmatprep.subr.bf16.mxu0 0
  %367 = vmatpush1.bf16.msra.mxu0 0
  %368 = vmatprep.subr.bf16.mxu0 0
  %369 = vmatpush1.bf16.msra.mxu0 0
  %370 = vmatprep.subr.bf16.mxu0 0
  %371 = vmatpush1.bf16.msra.mxu0 0
  %372 = vmatprep.subr.bf16.mxu0 0
  %373 = vmatpush1.bf16.msra.mxu0 0
  %374 = vmatprep.mubr.bf16.mxu0 0
  %375 = vmatmul.mubr.bf16.gmra.mrb[0].mxu0 %v337
  %v376 = vpop.f32.mrb[0].mxu0
  %v377 = vadd.f32 0.0, %v376
  %v378 = vpop.f32.mrb[0].mxu0
  %v379 = vpop.f32.mrb[0].mxu0
  %v380 = vpop.f32.mrb[0].mxu0
  %381 = vdwg.mxu0
  %382 = vrot.lane.b32.xlu0 %v158, 120
  %v383 = vpop.permute.xlu0 %382
  %384 = vrot.lane.b32.xlu0 %v158, 88
  %v385 = vpop.permute.xlu0 %384
  %v387 = vsel %vm163, %v383, 0
  %v390 = vsel %vm163, %v385, 0
  %392 = vmatprep.subr.bf16.mxu0 0
  %393 = vmatpush1.bf16.xpose.msra.mxu0 %v390
  %394 = vmatprep.subr.bf16.mxu0 0
  %395 = vmatpush1.bf16.xpose.msra.mxu0 0
  %396 = vmatprep.subr.bf16.mxu0 0
  %397 = vmatpush1.bf16.xpose.msra.mxu0 0
  %398 = vmatprep.subr.bf16.mxu0 0
  %399 = vmatpush1.bf16.xpose.msra.mxu0 0
  %400 = vmatprep.subr.bf16.mxu0 0
  %401 = vmatpush1.bf16.xpose.msra.mxu0 0
  %402 = vmatprep.subr.bf16.mxu0 0
  %403 = vmatpush1.bf16.xpose.msra.mxu0 0
  %404 = vmatprep.subr.bf16.mxu0 0
  %405 = vmatpush1.bf16.xpose.msra.mxu0 0
  %406 = vmatprep.subr.bf16.mxu0 0
  %407 = vmatpush1.bf16.xpose.msra.mxu0 0
  %408 = vmatprep.subr.bf16.mxu0 0
  %409 = vmatpush1.bf16.xpose.msra.mxu0 0
  %410 = vmatprep.subr.bf16.mxu0 0
  %411 = vmatpush1.bf16.xpose.msra.mxu0 0
  %412 = vmatprep.subr.bf16.mxu0 0
  %413 = vmatpush1.bf16.xpose.msra.mxu0 0
  %414 = vmatprep.subr.bf16.mxu0 0
  %415 = vmatpush1.bf16.xpose.msra.mxu0 0
  %416 = vmatprep.subr.bf16.mxu0 0
  %417 = vmatpush1.bf16.xpose.msra.mxu0 0
  %418 = vmatprep.subr.bf16.mxu0 0
  %419 = vmatpush1.bf16.xpose.msra.mxu0 0
  %420 = vmatprep.subr.bf16.mxu0 0
  %421 = vmatpush1.bf16.xpose.msra.mxu0 0
  %422 = vmatprep.subr.bf16.mxu0 0
  %423 = vmatpush1.bf16.xpose.msra.mxu0 0
  %424 = vmatprep.mubr.bf16.mxu0 0
  %425 = vmatmul.mubr.bf16.gmra.mrb[0].mxu0 %v387
  %v426 = vpop.f32.mrb[0].mxu0
  %v427 = vadd.f32 0.0, %v426
  %v428 = vpop.f32.mrb[0].mxu0
  %v429 = vpop.f32.mrb[0].mxu0
  %v430 = vpop.f32.mrb[0].mxu0
  %431 = vdwg.mxu0
  %432 = vrot.lane.b32.xlu0 %v159, 120
  %v433 = vpop.permute.xlu0 %432
  %434 = vrot.lane.b32.xlu0 %v159, 88
  %v435 = vpop.permute.xlu0 %434
  %v437 = vsel %vm163, %v433, 0
  %v440 = vsel %vm163, %v435, 0
  %442 = vmatprep.subr.bf16.mxu0 0
  %443 = vmatpush1.bf16.xpose.msra.mxu0 %v440
  %444 = vmatprep.subr.bf16.mxu0 0
  %445 = vmatpush1.bf16.xpose.msra.mxu0 0
  %446 = vmatprep.subr.bf16.mxu0 0
  %447 = vmatpush1.bf16.xpose.msra.mxu0 0
  %448 = vmatprep.subr.bf16.mxu0 0
  %449 = vmatpush1.bf16.xpose.msra.mxu0 0
  %450 = vmatprep.subr.bf16.mxu0 0
  %451 = vmatpush1.bf16.xpose.msra.mxu0 0
  %452 = vmatprep.subr.bf16.mxu0 0
  %453 = vmatpush1.bf16.xpose.msra.mxu0 0
  %454 = vmatprep.subr.bf16.mxu0 0
  %455 = vmatpush1.bf16.xpose.msra.mxu0 0
  %456 = vmatprep.subr.bf16.mxu0 0
  %457 = vmatpush1.bf16.xpose.msra.mxu0 0
  %458 = vmatprep.subr.bf16.mxu0 0
  %459 = vmatpush1.bf16.xpose.msra.mxu0 0
  %460 = vmatprep.subr.bf16.mxu0 0
  %461 = vmatpush1.bf16.xpose.msra.mxu0 0
  %462 = vmatprep.subr.bf16.mxu0 0
  %463 = vmatpush1.bf16.xpose.msra.mxu0 0
  %464 = vmatprep.subr.bf16.mxu0 0
  %465 = vmatpush1.bf16.xpose.msra.mxu0 0
  %466 = vmatprep.subr.bf16.mxu0 0
  %467 = vmatpush1.bf16.xpose.msra.mxu0 0
  %468 = vmatprep.subr.bf16.mxu0 0
  %469 = vmatpush1.bf16.xpose.msra.mxu0 0
  %470 = vmatprep.subr.bf16.mxu0 0
  %471 = vmatpush1.bf16.xpose.msra.mxu0 0
  %472 = vmatprep.subr.bf16.mxu0 0
  %473 = vmatpush1.bf16.xpose.msra.mxu0 0
  %474 = vmatprep.mubr.bf16.mxu0 0
  %475 = vmatmul.mubr.bf16.gmra.mrb[0].mxu0 %v437
  %v476 = vpop.f32.mrb[0].mxu0
  %v477 = vadd.f32 0.0, %v476
  %v478 = vpop.f32.mrb[0].mxu0
  %v479 = vpop.f32.mrb[0].mxu0
  %v480 = vpop.f32.mrb[0].mxu0
  %481 = vdwg.mxu0
  %v482 = vsel %vm78, %v427, -1e+09
  %v483 = vsel %vm79, %v477, -1e+09
  %v484 = vsel %vm163, %v482, -inf
  %485 = vmax.xlane.f32.xlu0 %v484
  %v486 = vpop.xlane.xlu0 %485
  %v487 = vsel %vm163, %v483, -inf
  %488 = vmax.xlane.f32.xlu0 %v487
  %v489 = vpop.xlane.xlu0 %488
  %v490 = vsub.f32 %v482, %v486
  %v491 = vsub.f32 %v483, %v489
  %v492 = vmul.f32 %v490, 1.442695
  %v493 = vpow.pop %v492
  %v494 = vmul.f32 %v491, 1.442695
  %v495 = vpow.pop %v494
  %v496 = vsel %vm163, %v493, 0.0
  %497 = vadd.xlane.f32.xlu0 %v496
  %v498 = vpop.xlane.xlu0 %497
  %v499 = vsel %vm163, %v495, 0.0
  %500 = vadd.xlane.f32.xlu0 %v499
  %v501 = vpop.xlane.xlu0 %500
  %v502 = vrcp.pop %v498
  %v503 = vrcp.pop %v501
  %v504 = vmul.f32 %v493, %v502
  %v505 = vmul.f32 %v495, %v503
  %v506 = vpack.c.bf16 %v504, %v504
  %v507 = vpack.c.bf16 %v505, %v505
  %508 = vrot.lane.b32.xlu0 %v158, 56
  %v509 = vpop.permute.xlu0 %508
  %v511 = vsel %vm163, %v506, 0
  %v514 = vsel %vm290, %v509, 0
  %516 = vmatprep.subr.bf16.mxu0 0
  %517 = vmatpush1.bf16.msra.mxu0 %v514
  %518 = vmatprep.subr.bf16.mxu0 0
  %519 = vmatpush1.bf16.msra.mxu0 0
  %520 = vmatprep.subr.bf16.mxu0 0
  %521 = vmatpush1.bf16.msra.mxu0 0
  %522 = vmatprep.subr.bf16.mxu0 0
  %523 = vmatpush1.bf16.msra.mxu0 0
  %524 = vmatprep.subr.bf16.mxu0 0
  %525 = vmatpush1.bf16.msra.mxu0 0
  %526 = vmatprep.subr.bf16.mxu0 0
  %527 = vmatpush1.bf16.msra.mxu0 0
  %528 = vmatprep.subr.bf16.mxu0 0
  %529 = vmatpush1.bf16.msra.mxu0 0
  %530 = vmatprep.subr.bf16.mxu0 0
  %531 = vmatpush1.bf16.msra.mxu0 0
  %532 = vmatprep.subr.bf16.mxu0 0
  %533 = vmatpush1.bf16.msra.mxu0 0
  %534 = vmatprep.subr.bf16.mxu0 0
  %535 = vmatpush1.bf16.msra.mxu0 0
  %536 = vmatprep.subr.bf16.mxu0 0
  %537 = vmatpush1.bf16.msra.mxu0 0
  %538 = vmatprep.subr.bf16.mxu0 0
  %539 = vmatpush1.bf16.msra.mxu0 0
  %540 = vmatprep.subr.bf16.mxu0 0
  %541 = vmatpush1.bf16.msra.mxu0 0
  %542 = vmatprep.subr.bf16.mxu0 0
  %543 = vmatpush1.bf16.msra.mxu0 0
  %544 = vmatprep.subr.bf16.mxu0 0
  %545 = vmatpush1.bf16.msra.mxu0 0
  %546 = vmatprep.subr.bf16.mxu0 0
  %547 = vmatpush1.bf16.msra.mxu0 0
  %548 = vmatprep.mubr.bf16.mxu0 0
  %549 = vmatmul.mubr.bf16.gmra.mrb[0].mxu0 %v511
  %v550 = vpop.f32.mrb[0].mxu0
  %v551 = vadd.f32 0.0, %v550
  %v552 = vpop.f32.mrb[0].mxu0
  %v553 = vpop.f32.mrb[0].mxu0
  %v554 = vpop.f32.mrb[0].mxu0
  %555 = vdwg.mxu0
  %556 = vrot.lane.b32.xlu0 %v159, 56
  %v557 = vpop.permute.xlu0 %556
  %v559 = vsel %vm163, %v507, 0
  %v562 = vsel %vm290, %v557, 0
  %564 = vmatprep.subr.bf16.mxu0 0
  %565 = vmatpush1.bf16.msra.mxu0 %v562
  %566 = vmatprep.subr.bf16.mxu0 0
  %567 = vmatpush1.bf16.msra.mxu0 0
  %568 = vmatprep.subr.bf16.mxu0 0
  %569 = vmatpush1.bf16.msra.mxu0 0
  %570 = vmatprep.subr.bf16.mxu0 0
  %571 = vmatpush1.bf16.msra.mxu0 0
  %572 = vmatprep.subr.bf16.mxu0 0
  %573 = vmatpush1.bf16.msra.mxu0 0
  %574 = vmatprep.subr.bf16.mxu0 0
  %575 = vmatpush1.bf16.msra.mxu0 0
  %576 = vmatprep.subr.bf16.mxu0 0
  %577 = vmatpush1.bf16.msra.mxu0 0
  %578 = vmatprep.subr.bf16.mxu0 0
  %579 = vmatpush1.bf16.msra.mxu0 0
  %580 = vmatprep.subr.bf16.mxu0 0
  %581 = vmatpush1.bf16.msra.mxu0 0
  %582 = vmatprep.subr.bf16.mxu0 0
  %583 = vmatpush1.bf16.msra.mxu0 0
  %584 = vmatprep.subr.bf16.mxu0 0
  %585 = vmatpush1.bf16.msra.mxu0 0
  %586 = vmatprep.subr.bf16.mxu0 0
  %587 = vmatpush1.bf16.msra.mxu0 0
  %588 = vmatprep.subr.bf16.mxu0 0
  %589 = vmatpush1.bf16.msra.mxu0 0
  %590 = vmatprep.subr.bf16.mxu0 0
  %591 = vmatpush1.bf16.msra.mxu0 0
  %592 = vmatprep.subr.bf16.mxu0 0
  %593 = vmatpush1.bf16.msra.mxu0 0
  %594 = vmatprep.subr.bf16.mxu0 0
  %595 = vmatpush1.bf16.msra.mxu0 0
  %596 = vmatprep.mubr.bf16.mxu0 0
  %597 = vmatmul.mubr.bf16.gmra.mrb[0].mxu0 %v559
  %v598 = vpop.f32.mrb[0].mxu0
  %v599 = vadd.f32 0.0, %v598
  %v600 = vpop.f32.mrb[0].mxu0
  %v601 = vpop.f32.mrb[0].mxu0
  %v602 = vpop.f32.mrb[0].mxu0
  %603 = vdwg.mxu0
  %604 = vrot.lane.b32.xlu0 %v158, 112
  %v605 = vpop.permute.xlu0 %604
  %606 = vrot.lane.b32.xlu0 %v158, 80
  %v607 = vpop.permute.xlu0 %606
  %v609 = vsel %vm163, %v605, 0
  %v612 = vsel %vm163, %v607, 0
  %614 = vmatprep.subr.bf16.mxu0 0
  %615 = vmatpush1.bf16.xpose.msra.mxu0 %v612
  %616 = vmatprep.subr.bf16.mxu0 0
  %617 = vmatpush1.bf16.xpose.msra.mxu0 0
  %618 = vmatprep.subr.bf16.mxu0 0
  %619 = vmatpush1.bf16.xpose.msra.mxu0 0
  %620 = vmatprep.subr.bf16.mxu0 0
  %621 = vmatpush1.bf16.xpose.msra.mxu0 0
  %622 = vmatprep.subr.bf16.mxu0 0
  %623 = vmatpush1.bf16.xpose.msra.mxu0 0
  %624 = vmatprep.subr.bf16.mxu0 0
  %625 = vmatpush1.bf16.xpose.msra.mxu0 0
  %626 = vmatprep.subr.bf16.mxu0 0
  %627 = vmatpush1.bf16.xpose.msra.mxu0 0
  %628 = vmatprep.subr.bf16.mxu0 0
  %629 = vmatpush1.bf16.xpose.msra.mxu0 0
  %630 = vmatprep.subr.bf16.mxu0 0
  %631 = vmatpush1.bf16.xpose.msra.mxu0 0
  %632 = vmatprep.subr.bf16.mxu0 0
  %633 = vmatpush1.bf16.xpose.msra.mxu0 0
  %634 = vmatprep.subr.bf16.mxu0 0
  %635 = vmatpush1.bf16.xpose.msra.mxu0 0
  %636 = vmatprep.subr.bf16.mxu0 0
  %637 = vmatpush1.bf16.xpose.msra.mxu0 0
  %638 = vmatprep.subr.bf16.mxu0 0
  %639 = vmatpush1.bf16.xpose.msra.mxu0 0
  %640 = vmatprep.subr.bf16.mxu0 0
  %641 = vmatpush1.bf16.xpose.msra.mxu0 0
  %642 = vmatprep.subr.bf16.mxu0 0
  %643 = vmatpush1.bf16.xpose.msra.mxu0 0
  %644 = vmatprep.subr.bf16.mxu0 0
  %645 = vmatpush1.bf16.xpose.msra.mxu0 0
  %646 = vmatprep.mubr.bf16.mxu0 0
  %647 = vmatmul.mubr.bf16.gmra.mrb[0].mxu0 %v609
  %v648 = vpop.f32.mrb[0].mxu0
  %v649 = vadd.f32 0.0, %v648
  %v650 = vpop.f32.mrb[0].mxu0
  %v651 = vpop.f32.mrb[0].mxu0
  %v652 = vpop.f32.mrb[0].mxu0
  %653 = vdwg.mxu0
  %654 = vrot.lane.b32.xlu0 %v159, 112
  %v655 = vpop.permute.xlu0 %654
  %656 = vrot.lane.b32.xlu0 %v159, 80
  %v657 = vpop.permute.xlu0 %656
  %v659 = vsel %vm163, %v655, 0
  %v662 = vsel %vm163, %v657, 0
  %664 = vmatprep.subr.bf16.mxu0 0
  %665 = vmatpush1.bf16.xpose.msra.mxu0 %v662
  %666 = vmatprep.subr.bf16.mxu0 0
  %667 = vmatpush1.bf16.xpose.msra.mxu0 0
  %668 = vmatprep.subr.bf16.mxu0 0
  %669 = vmatpush1.bf16.xpose.msra.mxu0 0
  %670 = vmatprep.subr.bf16.mxu0 0
  %671 = vmatpush1.bf16.xpose.msra.mxu0 0
  %672 = vmatprep.subr.bf16.mxu0 0
  %673 = vmatpush1.bf16.xpose.msra.mxu0 0
  %674 = vmatprep.subr.bf16.mxu0 0
  %675 = vmatpush1.bf16.xpose.msra.mxu0 0
  %676 = vmatprep.subr.bf16.mxu0 0
  %677 = vmatpush1.bf16.xpose.msra.mxu0 0
  %678 = vmatprep.subr.bf16.mxu0 0
  %679 = vmatpush1.bf16.xpose.msra.mxu0 0
  %680 = vmatprep.subr.bf16.mxu0 0
  %681 = vmatpush1.bf16.xpose.msra.mxu0 0
  %682 = vmatprep.subr.bf16.mxu0 0
  %683 = vmatpush1.bf16.xpose.msra.mxu0 0
  %684 = vmatprep.subr.bf16.mxu0 0
  %685 = vmatpush1.bf16.xpose.msra.mxu0 0
  %686 = vmatprep.subr.bf16.mxu0 0
  %687 = vmatpush1.bf16.xpose.msra.mxu0 0
  %688 = vmatprep.subr.bf16.mxu0 0
  %689 = vmatpush1.bf16.xpose.msra.mxu0 0
  %690 = vmatprep.subr.bf16.mxu0 0
  %691 = vmatpush1.bf16.xpose.msra.mxu0 0
  %692 = vmatprep.subr.bf16.mxu0 0
  %693 = vmatpush1.bf16.xpose.msra.mxu0 0
  %694 = vmatprep.subr.bf16.mxu0 0
  %695 = vmatpush1.bf16.xpose.msra.mxu0 0
  %696 = vmatprep.mubr.bf16.mxu0 0
  %697 = vmatmul.mubr.bf16.gmra.mrb[0].mxu0 %v659
  %v698 = vpop.f32.mrb[0].mxu0
  %v699 = vadd.f32 0.0, %v698
  %v700 = vpop.f32.mrb[0].mxu0
  %v701 = vpop.f32.mrb[0].mxu0
  %v702 = vpop.f32.mrb[0].mxu0
  %703 = vdwg.mxu0
  %v704 = vsel %vm78, %v649, -1e+09
  %v705 = vsel %vm79, %v699, -1e+09
  %v706 = vsel %vm163, %v704, -inf
  %707 = vmax.xlane.f32.xlu0 %v706
  %v708 = vpop.xlane.xlu0 %707
  %v709 = vsel %vm163, %v705, -inf
  %710 = vmax.xlane.f32.xlu0 %v709
  %v711 = vpop.xlane.xlu0 %710
  %v712 = vsub.f32 %v704, %v708
  %v713 = vsub.f32 %v705, %v711
  %v714 = vmul.f32 %v712, 1.442695
  %v715 = vpow.pop %v714
  %v716 = vmul.f32 %v713, 1.442695
  %v717 = vpow.pop %v716
  %v718 = vsel %vm163, %v715, 0.0
  %719 = vadd.xlane.f32.xlu0 %v718
  %v720 = vpop.xlane.xlu0 %719
  %v721 = vsel %vm163, %v717, 0.0
  %722 = vadd.xlane.f32.xlu0 %v721
  %v723 = vpop.xlane.xlu0 %722
  %v724 = vrcp.pop %v720
  %v725 = vrcp.pop %v723
  %v726 = vmul.f32 %v715, %v724
  %v727 = vmul.f32 %v717, %v725
  %v728 = vpack.c.bf16 %v726, %v726
  %v729 = vpack.c.bf16 %v727, %v727
  %730 = vrot.lane.b32.xlu0 %v158, 48
  %v731 = vpop.permute.xlu0 %730
  %v733 = vsel %vm163, %v728, 0
  %v736 = vsel %vm290, %v731, 0
  %738 = vmatprep.subr.bf16.mxu0 0
  %739 = vmatpush1.bf16.msra.mxu0 %v736
  %740 = vmatprep.subr.bf16.mxu0 0
  %741 = vmatpush1.bf16.msra.mxu0 0
  %742 = vmatprep.subr.bf16.mxu0 0
  %743 = vmatpush1.bf16.msra.mxu0 0
  %744 = vmatprep.subr.bf16.mxu0 0
  %745 = vmatpush1.bf16.msra.mxu0 0
  %746 = vmatprep.subr.bf16.mxu0 0
  %747 = vmatpush1.bf16.msra.mxu0 0
  %748 = vmatprep.subr.bf16.mxu0 0
  %749 = vmatpush1.bf16.msra.mxu0 0
  %750 = vmatprep.subr.bf16.mxu0 0
  %751 = vmatpush1.bf16.msra.mxu0 0
  %752 = vmatprep.subr.bf16.mxu0 0
  %753 = vmatpush1.bf16.msra.mxu0 0
  %754 = vmatprep.subr.bf16.mxu0 0
  %755 = vmatpush1.bf16.msra.mxu0 0
  %756 = vmatprep.subr.bf16.mxu0 0
  %757 = vmatpush1.bf16.msra.mxu0 0
  %758 = vmatprep.subr.bf16.mxu0 0
  %759 = vmatpush1.bf16.msra.mxu0 0
  %760 = vmatprep.subr.bf16.mxu0 0
  %761 = vmatpush1.bf16.msra.mxu0 0
  %762 = vmatprep.subr.bf16.mxu0 0
  %763 = vmatpush1.bf16.msra.mxu0 0
  %764 = vmatprep.subr.bf16.mxu0 0
  %765 = vmatpush1.bf16.msra.mxu0 0
  %766 = vmatprep.subr.bf16.mxu0 0
  %767 = vmatpush1.bf16.msra.mxu0 0
  %768 = vmatprep.subr.bf16.mxu0 0
  %769 = vmatpush1.bf16.msra.mxu0 0
  %770 = vmatprep.mubr.bf16.mxu0 0
  %771 = vmatmul.mubr.bf16.gmra.mrb[0].mxu0 %v733
  %v772 = vpop.f32.mrb[0].mxu0
  %v773 = vadd.f32 0.0, %v772
  %v774 = vpop.f32.mrb[0].mxu0
  %v775 = vpop.f32.mrb[0].mxu0
  %v776 = vpop.f32.mrb[0].mxu0
  %777 = vdwg.mxu0
  %778 = vrot.lane.b32.xlu0 %v159, 48
  %v779 = vpop.permute.xlu0 %778
  %v781 = vsel %vm163, %v729, 0
  %v784 = vsel %vm290, %v779, 0
  %786 = vmatprep.subr.bf16.mxu0 0
  %787 = vmatpush1.bf16.msra.mxu0 %v784
  %788 = vmatprep.subr.bf16.mxu0 0
  %789 = vmatpush1.bf16.msra.mxu0 0
  %790 = vmatprep.subr.bf16.mxu0 0
  %791 = vmatpush1.bf16.msra.mxu0 0
  %792 = vmatprep.subr.bf16.mxu0 0
  %793 = vmatpush1.bf16.msra.mxu0 0
  %794 = vmatprep.subr.bf16.mxu0 0
  %795 = vmatpush1.bf16.msra.mxu0 0
  %796 = vmatprep.subr.bf16.mxu0 0
  %797 = vmatpush1.bf16.msra.mxu0 0
  %798 = vmatprep.subr.bf16.mxu0 0
  %799 = vmatpush1.bf16.msra.mxu0 0
  %800 = vmatprep.subr.bf16.mxu0 0
  %801 = vmatpush1.bf16.msra.mxu0 0
  %802 = vmatprep.subr.bf16.mxu0 0
  %803 = vmatpush1.bf16.msra.mxu0 0
  %804 = vmatprep.subr.bf16.mxu0 0
  %805 = vmatpush1.bf16.msra.mxu0 0
  %806 = vmatprep.subr.bf16.mxu0 0
  %807 = vmatpush1.bf16.msra.mxu0 0
  %808 = vmatprep.subr.bf16.mxu0 0
  %809 = vmatpush1.bf16.msra.mxu0 0
  %810 = vmatprep.subr.bf16.mxu0 0
  %811 = vmatpush1.bf16.msra.mxu0 0
  %812 = vmatprep.subr.bf16.mxu0 0
  %813 = vmatpush1.bf16.msra.mxu0 0
  %814 = vmatprep.subr.bf16.mxu0 0
  %815 = vmatpush1.bf16.msra.mxu0 0
  %816 = vmatprep.subr.bf16.mxu0 0
  %817 = vmatpush1.bf16.msra.mxu0 0
  %818 = vmatprep.mubr.bf16.mxu0 0
  %819 = vmatmul.mubr.bf16.gmra.mrb[0].mxu0 %v781
  %v820 = vpop.f32.mrb[0].mxu0
  %v821 = vadd.f32 0.0, %v820
  %v822 = vpop.f32.mrb[0].mxu0
  %v823 = vpop.f32.mrb[0].mxu0
  %v824 = vpop.f32.mrb[0].mxu0
  %825 = vdwg.mxu0
  %826 = vrot.lane.b32.xlu0 %v158, 104
  %v827 = vpop.permute.xlu0 %826
  %828 = vrot.lane.b32.xlu0 %v158, 72
  %v829 = vpop.permute.xlu0 %828
  %v831 = vsel %vm163, %v827, 0
  %v834 = vsel %vm163, %v829, 0
  %836 = vmatprep.subr.bf16.mxu0 0
  %837 = vmatpush1.bf16.xpose.msra.mxu0 %v834
  %838 = vmatprep.subr.bf16.mxu0 0
  %839 = vmatpush1.bf16.xpose.msra.mxu0 0
  %840 = vmatprep.subr.bf16.mxu0 0
  %841 = vmatpush1.bf16.xpose.msra.mxu0 0
  %842 = vmatprep.subr.bf16.mxu0 0
  %843 = vmatpush1.bf16.xpose.msra.mxu0 0
  %844 = vmatprep.subr.bf16.mxu0 0
  %845 = vmatpush1.bf16.xpose.msra.mxu0 0
  %846 = vmatprep.subr.bf16.mxu0 0
  %847 = vmatpush1.bf16.xpose.msra.mxu0 0
  %848 = vmatprep.subr.bf16.mxu0 0
  %849 = vmatpush1.bf16.xpose.msra.mxu0 0
  %850 = vmatprep.subr.bf16.mxu0 0
  %851 = vmatpush1.bf16.xpose.msra.mxu0 0
  %852 = vmatprep.subr.bf16.mxu0 0
  %853 = vmatpush1.bf16.xpose.msra.mxu0 0
  %854 = vmatprep.subr.bf16.mxu0 0
  %855 = vmatpush1.bf16.xpose.msra.mxu0 0
  %856 = vmatprep.subr.bf16.mxu0 0
  %857 = vmatpush1.bf16.xpose.msra.mxu0 0
  %858 = vmatprep.subr.bf16.mxu0 0
  %859 = vmatpush1.bf16.xpose.msra.mxu0 0
  %860 = vmatprep.subr.bf16.mxu0 0
  %861 = vmatpush1.bf16.xpose.msra.mxu0 0
  %862 = vmatprep.subr.bf16.mxu0 0
  %863 = vmatpush1.bf16.xpose.msra.mxu0 0
  %864 = vmatprep.subr.bf16.mxu0 0
  %865 = vmatpush1.bf16.xpose.msra.mxu0 0
  %866 = vmatprep.subr.bf16.mxu0 0
  %867 = vmatpush1.bf16.xpose.msra.mxu0 0
  %868 = vmatprep.mubr.bf16.mxu0 0
  %869 = vmatmul.mubr.bf16.gmra.mrb[0].mxu0 %v831
  %v870 = vpop.f32.mrb[0].mxu0
  %v871 = vadd.f32 0.0, %v870
  %v872 = vpop.f32.mrb[0].mxu0
  %v873 = vpop.f32.mrb[0].mxu0
  %v874 = vpop.f32.mrb[0].mxu0
  %875 = vdwg.mxu0
  %876 = vrot.lane.b32.xlu0 %v159, 104
  %v877 = vpop.permute.xlu0 %876
  %878 = vrot.lane.b32.xlu0 %v159, 72
  %v879 = vpop.permute.xlu0 %878
  %v881 = vsel %vm163, %v877, 0
  %v884 = vsel %vm163, %v879, 0
  %886 = vmatprep.subr.bf16.mxu0 0
  %887 = vmatpush1.bf16.xpose.msra.mxu0 %v884
  %888 = vmatprep.subr.bf16.mxu0 0
  %889 = vmatpush1.bf16.xpose.msra.mxu0 0
  %890 = vmatprep.subr.bf16.mxu0 0
  %891 = vmatpush1.bf16.xpose.msra.mxu0 0
  %892 = vmatprep.subr.bf16.mxu0 0
  %893 = vmatpush1.bf16.xpose.msra.mxu0 0
  %894 = vmatprep.subr.bf16.mxu0 0
  %895 = vmatpush1.bf16.xpose.msra.mxu0 0
  %896 = vmatprep.subr.bf16.mxu0 0
  %897 = vmatpush1.bf16.xpose.msra.mxu0 0
  %898 = vmatprep.subr.bf16.mxu0 0
  %899 = vmatpush1.bf16.xpose.msra.mxu0 0
  %900 = vmatprep.subr.bf16.mxu0 0
  %901 = vmatpush1.bf16.xpose.msra.mxu0 0
  %902 = vmatprep.subr.bf16.mxu0 0
  %903 = vmatpush1.bf16.xpose.msra.mxu0 0
  %904 = vmatprep.subr.bf16.mxu0 0
  %905 = vmatpush1.bf16.xpose.msra.mxu0 0
  %906 = vmatprep.subr.bf16.mxu0 0
  %907 = vmatpush1.bf16.xpose.msra.mxu0 0
  %908 = vmatprep.subr.bf16.mxu0 0
  %909 = vmatpush1.bf16.xpose.msra.mxu0 0
  %910 = vmatprep.subr.bf16.mxu0 0
  %911 = vmatpush1.bf16.xpose.msra.mxu0 0
  %912 = vmatprep.subr.bf16.mxu0 0
  %913 = vmatpush1.bf16.xpose.msra.mxu0 0
  %914 = vmatprep.subr.bf16.mxu0 0
  %915 = vmatpush1.bf16.xpose.msra.mxu0 0
  %916 = vmatprep.subr.bf16.mxu0 0
  %917 = vmatpush1.bf16.xpose.msra.mxu0 0
  %918 = vmatprep.mubr.bf16.mxu0 0
  %919 = vmatmul.mubr.bf16.gmra.mrb[0].mxu0 %v881
  %v920 = vpop.f32.mrb[0].mxu0
  %v921 = vadd.f32 0.0, %v920
  %v922 = vpop.f32.mrb[0].mxu0
  %v923 = vpop.f32.mrb[0].mxu0
  %v924 = vpop.f32.mrb[0].mxu0
  %925 = vdwg.mxu0
  %v926 = vsel %vm78, %v871, -1e+09
  %v927 = vsel %vm79, %v921, -1e+09
  %v928 = vsel %vm163, %v926, -inf
  %929 = vmax.xlane.f32.xlu0 %v928
  %v930 = vpop.xlane.xlu0 %929
  %v931 = vsel %vm163, %v927, -inf
  %932 = vmax.xlane.f32.xlu0 %v931
  %v933 = vpop.xlane.xlu0 %932
  %v934 = vsub.f32 %v926, %v930
  %v935 = vsub.f32 %v927, %v933
  %v936 = vmul.f32 %v934, 1.442695
  %v937 = vpow.pop %v936
  %v938 = vmul.f32 %v935, 1.442695
  %v939 = vpow.pop %v938
  %v940 = vsel %vm163, %v937, 0.0
  %941 = vadd.xlane.f32.xlu0 %v940
  %v942 = vpop.xlane.xlu0 %941
  %v943 = vsel %vm163, %v939, 0.0
  %944 = vadd.xlane.f32.xlu0 %v943
  %v945 = vpop.xlane.xlu0 %944
  %v946 = vrcp.pop %v942
  %v947 = vrcp.pop %v945
  %v948 = vmul.f32 %v937, %v946
  %v949 = vmul.f32 %v939, %v947
  %v950 = vpack.c.bf16 %v948, %v948
  %v951 = vpack.c.bf16 %v949, %v949
  %952 = vrot.lane.b32.xlu0 %v158, 40
  %v953 = vpop.permute.xlu0 %952
  %v955 = vsel %vm163, %v950, 0
  %v958 = vsel %vm290, %v953, 0
  %960 = vmatprep.subr.bf16.mxu0 0
  %961 = vmatpush1.bf16.msra.mxu0 %v958
  %962 = vmatprep.subr.bf16.mxu0 0
  %963 = vmatpush1.bf16.msra.mxu0 0
  %964 = vmatprep.subr.bf16.mxu0 0
  %965 = vmatpush1.bf16.msra.mxu0 0
  %966 = vmatprep.subr.bf16.mxu0 0
  %967 = vmatpush1.bf16.msra.mxu0 0
  %968 = vmatprep.subr.bf16.mxu0 0
  %969 = vmatpush1.bf16.msra.mxu0 0
  %970 = vmatprep.subr.bf16.mxu0 0
  %971 = vmatpush1.bf16.msra.mxu0 0
  %972 = vmatprep.subr.bf16.mxu0 0
  %973 = vmatpush1.bf16.msra.mxu0 0
  %974 = vmatprep.subr.bf16.mxu0 0
  %975 = vmatpush1.bf16.msra.mxu0 0
  %976 = vmatprep.subr.bf16.mxu0 0
  %977 = vmatpush1.bf16.msra.mxu0 0
  %978 = vmatprep.subr.bf16.mxu0 0
  %979 = vmatpush1.bf16.msra.mxu0 0
  %980 = vmatprep.subr.bf16.mxu0 0
  %981 = vmatpush1.bf16.msra.mxu0 0
  %982 = vmatprep.subr.bf16.mxu0 0
  %983 = vmatpush1.bf16.msra.mxu0 0
  %984 = vmatprep.subr.bf16.mxu0 0
  %985 = vmatpush1.bf16.msra.mxu0 0
  %986 = vmatprep.subr.bf16.mxu0 0
  %987 = vmatpush1.bf16.msra.mxu0 0
  %988 = vmatprep.subr.bf16.mxu0 0
  %989 = vmatpush1.bf16.msra.mxu0 0
  %990 = vmatprep.subr.bf16.mxu0 0
  %991 = vmatpush1.bf16.msra.mxu0 0
  %992 = vmatprep.mubr.bf16.mxu0 0
  %993 = vmatmul.mubr.bf16.gmra.mrb[0].mxu0 %v955
  %v994 = vpop.f32.mrb[0].mxu0
  %v995 = vadd.f32 0.0, %v994
  %v996 = vpop.f32.mrb[0].mxu0
  %v997 = vpop.f32.mrb[0].mxu0
  %v998 = vpop.f32.mrb[0].mxu0
  %999 = vdwg.mxu0
  %1000 = vrot.lane.b32.xlu0 %v159, 40
  %v1001 = vpop.permute.xlu0 %1000
  %v1003 = vsel %vm163, %v951, 0
  %v1006 = vsel %vm290, %v1001, 0
  %1008 = vmatprep.subr.bf16.mxu0 0
  %1009 = vmatpush1.bf16.msra.mxu0 %v1006
  %1010 = vmatprep.subr.bf16.mxu0 0
  %1011 = vmatpush1.bf16.msra.mxu0 0
  %1012 = vmatprep.subr.bf16.mxu0 0
  %1013 = vmatpush1.bf16.msra.mxu0 0
  %1014 = vmatprep.subr.bf16.mxu0 0
  %1015 = vmatpush1.bf16.msra.mxu0 0
  %1016 = vmatprep.subr.bf16.mxu0 0
  %1017 = vmatpush1.bf16.msra.mxu0 0
  %1018 = vmatprep.subr.bf16.mxu0 0
  %1019 = vmatpush1.bf16.msra.mxu0 0
  %1020 = vmatprep.subr.bf16.mxu0 0
  %1021 = vmatpush1.bf16.msra.mxu0 0
  %1022 = vmatprep.subr.bf16.mxu0 0
  %1023 = vmatpush1.bf16.msra.mxu0 0
  %1024 = vmatprep.subr.bf16.mxu0 0
  %1025 = vmatpush1.bf16.msra.mxu0 0
  %1026 = vmatprep.subr.bf16.mxu0 0
  %1027 = vmatpush1.bf16.msra.mxu0 0
  %1028 = vmatprep.subr.bf16.mxu0 0
  %1029 = vmatpush1.bf16.msra.mxu0 0
  %1030 = vmatprep.subr.bf16.mxu0 0
  %1031 = vmatpush1.bf16.msra.mxu0 0
  %1032 = vmatprep.subr.bf16.mxu0 0
  %1033 = vmatpush1.bf16.msra.mxu0 0
  %1034 = vmatprep.subr.bf16.mxu0 0
  %1035 = vmatpush1.bf16.msra.mxu0 0
  %1036 = vmatprep.subr.bf16.mxu0 0
  %1037 = vmatpush1.bf16.msra.mxu0 0
  %1038 = vmatprep.subr.bf16.mxu0 0
  %1039 = vmatpush1.bf16.msra.mxu0 0
  %1040 = vmatprep.mubr.bf16.mxu0 0
  %1041 = vmatmul.mubr.bf16.gmra.mrb[0].mxu0 %v1003
  %v1042 = vpop.f32.mrb[0].mxu0
  %v1043 = vadd.f32 0.0, %v1042
  %v1044 = vpop.f32.mrb[0].mxu0
  %v1045 = vpop.f32.mrb[0].mxu0
  %v1046 = vpop.f32.mrb[0].mxu0
  %1047 = vdwg.mxu0
  %1050 = vrot.lane.b32.xlu0 %v551, 8
  %v1051 = vpop.permute.xlu0 %1050
  %1052 = vrot.lane.b32.xlu0 %v599, 8
  %v1053 = vpop.permute.xlu0 %1052
  %1058 = vrot.lane.b32.xlu0 %v773, 16
  %v1059 = vpop.permute.xlu0 %1058
  %1060 = vrot.lane.b32.xlu0 %v821, 16
  %v1061 = vpop.permute.xlu0 %1060
  %1066 = vrot.lane.b32.xlu0 %v995, 24
  %v1067 = vpop.permute.xlu0 %1066
  %1068 = vrot.lane.b32.xlu0 %v1043, 24
  %v1069 = vpop.permute.xlu0 %1068
  %v1072 = vsel %vm163, %v329, %v1051
  %v1073 = vsel %vm163, %v377, %v1053
  %vm1074 = vcmask 130048
  %v1075 = vsel %vm1074, %v1072, %v1059
  %v1076 = vsel %vm1074, %v1073, %v1061
  %vm1077 = vcmask 195584
  %v1078 = vsel %vm1077, %v1075, %v1067
  %v1079 = vsel %vm1077, %v1076, %v1069
  %v1080 = vld [vmem:[%s3] sm:$0xf]
  %v1081 = vld [vmem:[%s3 + $0x4] sm:$0xf]
  %v1082 = vld [vmem:[%s3 + $0x8] sm:$0xf]
  %v1083 = vld [vmem:[%s3 + $0xc] sm:$0xf]
  %v1084 = vld [vmem:[%s9] sm:$0x1]
  %v1085 = vpack.c.bf16 %v1079, %v1078
  %v1087 = vlaneseq
  %v1088 = vshrl.u32 %v1087, 7
  %v1089 = vsub.s32 0, %v1088
  %v1090 = vrot.slane %v1084, %v1089
  %v1096 = vunpack.c.l.b16 %v1080
  %v1097 = vunpack.c.l.b16 %v1081
  %v1098 = vunpack.c.l.b16 %v1082
  %v1099 = vunpack.c.l.b16 %v1083
  %v1100 = vpack.c.b16 %v1097, %v1096
  %v1101 = vpack.c.b16 %v1099, %v1098
  %v1105 = vsel %vm113, %v1085, 0
  %1107 = vmatprep.subr.bf16.mxu0 0
  %1108 = vmatpush1.bf16.msra.mxu0 %v1100
  %1109 = vmatprep.subr.bf16.mxu0 0
  %1110 = vmatpush1.bf16.msra.mxu0 %v1101
  %1111 = vmatprep.subr.bf16.mxu0 0
  %1112 = vmatpush1.bf16.msra.mxu0 0
  %1113 = vmatprep.subr.bf16.mxu0 0
  %1114 = vmatpush1.bf16.msra.mxu0 0
  %1115 = vmatprep.subr.bf16.mxu0 0
  %1116 = vmatpush1.bf16.msra.mxu0 0
  %1117 = vmatprep.subr.bf16.mxu0 0
  %1118 = vmatpush1.bf16.msra.mxu0 0
  %1119 = vmatprep.subr.bf16.mxu0 0
  %1120 = vmatpush1.bf16.msra.mxu0 0
  %1121 = vmatprep.subr.bf16.mxu0 0
  %1122 = vmatpush1.bf16.msra.mxu0 0
  %1123 = vmatprep.subr.bf16.mxu0 0
  %1124 = vmatpush1.bf16.msra.mxu0 0
  %1125 = vmatprep.subr.bf16.mxu0 0
  %1126 = vmatpush1.bf16.msra.mxu0 0
  %1127 = vmatprep.subr.bf16.mxu0 0
  %1128 = vmatpush1.bf16.msra.mxu0 0
  %1129 = vmatprep.subr.bf16.mxu0 0
  %1130 = vmatpush1.bf16.msra.mxu0 0
  %1131 = vmatprep.subr.bf16.mxu0 0
  %1132 = vmatpush1.bf16.msra.mxu0 0
  %1133 = vmatprep.subr.bf16.mxu0 0
  %1134 = vmatpush1.bf16.msra.mxu0 0
  %1135 = vmatprep.subr.bf16.mxu0 0
  %1136 = vmatpush1.bf16.msra.mxu0 0
  %1137 = vmatprep.subr.bf16.mxu0 0
  %1138 = vmatpush1.bf16.msra.mxu0 0
  %1139 = vmatprep.mubr.bf16.mxu0 0
  %1140 = vmatmul.mubr.bf16.gmra.mrb[0].mxu0 %v1105
  %v1141 = vpop.f32.mrb[0].mxu0
  %v1142 = vadd.f32 %v1090, %v1141
  %v1143 = vpop.f32.mrb[0].mxu0
  %v1144 = vpop.f32.mrb[0].mxu0
  %v1145 = vadd.f32 %v1090, %v1144
  %v1146 = vpop.f32.mrb[0].mxu0
  %1147 = vdwg.mxu0
  %v1148 = vadd.f32 %v39, %v1142
  %v1149 = vadd.f32 %v40, %v1145
  %s1150 = scalar_lea.vmem %s9, 2
  %v1151 = vld [vmem:[%s1150] sm:$0x1]
  %s1152 = scalar_lea.vmem %s9, 3
  %v1153 = vld [vmem:[%s1152] sm:$0x1]
  %v1154 = vsel %vm113, %v1148, 0.0
  %1155 = vadd.xlane.f32.xlu0 %v1154
  %v1156 = vpop.xlane.xlu0 %1155
  %v1157 = vsel %vm113, %v1149, 0.0
  %1158 = vadd.xlane.f32.xlu0 %v1157
  %v1159 = vpop.xlane.xlu0 %1158
  %v1160 = vrcp.pop 32.0
  %v1161 = vmul.f32 %v1156, %v1160
  %v1162 = vmul.f32 %v1159, %v1160
  %v1163 = vsub.f32 %v1148, %v1161
  %v1164 = vsub.f32 %v1149, %v1162
  %v1165 = vmul.f32 %v1163, %v1163
  %v1166 = vmul.f32 %v1164, %v1164
  %v1167 = vsel %vm113, %v1165, 0.0
  %1168 = vadd.xlane.f32.xlu0 %v1167
  %v1169 = vpop.xlane.xlu0 %1168
  %v1170 = vsel %vm113, %v1166, 0.0
  %1171 = vadd.xlane.f32.xlu0 %v1170
  %v1172 = vpop.xlane.xlu0 %1171
  %v1173 = vmul.f32 %v1169, %v1160
  %v1174 = vmul.f32 %v1172, %v1160
  %v1175 = vadd.f32 %v1173, 1e-05
  %v1176 = vadd.f32 %v1174, 1e-05
  %v1177 = vrsqrt.pop %v1175
  %v1178 = vrsqrt.pop %v1176
  %v1179 = vmul.f32 %v1163, %v1177
  %v1180 = vmul.f32 %v1164, %v1178
  %v1182 = vlaneseq
  %v1183 = vshrl.u32 %v1182, 7
  %v1184 = vsub.s32 0, %v1183
  %v1185 = vrot.slane %v1151, %v1184
  %v1187 = vmul.f32 %v1179, %v1185
  %v1188 = vmul.f32 %v1180, %v1185
  %v1190 = vlaneseq
  %v1191 = vshrl.u32 %v1190, 7
  %v1192 = vsub.s32 0, %v1191
  %v1193 = vrot.slane %v1153, %v1192
  %v1195 = vadd.f32 %v1187, %v1193
  %v1196 = vadd.f32 %v1188, %v1193
  %v1197 = vld [vmem:[%s4] sm:$0xf]
  %v1198 = vld [vmem:[%s4 + $0x4] sm:$0xf]
  %v1199 = vld [vmem:[%s4 + $0x8] sm:$0xf]
  %v1200 = vld [vmem:[%s4 + $0xc] sm:$0xf]
  %v1201 = vld [vmem:[%s8] sm:$0x1]
  %v1202 = vld [vmem:[%s5] sm:$0xf]
  %v1203 = vld [vmem:[%s5 + $0x4] sm:$0xf]
  %v1204 = vld [vmem:[%s5 + $0x8] sm:$0xf]
  %v1205 = vld [vmem:[%s5 + $0xc] sm:$0xf]
  %v1206 = vld [vmem:[%s5 + $0x10] sm:$0xf]
  %v1207 = vld [vmem:[%s5 + $0x14] sm:$0xf]
  %v1208 = vld [vmem:[%s5 + $0x18] sm:$0xf]
  %v1209 = vld [vmem:[%s5 + $0x1c] sm:$0xf]
  %s1210 = scalar_lea.vmem %s9, 1
  %v1211 = vld [vmem:[%s1210] sm:$0x1]
  %v1212 = vpack.c.bf16 %v1196, %v1195
  %v1214 = vlaneseq
  %v1215 = vshrl.u32 %v1214, 7
  %v1216 = vsub.s32 0, %v1215
  %v1217 = vrot.slane %v1201, %v1216
  %v1223 = vunpack.c.l.b16 %v1197
  %v1224 = vunpack.c.l.b16 %v1198
  %v1225 = vunpack.c.l.b16 %v1199
  %v1226 = vunpack.c.l.b16 %v1200
  %v1227 = vpack.c.b16 %v1224, %v1223
  %v1228 = vpack.c.b16 %v1226, %v1225
  %v1232 = vsel %vm113, %v1212, 0
  %1234 = vmatprep.subr.bf16.mxu0 0
  %1235 = vmatpush1.bf16.msra.mxu0 %v1227
  %1236 = vmatprep.subr.bf16.mxu0 0
  %1237 = vmatpush1.bf16.msra.mxu0 %v1228
  %1238 = vmatprep.subr.bf16.mxu0 0
  %1239 = vmatpush1.bf16.msra.mxu0 0
  %1240 = vmatprep.subr.bf16.mxu0 0
  %1241 = vmatpush1.bf16.msra.mxu0 0
  %1242 = vmatprep.subr.bf16.mxu0 0
  %1243 = vmatpush1.bf16.msra.mxu0 0
  %1244 = vmatprep.subr.bf16.mxu0 0
  %1245 = vmatpush1.bf16.msra.mxu0 0
  %1246 = vmatprep.subr.bf16.mxu0 0
  %1247 = vmatpush1.bf16.msra.mxu0 0
  %1248 = vmatprep.subr.bf16.mxu0 0
  %1249 = vmatpush1.bf16.msra.mxu0 0
  %1250 = vmatprep.subr.bf16.mxu0 0
  %1251 = vmatpush1.bf16.msra.mxu0 0
  %1252 = vmatprep.subr.bf16.mxu0 0
  %1253 = vmatpush1.bf16.msra.mxu0 0
  %1254 = vmatprep.subr.bf16.mxu0 0
  %1255 = vmatpush1.bf16.msra.mxu0 0
  %1256 = vmatprep.subr.bf16.mxu0 0
  %1257 = vmatpush1.bf16.msra.mxu0 0
  %1258 = vmatprep.subr.bf16.mxu0 0
  %1259 = vmatpush1.bf16.msra.mxu0 0
  %1260 = vmatprep.subr.bf16.mxu0 0
  %1261 = vmatpush1.bf16.msra.mxu0 0
  %1262 = vmatprep.subr.bf16.mxu0 0
  %1263 = vmatpush1.bf16.msra.mxu0 0
  %1264 = vmatprep.subr.bf16.mxu0 0
  %1265 = vmatpush1.bf16.msra.mxu0 0
  %1266 = vmatprep.mubr.bf16.mxu0 0
  %1267 = vmatmul.mubr.bf16.gmra.mrb[0].mxu0 %v1232
  %v1268 = vpop.f32.mrb[0].mxu0
  %v1269 = vadd.f32 %v1217, %v1268
  %v1270 = vpop.f32.mrb[0].mxu0
  %v1271 = vpop.f32.mrb[0].mxu0
  %v1272 = vadd.f32 %v1217, %v1271
  %v1273 = vpop.f32.mrb[0].mxu0
  %1274 = vdwg.mxu0
  %v1275 = vmul.f32 %v1269, 0.5
  %v1276 = vmul.f32 %v1272, 0.5
  %v1277 = vmul.f32 %v1269, 0.70710677
  %v1278 = vmul.f32 %v1272, 0.70710677
  %v1279 = verf.f32.pop %v1277
  %v1280 = verf.f32.pop %v1278
  %v1281 = vadd.f32 %v1279, 1.0
  %v1282 = vadd.f32 %v1280, 1.0
  %v1283 = vmul.f32 %v1275, %v1281
  %v1284 = vmul.f32 %v1276, %v1282
  %v1285 = vpack.c.bf16 %v1284, %v1283
  %v1287 = vlaneseq
  %v1288 = vshrl.u32 %v1287, 7
  %v1289 = vsub.s32 0, %v1288
  %v1290 = vrot.slane %v1211, %v1289
  %v1300 = vunpack.c.l.b16 %v1202
  %v1301 = vunpack.c.l.b16 %v1203
  %v1302 = vunpack.c.l.b16 %v1204
  %v1303 = vunpack.c.l.b16 %v1205
  %v1304 = vunpack.c.l.b16 %v1206
  %v1305 = vunpack.c.l.b16 %v1207
  %v1306 = vunpack.c.l.b16 %v1208
  %v1307 = vunpack.c.l.b16 %v1209
  %v1308 = vpack.c.b16 %v1301, %v1300
  %v1309 = vpack.c.b16 %v1303, %v1302
  %v1310 = vpack.c.b16 %v1305, %v1304
  %v1311 = vpack.c.b16 %v1307, %v1306
  %vm1316 = vcmask 523264
  %v1318 = vsel %vm1316, %v1285, 0
  %1320 = vmatprep.subr.bf16.mxu0 0
  %1321 = vmatpush1.bf16.msra.mxu0 %v1308
  %1322 = vmatprep.subr.bf16.mxu0 0
  %1323 = vmatpush1.bf16.msra.mxu0 %v1309
  %1324 = vmatprep.subr.bf16.mxu0 0
  %1325 = vmatpush1.bf16.msra.mxu0 %v1310
  %1326 = vmatprep.subr.bf16.mxu0 0
  %1327 = vmatpush1.bf16.msra.mxu0 %v1311
  %1328 = vmatprep.subr.bf16.mxu0 0
  %1329 = vmatpush1.bf16.msra.mxu0 0
  %1330 = vmatprep.subr.bf16.mxu0 0
  %1331 = vmatpush1.bf16.msra.mxu0 0
  %1332 = vmatprep.subr.bf16.mxu0 0
  %1333 = vmatpush1.bf16.msra.mxu0 0
  %1334 = vmatprep.subr.bf16.mxu0 0
  %1335 = vmatpush1.bf16.msra.mxu0 0
  %1336 = vmatprep.subr.bf16.mxu0 0
  %1337 = vmatpush1.bf16.msra.mxu0 0
  %1338 = vmatprep.subr.bf16.mxu0 0
  %1339 = vmatpush1.bf16.msra.mxu0 0
  %1340 = vmatprep.subr.bf16.mxu0 0
  %1341 = vmatpush1.bf16.msra.mxu0 0
  %1342 = vmatprep.subr.bf16.mxu0 0
  %1343 = vmatpush1.bf16.msra.mxu0 0
  %1344 = vmatprep.subr.bf16.mxu0 0
  %1345 = vmatpush1.bf16.msra.mxu0 0
  %1346 = vmatprep.subr.bf16.mxu0 0
  %1347 = vmatpush1.bf16.msra.mxu0 0
  %1348 = vmatprep.subr.bf16.mxu0 0
  %1349 = vmatpush1.bf16.msra.mxu0 0
  %1350 = vmatprep.subr.bf16.mxu0 0
  %1351 = vmatpush1.bf16.msra.mxu0 0
  %1352 = vmatprep.mubr.bf16.mxu0 0
  %1353 = vmatmul.mubr.bf16.gmra.mrb[0].mxu0 %v1318
  %v1354 = vpop.f32.mrb[0].mxu0
  %v1355 = vadd.f32 %v1290, %v1354
  %v1356 = vpop.f32.mrb[0].mxu0
  %v1357 = vpop.f32.mrb[0].mxu0
  %v1358 = vadd.f32 %v1290, %v1357
  %v1359 = vpop.f32.mrb[0].mxu0
  %1360 = vdwg.mxu0
  %v1361 = vadd.f32 %v1195, %v1355
  %v1362 = vadd.f32 %v1196, %v1358
  %s1363 = scalar_lea.vmem %s9, 4
  %v1364 = vld [vmem:[%s1363] sm:$0x1]
  %s1365 = scalar_lea.vmem %s9, 5
  %v1366 = vld [vmem:[%s1365] sm:$0x1]
  %v1367 = vsel %vm113, %v1361, 0.0
  %1368 = vadd.xlane.f32.xlu0 %v1367
  %v1369 = vpop.xlane.xlu0 %1368
  %v1370 = vsel %vm113, %v1362, 0.0
  %1371 = vadd.xlane.f32.xlu0 %v1370
  %v1372 = vpop.xlane.xlu0 %1371
  %v1373 = vmul.f32 %v1369, %v1160
  %v1374 = vmul.f32 %v1372, %v1160
  %v1375 = vsub.f32 %v1361, %v1373
  %v1376 = vsub.f32 %v1362, %v1374
  %v1377 = vmul.f32 %v1375, %v1375
  %v1378 = vmul.f32 %v1376, %v1376
  %v1379 = vsel %vm113, %v1377, 0.0
  %1380 = vadd.xlane.f32.xlu0 %v1379
  %v1381 = vpop.xlane.xlu0 %1380
  %v1382 = vsel %vm113, %v1378, 0.0
  %1383 = vadd.xlane.f32.xlu0 %v1382
  %v1384 = vpop.xlane.xlu0 %1383
  %v1385 = vmul.f32 %v1381, %v1160
  %v1386 = vmul.f32 %v1384, %v1160
  %v1387 = vadd.f32 %v1385, 1e-05
  %v1388 = vadd.f32 %v1386, 1e-05
  %v1389 = vrsqrt.pop %v1387
  %v1390 = vrsqrt.pop %v1388
  %v1391 = vmul.f32 %v1375, %v1389
  %v1392 = vmul.f32 %v1376, %v1390
  %v1394 = vlaneseq
  %v1395 = vshrl.u32 %v1394, 7
  %v1396 = vsub.s32 0, %v1395
  %v1397 = vrot.slane %v1364, %v1396
  %v1399 = vmul.f32 %v1391, %v1397
  %v1400 = vmul.f32 %v1392, %v1397
  %v1402 = vlaneseq
  %v1403 = vshrl.u32 %v1402, 7
  %v1404 = vsub.s32 0, %v1403
  %v1405 = vrot.slane %v1366, %v1404
  %v1407 = vadd.f32 %v1399, %v1405
  %v1408 = vadd.f32 %v1400, %v1405
  %s1409 = scalar_lea.vmem %s2, 16
  %v1410 = vld [vmem:[%s1409] sm:$0xf]
  %v1411 = vld [vmem:[%s1409 + $0x4] sm:$0xf]
  %v1412 = vld [vmem:[%s1409 + $0x8] sm:$0xf]
  %v1413 = vld [vmem:[%s1409 + $0xc] sm:$0xf]
  %s1414 = scalar_lea.vmem %s7, 1
  %v1415 = vld [vmem:[%s1414] sm:$0x1]
  %v1416 = vpack.c.bf16 %v1408, %v1407
  %v1418 = vlaneseq
  %v1419 = vshrl.u32 %v1418, 7
  %v1420 = vsub.s32 0, %v1419
  %v1421 = vrot.slane %v1415, %v1420
  %v1427 = vunpack.c.l.b16 %v1410
  %v1428 = vunpack.c.l.b16 %v1411
  %v1429 = vunpack.c.l.b16 %v1412
  %v1430 = vunpack.c.l.b16 %v1413
  %v1431 = vpack.c.b16 %v1428, %v1427
  %v1432 = vpack.c.b16 %v1430, %v1429
  %v1436 = vsel %vm113, %v1416, 0
  %1438 = vmatprep.subr.bf16.mxu0 0
  %1439 = vmatpush1.bf16.msra.mxu0 %v1431
  %1440 = vmatprep.subr.bf16.mxu0 0
  %1441 = vmatpush1.bf16.msra.mxu0 %v1432
  %1442 = vmatprep.subr.bf16.mxu0 0
  %1443 = vmatpush1.bf16.msra.mxu0 0
  %1444 = vmatprep.subr.bf16.mxu0 0
  %1445 = vmatpush1.bf16.msra.mxu0 0
  %1446 = vmatprep.subr.bf16.mxu0 0
  %1447 = vmatpush1.bf16.msra.mxu0 0
  %1448 = vmatprep.subr.bf16.mxu0 0
  %1449 = vmatpush1.bf16.msra.mxu0 0
  %1450 = vmatprep.subr.bf16.mxu0 0
  %1451 = vmatpush1.bf16.msra.mxu0 0
  %1452 = vmatprep.subr.bf16.mxu0 0
  %1453 = vmatpush1.bf16.msra.mxu0 0
  %1454 = vmatprep.subr.bf16.mxu0 0
  %1455 = vmatpush1.bf16.msra.mxu0 0
  %1456 = vmatprep.subr.bf16.mxu0 0
  %1457 = vmatpush1.bf16.msra.mxu0 0
  %1458 = vmatprep.subr.bf16.mxu0 0
  %1459 = vmatpush1.bf16.msra.mxu0 0
  %1460 = vmatprep.subr.bf16.mxu0 0
  %1461 = vmatpush1.bf16.msra.mxu0 0
  %1462 = vmatprep.subr.bf16.mxu0 0
  %1463 = vmatpush1.bf16.msra.mxu0 0
  %1464 = vmatprep.subr.bf16.mxu0 0
  %1465 = vmatpush1.bf16.msra.mxu0 0
  %1466 = vmatprep.subr.bf16.mxu0 0
  %1467 = vmatpush1.bf16.msra.mxu0 0
  %1468 = vmatprep.subr.bf16.mxu0 0
  %1469 = vmatpush1.bf16.msra.mxu0 0
  %1470 = vmatprep.mubr.bf16.mxu0 0
  %1471 = vmatmul.mubr.bf16.gmra.mrb[0].mxu0 %v1436
  %v1472 = vpop.f32.mrb[0].mxu0
  %v1473 = vadd.f32 %v1421, %v1472
  %v1474 = vpop.f32.mrb[0].mxu0
  %v1475 = vpop.f32.mrb[0].mxu0
  %v1476 = vadd.f32 %v1421, %v1475
  %v1477 = vpop.f32.mrb[0].mxu0
  %1478 = vdwg.mxu0
  %v1479 = vpack.c.bf16 %v1473, %v1473
  %v1480 = vpack.c.bf16 %v1476, %v1476
  %1482 = vrot.lane.b32.xlu0 %v1479, 96
  %v1483 = vpop.permute.xlu0 %1482
  %v1485 = vsel %vm163, %v1479, 0
  %v1488 = vsel %vm163, %v1483, 0
  %1490 = vmatprep.subr.bf16.mxu0 0
  %1491 = vmatpush1.bf16.xpose.msra.mxu0 %v1488
  %1492 = vmatprep.subr.bf16.mxu0 0
  %1493 = vmatpush1.bf16.xpose.msra.mxu0 0
  %1494 = vmatprep.subr.bf16.mxu0 0
  %1495 = vmatpush1.bf16.xpose.msra.mxu0 0
  %1496 = vmatprep.subr.bf16.mxu0 0
  %1497 = vmatpush1.bf16.xpose.msra.mxu0 0
  %1498 = vmatprep.subr.bf16.mxu0 0
  %1499 = vmatpush1.bf16.xpose.msra.mxu0 0
  %1500 = vmatprep.subr.bf16.mxu0 0
  %1501 = vmatpush1.bf16.xpose.msra.mxu0 0
  %1502 = vmatprep.subr.bf16.mxu0 0
  %1503 = vmatpush1.bf16.xpose.msra.mxu0 0
  %1504 = vmatprep.subr.bf16.mxu0 0
  %1505 = vmatpush1.bf16.xpose.msra.mxu0 0
  %1506 = vmatprep.subr.bf16.mxu0 0
  %1507 = vmatpush1.bf16.xpose.msra.mxu0 0
  %1508 = vmatprep.subr.bf16.mxu0 0
  %1509 = vmatpush1.bf16.xpose.msra.mxu0 0
  %1510 = vmatprep.subr.bf16.mxu0 0
  %1511 = vmatpush1.bf16.xpose.msra.mxu0 0
  %1512 = vmatprep.subr.bf16.mxu0 0
  %1513 = vmatpush1.bf16.xpose.msra.mxu0 0
  %1514 = vmatprep.subr.bf16.mxu0 0
  %1515 = vmatpush1.bf16.xpose.msra.mxu0 0
  %1516 = vmatprep.subr.bf16.mxu0 0
  %1517 = vmatpush1.bf16.xpose.msra.mxu0 0
  %1518 = vmatprep.subr.bf16.mxu0 0
  %1519 = vmatpush1.bf16.xpose.msra.mxu0 0
  %1520 = vmatprep.subr.bf16.mxu0 0
  %1521 = vmatpush1.bf16.xpose.msra.mxu0 0
  %1522 = vmatprep.mubr.bf16.mxu0 0
  %1523 = vmatmul.mubr.bf16.gmra.mrb[0].mxu0 %v1485
  %v1524 = vpop.f32.mrb[0].mxu0
  %v1525 = vadd.f32 0.0, %v1524
  %v1526 = vpop.f32.mrb[0].mxu0
  %v1527 = vpop.f32.mrb[0].mxu0
  %v1528 = vpop.f32.mrb[0].mxu0
  %1529 = vdwg.mxu0
  %1531 = vrot.lane.b32.xlu0 %v1480, 96
  %v1532 = vpop.permute.xlu0 %1531
  %v1534 = vsel %vm163, %v1480, 0
  %v1537 = vsel %vm163, %v1532, 0
  %1539 = vmatprep.subr.bf16.mxu0 0
  %1540 = vmatpush1.bf16.xpose.msra.mxu0 %v1537
  %1541 = vmatprep.subr.bf16.mxu0 0
  %1542 = vmatpush1.bf16.xpose.msra.mxu0 0
  %1543 = vmatprep.subr.bf16.mxu0 0
  %1544 = vmatpush1.bf16.xpose.msra.mxu0 0
  %1545 = vmatprep.subr.bf16.mxu0 0
  %1546 = vmatpush1.bf16.xpose.msra.mxu0 0
  %1547 = vmatprep.subr.bf16.mxu0 0
  %1548 = vmatpush1.bf16.xpose.msra.mxu0 0
  %1549 = vmatprep.subr.bf16.mxu0 0
  %1550 = vmatpush1.bf16.xpose.msra.mxu0 0
  %1551 = vmatprep.subr.bf16.mxu0 0
  %1552 = vmatpush1.bf16.xpose.msra.mxu0 0
  %1553 = vmatprep.subr.bf16.mxu0 0
  %1554 = vmatpush1.bf16.xpose.msra.mxu0 0
  %1555 = vmatprep.subr.bf16.mxu0 0
  %1556 = vmatpush1.bf16.xpose.msra.mxu0 0
  %1557 = vmatprep.subr.bf16.mxu0 0
  %1558 = vmatpush1.bf16.xpose.msra.mxu0 0
  %1559 = vmatprep.subr.bf16.mxu0 0
  %1560 = vmatpush1.bf16.xpose.msra.mxu0 0
  %1561 = vmatprep.subr.bf16.mxu0 0
  %1562 = vmatpush1.bf16.xpose.msra.mxu0 0
  %1563 = vmatprep.subr.bf16.mxu0 0
  %1564 = vmatpush1.bf16.xpose.msra.mxu0 0
  %1565 = vmatprep.subr.bf16.mxu0 0
  %1566 = vmatpush1.bf16.xpose.msra.mxu0 0
  %1567 = vmatprep.subr.bf16.mxu0 0
  %1568 = vmatpush1.bf16.xpose.msra.mxu0 0
  %1569 = vmatprep.subr.bf16.mxu0 0
  %1570 = vmatpush1.bf16.xpose.msra.mxu0 0
  %1571 = vmatprep.mubr.bf16.mxu0 0
  %1572 = vmatmul.mubr.bf16.gmra.mrb[0].mxu0 %v1534
  %v1573 = vpop.f32.mrb[0].mxu0
  %v1574 = vadd.f32 0.0, %v1573
  %v1575 = vpop.f32.mrb[0].mxu0
  %v1576 = vpop.f32.mrb[0].mxu0
  %v1577 = vpop.f32.mrb[0].mxu0
  %1578 = vdwg.mxu0
  %v1579 = vsel %vm78, %v1525, -1e+09
  %v1580 = vsel %vm79, %v1574, -1e+09
  %v1581 = vsel %vm163, %v1579, -inf
  %1582 = vmax.xlane.f32.xlu0 %v1581
  %v1583 = vpop.xlane.xlu0 %1582
  %v1584 = vsel %vm163, %v1580, -inf
  %1585 = vmax.xlane.f32.xlu0 %v1584
  %v1586 = vpop.xlane.xlu0 %1585
  %v1587 = vsub.f32 %v1579, %v1583
  %v1588 = vsub.f32 %v1580, %v1586
  %v1589 = vmul.f32 %v1587, 1.442695
  %v1590 = vpow.pop %v1589
  %v1591 = vmul.f32 %v1588, 1.442695
  %v1592 = vpow.pop %v1591
  %v1593 = vsel %vm163, %v1590, 0.0
  %1594 = vadd.xlane.f32.xlu0 %v1593
  %v1595 = vpop.xlane.xlu0 %1594
  %v1596 = vsel %vm163, %v1592, 0.0
  %1597 = vadd.xlane.f32.xlu0 %v1596
  %v1598 = vpop.xlane.xlu0 %1597
  %v1599 = vrcp.pop %v1595
  %v1600 = vrcp.pop %v1598
  %v1601 = vmul.f32 %v1590, %v1599
  %v1602 = vmul.f32 %v1592, %v1600
  %v1603 = vpack.c.bf16 %v1601, %v1601
  %v1604 = vpack.c.bf16 %v1602, %v1602
  %1605 = vrot.lane.b32.xlu0 %v1479, 64
  %v1606 = vpop.permute.xlu0 %1605
  %v1608 = vsel %vm163, %v1603, 0
  %v1611 = vsel %vm290, %v1606, 0
  %1613 = vmatprep.subr.bf16.mxu0 0
  %1614 = vmatpush1.bf16.msra.mxu0 %v1611
  %1615 = vmatprep.subr.bf16.mxu0 0
  %1616 = vmatpush1.bf16.msra.mxu0 0
  %1617 = vmatprep.subr.bf16.mxu0 0
  %1618 = vmatpush1.bf16.msra.mxu0 0
  %1619 = vmatprep.subr.bf16.mxu0 0
  %1620 = vmatpush1.bf16.msra.mxu0 0
  %1621 = vmatprep.subr.bf16.mxu0 0
  %1622 = vmatpush1.bf16.msra.mxu0 0
  %1623 = vmatprep.subr.bf16.mxu0 0
  %1624 = vmatpush1.bf16.msra.mxu0 0
  %1625 = vmatprep.subr.bf16.mxu0 0
  %1626 = vmatpush1.bf16.msra.mxu0 0
  %1627 = vmatprep.subr.bf16.mxu0 0
  %1628 = vmatpush1.bf16.msra.mxu0 0
  %1629 = vmatprep.subr.bf16.mxu0 0
  %1630 = vmatpush1.bf16.msra.mxu0 0
  %1631 = vmatprep.subr.bf16.mxu0 0
  %1632 = vmatpush1.bf16.msra.mxu0 0
  %1633 = vmatprep.subr.bf16.mxu0 0
  %1634 = vmatpush1.bf16.msra.mxu0 0
  %1635 = vmatprep.subr.bf16.mxu0 0
  %1636 = vmatpush1.bf16.msra.mxu0 0
  %1637 = vmatprep.subr.bf16.mxu0 0
  %1638 = vmatpush1.bf16.msra.mxu0 0
  %1639 = vmatprep.subr.bf16.mxu0 0
  %1640 = vmatpush1.bf16.msra.mxu0 0
  %1641 = vmatprep.subr.bf16.mxu0 0
  %1642 = vmatpush1.bf16.msra.mxu0 0
  %1643 = vmatprep.subr.bf16.mxu0 0
  %1644 = vmatpush1.bf16.msra.mxu0 0
  %1645 = vmatprep.mubr.bf16.mxu0 0
  %1646 = vmatmul.mubr.bf16.gmra.mrb[0].mxu0 %v1608
  %v1647 = vpop.f32.mrb[0].mxu0
  %v1648 = vadd.f32 0.0, %v1647
  %v1649 = vpop.f32.mrb[0].mxu0
  %v1650 = vpop.f32.mrb[0].mxu0
  %v1651 = vpop.f32.mrb[0].mxu0
  %1652 = vdwg.mxu0
  %1653 = vrot.lane.b32.xlu0 %v1480, 64
  %v1654 = vpop.permute.xlu0 %1653
  %v1656 = vsel %vm163, %v1604, 0
  %v1659 = vsel %vm290, %v1654, 0
  %1661 = vmatprep.subr.bf16.mxu0 0
  %1662 = vmatpush1.bf16.msra.mxu0 %v1659
  %1663 = vmatprep.subr.bf16.mxu0 0
  %1664 = vmatpush1.bf16.msra.mxu0 0
  %1665 = vmatprep.subr.bf16.mxu0 0
  %1666 = vmatpush1.bf16.msra.mxu0 0
  %1667 = vmatprep.subr.bf16.mxu0 0
  %1668 = vmatpush1.bf16.msra.mxu0 0
  %1669 = vmatprep.subr.bf16.mxu0 0
  %1670 = vmatpush1.bf16.msra.mxu0 0
  %1671 = vmatprep.subr.bf16.mxu0 0
  %1672 = vmatpush1.bf16.msra.mxu0 0
  %1673 = vmatprep.subr.bf16.mxu0 0
  %1674 = vmatpush1.bf16.msra.mxu0 0
  %1675 = vmatprep.subr.bf16.mxu0 0
  %1676 = vmatpush1.bf16.msra.mxu0 0
  %1677 = vmatprep.subr.bf16.mxu0 0
  %1678 = vmatpush1.bf16.msra.mxu0 0
  %1679 = vmatprep.subr.bf16.mxu0 0
  %1680 = vmatpush1.bf16.msra.mxu0 0
  %1681 = vmatprep.subr.bf16.mxu0 0
  %1682 = vmatpush1.bf16.msra.mxu0 0
  %1683 = vmatprep.subr.bf16.mxu0 0
  %1684 = vmatpush1.bf16.msra.mxu0 0
  %1685 = vmatprep.subr.bf16.mxu0 0
  %1686 = vmatpush1.bf16.msra.mxu0 0
  %1687 = vmatprep.subr.bf16.mxu0 0
  %1688 = vmatpush1.bf16.msra.mxu0 0
  %1689 = vmatprep.subr.bf16.mxu0 0
  %1690 = vmatpush1.bf16.msra.mxu0 0
  %1691 = vmatprep.subr.bf16.mxu0 0
  %1692 = vmatpush1.bf16.msra.mxu0 0
  %1693 = vmatprep.mubr.bf16.mxu0 0
  %1694 = vmatmul.mubr.bf16.gmra.mrb[0].mxu0 %v1656
  %v1695 = vpop.f32.mrb[0].mxu0
  %v1696 = vadd.f32 0.0, %v1695
  %v1697 = vpop.f32.mrb[0].mxu0
  %v1698 = vpop.f32.mrb[0].mxu0
  %v1699 = vpop.f32.mrb[0].mxu0
  %1700 = vdwg.mxu0
  %1701 = vrot.lane.b32.xlu0 %v1479, 120
  %v1702 = vpop.permute.xlu0 %1701
  %1703 = vrot.lane.b32.xlu0 %v1479, 88
  %v1704 = vpop.permute.xlu0 %1703
  %v1706 = vsel %vm163, %v1702, 0
  %v1709 = vsel %vm163, %v1704, 0
  %1711 = vmatprep.subr.bf16.mxu0 0
  %1712 = vmatpush1.bf16.xpose.msra.mxu0 %v1709
  %1713 = vmatprep.subr.bf16.mxu0 0
  %1714 = vmatpush1.bf16.xpose.msra.mxu0 0
  %1715 = vmatprep.subr.bf16.mxu0 0
  %1716 = vmatpush1.bf16.xpose.msra.mxu0 0
  %1717 = vmatprep.subr.bf16.mxu0 0
  %1718 = vmatpush1.bf16.xpose.msra.mxu0 0
  %1719 = vmatprep.subr.bf16.mxu0 0
  %1720 = vmatpush1.bf16.xpose.msra.mxu0 0
  %1721 = vmatprep.subr.bf16.mxu0 0
  %1722 = vmatpush1.bf16.xpose.msra.mxu0 0
  %1723 = vmatprep.subr.bf16.mxu0 0
  %1724 = vmatpush1.bf16.xpose.msra.mxu0 0
  %1725 = vmatprep.subr.bf16.mxu0 0
  %1726 = vmatpush1.bf16.xpose.msra.mxu0 0
  %1727 = vmatprep.subr.bf16.mxu0 0
  %1728 = vmatpush1.bf16.xpose.msra.mxu0 0
  %1729 = vmatprep.subr.bf16.mxu0 0
  %1730 = vmatpush1.bf16.xpose.msra.mxu0 0
  %1731 = vmatprep.subr.bf16.mxu0 0
  %1732 = vmatpush1.bf16.xpose.msra.mxu0 0
  %1733 = vmatprep.subr.bf16.mxu0 0
  %1734 = vmatpush1.bf16.xpose.msra.mxu0 0
  %1735 = vmatprep.subr.bf16.mxu0 0
  %1736 = vmatpush1.bf16.xpose.msra.mxu0 0
  %1737 = vmatprep.subr.bf16.mxu0 0
  %1738 = vmatpush1.bf16.xpose.msra.mxu0 0
  %1739 = vmatprep.subr.bf16.mxu0 0
  %1740 = vmatpush1.bf16.xpose.msra.mxu0 0
  %1741 = vmatprep.subr.bf16.mxu0 0
  %1742 = vmatpush1.bf16.xpose.msra.mxu0 0
  %1743 = vmatprep.mubr.bf16.mxu0 0
  %1744 = vmatmul.mubr.bf16.gmra.mrb[0].mxu0 %v1706
  %v1745 = vpop.f32.mrb[0].mxu0
  %v1746 = vadd.f32 0.0, %v1745
  %v1747 = vpop.f32.mrb[0].mxu0
  %v1748 = vpop.f32.mrb[0].mxu0
  %v1749 = vpop.f32.mrb[0].mxu0
  %1750 = vdwg.mxu0
  %1751 = vrot.lane.b32.xlu0 %v1480, 120
  %v1752 = vpop.permute.xlu0 %1751
  %1753 = vrot.lane.b32.xlu0 %v1480, 88
  %v1754 = vpop.permute.xlu0 %1753
  %v1756 = vsel %vm163, %v1752, 0
  %v1759 = vsel %vm163, %v1754, 0
  %1761 = vmatprep.subr.bf16.mxu0 0
  %1762 = vmatpush1.bf16.xpose.msra.mxu0 %v1759
  %1763 = vmatprep.subr.bf16.mxu0 0
  %1764 = vmatpush1.bf16.xpose.msra.mxu0 0
  %1765 = vmatprep.subr.bf16.mxu0 0
  %1766 = vmatpush1.bf16.xpose.msra.mxu0 0
  %1767 = vmatprep.subr.bf16.mxu0 0
  %1768 = vmatpush1.bf16.xpose.msra.mxu0 0
  %1769 = vmatprep.subr.bf16.mxu0 0
  %1770 = vmatpush1.bf16.xpose.msra.mxu0 0
  %1771 = vmatprep.subr.bf16.mxu0 0
  %1772 = vmatpush1.bf16.xpose.msra.mxu0 0
  %1773 = vmatprep.subr.bf16.mxu0 0
  %1774 = vmatpush1.bf16.xpose.msra.mxu0 0
  %1775 = vmatprep.subr.bf16.mxu0 0
  %1776 = vmatpush1.bf16.xpose.msra.mxu0 0
  %1777 = vmatprep.subr.bf16.mxu0 0
  %1778 = vmatpush1.bf16.xpose.msra.mxu0 0
  %1779 = vmatprep.subr.bf16.mxu0 0
  %1780 = vmatpush1.bf16.xpose.msra.mxu0 0
  %1781 = vmatprep.subr.bf16.mxu0 0
  %1782 = vmatpush1.bf16.xpose.msra.mxu0 0
  %1783 = vmatprep.subr.bf16.mxu0 0
  %1784 = vmatpush1.bf16.xpose.msra.mxu0 0
  %1785 = vmatprep.subr.bf16.mxu0 0
  %1786 = vmatpush1.bf16.xpose.msra.mxu0 0
  %1787 = vmatprep.subr.bf16.mxu0 0
  %1788 = vmatpush1.bf16.xpose.msra.mxu0 0
  %1789 = vmatprep.subr.bf16.mxu0 0
  %1790 = vmatpush1.bf16.xpose.msra.mxu0 0
  %1791 = vmatprep.subr.bf16.mxu0 0
  %1792 = vmatpush1.bf16.xpose.msra.mxu0 0
  %1793 = vmatprep.mubr.bf16.mxu0 0
  %1794 = vmatmul.mubr.bf16.gmra.mrb[0].mxu0 %v1756
  %v1795 = vpop.f32.mrb[0].mxu0
  %v1796 = vadd.f32 0.0, %v1795
  %v1797 = vpop.f32.mrb[0].mxu0
  %v1798 = vpop.f32.mrb[0].mxu0
  %v1799 = vpop.f32.mrb[0].mxu0
  %1800 = vdwg.mxu0
  %v1801 = vsel %vm78, %v1746, -1e+09
  %v1802 = vsel %vm79, %v1796, -1e+09
  %v1803 = vsel %vm163, %v1801, -inf
  %1804 = vmax.xlane.f32.xlu0 %v1803
  %v1805 = vpop.xlane.xlu0 %1804
  %v1806 = vsel %vm163, %v1802, -inf
  %1807 = vmax.xlane.f32.xlu0 %v1806
  %v1808 = vpop.xlane.xlu0 %1807
  %v1809 = vsub.f32 %v1801, %v1805
  %v1810 = vsub.f32 %v1802, %v1808
  %v1811 = vmul.f32 %v1809, 1.442695
  %v1812 = vpow.pop %v1811
  %v1813 = vmul.f32 %v1810, 1.442695
  %v1814 = vpow.pop %v1813
  %v1815 = vsel %vm163, %v1812, 0.0
  %1816 = vadd.xlane.f32.xlu0 %v1815
  %v1817 = vpop.xlane.xlu0 %1816
  %v1818 = vsel %vm163, %v1814, 0.0
  %1819 = vadd.xlane.f32.xlu0 %v1818
  %v1820 = vpop.xlane.xlu0 %1819
  %v1821 = vrcp.pop %v1817
  %v1822 = vrcp.pop %v1820
  %v1823 = vmul.f32 %v1812, %v1821
  %v1824 = vmul.f32 %v1814, %v1822
  %v1825 = vpack.c.bf16 %v1823, %v1823
  %v1826 = vpack.c.bf16 %v1824, %v1824
  %1827 = vrot.lane.b32.xlu0 %v1479, 56
  %v1828 = vpop.permute.xlu0 %1827
  %v1830 = vsel %vm163, %v1825, 0
  %v1833 = vsel %vm290, %v1828, 0
  %1835 = vmatprep.subr.bf16.mxu0 0
  %1836 = vmatpush1.bf16.msra.mxu0 %v1833
  %1837 = vmatprep.subr.bf16.mxu0 0
  %1838 = vmatpush1.bf16.msra.mxu0 0
  %1839 = vmatprep.subr.bf16.mxu0 0
  %1840 = vmatpush1.bf16.msra.mxu0 0
  %1841 = vmatprep.subr.bf16.mxu0 0
  %1842 = vmatpush1.bf16.msra.mxu0 0
  %1843 = vmatprep.subr.bf16.mxu0 0
  %1844 = vmatpush1.bf16.msra.mxu0 0
  %1845 = vmatprep.subr.bf16.mxu0 0
  %1846 = vmatpush1.bf16.msra.mxu0 0
  %1847 = vmatprep.subr.bf16.mxu0 0
  %1848 = vmatpush1.bf16.msra.mxu0 0
  %1849 = vmatprep.subr.bf16.mxu0 0
  %1850 = vmatpush1.bf16.msra.mxu0 0
  %1851 = vmatprep.subr.bf16.mxu0 0
  %1852 = vmatpush1.bf16.msra.mxu0 0
  %1853 = vmatprep.subr.bf16.mxu0 0
  %1854 = vmatpush1.bf16.msra.mxu0 0
  %1855 = vmatprep.subr.bf16.mxu0 0
  %1856 = vmatpush1.bf16.msra.mxu0 0
  %1857 = vmatprep.subr.bf16.mxu0 0
  %1858 = vmatpush1.bf16.msra.mxu0 0
  %1859 = vmatprep.subr.bf16.mxu0 0
  %1860 = vmatpush1.bf16.msra.mxu0 0
  %1861 = vmatprep.subr.bf16.mxu0 0
  %1862 = vmatpush1.bf16.msra.mxu0 0
  %1863 = vmatprep.subr.bf16.mxu0 0
  %1864 = vmatpush1.bf16.msra.mxu0 0
  %1865 = vmatprep.subr.bf16.mxu0 0
  %1866 = vmatpush1.bf16.msra.mxu0 0
  %1867 = vmatprep.mubr.bf16.mxu0 0
  %1868 = vmatmul.mubr.bf16.gmra.mrb[0].mxu0 %v1830
  %v1869 = vpop.f32.mrb[0].mxu0
  %v1870 = vadd.f32 0.0, %v1869
  %v1871 = vpop.f32.mrb[0].mxu0
  %v1872 = vpop.f32.mrb[0].mxu0
  %v1873 = vpop.f32.mrb[0].mxu0
  %1874 = vdwg.mxu0
  %1875 = vrot.lane.b32.xlu0 %v1480, 56
  %v1876 = vpop.permute.xlu0 %1875
  %v1878 = vsel %vm163, %v1826, 0
  %v1881 = vsel %vm290, %v1876, 0
  %1883 = vmatprep.subr.bf16.mxu0 0
  %1884 = vmatpush1.bf16.msra.mxu0 %v1881
  %1885 = vmatprep.subr.bf16.mxu0 0
  %1886 = vmatpush1.bf16.msra.mxu0 0
  %1887 = vmatprep.subr.bf16.mxu0 0
  %1888 = vmatpush1.bf16.msra.mxu0 0
  %1889 = vmatprep.subr.bf16.mxu0 0
  %1890 = vmatpush1.bf16.msra.mxu0 0
  %1891 = vmatprep.subr.bf16.mxu0 0
  %1892 = vmatpush1.bf16.msra.mxu0 0
  %1893 = vmatprep.subr.bf16.mxu0 0
  %1894 = vmatpush1.bf16.msra.mxu0 0
  %1895 = vmatprep.subr.bf16.mxu0 0
  %1896 = vmatpush1.bf16.msra.mxu0 0
  %1897 = vmatprep.subr.bf16.mxu0 0
  %1898 = vmatpush1.bf16.msra.mxu0 0
  %1899 = vmatprep.subr.bf16.mxu0 0
  %1900 = vmatpush1.bf16.msra.mxu0 0
  %1901 = vmatprep.subr.bf16.mxu0 0
  %1902 = vmatpush1.bf16.msra.mxu0 0
  %1903 = vmatprep.subr.bf16.mxu0 0
  %1904 = vmatpush1.bf16.msra.mxu0 0
  %1905 = vmatprep.subr.bf16.mxu0 0
  %1906 = vmatpush1.bf16.msra.mxu0 0
  %1907 = vmatprep.subr.bf16.mxu0 0
  %1908 = vmatpush1.bf16.msra.mxu0 0
  %1909 = vmatprep.subr.bf16.mxu0 0
  %1910 = vmatpush1.bf16.msra.mxu0 0
  %1911 = vmatprep.subr.bf16.mxu0 0
  %1912 = vmatpush1.bf16.msra.mxu0 0
  %1913 = vmatprep.subr.bf16.mxu0 0
  %1914 = vmatpush1.bf16.msra.mxu0 0
  %1915 = vmatprep.mubr.bf16.mxu0 0
  %1916 = vmatmul.mubr.bf16.gmra.mrb[0].mxu0 %v1878
  %v1917 = vpop.f32.mrb[0].mxu0
  %v1918 = vadd.f32 0.0, %v1917
  %v1919 = vpop.f32.mrb[0].mxu0
  %v1920 = vpop.f32.mrb[0].mxu0
  %v1921 = vpop.f32.mrb[0].mxu0
  %1922 = vdwg.mxu0
  %1923 = vrot.lane.b32.xlu0 %v1479, 112
  %v1924 = vpop.permute.xlu0 %1923
  %1925 = vrot.lane.b32.xlu0 %v1479, 80
  %v1926 = vpop.permute.xlu0 %1925
  %v1928 = vsel %vm163, %v1924, 0
  %v1931 = vsel %vm163, %v1926, 0
  %1933 = vmatprep.subr.bf16.mxu0 0
  %1934 = vmatpush1.bf16.xpose.msra.mxu0 %v1931
  %1935 = vmatprep.subr.bf16.mxu0 0
  %1936 = vmatpush1.bf16.xpose.msra.mxu0 0
  %1937 = vmatprep.subr.bf16.mxu0 0
  %1938 = vmatpush1.bf16.xpose.msra.mxu0 0
  %1939 = vmatprep.subr.bf16.mxu0 0
  %1940 = vmatpush1.bf16.xpose.msra.mxu0 0
  %1941 = vmatprep.subr.bf16.mxu0 0
  %1942 = vmatpush1.bf16.xpose.msra.mxu0 0
  %1943 = vmatprep.subr.bf16.mxu0 0
  %1944 = vmatpush1.bf16.xpose.msra.mxu0 0
  %1945 = vmatprep.subr.bf16.mxu0 0
  %1946 = vmatpush1.bf16.xpose.msra.mxu0 0
  %1947 = vmatprep.subr.bf16.mxu0 0
  %1948 = vmatpush1.bf16.xpose.msra.mxu0 0
  %1949 = vmatprep.subr.bf16.mxu0 0
  %1950 = vmatpush1.bf16.xpose.msra.mxu0 0
  %1951 = vmatprep.subr.bf16.mxu0 0
  %1952 = vmatpush1.bf16.xpose.msra.mxu0 0
  %1953 = vmatprep.subr.bf16.mxu0 0
  %1954 = vmatpush1.bf16.xpose.msra.mxu0 0
  %1955 = vmatprep.subr.bf16.mxu0 0
  %1956 = vmatpush1.bf16.xpose.msra.mxu0 0
  %1957 = vmatprep.subr.bf16.mxu0 0
  %1958 = vmatpush1.bf16.xpose.msra.mxu0 0
  %1959 = vmatprep.subr.bf16.mxu0 0
  %1960 = vmatpush1.bf16.xpose.msra.mxu0 0
  %1961 = vmatprep.subr.bf16.mxu0 0
  %1962 = vmatpush1.bf16.xpose.msra.mxu0 0
  %1963 = vmatprep.subr.bf16.mxu0 0
  %1964 = vmatpush1.bf16.xpose.msra.mxu0 0
  %1965 = vmatprep.mubr.bf16.mxu0 0
  %1966 = vmatmul.mubr.bf16.gmra.mrb[0].mxu0 %v1928
  %v1967 = vpop.f32.mrb[0].mxu0
  %v1968 = vadd.f32 0.0, %v1967
  %v1969 = vpop.f32.mrb[0].mxu0
  %v1970 = vpop.f32.mrb[0].mxu0
  %v1971 = vpop.f32.mrb[0].mxu0
  %1972 = vdwg.mxu0
  %1973 = vrot.lane.b32.xlu0 %v1480, 112
  %v1974 = vpop.permute.xlu0 %1973
  %1975 = vrot.lane.b32.xlu0 %v1480, 80
  %v1976 = vpop.permute.xlu0 %1975
  %v1978 = vsel %vm163, %v1974, 0
  %v1981 = vsel %vm163, %v1976, 0
  %1983 = vmatprep.subr.bf16.mxu0 0
  %1984 = vmatpush1.bf16.xpose.msra.mxu0 %v1981
  %1985 = vmatprep.subr.bf16.mxu0 0
  %1986 = vmatpush1.bf16.xpose.msra.mxu0 0
  %1987 = vmatprep.subr.bf16.mxu0 0
  %1988 = vmatpush1.bf16.xpose.msra.mxu0 0
  %1989 = vmatprep.subr.bf16.mxu0 0
  %1990 = vmatpush1.bf16.xpose.msra.mxu0 0
  %1991 = vmatprep.subr.bf16.mxu0 0
  %1992 = vmatpush1.bf16.xpose.msra.mxu0 0
  %1993 = vmatprep.subr.bf16.mxu0 0
  %1994 = vmatpush1.bf16.xpose.msra.mxu0 0
  %1995 = vmatprep.subr.bf16.mxu0 0
  %1996 = vmatpush1.bf16.xpose.msra.mxu0 0
  %1997 = vmatprep.subr.bf16.mxu0 0
  %1998 = vmatpush1.bf16.xpose.msra.mxu0 0
  %1999 = vmatprep.subr.bf16.mxu0 0
  %2000 = vmatpush1.bf16.xpose.msra.mxu0 0
  %2001 = vmatprep.subr.bf16.mxu0 0
  %2002 = vmatpush1.bf16.xpose.msra.mxu0 0
  %2003 = vmatprep.subr.bf16.mxu0 0
  %2004 = vmatpush1.bf16.xpose.msra.mxu0 0
  %2005 = vmatprep.subr.bf16.mxu0 0
  %2006 = vmatpush1.bf16.xpose.msra.mxu0 0
  %2007 = vmatprep.subr.bf16.mxu0 0
  %2008 = vmatpush1.bf16.xpose.msra.mxu0 0
  %2009 = vmatprep.subr.bf16.mxu0 0
  %2010 = vmatpush1.bf16.xpose.msra.mxu0 0
  %2011 = vmatprep.subr.bf16.mxu0 0
  %2012 = vmatpush1.bf16.xpose.msra.mxu0 0
  %2013 = vmatprep.subr.bf16.mxu0 0
  %2014 = vmatpush1.bf16.xpose.msra.mxu0 0
  %2015 = vmatprep.mubr.bf16.mxu0 0
  %2016 = vmatmul.mubr.bf16.gmra.mrb[0].mxu0 %v1978
  %v2017 = vpop.f32.mrb[0].mxu0
  %v2018 = vadd.f32 0.0, %v2017
  %v2019 = vpop.f32.mrb[0].mxu0
  %v2020 = vpop.f32.mrb[0].mxu0
  %v2021 = vpop.f32.mrb[0].mxu0
  %2022 = vdwg.mxu0
  %v2023 = vsel %vm78, %v1968, -1e+09
  %v2024 = vsel %vm79, %v2018, -1e+09
  %v2025 = vsel %vm163, %v2023, -inf
  %2026 = vmax.xlane.f32.xlu0 %v2025
  %v2027 = vpop.xlane.xlu0 %2026
  %v2028 = vsel %vm163, %v2024, -inf
  %2029 = vmax.xlane.f32.xlu0 %v2028
  %v2030 = vpop.xlane.xlu0 %2029
  %v2031 = vsub.f32 %v2023, %v2027
  %v2032 = vsub.f32 %v2024, %v2030
  %v2033 = vmul.f32 %v2031, 1.442695
  %v2034 = vpow.pop %v2033
  %v2035 = vmul.f32 %v2032, 1.442695
  %v2036 = vpow.pop %v2035
  %v2037 = vsel %vm163, %v2034, 0.0
  %2038 = vadd.xlane.f32.xlu0 %v2037
  %v2039 = vpop.xlane.xlu0 %2038
  %v2040 = vsel %vm163, %v2036, 0.0
  %2041 = vadd.xlane.f32.xlu0 %v2040
  %v2042 = vpop.xlane.xlu0 %2041
  %v2043 = vrcp.pop %v2039
  %v2044 = vrcp.pop %v2042
  %v2045 = vmul.f32 %v2034, %v2043
  %v2046 = vmul.f32 %v2036, %v2044
  %v2047 = vpack.c.bf16 %v2045, %v2045
  %v2048 = vpack.c.bf16 %v2046, %v2046
  %2049 = vrot.lane.b32.xlu0 %v1479, 48
  %v2050 = vpop.permute.xlu0 %2049
  %v2052 = vsel %vm163, %v2047, 0
  %v2055 = vsel %vm290, %v2050, 0
  %2057 = vmatprep.subr.bf16.mxu0 0
  %2058 = vmatpush1.bf16.msra.mxu0 %v2055
  %2059 = vmatprep.subr.bf16.mxu0 0
  %2060 = vmatpush1.bf16.msra.mxu0 0
  %2061 = vmatprep.subr.bf16.mxu0 0
  %2062 = vmatpush1.bf16.msra.mxu0 0
  %2063 = vmatprep.subr.bf16.mxu0 0
  %2064 = vmatpush1.bf16.msra.mxu0 0
  %2065 = vmatprep.subr.bf16.mxu0 0
  %2066 = vmatpush1.bf16.msra.mxu0 0
  %2067 = vmatprep.subr.bf16.mxu0 0
  %2068 = vmatpush1.bf16.msra.mxu0 0
  %2069 = vmatprep.subr.bf16.mxu0 0
  %2070 = vmatpush1.bf16.msra.mxu0 0
  %2071 = vmatprep.subr.bf16.mxu0 0
  %2072 = vmatpush1.bf16.msra.mxu0 0
  %2073 = vmatprep.subr.bf16.mxu0 0
  %2074 = vmatpush1.bf16.msra.mxu0 0
  %2075 = vmatprep.subr.bf16.mxu0 0
  %2076 = vmatpush1.bf16.msra.mxu0 0
  %2077 = vmatprep.subr.bf16.mxu0 0
  %2078 = vmatpush1.bf16.msra.mxu0 0
  %2079 = vmatprep.subr.bf16.mxu0 0
  %2080 = vmatpush1.bf16.msra.mxu0 0
  %2081 = vmatprep.subr.bf16.mxu0 0
  %2082 = vmatpush1.bf16.msra.mxu0 0
  %2083 = vmatprep.subr.bf16.mxu0 0
  %2084 = vmatpush1.bf16.msra.mxu0 0
  %2085 = vmatprep.subr.bf16.mxu0 0
  %2086 = vmatpush1.bf16.msra.mxu0 0
  %2087 = vmatprep.subr.bf16.mxu0 0
  %2088 = vmatpush1.bf16.msra.mxu0 0
  %2089 = vmatprep.mubr.bf16.mxu0 0
  %2090 = vmatmul.mubr.bf16.gmra.mrb[0].mxu0 %v2052
  %v2091 = vpop.f32.mrb[0].mxu0
  %v2092 = vadd.f32 0.0, %v2091
  %v2093 = vpop.f32.mrb[0].mxu0
  %v2094 = vpop.f32.mrb[0].mxu0
  %v2095 = vpop.f32.mrb[0].mxu0
  %2096 = vdwg.mxu0
  %2097 = vrot.lane.b32.xlu0 %v1480, 48
  %v2098 = vpop.permute.xlu0 %2097
  %v2100 = vsel %vm163, %v2048, 0
  %v2103 = vsel %vm290, %v2098, 0
  %2105 = vmatprep.subr.bf16.mxu0 0
  %2106 = vmatpush1.bf16.msra.mxu0 %v2103
  %2107 = vmatprep.subr.bf16.mxu0 0
  %2108 = vmatpush1.bf16.msra.mxu0 0
  %2109 = vmatprep.subr.bf16.mxu0 0
  %2110 = vmatpush1.bf16.msra.mxu0 0
  %2111 = vmatprep.subr.bf16.mxu0 0
  %2112 = vmatpush1.bf16.msra.mxu0 0
  %2113 = vmatprep.subr.bf16.mxu0 0
  %2114 = vmatpush1.bf16.msra.mxu0 0
  %2115 = vmatprep.subr.bf16.mxu0 0
  %2116 = vmatpush1.bf16.msra.mxu0 0
  %2117 = vmatprep.subr.bf16.mxu0 0
  %2118 = vmatpush1.bf16.msra.mxu0 0
  %2119 = vmatprep.subr.bf16.mxu0 0
  %2120 = vmatpush1.bf16.msra.mxu0 0
  %2121 = vmatprep.subr.bf16.mxu0 0
  %2122 = vmatpush1.bf16.msra.mxu0 0
  %2123 = vmatprep.subr.bf16.mxu0 0
  %2124 = vmatpush1.bf16.msra.mxu0 0
  %2125 = vmatprep.subr.bf16.mxu0 0
  %2126 = vmatpush1.bf16.msra.mxu0 0
  %2127 = vmatprep.subr.bf16.mxu0 0
  %2128 = vmatpush1.bf16.msra.mxu0 0
  %2129 = vmatprep.subr.bf16.mxu0 0
  %2130 = vmatpush1.bf16.msra.mxu0 0
  %2131 = vmatprep.subr.bf16.mxu0 0
  %2132 = vmatpush1.bf16.msra.mxu0 0
  %2133 = vmatprep.subr.bf16.mxu0 0
  %2134 = vmatpush1.bf16.msra.mxu0 0
  %2135 = vmatprep.subr.bf16.mxu0 0
  %2136 = vmatpush1.bf16.msra.mxu0 0
  %2137 = vmatprep.mubr.bf16.mxu0 0
  %2138 = vmatmul.mubr.bf16.gmra.mrb[0].mxu0 %v2100
  %v2139 = vpop.f32.mrb[0].mxu0
  %v2140 = vadd.f32 0.0, %v2139
  %v2141 = vpop.f32.mrb[0].mxu0
  %v2142 = vpop.f32.mrb[0].mxu0
  %v2143 = vpop.f32.mrb[0].mxu0
  %2144 = vdwg.mxu0
  %2145 = vrot.lane.b32.xlu0 %v1479, 104
  %v2146 = vpop.permute.xlu0 %2145
  %2147 = vrot.lane.b32.xlu0 %v1479, 72
  %v2148 = vpop.permute.xlu0 %2147
  %v2150 = vsel %vm163, %v2146, 0
  %v2153 = vsel %vm163, %v2148, 0
  %2155 = vmatprep.subr.bf16.mxu0 0
  %2156 = vmatpush1.bf16.xpose.msra.mxu0 %v2153
  %2157 = vmatprep.subr.bf16.mxu0 0
  %2158 = vmatpush1.bf16.xpose.msra.mxu0 0
  %2159 = vmatprep.subr.bf16.mxu0 0
  %2160 = vmatpush1.bf16.xpose.msra.mxu0 0
  %2161 = vmatprep.subr.bf16.mxu0 0
  %2162 = vmatpush1.bf16.xpose.msra.mxu0 0
  %2163 = vmatprep.subr.bf16.mxu0 0
  %2164 = vmatpush1.bf16.xpose.msra.mxu0 0
  %2165 = vmatprep.subr.bf16.mxu0 0
  %2166 = vmatpush1.bf16.xpose.msra.mxu0 0
  %2167 = vmatprep.subr.bf16.mxu0 0
  %2168 = vmatpush1.bf16.xpose.msra.mxu0 0
  %2169 = vmatprep.subr.bf16.mxu0 0
  %2170 = vmatpush1.bf16.xpose.msra.mxu0 0
  %2171 = vmatprep.subr.bf16.mxu0 0
  %2172 = vmatpush1.bf16.xpose.msra.mxu0 0
  %2173 = vmatprep.subr.bf16.mxu0 0
  %2174 = vmatpush1.bf16.xpose.msra.mxu0 0
  %2175 = vmatprep.subr.bf16.mxu0 0
  %2176 = vmatpush1.bf16.xpose.msra.mxu0 0
  %2177 = vmatprep.subr.bf16.mxu0 0
  %2178 = vmatpush1.bf16.xpose.msra.mxu0 0
  %2179 = vmatprep.subr.bf16.mxu0 0
  %2180 = vmatpush1.bf16.xpose.msra.mxu0 0
  %2181 = vmatprep.subr.bf16.mxu0 0
  %2182 = vmatpush1.bf16.xpose.msra.mxu0 0
  %2183 = vmatprep.subr.bf16.mxu0 0
  %2184 = vmatpush1.bf16.xpose.msra.mxu0 0
  %2185 = vmatprep.subr.bf16.mxu0 0
  %2186 = vmatpush1.bf16.xpose.msra.mxu0 0
  %2187 = vmatprep.mubr.bf16.mxu0 0
  %2188 = vmatmul.mubr.bf16.gmra.mrb[0].mxu0 %v2150
  %v2189 = vpop.f32.mrb[0].mxu0
  %v2190 = vadd.f32 0.0, %v2189
  %v2191 = vpop.f32.mrb[0].mxu0
  %v2192 = vpop.f32.mrb[0].mxu0
  %v2193 = vpop.f32.mrb[0].mxu0
  %2194 = vdwg.mxu0
  %2195 = vrot.lane.b32.xlu0 %v1480, 104
  %v2196 = vpop.permute.xlu0 %2195
  %2197 = vrot.lane.b32.xlu0 %v1480, 72
  %v2198 = vpop.permute.xlu0 %2197
  %v2200 = vsel %vm163, %v2196, 0
  %v2203 = vsel %vm163, %v2198, 0
  %2205 = vmatprep.subr.bf16.mxu0 0
  %2206 = vmatpush1.bf16.xpose.msra.mxu0 %v2203
  %2207 = vmatprep.subr.bf16.mxu0 0
  %2208 = vmatpush1.bf16.xpose.msra.mxu0 0
  %2209 = vmatprep.subr.bf16.mxu0 0
  %2210 = vmatpush1.bf16.xpose.msra.mxu0 0
  %2211 = vmatprep.subr.bf16.mxu0 0
  %2212 = vmatpush1.bf16.xpose.msra.mxu0 0
  %2213 = vmatprep.subr.bf16.mxu0 0
  %2214 = vmatpush1.bf16.xpose.msra.mxu0 0
  %2215 = vmatprep.subr.bf16.mxu0 0
  %2216 = vmatpush1.bf16.xpose.msra.mxu0 0
  %2217 = vmatprep.subr.bf16.mxu0 0
  %2218 = vmatpush1.bf16.xpose.msra.mxu0 0
  %2219 = vmatprep.subr.bf16.mxu0 0
  %2220 = vmatpush1.bf16.xpose.msra.mxu0 0
  %2221 = vmatprep.subr.bf16.mxu0 0
  %2222 = vmatpush1.bf16.xpose.msra.mxu0 0
  %2223 = vmatprep.subr.bf16.mxu0 0
  %2224 = vmatpush1.bf16.xpose.msra.mxu0 0
  %2225 = vmatprep.subr.bf16.mxu0 0
  %2226 = vmatpush1.bf16.xpose.msra.mxu0 0
  %2227 = vmatprep.subr.bf16.mxu0 0
  %2228 = vmatpush1.bf16.xpose.msra.mxu0 0
  %2229 = vmatprep.subr.bf16.mxu0 0
  %2230 = vmatpush1.bf16.xpose.msra.mxu0 0
  %2231 = vmatprep.subr.bf16.mxu0 0
  %2232 = vmatpush1.bf16.xpose.msra.mxu0 0
  %2233 = vmatprep.subr.bf16.mxu0 0
  %2234 = vmatpush1.bf16.xpose.msra.mxu0 0
  %2235 = vmatprep.subr.bf16.mxu0 0
  %2236 = vmatpush1.bf16.xpose.msra.mxu0 0
  %2237 = vmatprep.mubr.bf16.mxu0 0
  %2238 = vmatmul.mubr.bf16.gmra.mrb[0].mxu0 %v2200
  %v2239 = vpop.f32.mrb[0].mxu0
  %v2240 = vadd.f32 0.0, %v2239
  %v2241 = vpop.f32.mrb[0].mxu0
  %v2242 = vpop.f32.mrb[0].mxu0
  %v2243 = vpop.f32.mrb[0].mxu0
  %2244 = vdwg.mxu0
  %v2245 = vsel %vm78, %v2190, -1e+09
  %v2246 = vsel %vm79, %v2240, -1e+09
  %v2247 = vsel %vm163, %v2245, -inf
  %2248 = vmax.xlane.f32.xlu0 %v2247
  %v2249 = vpop.xlane.xlu0 %2248
  %v2250 = vsel %vm163, %v2246, -inf
  %2251 = vmax.xlane.f32.xlu0 %v2250
  %v2252 = vpop.xlane.xlu0 %2251
  %v2253 = vsub.f32 %v2245, %v2249
  %v2254 = vsub.f32 %v2246, %v2252
  %v2255 = vmul.f32 %v2253, 1.442695
  %v2256 = vpow.pop %v2255
  %v2257 = vmul.f32 %v2254, 1.442695
  %v2258 = vpow.pop %v2257
  %v2259 = vsel %vm163, %v2256, 0.0
  %2260 = vadd.xlane.f32.xlu0 %v2259
  %v2261 = vpop.xlane.xlu0 %2260
  %v2262 = vsel %vm163, %v2258, 0.0
  %2263 = vadd.xlane.f32.xlu0 %v2262
  %v2264 = vpop.xlane.xlu0 %2263
  %v2265 = vrcp.pop %v2261
  %v2266 = vrcp.pop %v2264
  %v2267 = vmul.f32 %v2256, %v2265
  %v2268 = vmul.f32 %v2258, %v2266
  %v2269 = vpack.c.bf16 %v2267, %v2267
  %v2270 = vpack.c.bf16 %v2268, %v2268
  %2271 = vrot.lane.b32.xlu0 %v1479, 40
  %v2272 = vpop.permute.xlu0 %2271
  %v2274 = vsel %vm163, %v2269, 0
  %v2277 = vsel %vm290, %v2272, 0
  %2279 = vmatprep.subr.bf16.mxu0 0
  %2280 = vmatpush1.bf16.msra.mxu0 %v2277
  %2281 = vmatprep.subr.bf16.mxu0 0
  %2282 = vmatpush1.bf16.msra.mxu0 0
  %2283 = vmatprep.subr.bf16.mxu0 0
  %2284 = vmatpush1.bf16.msra.mxu0 0
  %2285 = vmatprep.subr.bf16.mxu0 0
  %2286 = vmatpush1.bf16.msra.mxu0 0
  %2287 = vmatprep.subr.bf16.mxu0 0
  %2288 = vmatpush1.bf16.msra.mxu0 0
  %2289 = vmatprep.subr.bf16.mxu0 0
  %2290 = vmatpush1.bf16.msra.mxu0 0
  %2291 = vmatprep.subr.bf16.mxu0 0
  %2292 = vmatpush1.bf16.msra.mxu0 0
  %2293 = vmatprep.subr.bf16.mxu0 0
  %2294 = vmatpush1.bf16.msra.mxu0 0
  %2295 = vmatprep.subr.bf16.mxu0 0
  %2296 = vmatpush1.bf16.msra.mxu0 0
  %2297 = vmatprep.subr.bf16.mxu0 0
  %2298 = vmatpush1.bf16.msra.mxu0 0
  %2299 = vmatprep.subr.bf16.mxu0 0
  %2300 = vmatpush1.bf16.msra.mxu0 0
  %2301 = vmatprep.subr.bf16.mxu0 0
  %2302 = vmatpush1.bf16.msra.mxu0 0
  %2303 = vmatprep.subr.bf16.mxu0 0
  %2304 = vmatpush1.bf16.msra.mxu0 0
  %2305 = vmatprep.subr.bf16.mxu0 0
  %2306 = vmatpush1.bf16.msra.mxu0 0
  %2307 = vmatprep.subr.bf16.mxu0 0
  %2308 = vmatpush1.bf16.msra.mxu0 0
  %2309 = vmatprep.subr.bf16.mxu0 0
  %2310 = vmatpush1.bf16.msra.mxu0 0
  %2311 = vmatprep.mubr.bf16.mxu0 0
  %2312 = vmatmul.mubr.bf16.gmra.mrb[0].mxu0 %v2274
  %v2313 = vpop.f32.mrb[0].mxu0
  %v2314 = vadd.f32 0.0, %v2313
  %v2315 = vpop.f32.mrb[0].mxu0
  %v2316 = vpop.f32.mrb[0].mxu0
  %v2317 = vpop.f32.mrb[0].mxu0
  %2318 = vdwg.mxu0
  %2319 = vrot.lane.b32.xlu0 %v1480, 40
  %v2320 = vpop.permute.xlu0 %2319
  %v2322 = vsel %vm163, %v2270, 0
  %v2325 = vsel %vm290, %v2320, 0
  %2327 = vmatprep.subr.bf16.mxu0 0
  %2328 = vmatpush1.bf16.msra.mxu0 %v2325
  %2329 = vmatprep.subr.bf16.mxu0 0
  %2330 = vmatpush1.bf16.msra.mxu0 0
  %2331 = vmatprep.subr.bf16.mxu0 0
  %2332 = vmatpush1.bf16.msra.mxu0 0
  %2333 = vmatprep.subr.bf16.mxu0 0
  %2334 = vmatpush1.bf16.msra.mxu0 0
  %2335 = vmatprep.subr.bf16.mxu0 0
  %2336 = vmatpush1.bf16.msra.mxu0 0
  %2337 = vmatprep.subr.bf16.mxu0 0
  %2338 = vmatpush1.bf16.msra.mxu0 0
  %2339 = vmatprep.subr.bf16.mxu0 0
  %2340 = vmatpush1.bf16.msra.mxu0 0
  %2341 = vmatprep.subr.bf16.mxu0 0
  %2342 = vmatpush1.bf16.msra.mxu0 0
  %2343 = vmatprep.subr.bf16.mxu0 0
  %2344 = vmatpush1.bf16.msra.mxu0 0
  %2345 = vmatprep.subr.bf16.mxu0 0
  %2346 = vmatpush1.bf16.msra.mxu0 0
  %2347 = vmatprep.subr.bf16.mxu0 0
  %2348 = vmatpush1.bf16.msra.mxu0 0
  %2349 = vmatprep.subr.bf16.mxu0 0
  %2350 = vmatpush1.bf16.msra.mxu0 0
  %2351 = vmatprep.subr.bf16.mxu0 0
  %2352 = vmatpush1.bf16.msra.mxu0 0
  %2353 = vmatprep.subr.bf16.mxu0 0
  %2354 = vmatpush1.bf16.msra.mxu0 0
  %2355 = vmatprep.subr.bf16.mxu0 0
  %2356 = vmatpush1.bf16.msra.mxu0 0
  %2357 = vmatprep.subr.bf16.mxu0 0
  %2358 = vmatpush1.bf16.msra.mxu0 0
  %2359 = vmatprep.mubr.bf16.mxu0 0
  %2360 = vmatmul.mubr.bf16.gmra.mrb[0].mxu0 %v2322
  %v2361 = vpop.f32.mrb[0].mxu0
  %v2362 = vadd.f32 0.0, %v2361
  %v2363 = vpop.f32.mrb[0].mxu0
  %v2364 = vpop.f32.mrb[0].mxu0
  %v2365 = vpop.f32.mrb[0].mxu0
  %2366 = vdwg.mxu0
  %2369 = vrot.lane.b32.xlu0 %v1870, 8
  %v2370 = vpop.permute.xlu0 %2369
  %2371 = vrot.lane.b32.xlu0 %v1918, 8
  %v2372 = vpop.permute.xlu0 %2371
  %2377 = vrot.lane.b32.xlu0 %v2092, 16
  %v2378 = vpop.permute.xlu0 %2377
  %2379 = vrot.lane.b32.xlu0 %v2140, 16
  %v2380 = vpop.permute.xlu0 %2379
  %2385 = vrot.lane.b32.xlu0 %v2314, 24
  %v2386 = vpop.permute.xlu0 %2385
  %2387 = vrot.lane.b32.xlu0 %v2362, 24
  %v2388 = vpop.permute.xlu0 %2387
  %v2391 = vsel %vm163, %v1648, %v2370
  %v2392 = vsel %vm163, %v1696, %v2372
  %v2393 = vsel %vm1074, %v2391, %v2378
  %v2394 = vsel %vm1074, %v2392, %v2380
  %v2395 = vsel %vm1077, %v2393, %v2386
  %v2396 = vsel %vm1077, %v2394, %v2388
  %s2397 = scalar_lea.vmem %s3, 16
  %v2398 = vld [vmem:[%s2397] sm:$0xf]
  %v2399 = vld [vmem:[%s2397 + $0x4] sm:$0xf]
  %v2400 = vld [vmem:[%s2397 + $0x8] sm:$0xf]
  %v2401 = vld [vmem:[%s2397 + $0xc] sm:$0xf]
  %s2402 = scalar_lea.vmem %s9, 6
  %v2403 = vld [vmem:[%s2402] sm:$0x1]
  %v2404 = vpack.c.bf16 %v2396, %v2395
  %v2406 = vlaneseq
  %v2407 = vshrl.u32 %v2406, 7
  %v2408 = vsub.s32 0, %v2407
  %v2409 = vrot.slane %v2403, %v2408
  %v2415 = vunpack.c.l.b16 %v2398
  %v2416 = vunpack.c.l.b16 %v2399
  %v2417 = vunpack.c.l.b16 %v2400
  %v2418 = vunpack.c.l.b16 %v2401
  %v2419 = vpack.c.b16 %v2416, %v2415
  %v2420 = vpack.c.b16 %v2418, %v2417
  %v2424 = vsel %vm113, %v2404, 0
  %2426 = vmatprep.subr.bf16.mxu0 0
  %2427 = vmatpush1.bf16.msra.mxu0 %v2419
  %2428 = vmatprep.subr.bf16.mxu0 0
  %2429 = vmatpush1.bf16.msra.mxu0 %v2420
  %2430 = vmatprep.subr.bf16.mxu0 0
  %2431 = vmatpush1.bf16.msra.mxu0 0
  %2432 = vmatprep.subr.bf16.mxu0 0
  %2433 = vmatpush1.bf16.msra.mxu0 0
  %2434 = vmatprep.subr.bf16.mxu0 0
  %2435 = vmatpush1.bf16.msra.mxu0 0
  %2436 = vmatprep.subr.bf16.mxu0 0
  %2437 = vmatpush1.bf16.msra.mxu0 0
  %2438 = vmatprep.subr.bf16.mxu0 0
  %2439 = vmatpush1.bf16.msra.mxu0 0
  %2440 = vmatprep.subr.bf16.mxu0 0
  %2441 = vmatpush1.bf16.msra.mxu0 0
  %2442 = vmatprep.subr.bf16.mxu0 0
  %2443 = vmatpush1.bf16.msra.mxu0 0
  %2444 = vmatprep.subr.bf16.mxu0 0
  %2445 = vmatpush1.bf16.msra.mxu0 0
  %2446 = vmatprep.subr.bf16.mxu0 0
  %2447 = vmatpush1.bf16.msra.mxu0 0
  %2448 = vmatprep.subr.bf16.mxu0 0
  %2449 = vmatpush1.bf16.msra.mxu0 0
  %2450 = vmatprep.subr.bf16.mxu0 0
  %2451 = vmatpush1.bf16.msra.mxu0 0
  %2452 = vmatprep.subr.bf16.mxu0 0
  %2453 = vmatpush1.bf16.msra.mxu0 0
  %2454 = vmatprep.subr.bf16.mxu0 0
  %2455 = vmatpush1.bf16.msra.mxu0 0
  %2456 = vmatprep.subr.bf16.mxu0 0
  %2457 = vmatpush1.bf16.msra.mxu0 0
  %2458 = vmatprep.mubr.bf16.mxu0 0
  %2459 = vmatmul.mubr.bf16.gmra.mrb[0].mxu0 %v2424
  %v2460 = vpop.f32.mrb[0].mxu0
  %v2461 = vadd.f32 %v2409, %v2460
  %v2462 = vpop.f32.mrb[0].mxu0
  %v2463 = vpop.f32.mrb[0].mxu0
  %v2464 = vadd.f32 %v2409, %v2463
  %v2465 = vpop.f32.mrb[0].mxu0
  %2466 = vdwg.mxu0
  %v2467 = vadd.f32 %v1407, %v2461
  %v2468 = vadd.f32 %v1408, %v2464
  %s2469 = scalar_lea.vmem %s9, 8
  %v2470 = vld [vmem:[%s2469] sm:$0x1]
  %s2471 = scalar_lea.vmem %s9, 9
  %v2472 = vld [vmem:[%s2471] sm:$0x1]
  %v2473 = vsel %vm113, %v2467, 0.0
  %2474 = vadd.xlane.f32.xlu0 %v2473
  %v2475 = vpop.xlane.xlu0 %2474
  %v2476 = vsel %vm113, %v2468, 0.0
  %2477 = vadd.xlane.f32.xlu0 %v2476
  %v2478 = vpop.xlane.xlu0 %2477
  %v2479 = vmul.f32 %v2475, %v1160
  %v2480 = vmul.f32 %v2478, %v1160
  %v2481 = vsub.f32 %v2467, %v2479
  %v2482 = vsub.f32 %v2468, %v2480
  %v2483 = vmul.f32 %v2481, %v2481
  %v2484 = vmul.f32 %v2482, %v2482
  %v2485 = vsel %vm113, %v2483, 0.0
  %2486 = vadd.xlane.f32.xlu0 %v2485
  %v2487 = vpop.xlane.xlu0 %2486
  %v2488 = vsel %vm113, %v2484, 0.0
  %2489 = vadd.xlane.f32.xlu0 %v2488
  %v2490 = vpop.xlane.xlu0 %2489
  %v2491 = vmul.f32 %v2487, %v1160
  %v2492 = vmul.f32 %v2490, %v1160
  %v2493 = vadd.f32 %v2491, 1e-05
  %v2494 = vadd.f32 %v2492, 1e-05
  %v2495 = vrsqrt.pop %v2493
  %v2496 = vrsqrt.pop %v2494
  %v2497 = vmul.f32 %v2481, %v2495
  %v2498 = vmul.f32 %v2482, %v2496
  %v2500 = vlaneseq
  %v2501 = vshrl.u32 %v2500, 7
  %v2502 = vsub.s32 0, %v2501
  %v2503 = vrot.slane %v2470, %v2502
  %v2505 = vmul.f32 %v2497, %v2503
  %v2506 = vmul.f32 %v2498, %v2503
  %v2508 = vlaneseq
  %v2509 = vshrl.u32 %v2508, 7
  %v2510 = vsub.s32 0, %v2509
  %v2511 = vrot.slane %v2472, %v2510
  %v2513 = vadd.f32 %v2505, %v2511
  %v2514 = vadd.f32 %v2506, %v2511
  %s2515 = scalar_lea.vmem %s4, 16
  %v2516 = vld [vmem:[%s2515] sm:$0xf]
  %v2517 = vld [vmem:[%s2515 + $0x4] sm:$0xf]
  %v2518 = vld [vmem:[%s2515 + $0x8] sm:$0xf]
  %v2519 = vld [vmem:[%s2515 + $0xc] sm:$0xf]
  %s2520 = scalar_lea.vmem %s8, 1
  %v2521 = vld [vmem:[%s2520] sm:$0x1]
  %s2522 = scalar_lea.vmem %s5, 32
  %v2523 = vld [vmem:[%s2522] sm:$0xf]
  %v2524 = vld [vmem:[%s2522 + $0x4] sm:$0xf]
  %v2525 = vld [vmem:[%s2522 + $0x8] sm:$0xf]
  %v2526 = vld [vmem:[%s2522 + $0xc] sm:$0xf]
  %v2527 = vld [vmem:[%s2522 + $0x10] sm:$0xf]
  %v2528 = vld [vmem:[%s2522 + $0x14] sm:$0xf]
  %v2529 = vld [vmem:[%s2522 + $0x18] sm:$0xf]
  %v2530 = vld [vmem:[%s2522 + $0x1c] sm:$0xf]
  %s2531 = scalar_lea.vmem %s9, 7
  %v2532 = vld [vmem:[%s2531] sm:$0x1]
  %v2533 = vpack.c.bf16 %v2514, %v2513
  %v2535 = vlaneseq
  %v2536 = vshrl.u32 %v2535, 7
  %v2537 = vsub.s32 0, %v2536
  %v2538 = vrot.slane %v2521, %v2537
  %v2544 = vunpack.c.l.b16 %v2516
  %v2545 = vunpack.c.l.b16 %v2517
  %v2546 = vunpack.c.l.b16 %v2518
  %v2547 = vunpack.c.l.b16 %v2519
  %v2548 = vpack.c.b16 %v2545, %v2544
  %v2549 = vpack.c.b16 %v2547, %v2546
  %v2553 = vsel %vm113, %v2533, 0
  %2555 = vmatprep.subr.bf16.mxu0 0
  %2556 = vmatpush1.bf16.msra.mxu0 %v2548
  %2557 = vmatprep.subr.bf16.mxu0 0
  %2558 = vmatpush1.bf16.msra.mxu0 %v2549
  %2559 = vmatprep.subr.bf16.mxu0 0
  %2560 = vmatpush1.bf16.msra.mxu0 0
  %2561 = vmatprep.subr.bf16.mxu0 0
  %2562 = vmatpush1.bf16.msra.mxu0 0
  %2563 = vmatprep.subr.bf16.mxu0 0
  %2564 = vmatpush1.bf16.msra.mxu0 0
  %2565 = vmatprep.subr.bf16.mxu0 0
  %2566 = vmatpush1.bf16.msra.mxu0 0
  %2567 = vmatprep.subr.bf16.mxu0 0
  %2568 = vmatpush1.bf16.msra.mxu0 0
  %2569 = vmatprep.subr.bf16.mxu0 0
  %2570 = vmatpush1.bf16.msra.mxu0 0
  %2571 = vmatprep.subr.bf16.mxu0 0
  %2572 = vmatpush1.bf16.msra.mxu0 0
  %2573 = vmatprep.subr.bf16.mxu0 0
  %2574 = vmatpush1.bf16.msra.mxu0 0
  %2575 = vmatprep.subr.bf16.mxu0 0
  %2576 = vmatpush1.bf16.msra.mxu0 0
  %2577 = vmatprep.subr.bf16.mxu0 0
  %2578 = vmatpush1.bf16.msra.mxu0 0
  %2579 = vmatprep.subr.bf16.mxu0 0
  %2580 = vmatpush1.bf16.msra.mxu0 0
  %2581 = vmatprep.subr.bf16.mxu0 0
  %2582 = vmatpush1.bf16.msra.mxu0 0
  %2583 = vmatprep.subr.bf16.mxu0 0
  %2584 = vmatpush1.bf16.msra.mxu0 0
  %2585 = vmatprep.subr.bf16.mxu0 0
  %2586 = vmatpush1.bf16.msra.mxu0 0
  %2587 = vmatprep.mubr.bf16.mxu0 0
  %2588 = vmatmul.mubr.bf16.gmra.mrb[0].mxu0 %v2553
  %v2589 = vpop.f32.mrb[0].mxu0
  %v2590 = vadd.f32 %v2538, %v2589
  %v2591 = vpop.f32.mrb[0].mxu0
  %v2592 = vpop.f32.mrb[0].mxu0
  %v2593 = vadd.f32 %v2538, %v2592
  %v2594 = vpop.f32.mrb[0].mxu0
  %2595 = vdwg.mxu0
  %v2596 = vmul.f32 %v2590, 0.5
  %v2597 = vmul.f32 %v2593, 0.5
  %v2598 = vmul.f32 %v2590, 0.70710677
  %v2599 = vmul.f32 %v2593, 0.70710677
  %v2600 = verf.f32.pop %v2598
  %v2601 = verf.f32.pop %v2599
  %v2602 = vadd.f32 %v2600, 1.0
  %v2603 = vadd.f32 %v2601, 1.0
  %v2604 = vmul.f32 %v2596, %v2602
  %v2605 = vmul.f32 %v2597, %v2603
  %v2606 = vpack.c.bf16 %v2605, %v2604
  %v2608 = vlaneseq
  %v2609 = vshrl.u32 %v2608, 7
  %v2610 = vsub.s32 0, %v2609
  %v2611 = vrot.slane %v2532, %v2610
  %v2621 = vunpack.c.l.b16 %v2523
  %v2622 = vunpack.c.l.b16 %v2524
  %v2623 = vunpack.c.l.b16 %v2525
  %v2624 = vunpack.c.l.b16 %v2526
  %v2625 = vunpack.c.l.b16 %v2527
  %v2626 = vunpack.c.l.b16 %v2528
  %v2627 = vunpack.c.l.b16 %v2529
  %v2628 = vunpack.c.l.b16 %v2530
  %v2629 = vpack.c.b16 %v2622, %v2621
  %v2630 = vpack.c.b16 %v2624, %v2623
  %v2631 = vpack.c.b16 %v2626, %v2625
  %v2632 = vpack.c.b16 %v2628, %v2627
  %v2638 = vsel %vm1316, %v2606, 0
  %2640 = vmatprep.subr.bf16.mxu0 0
  %2641 = vmatpush1.bf16.msra.mxu0 %v2629
  %2642 = vmatprep.subr.bf16.mxu0 0
  %2643 = vmatpush1.bf16.msra.mxu0 %v2630
  %2644 = vmatprep.subr.bf16.mxu0 0
  %2645 = vmatpush1.bf16.msra.mxu0 %v2631
  %2646 = vmatprep.subr.bf16.mxu0 0
  %2647 = vmatpush1.bf16.msra.mxu0 %v2632
  %2648 = vmatprep.subr.bf16.mxu0 0
  %2649 = vmatpush1.bf16.msra.mxu0 0
  %2650 = vmatprep.subr.bf16.mxu0 0
  %2651 = vmatpush1.bf16.msra.mxu0 0
  %2652 = vmatprep.subr.bf16.mxu0 0
  %2653 = vmatpush1.bf16.msra.mxu0 0
  %2654 = vmatprep.subr.bf16.mxu0 0
  %2655 = vmatpush1.bf16.msra.mxu0 0
  %2656 = vmatprep.subr.bf16.mxu0 0
  %2657 = vmatpush1.bf16.msra.mxu0 0
  %2658 = vmatprep.subr.bf16.mxu0 0
  %2659 = vmatpush1.bf16.msra.mxu0 0
  %2660 = vmatprep.subr.bf16.mxu0 0
  %2661 = vmatpush1.bf16.msra.mxu0 0
  %2662 = vmatprep.subr.bf16.mxu0 0
  %2663 = vmatpush1.bf16.msra.mxu0 0
  %2664 = vmatprep.subr.bf16.mxu0 0
  %2665 = vmatpush1.bf16.msra.mxu0 0
  %2666 = vmatprep.subr.bf16.mxu0 0
  %2667 = vmatpush1.bf16.msra.mxu0 0
  %2668 = vmatprep.subr.bf16.mxu0 0
  %2669 = vmatpush1.bf16.msra.mxu0 0
  %2670 = vmatprep.subr.bf16.mxu0 0
  %2671 = vmatpush1.bf16.msra.mxu0 0
  %2672 = vmatprep.mubr.bf16.mxu0 0
  %2673 = vmatmul.mubr.bf16.gmra.mrb[0].mxu0 %v2638
  %v2674 = vpop.f32.mrb[0].mxu0
  %v2675 = vadd.f32 %v2611, %v2674
  %v2676 = vpop.f32.mrb[0].mxu0
  %v2677 = vpop.f32.mrb[0].mxu0
  %v2678 = vadd.f32 %v2611, %v2677
  %v2679 = vpop.f32.mrb[0].mxu0
  %2680 = vdwg.mxu0
  %v2681 = vadd.f32 %v2513, %v2675
  %v2682 = vadd.f32 %v2514, %v2678
  %s2683 = scalar_lea.vmem %s9, 10
  %v2684 = vld [vmem:[%s2683] sm:$0x1]
  %s2685 = scalar_lea.vmem %s9, 11
  %v2686 = vld [vmem:[%s2685] sm:$0x1]
  %v2687 = vsel %vm113, %v2681, 0.0
  %2688 = vadd.xlane.f32.xlu0 %v2687
  %v2689 = vpop.xlane.xlu0 %2688
  %v2690 = vsel %vm113, %v2682, 0.0
  %2691 = vadd.xlane.f32.xlu0 %v2690
  %v2692 = vpop.xlane.xlu0 %2691
  %v2693 = vmul.f32 %v2689, %v1160
  %v2694 = vmul.f32 %v2692, %v1160
  %v2695 = vsub.f32 %v2681, %v2693
  %v2696 = vsub.f32 %v2682, %v2694
  %v2697 = vmul.f32 %v2695, %v2695
  %v2698 = vmul.f32 %v2696, %v2696
  %v2699 = vsel %vm113, %v2697, 0.0
  %2700 = vadd.xlane.f32.xlu0 %v2699
  %v2701 = vpop.xlane.xlu0 %2700
  %v2702 = vsel %vm113, %v2698, 0.0
  %2703 = vadd.xlane.f32.xlu0 %v2702
  %v2704 = vpop.xlane.xlu0 %2703
  %v2705 = vmul.f32 %v2701, %v1160
  %v2706 = vmul.f32 %v2704, %v1160
  %v2707 = vadd.f32 %v2705, 1e-05
  %v2708 = vadd.f32 %v2706, 1e-05
  %v2709 = vrsqrt.pop %v2707
  %v2710 = vrsqrt.pop %v2708
  %v2711 = vmul.f32 %v2695, %v2709
  %v2712 = vmul.f32 %v2696, %v2710
  %v2714 = vlaneseq
  %v2715 = vshrl.u32 %v2714, 7
  %v2716 = vsub.s32 0, %v2715
  %v2717 = vrot.slane %v2684, %v2716
  %v2719 = vmul.f32 %v2711, %v2717
  %v2720 = vmul.f32 %v2712, %v2717
  %v2722 = vlaneseq
  %v2723 = vshrl.u32 %v2722, 7
  %v2724 = vsub.s32 0, %v2723
  %v2725 = vrot.slane %v2686, %v2724
  %v2727 = vadd.f32 %v2719, %v2725
  %v2728 = vadd.f32 %v2720, %v2725
  %s2729 = scalar_lea.vmem %s9, 32
  %v2730 = vld [vmem:[%s2729] sm:$0x1]
  %s2731 = scalar_lea.vmem %s9, 33
  %v2732 = vld [vmem:[%s2731] sm:$0x1]
  %v2733 = vsel %vm113, %v2727, 0.0
  %2734 = vadd.xlane.f32.xlu0 %v2733
  %v2735 = vpop.xlane.xlu0 %2734
  %v2736 = vsel %vm113, %v2728, 0.0
  %2737 = vadd.xlane.f32.xlu0 %v2736
  %v2738 = vpop.xlane.xlu0 %2737
  %v2739 = vmul.f32 %v2735, %v1160
  %v2740 = vmul.f32 %v2738, %v1160
  %v2741 = vsub.f32 %v2727, %v2739
  %v2742 = vsub.f32 %v2728, %v2740
  %v2743 = vmul.f32 %v2741, %v2741
  %v2744 = vmul.f32 %v2742, %v2742
  %v2745 = vsel %vm113, %v2743, 0.0
  %2746 = vadd.xlane.f32.xlu0 %v2745
  %v2747 = vpop.xlane.xlu0 %2746
  %v2748 = vsel %vm113, %v2744, 0.0
  %2749 = vadd.xlane.f32.xlu0 %v2748
  %v2750 = vpop.xlane.xlu0 %2749
  %v2751 = vmul.f32 %v2747, %v1160
  %v2752 = vmul.f32 %v2750, %v1160
  %v2753 = vadd.f32 %v2751, 1e-05
  %v2754 = vadd.f32 %v2752, 1e-05
  %v2755 = vrsqrt.pop %v2753
  %v2756 = vrsqrt.pop %v2754
  %v2757 = vmul.f32 %v2741, %v2755
  %v2758 = vmul.f32 %v2742, %v2756
  %v2760 = vlaneseq
  %v2761 = vshrl.u32 %v2760, 7
  %v2762 = vsub.s32 0, %v2761
  %v2763 = vrot.slane %v2730, %v2762
  %v2765 = vmul.f32 %v2757, %v2763
  %v2766 = vmul.f32 %v2758, %v2763
  %v2768 = vlaneseq
  %v2769 = vshrl.u32 %v2768, 7
  %v2770 = vsub.s32 0, %v2769
  %v2771 = vrot.slane %v2732, %v2770
  %v2773 = vadd.f32 %v2765, %v2771
  %v2774 = vadd.f32 %v2766, %v2771
  %s2775 = scalar_lea.vmem %s2, 32
  %v2776 = vld [vmem:[%s2775] sm:$0xf]
  %v2777 = vld [vmem:[%s2775 + $0x4] sm:$0xf]
  %v2778 = vld [vmem:[%s2775 + $0x8] sm:$0xf]
  %v2779 = vld [vmem:[%s2775 + $0xc] sm:$0xf]
  %s2780 = scalar_lea.vmem %s7, 2
  %v2781 = vld [vmem:[%s2780] sm:$0x1]
  %v2783 = vlaneseq
  %v2784 = vshrl.u32 %v2783, 7
  %v2785 = vsub.s32 0, %v2784
  %v2786 = vrot.slane %v2781, %v2785
  %v2792 = vunpack.c.l.b16 %v2776
  %v2793 = vunpack.c.l.b16 %v2777
  %v2794 = vunpack.c.l.b16 %v2778
  %v2795 = vunpack.c.l.b16 %v2779
  %v2796 = vpack.c.b16 %v2793, %v2792
  %v2797 = vpack.c.b16 %v2795, %v2794
  %2800 = vmatprep.subr.bf16.mxu0 0
  %2801 = vmatpush1.bf16.msra.mxu0 %v2796
  %2802 = vmatprep.subr.bf16.mxu0 0
  %2803 = vmatpush1.bf16.msra.mxu0 %v2797
  %2804 = vmatprep.subr.bf16.mxu0 0
  %2805 = vmatpush1.bf16.msra.mxu0 0
  %2806 = vmatprep.subr.bf16.mxu0 0
  %2807 = vmatpush1.bf16.msra.mxu0 0
  %2808 = vmatprep.subr.bf16.mxu0 0
  %2809 = vmatpush1.bf16.msra.mxu0 0
  %2810 = vmatprep.subr.bf16.mxu0 0
  %2811 = vmatpush1.bf16.msra.mxu0 0
  %2812 = vmatprep.subr.bf16.mxu0 0
  %2813 = vmatpush1.bf16.msra.mxu0 0
  %2814 = vmatprep.subr.bf16.mxu0 0
  %2815 = vmatpush1.bf16.msra.mxu0 0
  %2816 = vmatprep.subr.bf16.mxu0 0
  %2817 = vmatpush1.bf16.msra.mxu0 0
  %2818 = vmatprep.subr.bf16.mxu0 0
  %2819 = vmatpush1.bf16.msra.mxu0 0
  %2820 = vmatprep.subr.bf16.mxu0 0
  %2821 = vmatpush1.bf16.msra.mxu0 0
  %2822 = vmatprep.subr.bf16.mxu0 0
  %2823 = vmatpush1.bf16.msra.mxu0 0
  %2824 = vmatprep.subr.bf16.mxu0 0
  %2825 = vmatpush1.bf16.msra.mxu0 0
  %2826 = vmatprep.subr.bf16.mxu0 0
  %2827 = vmatpush1.bf16.msra.mxu0 0
  %2828 = vmatprep.subr.bf16.mxu0 0
  %2829 = vmatpush1.bf16.msra.mxu0 0
  %2830 = vmatprep.subr.bf16.mxu0 0
  %2831 = vmatpush1.bf16.msra.mxu0 0
  %2832 = vmatprep.mubr.bf16.mxu0 0
  %2833 = vmatmul.mubr.bf16.gmra.mrb[0].mxu0 %v115
  %v2834 = vpop.f32.mrb[0].mxu0
  %v2835 = vadd.f32 %v2786, %v2834
  %v2836 = vpop.f32.mrb[0].mxu0
  %v2837 = vpop.f32.mrb[0].mxu0
  %v2838 = vadd.f32 %v2786, %v2837
  %v2839 = vpop.f32.mrb[0].mxu0
  %2840 = vdwg.mxu0
  %v2841 = vpack.c.bf16 %v2835, %v2835
  %v2842 = vpack.c.bf16 %v2838, %v2838
  %2844 = vrot.lane.b32.xlu0 %v2841, 96
  %v2845 = vpop.permute.xlu0 %2844
  %v2847 = vsel %vm163, %v2841, 0
  %v2850 = vsel %vm163, %v2845, 0
  %2852 = vmatprep.subr.bf16.mxu0 0
  %2853 = vmatpush1.bf16.xpose.msra.mxu0 %v2850
  %2854 = vmatprep.subr.bf16.mxu0 0
  %2855 = vmatpush1.bf16.xpose.msra.mxu0 0
  %2856 = vmatprep.subr.bf16.mxu0 0
  %2857 = vmatpush1.bf16.xpose.msra.mxu0 0
  %2858 = vmatprep.subr.bf16.mxu0 0
  %2859 = vmatpush1.bf16.xpose.msra.mxu0 0
  %2860 = vmatprep.subr.bf16.mxu0 0
  %2861 = vmatpush1.bf16.xpose.msra.mxu0 0
  %2862 = vmatprep.subr.bf16.mxu0 0
  %2863 = vmatpush1.bf16.xpose.msra.mxu0 0
  %2864 = vmatprep.subr.bf16.mxu0 0
  %2865 = vmatpush1.bf16.xpose.msra.mxu0 0
  %2866 = vmatprep.subr.bf16.mxu0 0
  %2867 = vmatpush1.bf16.xpose.msra.mxu0 0
  %2868 = vmatprep.subr.bf16.mxu0 0
  %2869 = vmatpush1.bf16.xpose.msra.mxu0 0
  %2870 = vmatprep.subr.bf16.mxu0 0
  %2871 = vmatpush1.bf16.xpose.msra.mxu0 0
  %2872 = vmatprep.subr.bf16.mxu0 0
  %2873 = vmatpush1.bf16.xpose.msra.mxu0 0
  %2874 = vmatprep.subr.bf16.mxu0 0
  %2875 = vmatpush1.bf16.xpose.msra.mxu0 0
  %2876 = vmatprep.subr.bf16.mxu0 0
  %2877 = vmatpush1.bf16.xpose.msra.mxu0 0
  %2878 = vmatprep.subr.bf16.mxu0 0
  %2879 = vmatpush1.bf16.xpose.msra.mxu0 0
  %2880 = vmatprep.subr.bf16.mxu0 0
  %2881 = vmatpush1.bf16.xpose.msra.mxu0 0
  %2882 = vmatprep.subr.bf16.mxu0 0
  %2883 = vmatpush1.bf16.xpose.msra.mxu0 0
  %2884 = vmatprep.mubr.bf16.mxu0 0
  %2885 = vmatmul.mubr.bf16.gmra.mrb[0].mxu0 %v2847
  %v2886 = vpop.f32.mrb[0].mxu0
  %v2887 = vadd.f32 0.0, %v2886
  %v2888 = vpop.f32.mrb[0].mxu0
  %v2889 = vpop.f32.mrb[0].mxu0
  %v2890 = vpop.f32.mrb[0].mxu0
  %2891 = vdwg.mxu0
  %2893 = vrot.lane.b32.xlu0 %v2842, 96
  %v2894 = vpop.permute.xlu0 %2893
  %v2896 = vsel %vm163, %v2842, 0
  %v2899 = vsel %vm163, %v2894, 0
  %2901 = vmatprep.subr.bf16.mxu0 0
  %2902 = vmatpush1.bf16.xpose.msra.mxu0 %v2899
  %2903 = vmatprep.subr.bf16.mxu0 0
  %2904 = vmatpush1.bf16.xpose.msra.mxu0 0
  %2905 = vmatprep.subr.bf16.mxu0 0
  %2906 = vmatpush1.bf16.xpose.msra.mxu0 0
  %2907 = vmatprep.subr.bf16.mxu0 0
  %2908 = vmatpush1.bf16.xpose.msra.mxu0 0
  %2909 = vmatprep.subr.bf16.mxu0 0
  %2910 = vmatpush1.bf16.xpose.msra.mxu0 0
  %2911 = vmatprep.subr.bf16.mxu0 0
  %2912 = vmatpush1.bf16.xpose.msra.mxu0 0
  %2913 = vmatprep.subr.bf16.mxu0 0
  %2914 = vmatpush1.bf16.xpose.msra.mxu0 0
  %2915 = vmatprep.subr.bf16.mxu0 0
  %2916 = vmatpush1.bf16.xpose.msra.mxu0 0
  %2917 = vmatprep.subr.bf16.mxu0 0
  %2918 = vmatpush1.bf16.xpose.msra.mxu0 0
  %2919 = vmatprep.subr.bf16.mxu0 0
  %2920 = vmatpush1.bf16.xpose.msra.mxu0 0
  %2921 = vmatprep.subr.bf16.mxu0 0
  %2922 = vmatpush1.bf16.xpose.msra.mxu0 0
  %2923 = vmatprep.subr.bf16.mxu0 0
  %2924 = vmatpush1.bf16.xpose.msra.mxu0 0
  %2925 = vmatprep.subr.bf16.mxu0 0
  %2926 = vmatpush1.bf16.xpose.msra.mxu0 0
  %2927 = vmatprep.subr.bf16.mxu0 0
  %2928 = vmatpush1.bf16.xpose.msra.mxu0 0
  %2929 = vmatprep.subr.bf16.mxu0 0
  %2930 = vmatpush1.bf16.xpose.msra.mxu0 0
  %2931 = vmatprep.subr.bf16.mxu0 0
  %2932 = vmatpush1.bf16.xpose.msra.mxu0 0
  %2933 = vmatprep.mubr.bf16.mxu0 0
  %2934 = vmatmul.mubr.bf16.gmra.mrb[0].mxu0 %v2896
  %v2935 = vpop.f32.mrb[0].mxu0
  %v2936 = vadd.f32 0.0, %v2935
  %v2937 = vpop.f32.mrb[0].mxu0
  %v2938 = vpop.f32.mrb[0].mxu0
  %v2939 = vpop.f32.mrb[0].mxu0
  %2940 = vdwg.mxu0
  %v2941 = vsel %vm87, %v2887, -1e+09
  %v2942 = vsel %vm88, %v2936, -1e+09
  %v2943 = vsel %vm163, %v2941, -inf
  %2944 = vmax.xlane.f32.xlu0 %v2943
  %v2945 = vpop.xlane.xlu0 %2944
  %v2946 = vsel %vm163, %v2942, -inf
  %2947 = vmax.xlane.f32.xlu0 %v2946
  %v2948 = vpop.xlane.xlu0 %2947
  %v2949 = vsub.f32 %v2941, %v2945
  %v2950 = vsub.f32 %v2942, %v2948
  %v2951 = vmul.f32 %v2949, 1.442695
  %v2952 = vpow.pop %v2951
  %v2953 = vmul.f32 %v2950, 1.442695
  %v2954 = vpow.pop %v2953
  %v2955 = vsel %vm163, %v2952, 0.0
  %2956 = vadd.xlane.f32.xlu0 %v2955
  %v2957 = vpop.xlane.xlu0 %2956
  %v2958 = vsel %vm163, %v2954, 0.0
  %2959 = vadd.xlane.f32.xlu0 %v2958
  %v2960 = vpop.xlane.xlu0 %2959
  %v2961 = vrcp.pop %v2957
  %v2962 = vrcp.pop %v2960
  %v2963 = vmul.f32 %v2952, %v2961
  %v2964 = vmul.f32 %v2954, %v2962
  %v2965 = vpack.c.bf16 %v2963, %v2963
  %v2966 = vpack.c.bf16 %v2964, %v2964
  %2967 = vrot.lane.b32.xlu0 %v2841, 64
  %v2968 = vpop.permute.xlu0 %2967
  %v2970 = vsel %vm163, %v2965, 0
  %v2973 = vsel %vm290, %v2968, 0
  %2975 = vmatprep.subr.bf16.mxu0 0
  %2976 = vmatpush1.bf16.msra.mxu0 %v2973
  %2977 = vmatprep.subr.bf16.mxu0 0
  %2978 = vmatpush1.bf16.msra.mxu0 0
  %2979 = vmatprep.subr.bf16.mxu0 0
  %2980 = vmatpush1.bf16.msra.mxu0 0
  %2981 = vmatprep.subr.bf16.mxu0 0
  %2982 = vmatpush1.bf16.msra.mxu0 0
  %2983 = vmatprep.subr.bf16.mxu0 0
  %2984 = vmatpush1.bf16.msra.mxu0 0
  %2985 = vmatprep.subr.bf16.mxu0 0
  %2986 = vmatpush1.bf16.msra.mxu0 0
  %2987 = vmatprep.subr.bf16.mxu0 0
  %2988 = vmatpush1.bf16.msra.mxu0 0
  %2989 = vmatprep.subr.bf16.mxu0 0
  %2990 = vmatpush1.bf16.msra.mxu0 0
  %2991 = vmatprep.subr.bf16.mxu0 0
  %2992 = vmatpush1.bf16.msra.mxu0 0
  %2993 = vmatprep.subr.bf16.mxu0 0
  %2994 = vmatpush1.bf16.msra.mxu0 0
  %2995 = vmatprep.subr.bf16.mxu0 0
  %2996 = vmatpush1.bf16.msra.mxu0 0
  %2997 = vmatprep.subr.bf16.mxu0 0
  %2998 = vmatpush1.bf16.msra.mxu0 0
  %2999 = vmatprep.subr.bf16.mxu0 0
  %3000 = vmatpush1.bf16.msra.mxu0 0
  %3001 = vmatprep.subr.bf16.mxu0 0
  %3002 = vmatpush1.bf16.msra.mxu0 0
  %3003 = vmatprep.subr.bf16.mxu0 0
  %3004 = vmatpush1.bf16.msra.mxu0 0
  %3005 = vmatprep.subr.bf16.mxu0 0
  %3006 = vmatpush1.bf16.msra.mxu0 0
  %3007 = vmatprep.mubr.bf16.mxu0 0
  %3008 = vmatmul.mubr.bf16.gmra.mrb[0].mxu0 %v2970
  %v3009 = vpop.f32.mrb[0].mxu0
  %v3010 = vadd.f32 0.0, %v3009
  %v3011 = vpop.f32.mrb[0].mxu0
  %v3012 = vpop.f32.mrb[0].mxu0
  %v3013 = vpop.f32.mrb[0].mxu0
  %3014 = vdwg.mxu0
  %3015 = vrot.lane.b32.xlu0 %v2842, 64
  %v3016 = vpop.permute.xlu0 %3015
  %v3018 = vsel %vm163, %v2966, 0
  %v3021 = vsel %vm290, %v3016, 0
  %3023 = vmatprep.subr.bf16.mxu0 0
  %3024 = vmatpush1.bf16.msra.mxu0 %v3021
  %3025 = vmatprep.subr.bf16.mxu0 0
  %3026 = vmatpush1.bf16.msra.mxu0 0
  %3027 = vmatprep.subr.bf16.mxu0 0
  %3028 = vmatpush1.bf16.msra.mxu0 0
  %3029 = vmatprep.subr.bf16.mxu0 0
  %3030 = vmatpush1.bf16.msra.mxu0 0
  %3031 = vmatprep.subr.bf16.mxu0 0
  %3032 = vmatpush1.bf16.msra.mxu0 0
  %3033 = vmatprep.subr.bf16.mxu0 0
  %3034 = vmatpush1.bf16.msra.mxu0 0
  %3035 = vmatprep.subr.bf16.mxu0 0
  %3036 = vmatpush1.bf16.msra.mxu0 0
  %3037 = vmatprep.subr.bf16.mxu0 0
  %3038 = vmatpush1.bf16.msra.mxu0 0
  %3039 = vmatprep.subr.bf16.mxu0 0
  %3040 = vmatpush1.bf16.msra.mxu0 0
  %3041 = vmatprep.subr.bf16.mxu0 0
  %3042 = vmatpush1.bf16.msra.mxu0 0
  %3043 = vmatprep.subr.bf16.mxu0 0
  %3044 = vmatpush1.bf16.msra.mxu0 0
  %3045 = vmatprep.subr.bf16.mxu0 0
  %3046 = vmatpush1.bf16.msra.mxu0 0
  %3047 = vmatprep.subr.bf16.mxu0 0
  %3048 = vmatpush1.bf16.msra.mxu0 0
  %3049 = vmatprep.subr.bf16.mxu0 0
  %3050 = vmatpush1.bf16.msra.mxu0 0
  %3051 = vmatprep.subr.bf16.mxu0 0
  %3052 = vmatpush1.bf16.msra.mxu0 0
  %3053 = vmatprep.subr.bf16.mxu0 0
  %3054 = vmatpush1.bf16.msra.mxu0 0
  %3055 = vmatprep.mubr.bf16.mxu0 0
  %3056 = vmatmul.mubr.bf16.gmra.mrb[0].mxu0 %v3018
  %v3057 = vpop.f32.mrb[0].mxu0
  %v3058 = vadd.f32 0.0, %v3057
  %v3059 = vpop.f32.mrb[0].mxu0
  %v3060 = vpop.f32.mrb[0].mxu0
  %v3061 = vpop.f32.mrb[0].mxu0
  %3062 = vdwg.mxu0
  %3063 = vrot.lane.b32.xlu0 %v2841, 120
  %v3064 = vpop.permute.xlu0 %3063
  %3065 = vrot.lane.b32.xlu0 %v2841, 88
  %v3066 = vpop.permute.xlu0 %3065
  %v3068 = vsel %vm163, %v3064, 0
  %v3071 = vsel %vm163, %v3066, 0
  %3073 = vmatprep.subr.bf16.mxu0 0
  %3074 = vmatpush1.bf16.xpose.msra.mxu0 %v3071
  %3075 = vmatprep.subr.bf16.mxu0 0
  %3076 = vmatpush1.bf16.xpose.msra.mxu0 0
  %3077 = vmatprep.subr.bf16.mxu0 0
  %3078 = vmatpush1.bf16.xpose.msra.mxu0 0
  %3079 = vmatprep.subr.bf16.mxu0 0
  %3080 = vmatpush1.bf16.xpose.msra.mxu0 0
  %3081 = vmatprep.subr.bf16.mxu0 0
  %3082 = vmatpush1.bf16.xpose.msra.mxu0 0
  %3083 = vmatprep.subr.bf16.mxu0 0
  %3084 = vmatpush1.bf16.xpose.msra.mxu0 0
  %3085 = vmatprep.subr.bf16.mxu0 0
  %3086 = vmatpush1.bf16.xpose.msra.mxu0 0
  %3087 = vmatprep.subr.bf16.mxu0 0
  %3088 = vmatpush1.bf16.xpose.msra.mxu0 0
  %3089 = vmatprep.subr.bf16.mxu0 0
  %3090 = vmatpush1.bf16.xpose.msra.mxu0 0
  %3091 = vmatprep.subr.bf16.mxu0 0
  %3092 = vmatpush1.bf16.xpose.msra.mxu0 0
  %3093 = vmatprep.subr.bf16.mxu0 0
  %3094 = vmatpush1.bf16.xpose.msra.mxu0 0
  %3095 = vmatprep.subr.bf16.mxu0 0
  %3096 = vmatpush1.bf16.xpose.msra.mxu0 0
  %3097 = vmatprep.subr.bf16.mxu0 0
  %3098 = vmatpush1.bf16.xpose.msra.mxu0 0
  %3099 = vmatprep.subr.bf16.mxu0 0
  %3100 = vmatpush1.bf16.xpose.msra.mxu0 0
  %3101 = vmatprep.subr.bf16.mxu0 0
  %3102 = vmatpush1.bf16.xpose.msra.mxu0 0
  %3103 = vmatprep.subr.bf16.mxu0 0
  %3104 = vmatpush1.bf16.xpose.msra.mxu0 0
  %3105 = vmatprep.mubr.bf16.mxu0 0
  %3106 = vmatmul.mubr.bf16.gmra.mrb[0].mxu0 %v3068
  %v3107 = vpop.f32.mrb[0].mxu0
  %v3108 = vadd.f32 0.0, %v3107
  %v3109 = vpop.f32.mrb[0].mxu0
  %v3110 = vpop.f32.mrb[0].mxu0
  %v3111 = vpop.f32.mrb[0].mxu0
  %3112 = vdwg.mxu0
  %3113 = vrot.lane.b32.xlu0 %v2842, 120
  %v3114 = vpop.permute.xlu0 %3113
  %3115 = vrot.lane.b32.xlu0 %v2842, 88
  %v3116 = vpop.permute.xlu0 %3115
  %v3118 = vsel %vm163, %v3114, 0
  %v3121 = vsel %vm163, %v3116, 0
  %3123 = vmatprep.subr.bf16.mxu0 0
  %3124 = vmatpush1.bf16.xpose.msra.mxu0 %v3121
  %3125 = vmatprep.subr.bf16.mxu0 0
  %3126 = vmatpush1.bf16.xpose.msra.mxu0 0
  %3127 = vmatprep.subr.bf16.mxu0 0
  %3128 = vmatpush1.bf16.xpose.msra.mxu0 0
  %3129 = vmatprep.subr.bf16.mxu0 0
  %3130 = vmatpush1.bf16.xpose.msra.mxu0 0
  %3131 = vmatprep.subr.bf16.mxu0 0
  %3132 = vmatpush1.bf16.xpose.msra.mxu0 0
  %3133 = vmatprep.subr.bf16.mxu0 0
  %3134 = vmatpush1.bf16.xpose.msra.mxu0 0
  %3135 = vmatprep.subr.bf16.mxu0 0
  %3136 = vmatpush1.bf16.xpose.msra.mxu0 0
  %3137 = vmatprep.subr.bf16.mxu0 0
  %3138 = vmatpush1.bf16.xpose.msra.mxu0 0
  %3139 = vmatprep.subr.bf16.mxu0 0
  %3140 = vmatpush1.bf16.xpose.msra.mxu0 0
  %3141 = vmatprep.subr.bf16.mxu0 0
  %3142 = vmatpush1.bf16.xpose.msra.mxu0 0
  %3143 = vmatprep.subr.bf16.mxu0 0
  %3144 = vmatpush1.bf16.xpose.msra.mxu0 0
  %3145 = vmatprep.subr.bf16.mxu0 0
  %3146 = vmatpush1.bf16.xpose.msra.mxu0 0
  %3147 = vmatprep.subr.bf16.mxu0 0
  %3148 = vmatpush1.bf16.xpose.msra.mxu0 0
  %3149 = vmatprep.subr.bf16.mxu0 0
  %3150 = vmatpush1.bf16.xpose.msra.mxu0 0
  %3151 = vmatprep.subr.bf16.mxu0 0
  %3152 = vmatpush1.bf16.xpose.msra.mxu0 0
  %3153 = vmatprep.subr.bf16.mxu0 0
  %3154 = vmatpush1.bf16.xpose.msra.mxu0 0
  %3155 = vmatprep.mubr.bf16.mxu0 0
  %3156 = vmatmul.mubr.bf16.gmra.mrb[0].mxu0 %v3118
  %v3157 = vpop.f32.mrb[0].mxu0
  %v3158 = vadd.f32 0.0, %v3157
  %v3159 = vpop.f32.mrb[0].mxu0
  %v3160 = vpop.f32.mrb[0].mxu0
  %v3161 = vpop.f32.mrb[0].mxu0
  %3162 = vdwg.mxu0
  %v3163 = vsel %vm87, %v3108, -1e+09
  %v3164 = vsel %vm88, %v3158, -1e+09
  %v3165 = vsel %vm163, %v3163, -inf
  %3166 = vmax.xlane.f32.xlu0 %v3165
  %v3167 = vpop.xlane.xlu0 %3166
  %v3168 = vsel %vm163, %v3164, -inf
  %3169 = vmax.xlane.f32.xlu0 %v3168
  %v3170 = vpop.xlane.xlu0 %3169
  %v3171 = vsub.f32 %v3163, %v3167
  %v3172 = vsub.f32 %v3164, %v3170
  %v3173 = vmul.f32 %v3171, 1.442695
  %v3174 = vpow.pop %v3173
  %v3175 = vmul.f32 %v3172, 1.442695
  %v3176 = vpow.pop %v3175
  %v3177 = vsel %vm163, %v3174, 0.0
  %3178 = vadd.xlane.f32.xlu0 %v3177
  %v3179 = vpop.xlane.xlu0 %3178
  %v3180 = vsel %vm163, %v3176, 0.0
  %3181 = vadd.xlane.f32.xlu0 %v3180
  %v3182 = vpop.xlane.xlu0 %3181
  %v3183 = vrcp.pop %v3179
  %v3184 = vrcp.pop %v3182
  %v3185 = vmul.f32 %v3174, %v3183
  %v3186 = vmul.f32 %v3176, %v3184
  %v3187 = vpack.c.bf16 %v3185, %v3185
  %v3188 = vpack.c.bf16 %v3186, %v3186
  %3189 = vrot.lane.b32.xlu0 %v2841, 56
  %v3190 = vpop.permute.xlu0 %3189
  %v3192 = vsel %vm163, %v3187, 0
  %v3195 = vsel %vm290, %v3190, 0
  %3197 = vmatprep.subr.bf16.mxu0 0
  %3198 = vmatpush1.bf16.msra.mxu0 %v3195
  %3199 = vmatprep.subr.bf16.mxu0 0
  %3200 = vmatpush1.bf16.msra.mxu0 0
  %3201 = vmatprep.subr.bf16.mxu0 0
  %3202 = vmatpush1.bf16.msra.mxu0 0
  %3203 = vmatprep.subr.bf16.mxu0 0
  %3204 = vmatpush1.bf16.msra.mxu0 0
  %3205 = vmatprep.subr.bf16.mxu0 0
  %3206 = vmatpush1.bf16.msra.mxu0 0
  %3207 = vmatprep.subr.bf16.mxu0 0
  %3208 = vmatpush1.bf16.msra.mxu0 0
  %3209 = vmatprep.subr.bf16.mxu0 0
  %3210 = vmatpush1.bf16.msra.mxu0 0
  %3211 = vmatprep.subr.bf16.mxu0 0
  %3212 = vmatpush1.bf16.msra.mxu0 0
  %3213 = vmatprep.subr.bf16.mxu0 0
  %3214 = vmatpush1.bf16.msra.mxu0 0
  %3215 = vmatprep.subr.bf16.mxu0 0
  %3216 = vmatpush1.bf16.msra.mxu0 0
  %3217 = vmatprep.subr.bf16.mxu0 0
  %3218 = vmatpush1.bf16.msra.mxu0 0
  %3219 = vmatprep.subr.bf16.mxu0 0
  %3220 = vmatpush1.bf16.msra.mxu0 0
  %3221 = vmatprep.subr.bf16.mxu0 0
  %3222 = vmatpush1.bf16.msra.mxu0 0
  %3223 = vmatprep.subr.bf16.mxu0 0
  %3224 = vmatpush1.bf16.msra.mxu0 0
  %3225 = vmatprep.subr.bf16.mxu0 0
  %3226 = vmatpush1.bf16.msra.mxu0 0
  %3227 = vmatprep.subr.bf16.mxu0 0
  %3228 = vmatpush1.bf16.msra.mxu0 0
  %3229 = vmatprep.mubr.bf16.mxu0 0
  %3230 = vmatmul.mubr.bf16.gmra.mrb[0].mxu0 %v3192
  %v3231 = vpop.f32.mrb[0].mxu0
  %v3232 = vadd.f32 0.0, %v3231
  %v3233 = vpop.f32.mrb[0].mxu0
  %v3234 = vpop.f32.mrb[0].mxu0
  %v3235 = vpop.f32.mrb[0].mxu0
  %3236 = vdwg.mxu0
  %3237 = vrot.lane.b32.xlu0 %v2842, 56
  %v3238 = vpop.permute.xlu0 %3237
  %v3240 = vsel %vm163, %v3188, 0
  %v3243 = vsel %vm290, %v3238, 0
  %3245 = vmatprep.subr.bf16.mxu0 0
  %3246 = vmatpush1.bf16.msra.mxu0 %v3243
  %3247 = vmatprep.subr.bf16.mxu0 0
  %3248 = vmatpush1.bf16.msra.mxu0 0
  %3249 = vmatprep.subr.bf16.mxu0 0
  %3250 = vmatpush1.bf16.msra.mxu0 0
  %3251 = vmatprep.subr.bf16.mxu0 0
  %3252 = vmatpush1.bf16.msra.mxu0 0
  %3253 = vmatprep.subr.bf16.mxu0 0
  %3254 = vmatpush1.bf16.msra.mxu0 0
  %3255 = vmatprep.subr.bf16.mxu0 0
  %3256 = vmatpush1.bf16.msra.mxu0 0
  %3257 = vmatprep.subr.bf16.mxu0 0
  %3258 = vmatpush1.bf16.msra.mxu0 0
  %3259 = vmatprep.subr.bf16.mxu0 0
  %3260 = vmatpush1.bf16.msra.mxu0 0
  %3261 = vmatprep.subr.bf16.mxu0 0
  %3262 = vmatpush1.bf16.msra.mxu0 0
  %3263 = vmatprep.subr.bf16.mxu0 0
  %3264 = vmatpush1.bf16.msra.mxu0 0
  %3265 = vmatprep.subr.bf16.mxu0 0
  %3266 = vmatpush1.bf16.msra.mxu0 0
  %3267 = vmatprep.subr.bf16.mxu0 0
  %3268 = vmatpush1.bf16.msra.mxu0 0
  %3269 = vmatprep.subr.bf16.mxu0 0
  %3270 = vmatpush1.bf16.msra.mxu0 0
  %3271 = vmatprep.subr.bf16.mxu0 0
  %3272 = vmatpush1.bf16.msra.mxu0 0
  %3273 = vmatprep.subr.bf16.mxu0 0
  %3274 = vmatpush1.bf16.msra.mxu0 0
  %3275 = vmatprep.subr.bf16.mxu0 0
  %3276 = vmatpush1.bf16.msra.mxu0 0
  %3277 = vmatprep.mubr.bf16.mxu0 0
  %3278 = vmatmul.mubr.bf16.gmra.mrb[0].mxu0 %v3240
  %v3279 = vpop.f32.mrb[0].mxu0
  %v3280 = vadd.f32 0.0, %v3279
  %v3281 = vpop.f32.mrb[0].mxu0
  %v3282 = vpop.f32.mrb[0].mxu0
  %v3283 = vpop.f32.mrb[0].mxu0
  %3284 = vdwg.mxu0
  %3285 = vrot.lane.b32.xlu0 %v2841, 112
  %v3286 = vpop.permute.xlu0 %3285
  %3287 = vrot.lane.b32.xlu0 %v2841, 80
  %v3288 = vpop.permute.xlu0 %3287
  %v3290 = vsel %vm163, %v3286, 0
  %v3293 = vsel %vm163, %v3288, 0
  %3295 = vmatprep.subr.bf16.mxu0 0
  %3296 = vmatpush1.bf16.xpose.msra.mxu0 %v3293
  %3297 = vmatprep.subr.bf16.mxu0 0
  %3298 = vmatpush1.bf16.xpose.msra.mxu0 0
  %3299 = vmatprep.subr.bf16.mxu0 0
  %3300 = vmatpush1.bf16.xpose.msra.mxu0 0
  %3301 = vmatprep.subr.bf16.mxu0 0
  %3302 = vmatpush1.bf16.xpose.msra.mxu0 0
  %3303 = vmatprep.subr.bf16.mxu0 0
  %3304 = vmatpush1.bf16.xpose.msra.mxu0 0
  %3305 = vmatprep.subr.bf16.mxu0 0
  %3306 = vmatpush1.bf16.xpose.msra.mxu0 0
  %3307 = vmatprep.subr.bf16.mxu0 0
  %3308 = vmatpush1.bf16.xpose.msra.mxu0 0
  %3309 = vmatprep.subr.bf16.mxu0 0
  %3310 = vmatpush1.bf16.xpose.msra.mxu0 0
  %3311 = vmatprep.subr.bf16.mxu0 0
  %3312 = vmatpush1.bf16.xpose.msra.mxu0 0
  %3313 = vmatprep.subr.bf16.mxu0 0
  %3314 = vmatpush1.bf16.xpose.msra.mxu0 0
  %3315 = vmatprep.subr.bf16.mxu0 0
  %3316 = vmatpush1.bf16.xpose.msra.mxu0 0
  %3317 = vmatprep.subr.bf16.mxu0 0
  %3318 = vmatpush1.bf16.xpose.msra.mxu0 0
  %3319 = vmatprep.subr.bf16.mxu0 0
  %3320 = vmatpush1.bf16.xpose.msra.mxu0 0
  %3321 = vmatprep.subr.bf16.mxu0 0
  %3322 = vmatpush1.bf16.xpose.msra.mxu0 0
  %3323 = vmatprep.subr.bf16.mxu0 0
  %3324 = vmatpush1.bf16.xpose.msra.mxu0 0
  %3325 = vmatprep.subr.bf16.mxu0 0
  %3326 = vmatpush1.bf16.xpose.msra.mxu0 0
  %3327 = vmatprep.mubr.bf16.mxu0 0
  %3328 = vmatmul.mubr.bf16.gmra.mrb[0].mxu0 %v3290
  %v3329 = vpop.f32.mrb[0].mxu0
  %v3330 = vadd.f32 0.0, %v3329
  %v3331 = vpop.f32.mrb[0].mxu0
  %v3332 = vpop.f32.mrb[0].mxu0
  %v3333 = vpop.f32.mrb[0].mxu0
  %3334 = vdwg.mxu0
  %3335 = vrot.lane.b32.xlu0 %v2842, 112
  %v3336 = vpop.permute.xlu0 %3335
  %3337 = vrot.lane.b32.xlu0 %v2842, 80
  %v3338 = vpop.permute.xlu0 %3337
  %v3340 = vsel %vm163, %v3336, 0
  %v3343 = vsel %vm163, %v3338, 0
  %3345 = vmatprep.subr.bf16.mxu0 0
  %3346 = vmatpush1.bf16.xpose.msra.mxu0 %v3343
  %3347 = vmatprep.subr.bf16.mxu0 0
  %3348 = vmatpush1.bf16.xpose.msra.mxu0 0
  %3349 = vmatprep.subr.bf16.mxu0 0
  %3350 = vmatpush1.bf16.xpose.msra.mxu0 0
  %3351 = vmatprep.subr.bf16.mxu0 0
  %3352 = vmatpush1.bf16.xpose.msra.mxu0 0
  %3353 = vmatprep.subr.bf16.mxu0 0
  %3354 = vmatpush1.bf16.xpose.msra.mxu0 0
  %3355 = vmatprep.subr.bf16.mxu0 0
  %3356 = vmatpush1.bf16.xpose.msra.mxu0 0
  %3357 = vmatprep.subr.bf16.mxu0 0
  %3358 = vmatpush1.bf16.xpose.msra.mxu0 0
  %3359 = vmatprep.subr.bf16.mxu0 0
  %3360 = vmatpush1.bf16.xpose.msra.mxu0 0
  %3361 = vmatprep.subr.bf16.mxu0 0
  %3362 = vmatpush1.bf16.xpose.msra.mxu0 0
  %3363 = vmatprep.subr.bf16.mxu0 0
  %3364 = vmatpush1.bf16.xpose.msra.mxu0 0
  %3365 = vmatprep.subr.bf16.mxu0 0
  %3366 = vmatpush1.bf16.xpose.msra.mxu0 0
  %3367 = vmatprep.subr.bf16.mxu0 0
  %3368 = vmatpush1.bf16.xpose.msra.mxu0 0
  %3369 = vmatprep.subr.bf16.mxu0 0
  %3370 = vmatpush1.bf16.xpose.msra.mxu0 0
  %3371 = vmatprep.subr.bf16.mxu0 0
  %3372 = vmatpush1.bf16.xpose.msra.mxu0 0
  %3373 = vmatprep.subr.bf16.mxu0 0
  %3374 = vmatpush1.bf16.xpose.msra.mxu0 0
  %3375 = vmatprep.subr.bf16.mxu0 0
  %3376 = vmatpush1.bf16.xpose.msra.mxu0 0
  %3377 = vmatprep.mubr.bf16.mxu0 0
  %3378 = vmatmul.mubr.bf16.gmra.mrb[0].mxu0 %v3340
  %v3379 = vpop.f32.mrb[0].mxu0
  %v3380 = vadd.f32 0.0, %v3379
  %v3381 = vpop.f32.mrb[0].mxu0
  %v3382 = vpop.f32.mrb[0].mxu0
  %v3383 = vpop.f32.mrb[0].mxu0
  %3384 = vdwg.mxu0
  %v3385 = vsel %vm87, %v3330, -1e+09
  %v3386 = vsel %vm88, %v3380, -1e+09
  %v3387 = vsel %vm163, %v3385, -inf
  %3388 = vmax.xlane.f32.xlu0 %v3387
  %v3389 = vpop.xlane.xlu0 %3388
  %v3390 = vsel %vm163, %v3386, -inf
  %3391 = vmax.xlane.f32.xlu0 %v3390
  %v3392 = vpop.xlane.xlu0 %3391
  %v3393 = vsub.f32 %v3385, %v3389
  %v3394 = vsub.f32 %v3386, %v3392
  %v3395 = vmul.f32 %v3393, 1.442695
  %v3396 = vpow.pop %v3395
  %v3397 = vmul.f32 %v3394, 1.442695
  %v3398 = vpow.pop %v3397
  %v3399 = vsel %vm163, %v3396, 0.0
  %3400 = vadd.xlane.f32.xlu0 %v3399
  %v3401 = vpop.xlane.xlu0 %3400
  %v3402 = vsel %vm163, %v3398, 0.0
  %3403 = vadd.xlane.f32.xlu0 %v3402
  %v3404 = vpop.xlane.xlu0 %3403
  %v3405 = vrcp.pop %v3401
  %v3406 = vrcp.pop %v3404
  %v3407 = vmul.f32 %v3396, %v3405
  %v3408 = vmul.f32 %v3398, %v3406
  %v3409 = vpack.c.bf16 %v3407, %v3407
  %v3410 = vpack.c.bf16 %v3408, %v3408
  %3411 = vrot.lane.b32.xlu0 %v2841, 48
  %v3412 = vpop.permute.xlu0 %3411
  %v3414 = vsel %vm163, %v3409, 0
  %v3417 = vsel %vm290, %v3412, 0
  %3419 = vmatprep.subr.bf16.mxu0 0
  %3420 = vmatpush1.bf16.msra.mxu0 %v3417
  %3421 = vmatprep.subr.bf16.mxu0 0
  %3422 = vmatpush1.bf16.msra.mxu0 0
  %3423 = vmatprep.subr.bf16.mxu0 0
  %3424 = vmatpush1.bf16.msra.mxu0 0
  %3425 = vmatprep.subr.bf16.mxu0 0
  %3426 = vmatpush1.bf16.msra.mxu0 0
  %3427 = vmatprep.subr.bf16.mxu0 0
  %3428 = vmatpush1.bf16.msra.mxu0 0
  %3429 = vmatprep.subr.bf16.mxu0 0
  %3430 = vmatpush1.bf16.msra.mxu0 0
  %3431 = vmatprep.subr.bf16.mxu0 0
  %3432 = vmatpush1.bf16.msra.mxu0 0
  %3433 = vmatprep.subr.bf16.mxu0 0
  %3434 = vmatpush1.bf16.msra.mxu0 0
  %3435 = vmatprep.subr.bf16.mxu0 0
  %3436 = vmatpush1.bf16.msra.mxu0 0
  %3437 = vmatprep.subr.bf16.mxu0 0
  %3438 = vmatpush1.bf16.msra.mxu0 0
  %3439 = vmatprep.subr.bf16.mxu0 0
  %3440 = vmatpush1.bf16.msra.mxu0 0
  %3441 = vmatprep.subr.bf16.mxu0 0
  %3442 = vmatpush1.bf16.msra.mxu0 0
  %3443 = vmatprep.subr.bf16.mxu0 0
  %3444 = vmatpush1.bf16.msra.mxu0 0
  %3445 = vmatprep.subr.bf16.mxu0 0
  %3446 = vmatpush1.bf16.msra.mxu0 0
  %3447 = vmatprep.subr.bf16.mxu0 0
  %3448 = vmatpush1.bf16.msra.mxu0 0
  %3449 = vmatprep.subr.bf16.mxu0 0
  %3450 = vmatpush1.bf16.msra.mxu0 0
  %3451 = vmatprep.mubr.bf16.mxu0 0
  %3452 = vmatmul.mubr.bf16.gmra.mrb[0].mxu0 %v3414
  %v3453 = vpop.f32.mrb[0].mxu0
  %v3454 = vadd.f32 0.0, %v3453
  %v3455 = vpop.f32.mrb[0].mxu0
  %v3456 = vpop.f32.mrb[0].mxu0
  %v3457 = vpop.f32.mrb[0].mxu0
  %3458 = vdwg.mxu0
  %3459 = vrot.lane.b32.xlu0 %v2842, 48
  %v3460 = vpop.permute.xlu0 %3459
  %v3462 = vsel %vm163, %v3410, 0
  %v3465 = vsel %vm290, %v3460, 0
  %3467 = vmatprep.subr.bf16.mxu0 0
  %3468 = vmatpush1.bf16.msra.mxu0 %v3465
  %3469 = vmatprep.subr.bf16.mxu0 0
  %3470 = vmatpush1.bf16.msra.mxu0 0
  %3471 = vmatprep.subr.bf16.mxu0 0
  %3472 = vmatpush1.bf16.msra.mxu0 0
  %3473 = vmatprep.subr.bf16.mxu0 0
  %3474 = vmatpush1.bf16.msra.mxu0 0
  %3475 = vmatprep.subr.bf16.mxu0 0
  %3476 = vmatpush1.bf16.msra.mxu0 0
  %3477 = vmatprep.subr.bf16.mxu0 0
  %3478 = vmatpush1.bf16.msra.mxu0 0
  %3479 = vmatprep.subr.bf16.mxu0 0
  %3480 = vmatpush1.bf16.msra.mxu0 0
  %3481 = vmatprep.subr.bf16.mxu0 0
  %3482 = vmatpush1.bf16.msra.mxu0 0
  %3483 = vmatprep.subr.bf16.mxu0 0
  %3484 = vmatpush1.bf16.msra.mxu0 0
  %3485 = vmatprep.subr.bf16.mxu0 0
  %3486 = vmatpush1.bf16.msra.mxu0 0
  %3487 = vmatprep.subr.bf16.mxu0 0
  %3488 = vmatpush1.bf16.msra.mxu0 0
  %3489 = vmatprep.subr.bf16.mxu0 0
  %3490 = vmatpush1.bf16.msra.mxu0 0
  %3491 = vmatprep.subr.bf16.mxu0 0
  %3492 = vmatpush1.bf16.msra.mxu0 0
  %3493 = vmatprep.subr.bf16.mxu0 0
  %3494 = vmatpush1.bf16.msra.mxu0 0
  %3495 = vmatprep.subr.bf16.mxu0 0
  %3496 = vmatpush1.bf16.msra.mxu0 0
  %3497 = vmatprep.subr.bf16.mxu0 0
  %3498 = vmatpush1.bf16.msra.mxu0 0
  %3499 = vmatprep.mubr.bf16.mxu0 0
  %3500 = vmatmul.mubr.bf16.gmra.mrb[0].mxu0 %v3462
  %v3501 = vpop.f32.mrb[0].mxu0
  %v3502 = vadd.f32 0.0, %v3501
  %v3503 = vpop.f32.mrb[0].mxu0
  %v3504 = vpop.f32.mrb[0].mxu0
  %v3505 = vpop.f32.mrb[0].mxu0
  %3506 = vdwg.mxu0
  %3507 = vrot.lane.b32.xlu0 %v2841, 104
  %v3508 = vpop.permute.xlu0 %3507
  %3509 = vrot.lane.b32.xlu0 %v2841, 72
  %v3510 = vpop.permute.xlu0 %3509
  %v3512 = vsel %vm163, %v3508, 0
  %v3515 = vsel %vm163, %v3510, 0
  %3517 = vmatprep.subr.bf16.mxu0 0
  %3518 = vmatpush1.bf16.xpose.msra.mxu0 %v3515
  %3519 = vmatprep.subr.bf16.mxu0 0
  %3520 = vmatpush1.bf16.xpose.msra.mxu0 0
  %3521 = vmatprep.subr.bf16.mxu0 0
  %3522 = vmatpush1.bf16.xpose.msra.mxu0 0
  %3523 = vmatprep.subr.bf16.mxu0 0
  %3524 = vmatpush1.bf16.xpose.msra.mxu0 0
  %3525 = vmatprep.subr.bf16.mxu0 0
  %3526 = vmatpush1.bf16.xpose.msra.mxu0 0
  %3527 = vmatprep.subr.bf16.mxu0 0
  %3528 = vmatpush1.bf16.xpose.msra.mxu0 0
  %3529 = vmatprep.subr.bf16.mxu0 0
  %3530 = vmatpush1.bf16.xpose.msra.mxu0 0
  %3531 = vmatprep.subr.bf16.mxu0 0
  %3532 = vmatpush1.bf16.xpose.msra.mxu0 0
  %3533 = vmatprep.subr.bf16.mxu0 0
  %3534 = vmatpush1.bf16.xpose.msra.mxu0 0
  %3535 = vmatprep.subr.bf16.mxu0 0
  %3536 = vmatpush1.bf16.xpose.msra.mxu0 0
  %3537 = vmatprep.subr.bf16.mxu0 0
  %3538 = vmatpush1.bf16.xpose.msra.mxu0 0
  %3539 = vmatprep.subr.bf16.mxu0 0
  %3540 = vmatpush1.bf16.xpose.msra.mxu0 0
  %3541 = vmatprep.subr.bf16.mxu0 0
  %3542 = vmatpush1.bf16.xpose.msra.mxu0 0
  %3543 = vmatprep.subr.bf16.mxu0 0
  %3544 = vmatpush1.bf16.xpose.msra.mxu0 0
  %3545 = vmatprep.subr.bf16.mxu0 0
  %3546 = vmatpush1.bf16.xpose.msra.mxu0 0
  %3547 = vmatprep.subr.bf16.mxu0 0
  %3548 = vmatpush1.bf16.xpose.msra.mxu0 0
  %3549 = vmatprep.mubr.bf16.mxu0 0
  %3550 = vmatmul.mubr.bf16.gmra.mrb[0].mxu0 %v3512
  %v3551 = vpop.f32.mrb[0].mxu0
  %v3552 = vadd.f32 0.0, %v3551
  %v3553 = vpop.f32.mrb[0].mxu0
  %v3554 = vpop.f32.mrb[0].mxu0
  %v3555 = vpop.f32.mrb[0].mxu0
  %3556 = vdwg.mxu0
  %3557 = vrot.lane.b32.xlu0 %v2842, 104
  %v3558 = vpop.permute.xlu0 %3557
  %3559 = vrot.lane.b32.xlu0 %v2842, 72
  %v3560 = vpop.permute.xlu0 %3559
  %v3562 = vsel %vm163, %v3558, 0
  %v3565 = vsel %vm163, %v3560, 0
  %3567 = vmatprep.subr.bf16.mxu0 0
  %3568 = vmatpush1.bf16.xpose.msra.mxu0 %v3565
  %3569 = vmatprep.subr.bf16.mxu0 0
  %3570 = vmatpush1.bf16.xpose.msra.mxu0 0
  %3571 = vmatprep.subr.bf16.mxu0 0
  %3572 = vmatpush1.bf16.xpose.msra.mxu0 0
  %3573 = vmatprep.subr.bf16.mxu0 0
  %3574 = vmatpush1.bf16.xpose.msra.mxu0 0
  %3575 = vmatprep.subr.bf16.mxu0 0
  %3576 = vmatpush1.bf16.xpose.msra.mxu0 0
  %3577 = vmatprep.subr.bf16.mxu0 0
  %3578 = vmatpush1.bf16.xpose.msra.mxu0 0
  %3579 = vmatprep.subr.bf16.mxu0 0
  %3580 = vmatpush1.bf16.xpose.msra.mxu0 0
  %3581 = vmatprep.subr.bf16.mxu0 0
  %3582 = vmatpush1.bf16.xpose.msra.mxu0 0
  %3583 = vmatprep.subr.bf16.mxu0 0
  %3584 = vmatpush1.bf16.xpose.msra.mxu0 0
  %3585 = vmatprep.subr.bf16.mxu0 0
  %3586 = vmatpush1.bf16.xpose.msra.mxu0 0
  %3587 = vmatprep.subr.bf16.mxu0 0
  %3588 = vmatpush1.bf16.xpose.msra.mxu0 0
  %3589 = vmatprep.subr.bf16.mxu0 0
  %3590 = vmatpush1.bf16.xpose.msra.mxu0 0
  %3591 = vmatprep.subr.bf16.mxu0 0
  %3592 = vmatpush1.bf16.xpose.msra.mxu0 0
  %3593 = vmatprep.subr.bf16.mxu0 0
  %3594 = vmatpush1.bf16.xpose.msra.mxu0 0
  %3595 = vmatprep.subr.bf16.mxu0 0
  %3596 = vmatpush1.bf16.xpose.msra.mxu0 0
  %3597 = vmatprep.subr.bf16.mxu0 0
  %3598 = vmatpush1.bf16.xpose.msra.mxu0 0
  %3599 = vmatprep.mubr.bf16.mxu0 0
  %3600 = vmatmul.mubr.bf16.gmra.mrb[0].mxu0 %v3562
  %v3601 = vpop.f32.mrb[0].mxu0
  %v3602 = vadd.f32 0.0, %v3601
  %v3603 = vpop.f32.mrb[0].mxu0
  %v3604 = vpop.f32.mrb[0].mxu0
  %v3605 = vpop.f32.mrb[0].mxu0
  %3606 = vdwg.mxu0
  %v3607 = vsel %vm87, %v3552, -1e+09
  %v3608 = vsel %vm88, %v3602, -1e+09
  %v3609 = vsel %vm163, %v3607, -inf
  %3610 = vmax.xlane.f32.xlu0 %v3609
  %v3611 = vpop.xlane.xlu0 %3610
  %v3612 = vsel %vm163, %v3608, -inf
  %3613 = vmax.xlane.f32.xlu0 %v3612
  %v3614 = vpop.xlane.xlu0 %3613
  %v3615 = vsub.f32 %v3607, %v3611
  %v3616 = vsub.f32 %v3608, %v3614
  %v3617 = vmul.f32 %v3615, 1.442695
  %v3618 = vpow.pop %v3617
  %v3619 = vmul.f32 %v3616, 1.442695
  %v3620 = vpow.pop %v3619
  %v3621 = vsel %vm163, %v3618, 0.0
  %3622 = vadd.xlane.f32.xlu0 %v3621
  %v3623 = vpop.xlane.xlu0 %3622
  %v3624 = vsel %vm163, %v3620, 0.0
  %3625 = vadd.xlane.f32.xlu0 %v3624
  %v3626 = vpop.xlane.xlu0 %3625
  %v3627 = vrcp.pop %v3623
  %v3628 = vrcp.pop %v3626
  %v3629 = vmul.f32 %v3618, %v3627
  %v3630 = vmul.f32 %v3620, %v3628
  %v3631 = vpack.c.bf16 %v3629, %v3629
  %v3632 = vpack.c.bf16 %v3630, %v3630
  %3633 = vrot.lane.b32.xlu0 %v2841, 40
  %v3634 = vpop.permute.xlu0 %3633
  %v3636 = vsel %vm163, %v3631, 0
  %v3639 = vsel %vm290, %v3634, 0
  %3641 = vmatprep.subr.bf16.mxu0 0
  %3642 = vmatpush1.bf16.msra.mxu0 %v3639
  %3643 = vmatprep.subr.bf16.mxu0 0
  %3644 = vmatpush1.bf16.msra.mxu0 0
  %3645 = vmatprep.subr.bf16.mxu0 0
  %3646 = vmatpush1.bf16.msra.mxu0 0
  %3647 = vmatprep.subr.bf16.mxu0 0
  %3648 = vmatpush1.bf16.msra.mxu0 0
  %3649 = vmatprep.subr.bf16.mxu0 0
  %3650 = vmatpush1.bf16.msra.mxu0 0
  %3651 = vmatprep.subr.bf16.mxu0 0
  %3652 = vmatpush1.bf16.msra.mxu0 0
  %3653 = vmatprep.subr.bf16.mxu0 0
  %3654 = vmatpush1.bf16.msra.mxu0 0
  %3655 = vmatprep.subr.bf16.mxu0 0
  %3656 = vmatpush1.bf16.msra.mxu0 0
  %3657 = vmatprep.subr.bf16.mxu0 0
  %3658 = vmatpush1.bf16.msra.mxu0 0
  %3659 = vmatprep.subr.bf16.mxu0 0
  %3660 = vmatpush1.bf16.msra.mxu0 0
  %3661 = vmatprep.subr.bf16.mxu0 0
  %3662 = vmatpush1.bf16.msra.mxu0 0
  %3663 = vmatprep.subr.bf16.mxu0 0
  %3664 = vmatpush1.bf16.msra.mxu0 0
  %3665 = vmatprep.subr.bf16.mxu0 0
  %3666 = vmatpush1.bf16.msra.mxu0 0
  %3667 = vmatprep.subr.bf16.mxu0 0
  %3668 = vmatpush1.bf16.msra.mxu0 0
  %3669 = vmatprep.subr.bf16.mxu0 0
  %3670 = vmatpush1.bf16.msra.mxu0 0
  %3671 = vmatprep.subr.bf16.mxu0 0
  %3672 = vmatpush1.bf16.msra.mxu0 0
  %3673 = vmatprep.mubr.bf16.mxu0 0
  %3674 = vmatmul.mubr.bf16.gmra.mrb[0].mxu0 %v3636
  %v3675 = vpop.f32.mrb[0].mxu0
  %v3676 = vadd.f32 0.0, %v3675
  %v3677 = vpop.f32.mrb[0].mxu0
  %v3678 = vpop.f32.mrb[0].mxu0
  %v3679 = vpop.f32.mrb[0].mxu0
  %3680 = vdwg.mxu0
  %3681 = vrot.lane.b32.xlu0 %v2842, 40
  %v3682 = vpop.permute.xlu0 %3681
  %v3684 = vsel %vm163, %v3632, 0
  %v3687 = vsel %vm290, %v3682, 0
  %3689 = vmatprep.subr.bf16.mxu0 0
  %3690 = vmatpush1.bf16.msra.mxu0 %v3687
  %3691 = vmatprep.subr.bf16.mxu0 0
  %3692 = vmatpush1.bf16.msra.mxu0 0
  %3693 = vmatprep.subr.bf16.mxu0 0
  %3694 = vmatpush1.bf16.msra.mxu0 0
  %3695 = vmatprep.subr.bf16.mxu0 0
  %3696 = vmatpush1.bf16.msra.mxu0 0
  %3697 = vmatprep.subr.bf16.mxu0 0
  %3698 = vmatpush1.bf16.msra.mxu0 0
  %3699 = vmatprep.subr.bf16.mxu0 0
  %3700 = vmatpush1.bf16.msra.mxu0 0
  %3701 = vmatprep.subr.bf16.mxu0 0
  %3702 = vmatpush1.bf16.msra.mxu0 0
  %3703 = vmatprep.subr.bf16.mxu0 0
  %3704 = vmatpush1.bf16.msra.mxu0 0
  %3705 = vmatprep.subr.bf16.mxu0 0
  %3706 = vmatpush1.bf16.msra.mxu0 0
  %3707 = vmatprep.subr.bf16.mxu0 0
  %3708 = vmatpush1.bf16.msra.mxu0 0
  %3709 = vmatprep.subr.bf16.mxu0 0
  %3710 = vmatpush1.bf16.msra.mxu0 0
  %3711 = vmatprep.subr.bf16.mxu0 0
  %3712 = vmatpush1.bf16.msra.mxu0 0
  %3713 = vmatprep.subr.bf16.mxu0 0
  %3714 = vmatpush1.bf16.msra.mxu0 0
  %3715 = vmatprep.subr.bf16.mxu0 0
  %3716 = vmatpush1.bf16.msra.mxu0 0
  %3717 = vmatprep.subr.bf16.mxu0 0
  %3718 = vmatpush1.bf16.msra.mxu0 0
  %3719 = vmatprep.subr.bf16.mxu0 0
  %3720 = vmatpush1.bf16.msra.mxu0 0
  %3721 = vmatprep.mubr.bf16.mxu0 0
  %3722 = vmatmul.mubr.bf16.gmra.mrb[0].mxu0 %v3684
  %v3723 = vpop.f32.mrb[0].mxu0
  %v3724 = vadd.f32 0.0, %v3723
  %v3725 = vpop.f32.mrb[0].mxu0
  %v3726 = vpop.f32.mrb[0].mxu0
  %v3727 = vpop.f32.mrb[0].mxu0
  %3728 = vdwg.mxu0
  %3731 = vrot.lane.b32.xlu0 %v3232, 8
  %v3732 = vpop.permute.xlu0 %3731
  %3733 = vrot.lane.b32.xlu0 %v3280, 8
  %v3734 = vpop.permute.xlu0 %3733
  %3739 = vrot.lane.b32.xlu0 %v3454, 16
  %v3740 = vpop.permute.xlu0 %3739
  %3741 = vrot.lane.b32.xlu0 %v3502, 16
  %v3742 = vpop.permute.xlu0 %3741
  %3747 = vrot.lane.b32.xlu0 %v3676, 24
  %v3748 = vpop.permute.xlu0 %3747
  %3749 = vrot.lane.b32.xlu0 %v3724, 24
  %v3750 = vpop.permute.xlu0 %3749
  %v3753 = vsel %vm163, %v3010, %v3732
  %v3754 = vsel %vm163, %v3058, %v3734
  %v3755 = vsel %vm1074, %v3753, %v3740
  %v3756 = vsel %vm1074, %v3754, %v3742
  %v3757 = vsel %vm1077, %v3755, %v3748
  %v3758 = vsel %vm1077, %v3756, %v3750
  %s3759 = scalar_lea.vmem %s3, 32
  %v3760 = vld [vmem:[%s3759] sm:$0xf]
  %v3761 = vld [vmem:[%s3759 + $0x4] sm:$0xf]
  %v3762 = vld [vmem:[%s3759 + $0x8] sm:$0xf]
  %v3763 = vld [vmem:[%s3759 + $0xc] sm:$0xf]
  %s3764 = scalar_lea.vmem %s9, 12
  %v3765 = vld [vmem:[%s3764] sm:$0x1]
  %v3766 = vpack.c.bf16 %v3758, %v3757
  %v3768 = vlaneseq
  %v3769 = vshrl.u32 %v3768, 7
  %v3770 = vsub.s32 0, %v3769
  %v3771 = vrot.slane %v3765, %v3770
  %v3777 = vunpack.c.l.b16 %v3760
  %v3778 = vunpack.c.l.b16 %v3761
  %v3779 = vunpack.c.l.b16 %v3762
  %v3780 = vunpack.c.l.b16 %v3763
  %v3781 = vpack.c.b16 %v3778, %v3777
  %v3782 = vpack.c.b16 %v3780, %v3779
  %v3786 = vsel %vm113, %v3766, 0
  %3788 = vmatprep.subr.bf16.mxu0 0
  %3789 = vmatpush1.bf16.msra.mxu0 %v3781
  %3790 = vmatprep.subr.bf16.mxu0 0
  %3791 = vmatpush1.bf16.msra.mxu0 %v3782
  %3792 = vmatprep.subr.bf16.mxu0 0
  %3793 = vmatpush1.bf16.msra.mxu0 0
  %3794 = vmatprep.subr.bf16.mxu0 0
  %3795 = vmatpush1.bf16.msra.mxu0 0
  %3796 = vmatprep.subr.bf16.mxu0 0
  %3797 = vmatpush1.bf16.msra.mxu0 0
  %3798 = vmatprep.subr.bf16.mxu0 0
  %3799 = vmatpush1.bf16.msra.mxu0 0
  %3800 = vmatprep.subr.bf16.mxu0 0
  %3801 = vmatpush1.bf16.msra.mxu0 0
  %3802 = vmatprep.subr.bf16.mxu0 0
  %3803 = vmatpush1.bf16.msra.mxu0 0
  %3804 = vmatprep.subr.bf16.mxu0 0
  %3805 = vmatpush1.bf16.msra.mxu0 0
  %3806 = vmatprep.subr.bf16.mxu0 0
  %3807 = vmatpush1.bf16.msra.mxu0 0
  %3808 = vmatprep.subr.bf16.mxu0 0
  %3809 = vmatpush1.bf16.msra.mxu0 0
  %3810 = vmatprep.subr.bf16.mxu0 0
  %3811 = vmatpush1.bf16.msra.mxu0 0
  %3812 = vmatprep.subr.bf16.mxu0 0
  %3813 = vmatpush1.bf16.msra.mxu0 0
  %3814 = vmatprep.subr.bf16.mxu0 0
  %3815 = vmatpush1.bf16.msra.mxu0 0
  %3816 = vmatprep.subr.bf16.mxu0 0
  %3817 = vmatpush1.bf16.msra.mxu0 0
  %3818 = vmatprep.subr.bf16.mxu0 0
  %3819 = vmatpush1.bf16.msra.mxu0 0
  %3820 = vmatprep.mubr.bf16.mxu0 0
  %3821 = vmatmul.mubr.bf16.gmra.mrb[0].mxu0 %v3786
  %v3822 = vpop.f32.mrb[0].mxu0
  %v3823 = vadd.f32 %v3771, %v3822
  %v3824 = vpop.f32.mrb[0].mxu0
  %v3825 = vpop.f32.mrb[0].mxu0
  %v3826 = vadd.f32 %v3771, %v3825
  %v3827 = vpop.f32.mrb[0].mxu0
  %3828 = vdwg.mxu0
  %v3829 = vadd.f32 %v39, %v3823
  %v3830 = vadd.f32 %v40, %v3826
  %s3831 = scalar_lea.vmem %s9, 16
  %v3832 = vld [vmem:[%s3831] sm:$0x1]
  %s3833 = scalar_lea.vmem %s9, 17
  %v3834 = vld [vmem:[%s3833] sm:$0x1]
  %v3835 = vsel %vm113, %v3829, 0.0
  %3836 = vadd.xlane.f32.xlu0 %v3835
  %v3837 = vpop.xlane.xlu0 %3836
  %v3838 = vsel %vm113, %v3830, 0.0
  %3839 = vadd.xlane.f32.xlu0 %v3838
  %v3840 = vpop.xlane.xlu0 %3839
  %v3841 = vmul.f32 %v3837, %v1160
  %v3842 = vmul.f32 %v3840, %v1160
  %v3843 = vsub.f32 %v3829, %v3841
  %v3844 = vsub.f32 %v3830, %v3842
  %v3845 = vmul.f32 %v3843, %v3843
  %v3846 = vmul.f32 %v3844, %v3844
  %v3847 = vsel %vm113, %v3845, 0.0
  %3848 = vadd.xlane.f32.xlu0 %v3847
  %v3849 = vpop.xlane.xlu0 %3848
  %v3850 = vsel %vm113, %v3846, 0.0
  %3851 = vadd.xlane.f32.xlu0 %v3850
  %v3852 = vpop.xlane.xlu0 %3851
  %v3853 = vmul.f32 %v3849, %v1160
  %v3854 = vmul.f32 %v3852, %v1160
  %v3855 = vadd.f32 %v3853, 1e-05
  %v3856 = vadd.f32 %v3854, 1e-05
  %v3857 = vrsqrt.pop %v3855
  %v3858 = vrsqrt.pop %v3856
  %v3859 = vmul.f32 %v3843, %v3857
  %v3860 = vmul.f32 %v3844, %v3858
  %v3862 = vlaneseq
  %v3863 = vshrl.u32 %v3862, 7
  %v3864 = vsub.s32 0, %v3863
  %v3865 = vrot.slane %v3832, %v3864
  %v3867 = vmul.f32 %v3859, %v3865
  %v3868 = vmul.f32 %v3860, %v3865
  %v3870 = vlaneseq
  %v3871 = vshrl.u32 %v3870, 7
  %v3872 = vsub.s32 0, %v3871
  %v3873 = vrot.slane %v3834, %v3872
  %v3875 = vadd.f32 %v3867, %v3873
  %v3876 = vadd.f32 %v3868, %v3873
  %s3877 = scalar_lea.vmem %s3, 48
  %v3878 = vld [vmem:[%s3877] sm:$0xf]
  %v3879 = vld [vmem:[%s3877 + $0x4] sm:$0xf]
  %v3880 = vld [vmem:[%s3877 + $0x8] sm:$0xf]
  %v3881 = vld [vmem:[%s3877 + $0xc] sm:$0xf]
  %s3882 = scalar_lea.vmem %s9, 13
  %v3883 = vld [vmem:[%s3882] sm:$0x1]
  %v3884 = vpack.c.bf16 %v3876, %v3875
  %v3886 = vlaneseq
  %v3887 = vshrl.u32 %v3886, 7
  %v3888 = vsub.s32 0, %v3887
  %v3889 = vrot.slane %v3883, %v3888
  %v3895 = vunpack.c.l.b16 %v3878
  %v3896 = vunpack.c.l.b16 %v3879
  %v3897 = vunpack.c.l.b16 %v3880
  %v3898 = vunpack.c.l.b16 %v3881
  %v3899 = vpack.c.b16 %v3896, %v3895
  %v3900 = vpack.c.b16 %v3898, %v3897
  %v3904 = vsel %vm113, %v3884, 0
  %3906 = vmatprep.subr.bf16.mxu0 0
  %3907 = vmatpush1.bf16.msra.mxu0 %v3899
  %3908 = vmatprep.subr.bf16.mxu0 0
  %3909 = vmatpush1.bf16.msra.mxu0 %v3900
  %3910 = vmatprep.subr.bf16.mxu0 0
  %3911 = vmatpush1.bf16.msra.mxu0 0
  %3912 = vmatprep.subr.bf16.mxu0 0
  %3913 = vmatpush1.bf16.msra.mxu0 0
  %3914 = vmatprep.subr.bf16.mxu0 0
  %3915 = vmatpush1.bf16.msra.mxu0 0
  %3916 = vmatprep.subr.bf16.mxu0 0
  %3917 = vmatpush1.bf16.msra.mxu0 0
  %3918 = vmatprep.subr.bf16.mxu0 0
  %3919 = vmatpush1.bf16.msra.mxu0 0
  %3920 = vmatprep.subr.bf16.mxu0 0
  %3921 = vmatpush1.bf16.msra.mxu0 0
  %3922 = vmatprep.subr.bf16.mxu0 0
  %3923 = vmatpush1.bf16.msra.mxu0 0
  %3924 = vmatprep.subr.bf16.mxu0 0
  %3925 = vmatpush1.bf16.msra.mxu0 0
  %3926 = vmatprep.subr.bf16.mxu0 0
  %3927 = vmatpush1.bf16.msra.mxu0 0
  %3928 = vmatprep.subr.bf16.mxu0 0
  %3929 = vmatpush1.bf16.msra.mxu0 0
  %3930 = vmatprep.subr.bf16.mxu0 0
  %3931 = vmatpush1.bf16.msra.mxu0 0
  %3932 = vmatprep.subr.bf16.mxu0 0
  %3933 = vmatpush1.bf16.msra.mxu0 0
  %3934 = vmatprep.subr.bf16.mxu0 0
  %3935 = vmatpush1.bf16.msra.mxu0 0
  %3936 = vmatprep.subr.bf16.mxu0 0
  %3937 = vmatpush1.bf16.msra.mxu0 0
  %3938 = vmatprep.mubr.bf16.mxu0 0
  %3939 = vmatmul.mubr.bf16.gmra.mrb[0].mxu0 %v3904
  %v3940 = vpop.f32.mrb[0].mxu0
  %v3941 = vadd.f32 %v3889, %v3940
  %v3942 = vpop.f32.mrb[0].mxu0
  %v3943 = vpop.f32.mrb[0].mxu0
  %v3944 = vadd.f32 %v3889, %v3943
  %v3945 = vpop.f32.mrb[0].mxu0
  %3946 = vdwg.mxu0
  %s3947 = scalar_lea.vmem %s4, 48
  %v3948 = vld [vmem:[%s3947] sm:$0xf]
  %v3949 = vld [vmem:[%s3947 + $0x4] sm:$0xf]
  %v3950 = vld [vmem:[%s3947 + $0x8] sm:$0xf]
  %v3951 = vld [vmem:[%s3947 + $0xc] sm:$0xf]
  %s3952 = scalar_lea.vmem %s8, 3
  %v3953 = vld [vmem:[%s3952] sm:$0x1]
  %v3954 = vpack.c.bf16 %v2774, %v2773
  %v3956 = vlaneseq
  %v3957 = vshrl.u32 %v3956, 7
  %v3958 = vsub.s32 0, %v3957
  %v3959 = vrot.slane %v3953, %v3958
  %v3965 = vunpack.c.l.b16 %v3948
  %v3966 = vunpack.c.l.b16 %v3949
  %v3967 = vunpack.c.l.b16 %v3950
  %v3968 = vunpack.c.l.b16 %v3951
  %v3969 = vpack.c.b16 %v3966, %v3965
  %v3970 = vpack.c.b16 %v3968, %v3967
  %v3974 = vsel %vm113, %v3954, 0
  %3976 = vmatprep.subr.bf16.mxu0 0
  %3977 = vmatpush1.bf16.msra.mxu0 %v3969
  %3978 = vmatprep.subr.bf16.mxu0 0
  %3979 = vmatpush1.bf16.msra.mxu0 %v3970
  %3980 = vmatprep.subr.bf16.mxu0 0
  %3981 = vmatpush1.bf16.msra.mxu0 0
  %3982 = vmatprep.subr.bf16.mxu0 0
  %3983 = vmatpush1.bf16.msra.mxu0 0
  %3984 = vmatprep.subr.bf16.mxu0 0
  %3985 = vmatpush1.bf16.msra.mxu0 0
  %3986 = vmatprep.subr.bf16.mxu0 0
  %3987 = vmatpush1.bf16.msra.mxu0 0
  %3988 = vmatprep.subr.bf16.mxu0 0
  %3989 = vmatpush1.bf16.msra.mxu0 0
  %3990 = vmatprep.subr.bf16.mxu0 0
  %3991 = vmatpush1.bf16.msra.mxu0 0
  %3992 = vmatprep.subr.bf16.mxu0 0
  %3993 = vmatpush1.bf16.msra.mxu0 0
  %3994 = vmatprep.subr.bf16.mxu0 0
  %3995 = vmatpush1.bf16.msra.mxu0 0
  %3996 = vmatprep.subr.bf16.mxu0 0
  %3997 = vmatpush1.bf16.msra.mxu0 0
  %3998 = vmatprep.subr.bf16.mxu0 0
  %3999 = vmatpush1.bf16.msra.mxu0 0
  %4000 = vmatprep.subr.bf16.mxu0 0
  %4001 = vmatpush1.bf16.msra.mxu0 0
  %4002 = vmatprep.subr.bf16.mxu0 0
  %4003 = vmatpush1.bf16.msra.mxu0 0
  %4004 = vmatprep.subr.bf16.mxu0 0
  %4005 = vmatpush1.bf16.msra.mxu0 0
  %4006 = vmatprep.subr.bf16.mxu0 0
  %4007 = vmatpush1.bf16.msra.mxu0 0
  %4008 = vmatprep.mubr.bf16.mxu0 0
  %4009 = vmatmul.mubr.bf16.gmra.mrb[0].mxu0 %v3974
  %v4010 = vpop.f32.mrb[0].mxu0
  %v4011 = vadd.f32 %v3959, %v4010
  %v4012 = vpop.f32.mrb[0].mxu0
  %v4013 = vpop.f32.mrb[0].mxu0
  %v4014 = vadd.f32 %v3959, %v4013
  %v4015 = vpop.f32.mrb[0].mxu0
  %4016 = vdwg.mxu0
  %v4017 = vpack.c.bf16 %v3941, %v3941
  %v4018 = vpack.c.bf16 %v3944, %v3944
  %v4019 = vpack.c.bf16 %v4011, %v4011
  %v4020 = vpack.c.bf16 %v4014, %v4014
  %v4022 = vsel %vm163, %v4017, 0
  %v4025 = vsel %vm163, %v4019, 0
  %4027 = vmatprep.subr.bf16.mxu0 0
  %4028 = vmatpush1.bf16.xpose.msra.mxu0 %v4025
  %4029 = vmatprep.subr.bf16.mxu0 0
  %4030 = vmatpush1.bf16.xpose.msra.mxu0 0
  %4031 = vmatprep.subr.bf16.mxu0 0
  %4032 = vmatpush1.bf16.xpose.msra.mxu0 0
  %4033 = vmatprep.subr.bf16.mxu0 0
  %4034 = vmatpush1.bf16.xpose.msra.mxu0 0
  %4035 = vmatprep.subr.bf16.mxu0 0
  %4036 = vmatpush1.bf16.xpose.msra.mxu0 0
  %4037 = vmatprep.subr.bf16.mxu0 0
  %4038 = vmatpush1.bf16.xpose.msra.mxu0 0
  %4039 = vmatprep.subr.bf16.mxu0 0
  %4040 = vmatpush1.bf16.xpose.msra.mxu0 0
  %4041 = vmatprep.subr.bf16.mxu0 0
  %4042 = vmatpush1.bf16.xpose.msra.mxu0 0
  %4043 = vmatprep.subr.bf16.mxu0 0
  %4044 = vmatpush1.bf16.xpose.msra.mxu0 0
  %4045 = vmatprep.subr.bf16.mxu0 0
  %4046 = vmatpush1.bf16.xpose.msra.mxu0 0
  %4047 = vmatprep.subr.bf16.mxu0 0
  %4048 = vmatpush1.bf16.xpose.msra.mxu0 0
  %4049 = vmatprep.subr.bf16.mxu0 0
  %4050 = vmatpush1.bf16.xpose.msra.mxu0 0
  %4051 = vmatprep.subr.bf16.mxu0 0
  %4052 = vmatpush1.bf16.xpose.msra.mxu0 0
  %4053 = vmatprep.subr.bf16.mxu0 0
  %4054 = vmatpush1.bf16.xpose.msra.mxu0 0
  %4055 = vmatprep.subr.bf16.mxu0 0
  %4056 = vmatpush1.bf16.xpose.msra.mxu0 0
  %4057 = vmatprep.subr.bf16.mxu0 0
  %4058 = vmatpush1.bf16.xpose.msra.mxu0 0
  %4059 = vmatprep.mubr.bf16.mxu0 0
  %4060 = vmatmul.mubr.bf16.gmra.mrb[0].mxu0 %v4022
  %v4061 = vpop.f32.mrb[0].mxu0
  %v4062 = vadd.f32 0.0, %v4061
  %v4063 = vpop.f32.mrb[0].mxu0
  %v4064 = vpop.f32.mrb[0].mxu0
  %v4065 = vpop.f32.mrb[0].mxu0
  %4066 = vdwg.mxu0
  %v4068 = vsel %vm163, %v4018, 0
  %v4071 = vsel %vm163, %v4020, 0
  %4073 = vmatprep.subr.bf16.mxu0 0
  %4074 = vmatpush1.bf16.xpose.msra.mxu0 %v4071
  %4075 = vmatprep.subr.bf16.mxu0 0
  %4076 = vmatpush1.bf16.xpose.msra.mxu0 0
  %4077 = vmatprep.subr.bf16.mxu0 0
  %4078 = vmatpush1.bf16.xpose.msra.mxu0 0
  %4079 = vmatprep.subr.bf16.mxu0 0
  %4080 = vmatpush1.bf16.xpose.msra.mxu0 0
  %4081 = vmatprep.subr.bf16.mxu0 0
  %4082 = vmatpush1.bf16.xpose.msra.mxu0 0
  %4083 = vmatprep.subr.bf16.mxu0 0
  %4084 = vmatpush1.bf16.xpose.msra.mxu0 0
  %4085 = vmatprep.subr.bf16.mxu0 0
  %4086 = vmatpush1.bf16.xpose.msra.mxu0 0
  %4087 = vmatprep.subr.bf16.mxu0 0
  %4088 = vmatpush1.bf16.xpose.msra.mxu0 0
  %4089 = vmatprep.subr.bf16.mxu0 0
  %4090 = vmatpush1.bf16.xpose.msra.mxu0 0
  %4091 = vmatprep.subr.bf16.mxu0 0
  %4092 = vmatpush1.bf16.xpose.msra.mxu0 0
  %4093 = vmatprep.subr.bf16.mxu0 0
  %4094 = vmatpush1.bf16.xpose.msra.mxu0 0
  %4095 = vmatprep.subr.bf16.mxu0 0
  %4096 = vmatpush1.bf16.xpose.msra.mxu0 0
  %4097 = vmatprep.subr.bf16.mxu0 0
  %4098 = vmatpush1.bf16.xpose.msra.mxu0 0
  %4099 = vmatprep.subr.bf16.mxu0 0
  %4100 = vmatpush1.bf16.xpose.msra.mxu0 0
  %4101 = vmatprep.subr.bf16.mxu0 0
  %4102 = vmatpush1.bf16.xpose.msra.mxu0 0
  %4103 = vmatprep.subr.bf16.mxu0 0
  %4104 = vmatpush1.bf16.xpose.msra.mxu0 0
  %4105 = vmatprep.mubr.bf16.mxu0 0
  %4106 = vmatmul.mubr.bf16.gmra.mrb[0].mxu0 %v4068
  %v4107 = vpop.f32.mrb[0].mxu0
  %v4108 = vadd.f32 0.0, %v4107
  %v4109 = vpop.f32.mrb[0].mxu0
  %v4110 = vpop.f32.mrb[0].mxu0
  %v4111 = vpop.f32.mrb[0].mxu0
  %4112 = vdwg.mxu0
  %v4113 = vsel %vm78, %v4062, -1e+09
  %v4114 = vsel %vm79, %v4108, -1e+09
  %v4115 = vsel %vm163, %v4113, -inf
  %4116 = vmax.xlane.f32.xlu0 %v4115
  %v4117 = vpop.xlane.xlu0 %4116
  %v4118 = vsel %vm163, %v4114, -inf
  %4119 = vmax.xlane.f32.xlu0 %v4118
  %v4120 = vpop.xlane.xlu0 %4119
  %v4121 = vsub.f32 %v4113, %v4117
  %v4122 = vsub.f32 %v4114, %v4120
  %v4123 = vmul.f32 %v4121, 1.442695
  %v4124 = vpow.pop %v4123
  %v4125 = vmul.f32 %v4122, 1.442695
  %v4126 = vpow.pop %v4125
  %v4127 = vsel %vm163, %v4124, 0.0
  %4128 = vadd.xlane.f32.xlu0 %v4127
  %v4129 = vpop.xlane.xlu0 %4128
  %v4130 = vsel %vm163, %v4126, 0.0
  %4131 = vadd.xlane.f32.xlu0 %v4130
  %v4132 = vpop.xlane.xlu0 %4131
  %v4133 = vrcp.pop %v4129
  %v4134 = vrcp.pop %v4132
  %v4135 = vmul.f32 %v4124, %v4133
  %v4136 = vmul.f32 %v4126, %v4134
  %v4137 = vpack.c.bf16 %v4135, %v4135
  %v4138 = vpack.c.bf16 %v4136, %v4136
  %4140 = vrot.lane.b32.xlu0 %v4019, 96
  %v4141 = vpop.permute.xlu0 %4140
  %v4143 = vsel %vm163, %v4137, 0
  %v4146 = vsel %vm290, %v4141, 0
  %4148 = vmatprep.subr.bf16.mxu0 0
  %4149 = vmatpush1.bf16.msra.mxu0 %v4146
  %4150 = vmatprep.subr.bf16.mxu0 0
  %4151 = vmatpush1.bf16.msra.mxu0 0
  %4152 = vmatprep.subr.bf16.mxu0 0
  %4153 = vmatpush1.bf16.msra.mxu0 0
  %4154 = vmatprep.subr.bf16.mxu0 0
  %4155 = vmatpush1.bf16.msra.mxu0 0
  %4156 = vmatprep.subr.bf16.mxu0 0
  %4157 = vmatpush1.bf16.msra.mxu0 0
  %4158 = vmatprep.subr.bf16.mxu0 0
  %4159 = vmatpush1.bf16.msra.mxu0 0
  %4160 = vmatprep.subr.bf16.mxu0 0
  %4161 = vmatpush1.bf16.msra.mxu0 0
  %4162 = vmatprep.subr.bf16.mxu0 0
  %4163 = vmatpush1.bf16.msra.mxu0 0
  %4164 = vmatprep.subr.bf16.mxu0 0
  %4165 = vmatpush1.bf16.msra.mxu0 0
  %4166 = vmatprep.subr.bf16.mxu0 0
  %4167 = vmatpush1.bf16.msra.mxu0 0
  %4168 = vmatprep.subr.bf16.mxu0 0
  %4169 = vmatpush1.bf16.msra.mxu0 0
  %4170 = vmatprep.subr.bf16.mxu0 0
  %4171 = vmatpush1.bf16.msra.mxu0 0
  %4172 = vmatprep.subr.bf16.mxu0 0
  %4173 = vmatpush1.bf16.msra.mxu0 0
  %4174 = vmatprep.subr.bf16.mxu0 0
  %4175 = vmatpush1.bf16.msra.mxu0 0
  %4176 = vmatprep.subr.bf16.mxu0 0
  %4177 = vmatpush1.bf16.msra.mxu0 0
  %4178 = vmatprep.subr.bf16.mxu0 0
  %4179 = vmatpush1.bf16.msra.mxu0 0
  %4180 = vmatprep.mubr.bf16.mxu0 0
  %4181 = vmatmul.mubr.bf16.gmra.mrb[0].mxu0 %v4143
  %v4182 = vpop.f32.mrb[0].mxu0
  %v4183 = vadd.f32 0.0, %v4182
  %v4184 = vpop.f32.mrb[0].mxu0
  %v4185 = vpop.f32.mrb[0].mxu0
  %v4186 = vpop.f32.mrb[0].mxu0
  %4187 = vdwg.mxu0
  %4189 = vrot.lane.b32.xlu0 %v4020, 96
  %v4190 = vpop.permute.xlu0 %4189
  %v4192 = vsel %vm163, %v4138, 0
  %v4195 = vsel %vm290, %v4190, 0
  %4197 = vmatprep.subr.bf16.mxu0 0
  %4198 = vmatpush1.bf16.msra.mxu0 %v4195
  %4199 = vmatprep.subr.bf16.mxu0 0
  %4200 = vmatpush1.bf16.msra.mxu0 0
  %4201 = vmatprep.subr.bf16.mxu0 0
  %4202 = vmatpush1.bf16.msra.mxu0 0
  %4203 = vmatprep.subr.bf16.mxu0 0
  %4204 = vmatpush1.bf16.msra.mxu0 0
  %4205 = vmatprep.subr.bf16.mxu0 0
  %4206 = vmatpush1.bf16.msra.mxu0 0
  %4207 = vmatprep.subr.bf16.mxu0 0
  %4208 = vmatpush1.bf16.msra.mxu0 0
  %4209 = vmatprep.subr.bf16.mxu0 0
  %4210 = vmatpush1.bf16.msra.mxu0 0
  %4211 = vmatprep.subr.bf16.mxu0 0
  %4212 = vmatpush1.bf16.msra.mxu0 0
  %4213 = vmatprep.subr.bf16.mxu0 0
  %4214 = vmatpush1.bf16.msra.mxu0 0
  %4215 = vmatprep.subr.bf16.mxu0 0
  %4216 = vmatpush1.bf16.msra.mxu0 0
  %4217 = vmatprep.subr.bf16.mxu0 0
  %4218 = vmatpush1.bf16.msra.mxu0 0
  %4219 = vmatprep.subr.bf16.mxu0 0
  %4220 = vmatpush1.bf16.msra.mxu0 0
  %4221 = vmatprep.subr.bf16.mxu0 0
  %4222 = vmatpush1.bf16.msra.mxu0 0
  %4223 = vmatprep.subr.bf16.mxu0 0
  %4224 = vmatpush1.bf16.msra.mxu0 0
  %4225 = vmatprep.subr.bf16.mxu0 0
  %4226 = vmatpush1.bf16.msra.mxu0 0
  %4227 = vmatprep.subr.bf16.mxu0 0
  %4228 = vmatpush1.bf16.msra.mxu0 0
  %4229 = vmatprep.mubr.bf16.mxu0 0
  %4230 = vmatmul.mubr.bf16.gmra.mrb[0].mxu0 %v4192
  %v4231 = vpop.f32.mrb[0].mxu0
  %v4232 = vadd.f32 0.0, %v4231
  %v4233 = vpop.f32.mrb[0].mxu0
  %v4234 = vpop.f32.mrb[0].mxu0
  %v4235 = vpop.f32.mrb[0].mxu0
  %4236 = vdwg.mxu0
  %4238 = vrot.lane.b32.xlu0 %v4017, 120
  %v4239 = vpop.permute.xlu0 %4238
  %4240 = vrot.lane.b32.xlu0 %v4019, 120
  %v4241 = vpop.permute.xlu0 %4240
  %v4243 = vsel %vm163, %v4239, 0
  %v4246 = vsel %vm163, %v4241, 0
  %4248 = vmatprep.subr.bf16.mxu0 0
  %4249 = vmatpush1.bf16.xpose.msra.mxu0 %v4246
  %4250 = vmatprep.subr.bf16.mxu0 0
  %4251 = vmatpush1.bf16.xpose.msra.mxu0 0
  %4252 = vmatprep.subr.bf16.mxu0 0
  %4253 = vmatpush1.bf16.xpose.msra.mxu0 0
  %4254 = vmatprep.subr.bf16.mxu0 0
  %4255 = vmatpush1.bf16.xpose.msra.mxu0 0
  %4256 = vmatprep.subr.bf16.mxu0 0
  %4257 = vmatpush1.bf16.xpose.msra.mxu0 0
  %4258 = vmatprep.subr.bf16.mxu0 0
  %4259 = vmatpush1.bf16.xpose.msra.mxu0 0
  %4260 = vmatprep.subr.bf16.mxu0 0
  %4261 = vmatpush1.bf16.xpose.msra.mxu0 0
  %4262 = vmatprep.subr.bf16.mxu0 0
  %4263 = vmatpush1.bf16.xpose.msra.mxu0 0
  %4264 = vmatprep.subr.bf16.mxu0 0
  %4265 = vmatpush1.bf16.xpose.msra.mxu0 0
  %4266 = vmatprep.subr.bf16.mxu0 0
  %4267 = vmatpush1.bf16.xpose.msra.mxu0 0
  %4268 = vmatprep.subr.bf16.mxu0 0
  %4269 = vmatpush1.bf16.xpose.msra.mxu0 0
  %4270 = vmatprep.subr.bf16.mxu0 0
  %4271 = vmatpush1.bf16.xpose.msra.mxu0 0
  %4272 = vmatprep.subr.bf16.mxu0 0
  %4273 = vmatpush1.bf16.xpose.msra.mxu0 0
  %4274 = vmatprep.subr.bf16.mxu0 0
  %4275 = vmatpush1.bf16.xpose.msra.mxu0 0
  %4276 = vmatprep.subr.bf16.mxu0 0
  %4277 = vmatpush1.bf16.xpose.msra.mxu0 0
  %4278 = vmatprep.subr.bf16.mxu0 0
  %4279 = vmatpush1.bf16.xpose.msra.mxu0 0
  %4280 = vmatprep.mubr.bf16.mxu0 0
  %4281 = vmatmul.mubr.bf16.gmra.mrb[0].mxu0 %v4243
  %v4282 = vpop.f32.mrb[0].mxu0
  %v4283 = vadd.f32 0.0, %v4282
  %v4284 = vpop.f32.mrb[0].mxu0
  %v4285 = vpop.f32.mrb[0].mxu0
  %v4286 = vpop.f32.mrb[0].mxu0
  %4287 = vdwg.mxu0
  %4289 = vrot.lane.b32.xlu0 %v4018, 120
  %v4290 = vpop.permute.xlu0 %4289
  %4291 = vrot.lane.b32.xlu0 %v4020, 120
  %v4292 = vpop.permute.xlu0 %4291
  %v4294 = vsel %vm163, %v4290, 0
  %v4297 = vsel %vm163, %v4292, 0
  %4299 = vmatprep.subr.bf16.mxu0 0
  %4300 = vmatpush1.bf16.xpose.msra.mxu0 %v4297
  %4301 = vmatprep.subr.bf16.mxu0 0
  %4302 = vmatpush1.bf16.xpose.msra.mxu0 0
  %4303 = vmatprep.subr.bf16.mxu0 0
  %4304 = vmatpush1.bf16.xpose.msra.mxu0 0
  %4305 = vmatprep.subr.bf16.mxu0 0
  %4306 = vmatpush1.bf16.xpose.msra.mxu0 0
  %4307 = vmatprep.subr.bf16.mxu0 0
  %4308 = vmatpush1.bf16.xpose.msra.mxu0 0
  %4309 = vmatprep.subr.bf16.mxu0 0
  %4310 = vmatpush1.bf16.xpose.msra.mxu0 0
  %4311 = vmatprep.subr.bf16.mxu0 0
  %4312 = vmatpush1.bf16.xpose.msra.mxu0 0
  %4313 = vmatprep.subr.bf16.mxu0 0
  %4314 = vmatpush1.bf16.xpose.msra.mxu0 0
  %4315 = vmatprep.subr.bf16.mxu0 0
  %4316 = vmatpush1.bf16.xpose.msra.mxu0 0
  %4317 = vmatprep.subr.bf16.mxu0 0
  %4318 = vmatpush1.bf16.xpose.msra.mxu0 0
  %4319 = vmatprep.subr.bf16.mxu0 0
  %4320 = vmatpush1.bf16.xpose.msra.mxu0 0
  %4321 = vmatprep.subr.bf16.mxu0 0
  %4322 = vmatpush1.bf16.xpose.msra.mxu0 0
  %4323 = vmatprep.subr.bf16.mxu0 0
  %4324 = vmatpush1.bf16.xpose.msra.mxu0 0
  %4325 = vmatprep.subr.bf16.mxu0 0
  %4326 = vmatpush1.bf16.xpose.msra.mxu0 0
  %4327 = vmatprep.subr.bf16.mxu0 0
  %4328 = vmatpush1.bf16.xpose.msra.mxu0 0
  %4329 = vmatprep.subr.bf16.mxu0 0
  %4330 = vmatpush1.bf16.xpose.msra.mxu0 0
  %4331 = vmatprep.mubr.bf16.mxu0 0
  %4332 = vmatmul.mubr.bf16.gmra.mrb[0].mxu0 %v4294
  %v4333 = vpop.f32.mrb[0].mxu0
  %v4334 = vadd.f32 0.0, %v4333
  %v4335 = vpop.f32.mrb[0].mxu0
  %v4336 = vpop.f32.mrb[0].mxu0
  %v4337 = vpop.f32.mrb[0].mxu0
  %4338 = vdwg.mxu0
  %v4339 = vsel %vm78, %v4283, -1e+09
  %v4340 = vsel %vm79, %v4334, -1e+09
  %v4341 = vsel %vm163, %v4339, -inf
  %4342 = vmax.xlane.f32.xlu0 %v4341
  %v4343 = vpop.xlane.xlu0 %4342
  %v4344 = vsel %vm163, %v4340, -inf
  %4345 = vmax.xlane.f32.xlu0 %v4344
  %v4346 = vpop.xlane.xlu0 %4345
  %v4347 = vsub.f32 %v4339, %v4343
  %v4348 = vsub.f32 %v4340, %v4346
  %v4349 = vmul.f32 %v4347, 1.442695
  %v4350 = vpow.pop %v4349
  %v4351 = vmul.f32 %v4348, 1.442695
  %v4352 = vpow.pop %v4351
  %v4353 = vsel %vm163, %v4350, 0.0
  %4354 = vadd.xlane.f32.xlu0 %v4353
  %v4355 = vpop.xlane.xlu0 %4354
  %v4356 = vsel %vm163, %v4352, 0.0
  %4357 = vadd.xlane.f32.xlu0 %v4356
  %v4358 = vpop.xlane.xlu0 %4357
  %v4359 = vrcp.pop %v4355
  %v4360 = vrcp.pop %v4358
  %v4361 = vmul.f32 %v4350, %v4359
  %v4362 = vmul.f32 %v4352, %v4360
  %v4363 = vpack.c.bf16 %v4361, %v4361
  %v4364 = vpack.c.bf16 %v4362, %v4362
  %4365 = vrot.lane.b32.xlu0 %v4019, 88
  %v4366 = vpop.permute.xlu0 %4365
  %v4368 = vsel %vm163, %v4363, 0
  %v4371 = vsel %vm290, %v4366, 0
  %4373 = vmatprep.subr.bf16.mxu0 0
  %4374 = vmatpush1.bf16.msra.mxu0 %v4371
  %4375 = vmatprep.subr.bf16.mxu0 0
  %4376 = vmatpush1.bf16.msra.mxu0 0
  %4377 = vmatprep.subr.bf16.mxu0 0
  %4378 = vmatpush1.bf16.msra.mxu0 0
  %4379 = vmatprep.subr.bf16.mxu0 0
  %4380 = vmatpush1.bf16.msra.mxu0 0
  %4381 = vmatprep.subr.bf16.mxu0 0
  %4382 = vmatpush1.bf16.msra.mxu0 0
  %4383 = vmatprep.subr.bf16.mxu0 0
  %4384 = vmatpush1.bf16.msra.mxu0 0
  %4385 = vmatprep.subr.bf16.mxu0 0
  %4386 = vmatpush1.bf16.msra.mxu0 0
  %4387 = vmatprep.subr.bf16.mxu0 0
  %4388 = vmatpush1.bf16.msra.mxu0 0
  %4389 = vmatprep.subr.bf16.mxu0 0
  %4390 = vmatpush1.bf16.msra.mxu0 0
  %4391 = vmatprep.subr.bf16.mxu0 0
  %4392 = vmatpush1.bf16.msra.mxu0 0
  %4393 = vmatprep.subr.bf16.mxu0 0
  %4394 = vmatpush1.bf16.msra.mxu0 0
  %4395 = vmatprep.subr.bf16.mxu0 0
  %4396 = vmatpush1.bf16.msra.mxu0 0
  %4397 = vmatprep.subr.bf16.mxu0 0
  %4398 = vmatpush1.bf16.msra.mxu0 0
  %4399 = vmatprep.subr.bf16.mxu0 0
  %4400 = vmatpush1.bf16.msra.mxu0 0
  %4401 = vmatprep.subr.bf16.mxu0 0
  %4402 = vmatpush1.bf16.msra.mxu0 0
  %4403 = vmatprep.subr.bf16.mxu0 0
  %4404 = vmatpush1.bf16.msra.mxu0 0
  %4405 = vmatprep.mubr.bf16.mxu0 0
  %4406 = vmatmul.mubr.bf16.gmra.mrb[0].mxu0 %v4368
  %v4407 = vpop.f32.mrb[0].mxu0
  %v4408 = vadd.f32 0.0, %v4407
  %v4409 = vpop.f32.mrb[0].mxu0
  %v4410 = vpop.f32.mrb[0].mxu0
  %v4411 = vpop.f32.mrb[0].mxu0
  %4412 = vdwg.mxu0
  %4413 = vrot.lane.b32.xlu0 %v4020, 88
  %v4414 = vpop.permute.xlu0 %4413
  %v4416 = vsel %vm163, %v4364, 0
  %v4419 = vsel %vm290, %v4414, 0
  %4421 = vmatprep.subr.bf16.mxu0 0
  %4422 = vmatpush1.bf16.msra.mxu0 %v4419
  %4423 = vmatprep.subr.bf16.mxu0 0
  %4424 = vmatpush1.bf16.msra.mxu0 0
  %4425 = vmatprep.subr.bf16.mxu0 0
  %4426 = vmatpush1.bf16.msra.mxu0 0
  %4427 = vmatprep.subr.bf16.mxu0 0
  %4428 = vmatpush1.bf16.msra.mxu0 0
  %4429 = vmatprep.subr.bf16.mxu0 0
  %4430 = vmatpush1.bf16.msra.mxu0 0
  %4431 = vmatprep.subr.bf16.mxu0 0
  %4432 = vmatpush1.bf16.msra.mxu0 0
  %4433 = vmatprep.subr.bf16.mxu0 0
  %4434 = vmatpush1.bf16.msra.mxu0 0
  %4435 = vmatprep.subr.bf16.mxu0 0
  %4436 = vmatpush1.bf16.msra.mxu0 0
  %4437 = vmatprep.subr.bf16.mxu0 0
  %4438 = vmatpush1.bf16.msra.mxu0 0
  %4439 = vmatprep.subr.bf16.mxu0 0
  %4440 = vmatpush1.bf16.msra.mxu0 0
  %4441 = vmatprep.subr.bf16.mxu0 0
  %4442 = vmatpush1.bf16.msra.mxu0 0
  %4443 = vmatprep.subr.bf16.mxu0 0
  %4444 = vmatpush1.bf16.msra.mxu0 0
  %4445 = vmatprep.subr.bf16.mxu0 0
  %4446 = vmatpush1.bf16.msra.mxu0 0
  %4447 = vmatprep.subr.bf16.mxu0 0
  %4448 = vmatpush1.bf16.msra.mxu0 0
  %4449 = vmatprep.subr.bf16.mxu0 0
  %4450 = vmatpush1.bf16.msra.mxu0 0
  %4451 = vmatprep.subr.bf16.mxu0 0
  %4452 = vmatpush1.bf16.msra.mxu0 0
  %4453 = vmatprep.mubr.bf16.mxu0 0
  %4454 = vmatmul.mubr.bf16.gmra.mrb[0].mxu0 %v4416
  %v4455 = vpop.f32.mrb[0].mxu0
  %v4456 = vadd.f32 0.0, %v4455
  %v4457 = vpop.f32.mrb[0].mxu0
  %v4458 = vpop.f32.mrb[0].mxu0
  %v4459 = vpop.f32.mrb[0].mxu0
  %4460 = vdwg.mxu0
  %4461 = vrot.lane.b32.xlu0 %v4017, 112
  %v4462 = vpop.permute.xlu0 %4461
  %4463 = vrot.lane.b32.xlu0 %v4019, 112
  %v4464 = vpop.permute.xlu0 %4463
  %v4466 = vsel %vm163, %v4462, 0
  %v4469 = vsel %vm163, %v4464, 0
  %4471 = vmatprep.subr.bf16.mxu0 0
  %4472 = vmatpush1.bf16.xpose.msra.mxu0 %v4469
  %4473 = vmatprep.subr.bf16.mxu0 0
  %4474 = vmatpush1.bf16.xpose.msra.mxu0 0
  %4475 = vmatprep.subr.bf16.mxu0 0
  %4476 = vmatpush1.bf16.xpose.msra.mxu0 0
  %4477 = vmatprep.subr.bf16.mxu0 0
  %4478 = vmatpush1.bf16.xpose.msra.mxu0 0
  %4479 = vmatprep.subr.bf16.mxu0 0
  %4480 = vmatpush1.bf16.xpose.msra.mxu0 0
  %4481 = vmatprep.subr.bf16.mxu0 0
  %4482 = vmatpush1.bf16.xpose.msra.mxu0 0
  %4483 = vmatprep.subr.bf16.mxu0 0
  %4484 = vmatpush1.bf16.xpose.msra.mxu0 0
  %4485 = vmatprep.subr.bf16.mxu0 0
  %4486 = vmatpush1.bf16.xpose.msra.mxu0 0
  %4487 = vmatprep.subr.bf16.mxu0 0
  %4488 = vmatpush1.bf16.xpose.msra.mxu0 0
  %4489 = vmatprep.subr.bf16.mxu0 0
  %4490 = vmatpush1.bf16.xpose.msra.mxu0 0
  %4491 = vmatprep.subr.bf16.mxu0 0
  %4492 = vmatpush1.bf16.xpose.msra.mxu0 0
  %4493 = vmatprep.subr.bf16.mxu0 0
  %4494 = vmatpush1.bf16.xpose.msra.mxu0 0
  %4495 = vmatprep.subr.bf16.mxu0 0
  %4496 = vmatpush1.bf16.xpose.msra.mxu0 0
  %4497 = vmatprep.subr.bf16.mxu0 0
  %4498 = vmatpush1.bf16.xpose.msra.mxu0 0
  %4499 = vmatprep.subr.bf16.mxu0 0
  %4500 = vmatpush1.bf16.xpose.msra.mxu0 0
  %4501 = vmatprep.subr.bf16.mxu0 0
  %4502 = vmatpush1.bf16.xpose.msra.mxu0 0
  %4503 = vmatprep.mubr.bf16.mxu0 0
  %4504 = vmatmul.mubr.bf16.gmra.mrb[0].mxu0 %v4466
  %v4505 = vpop.f32.mrb[0].mxu0
  %v4506 = vadd.f32 0.0, %v4505
  %v4507 = vpop.f32.mrb[0].mxu0
  %v4508 = vpop.f32.mrb[0].mxu0
  %v4509 = vpop.f32.mrb[0].mxu0
  %4510 = vdwg.mxu0
  %4511 = vrot.lane.b32.xlu0 %v4018, 112
  %v4512 = vpop.permute.xlu0 %4511
  %4513 = vrot.lane.b32.xlu0 %v4020, 112
  %v4514 = vpop.permute.xlu0 %4513
  %v4516 = vsel %vm163, %v4512, 0
  %v4519 = vsel %vm163, %v4514, 0
  %4521 = vmatprep.subr.bf16.mxu0 0
  %4522 = vmatpush1.bf16.xpose.msra.mxu0 %v4519
  %4523 = vmatprep.subr.bf16.mxu0 0
  %4524 = vmatpush1.bf16.xpose.msra.mxu0 0
  %4525 = vmatprep.subr.bf16.mxu0 0
  %4526 = vmatpush1.bf16.xpose.msra.mxu0 0
  %4527 = vmatprep.subr.bf16.mxu0 0
  %4528 = vmatpush1.bf16.xpose.msra.mxu0 0
  %4529 = vmatprep.subr.bf16.mxu0 0
  %4530 = vmatpush1.bf16.xpose.msra.mxu0 0
  %4531 = vmatprep.subr.bf16.mxu0 0
  %4532 = vmatpush1.bf16.xpose.msra.mxu0 0
  %4533 = vmatprep.subr.bf16.mxu0 0
  %4534 = vmatpush1.bf16.xpose.msra.mxu0 0
  %4535 = vmatprep.subr.bf16.mxu0 0
  %4536 = vmatpush1.bf16.xpose.msra.mxu0 0
  %4537 = vmatprep.subr.bf16.mxu0 0
  %4538 = vmatpush1.bf16.xpose.msra.mxu0 0
  %4539 = vmatprep.subr.bf16.mxu0 0
  %4540 = vmatpush1.bf16.xpose.msra.mxu0 0
  %4541 = vmatprep.subr.bf16.mxu0 0
  %4542 = vmatpush1.bf16.xpose.msra.mxu0 0
  %4543 = vmatprep.subr.bf16.mxu0 0
  %4544 = vmatpush1.bf16.xpose.msra.mxu0 0
  %4545 = vmatprep.subr.bf16.mxu0 0
  %4546 = vmatpush1.bf16.xpose.msra.mxu0 0
  %4547 = vmatprep.subr.bf16.mxu0 0
  %4548 = vmatpush1.bf16.xpose.msra.mxu0 0
  %4549 = vmatprep.subr.bf16.mxu0 0
  %4550 = vmatpush1.bf16.xpose.msra.mxu0 0
  %4551 = vmatprep.subr.bf16.mxu0 0
  %4552 = vmatpush1.bf16.xpose.msra.mxu0 0
  %4553 = vmatprep.mubr.bf16.mxu0 0
  %4554 = vmatmul.mubr.bf16.gmra.mrb[0].mxu0 %v4516
  %v4555 = vpop.f32.mrb[0].mxu0
  %v4556 = vadd.f32 0.0, %v4555
  %v4557 = vpop.f32.mrb[0].mxu0
  %v4558 = vpop.f32.mrb[0].mxu0
  %v4559 = vpop.f32.mrb[0].mxu0
  %4560 = vdwg.mxu0
  %v4561 = vsel %vm78, %v4506, -1e+09
  %v4562 = vsel %vm79, %v4556, -1e+09
  %v4563 = vsel %vm163, %v4561, -inf
  %4564 = vmax.xlane.f32.xlu0 %v4563
  %v4565 = vpop.xlane.xlu0 %4564
  %v4566 = vsel %vm163, %v4562, -inf
  %4567 = vmax.xlane.f32.xlu0 %v4566
  %v4568 = vpop.xlane.xlu0 %4567
  %v4569 = vsub.f32 %v4561, %v4565
  %v4570 = vsub.f32 %v4562, %v4568
  %v4571 = vmul.f32 %v4569, 1.442695
  %v4572 = vpow.pop %v4571
  %v4573 = vmul.f32 %v4570, 1.442695
  %v4574 = vpow.pop %v4573
  %v4575 = vsel %vm163, %v4572, 0.0
  %4576 = vadd.xlane.f32.xlu0 %v4575
  %v4577 = vpop.xlane.xlu0 %4576
  %v4578 = vsel %vm163, %v4574, 0.0
  %4579 = vadd.xlane.f32.xlu0 %v4578
  %v4580 = vpop.xlane.xlu0 %4579
  %v4581 = vrcp.pop %v4577
  %v4582 = vrcp.pop %v4580
  %v4583 = vmul.f32 %v4572, %v4581
  %v4584 = vmul.f32 %v4574, %v4582
  %v4585 = vpack.c.bf16 %v4583, %v4583
  %v4586 = vpack.c.bf16 %v4584, %v4584
  %4587 = vrot.lane.b32.xlu0 %v4019, 80
  %v4588 = vpop.permute.xlu0 %4587
  %v4590 = vsel %vm163, %v4585, 0
  %v4593 = vsel %vm290, %v4588, 0
  %4595 = vmatprep.subr.bf16.mxu0 0
  %4596 = vmatpush1.bf16.msra.mxu0 %v4593
  %4597 = vmatprep.subr.bf16.mxu0 0
  %4598 = vmatpush1.bf16.msra.mxu0 0
  %4599 = vmatprep.subr.bf16.mxu0 0
  %4600 = vmatpush1.bf16.msra.mxu0 0
  %4601 = vmatprep.subr.bf16.mxu0 0
  %4602 = vmatpush1.bf16.msra.mxu0 0
  %4603 = vmatprep.subr.bf16.mxu0 0
  %4604 = vmatpush1.bf16.msra.mxu0 0
  %4605 = vmatprep.subr.bf16.mxu0 0
  %4606 = vmatpush1.bf16.msra.mxu0 0
  %4607 = vmatprep.subr.bf16.mxu0 0
  %4608 = vmatpush1.bf16.msra.mxu0 0
  %4609 = vmatprep.subr.bf16.mxu0 0
  %4610 = vmatpush1.bf16.msra.mxu0 0
  %4611 = vmatprep.subr.bf16.mxu0 0
  %4612 = vmatpush1.bf16.msra.mxu0 0
  %4613 = vmatprep.subr.bf16.mxu0 0
  %4614 = vmatpush1.bf16.msra.mxu0 0
  %4615 = vmatprep.subr.bf16.mxu0 0
  %4616 = vmatpush1.bf16.msra.mxu0 0
  %4617 = vmatprep.subr.bf16.mxu0 0
  %4618 = vmatpush1.bf16.msra.mxu0 0
  %4619 = vmatprep.subr.bf16.mxu0 0
  %4620 = vmatpush1.bf16.msra.mxu0 0
  %4621 = vmatprep.subr.bf16.mxu0 0
  %4622 = vmatpush1.bf16.msra.mxu0 0
  %4623 = vmatprep.subr.bf16.mxu0 0
  %4624 = vmatpush1.bf16.msra.mxu0 0
  %4625 = vmatprep.subr.bf16.mxu0 0
  %4626 = vmatpush1.bf16.msra.mxu0 0
  %4627 = vmatprep.mubr.bf16.mxu0 0
  %4628 = vmatmul.mubr.bf16.gmra.mrb[0].mxu0 %v4590
  %v4629 = vpop.f32.mrb[0].mxu0
  %v4630 = vadd.f32 0.0, %v4629
  %v4631 = vpop.f32.mrb[0].mxu0
  %v4632 = vpop.f32.mrb[0].mxu0
  %v4633 = vpop.f32.mrb[0].mxu0
  %4634 = vdwg.mxu0
  %4635 = vrot.lane.b32.xlu0 %v4020, 80
  %v4636 = vpop.permute.xlu0 %4635
  %v4638 = vsel %vm163, %v4586, 0
  %v4641 = vsel %vm290, %v4636, 0
  %4643 = vmatprep.subr.bf16.mxu0 0
  %4644 = vmatpush1.bf16.msra.mxu0 %v4641
  %4645 = vmatprep.subr.bf16.mxu0 0
  %4646 = vmatpush1.bf16.msra.mxu0 0
  %4647 = vmatprep.subr.bf16.mxu0 0
  %4648 = vmatpush1.bf16.msra.mxu0 0
  %4649 = vmatprep.subr.bf16.mxu0 0
  %4650 = vmatpush1.bf16.msra.mxu0 0
  %4651 = vmatprep.subr.bf16.mxu0 0
  %4652 = vmatpush1.bf16.msra.mxu0 0
  %4653 = vmatprep.subr.bf16.mxu0 0
  %4654 = vmatpush1.bf16.msra.mxu0 0
  %4655 = vmatprep.subr.bf16.mxu0 0
  %4656 = vmatpush1.bf16.msra.mxu0 0
  %4657 = vmatprep.subr.bf16.mxu0 0
  %4658 = vmatpush1.bf16.msra.mxu0 0
  %4659 = vmatprep.subr.bf16.mxu0 0
  %4660 = vmatpush1.bf16.msra.mxu0 0
  %4661 = vmatprep.subr.bf16.mxu0 0
  %4662 = vmatpush1.bf16.msra.mxu0 0
  %4663 = vmatprep.subr.bf16.mxu0 0
  %4664 = vmatpush1.bf16.msra.mxu0 0
  %4665 = vmatprep.subr.bf16.mxu0 0
  %4666 = vmatpush1.bf16.msra.mxu0 0
  %4667 = vmatprep.subr.bf16.mxu0 0
  %4668 = vmatpush1.bf16.msra.mxu0 0
  %4669 = vmatprep.subr.bf16.mxu0 0
  %4670 = vmatpush1.bf16.msra.mxu0 0
  %4671 = vmatprep.subr.bf16.mxu0 0
  %4672 = vmatpush1.bf16.msra.mxu0 0
  %4673 = vmatprep.subr.bf16.mxu0 0
  %4674 = vmatpush1.bf16.msra.mxu0 0
  %4675 = vmatprep.mubr.bf16.mxu0 0
  %4676 = vmatmul.mubr.bf16.gmra.mrb[0].mxu0 %v4638
  %v4677 = vpop.f32.mrb[0].mxu0
  %v4678 = vadd.f32 0.0, %v4677
  %v4679 = vpop.f32.mrb[0].mxu0
  %v4680 = vpop.f32.mrb[0].mxu0
  %v4681 = vpop.f32.mrb[0].mxu0
  %4682 = vdwg.mxu0
  %4683 = vrot.lane.b32.xlu0 %v4017, 104
  %v4684 = vpop.permute.xlu0 %4683
  %4685 = vrot.lane.b32.xlu0 %v4019, 104
  %v4686 = vpop.permute.xlu0 %4685
  %v4688 = vsel %vm163, %v4684, 0
  %v4691 = vsel %vm163, %v4686, 0
  %4693 = vmatprep.subr.bf16.mxu0 0
  %4694 = vmatpush1.bf16.xpose.msra.mxu0 %v4691
  %4695 = vmatprep.subr.bf16.mxu0 0
  %4696 = vmatpush1.bf16.xpose.msra.mxu0 0
  %4697 = vmatprep.subr.bf16.mxu0 0
  %4698 = vmatpush1.bf16.xpose.msra.mxu0 0
  %4699 = vmatprep.subr.bf16.mxu0 0
  %4700 = vmatpush1.bf16.xpose.msra.mxu0 0
  %4701 = vmatprep.subr.bf16.mxu0 0
  %4702 = vmatpush1.bf16.xpose.msra.mxu0 0
  %4703 = vmatprep.subr.bf16.mxu0 0
  %4704 = vmatpush1.bf16.xpose.msra.mxu0 0
  %4705 = vmatprep.subr.bf16.mxu0 0
  %4706 = vmatpush1.bf16.xpose.msra.mxu0 0
  %4707 = vmatprep.subr.bf16.mxu0 0
  %4708 = vmatpush1.bf16.xpose.msra.mxu0 0
  %4709 = vmatprep.subr.bf16.mxu0 0
  %4710 = vmatpush1.bf16.xpose.msra.mxu0 0
  %4711 = vmatprep.subr.bf16.mxu0 0
  %4712 = vmatpush1.bf16.xpose.msra.mxu0 0
  %4713 = vmatprep.subr.bf16.mxu0 0
  %4714 = vmatpush1.bf16.xpose.msra.mxu0 0
  %4715 = vmatprep.subr.bf16.mxu0 0
  %4716 = vmatpush1.bf16.xpose.msra.mxu0 0
  %4717 = vmatprep.subr.bf16.mxu0 0
  %4718 = vmatpush1.bf16.xpose.msra.mxu0 0
  %4719 = vmatprep.subr.bf16.mxu0 0
  %4720 = vmatpush1.bf16.xpose.msra.mxu0 0
  %4721 = vmatprep.subr.bf16.mxu0 0
  %4722 = vmatpush1.bf16.xpose.msra.mxu0 0
  %4723 = vmatprep.subr.bf16.mxu0 0
  %4724 = vmatpush1.bf16.xpose.msra.mxu0 0
  %4725 = vmatprep.mubr.bf16.mxu0 0
  %4726 = vmatmul.mubr.bf16.gmra.mrb[0].mxu0 %v4688
  %v4727 = vpop.f32.mrb[0].mxu0
  %v4728 = vadd.f32 0.0, %v4727
  %v4729 = vpop.f32.mrb[0].mxu0
  %v4730 = vpop.f32.mrb[0].mxu0
  %v4731 = vpop.f32.mrb[0].mxu0
  %4732 = vdwg.mxu0
  %4733 = vrot.lane.b32.xlu0 %v4018, 104
  %v4734 = vpop.permute.xlu0 %4733
  %4735 = vrot.lane.b32.xlu0 %v4020, 104
  %v4736 = vpop.permute.xlu0 %4735
  %v4738 = vsel %vm163, %v4734, 0
  %v4741 = vsel %vm163, %v4736, 0
  %4743 = vmatprep.subr.bf16.mxu0 0
  %4744 = vmatpush1.bf16.xpose.msra.mxu0 %v4741
  %4745 = vmatprep.subr.bf16.mxu0 0
  %4746 = vmatpush1.bf16.xpose.msra.mxu0 0
  %4747 = vmatprep.subr.bf16.mxu0 0
  %4748 = vmatpush1.bf16.xpose.msra.mxu0 0
  %4749 = vmatprep.subr.bf16.mxu0 0
  %4750 = vmatpush1.bf16.xpose.msra.mxu0 0
  %4751 = vmatprep.subr.bf16.mxu0 0
  %4752 = vmatpush1.bf16.xpose.msra.mxu0 0
  %4753 = vmatprep.subr.bf16.mxu0 0
  %4754 = vmatpush1.bf16.xpose.msra.mxu0 0
  %4755 = vmatprep.subr.bf16.mxu0 0
  %4756 = vmatpush1.bf16.xpose.msra.mxu0 0
  %4757 = vmatprep.subr.bf16.mxu0 0
  %4758 = vmatpush1.bf16.xpose.msra.mxu0 0
  %4759 = vmatprep.subr.bf16.mxu0 0
  %4760 = vmatpush1.bf16.xpose.msra.mxu0 0
  %4761 = vmatprep.subr.bf16.mxu0 0
  %4762 = vmatpush1.bf16.xpose.msra.mxu0 0
  %4763 = vmatprep.subr.bf16.mxu0 0
  %4764 = vmatpush1.bf16.xpose.msra.mxu0 0
  %4765 = vmatprep.subr.bf16.mxu0 0
  %4766 = vmatpush1.bf16.xpose.msra.mxu0 0
  %4767 = vmatprep.subr.bf16.mxu0 0
  %4768 = vmatpush1.bf16.xpose.msra.mxu0 0
  %4769 = vmatprep.subr.bf16.mxu0 0
  %4770 = vmatpush1.bf16.xpose.msra.mxu0 0
  %4771 = vmatprep.subr.bf16.mxu0 0
  %4772 = vmatpush1.bf16.xpose.msra.mxu0 0
  %4773 = vmatprep.subr.bf16.mxu0 0
  %4774 = vmatpush1.bf16.xpose.msra.mxu0 0
  %4775 = vmatprep.mubr.bf16.mxu0 0
  %4776 = vmatmul.mubr.bf16.gmra.mrb[0].mxu0 %v4738
  %v4777 = vpop.f32.mrb[0].mxu0
  %v4778 = vadd.f32 0.0, %v4777
  %v4779 = vpop.f32.mrb[0].mxu0
  %v4780 = vpop.f32.mrb[0].mxu0
  %v4781 = vpop.f32.mrb[0].mxu0
  %4782 = vdwg.mxu0
  %v4783 = vsel %vm78, %v4728, -1e+09
  %v4784 = vsel %vm79, %v4778, -1e+09
  %v4785 = vsel %vm163, %v4783, -inf
  %4786 = vmax.xlane.f32.xlu0 %v4785
  %v4787 = vpop.xlane.xlu0 %4786
  %v4788 = vsel %vm163, %v4784, -inf
  %4789 = vmax.xlane.f32.xlu0 %v4788
  %v4790 = vpop.xlane.xlu0 %4789
  %v4791 = vsub.f32 %v4783, %v4787
  %v4792 = vsub.f32 %v4784, %v4790
  %v4793 = vmul.f32 %v4791, 1.442695
  %v4794 = vpow.pop %v4793
  %v4795 = vmul.f32 %v4792, 1.442695
  %v4796 = vpow.pop %v4795
  %v4797 = vsel %vm163, %v4794, 0.0
  %4798 = vadd.xlane.f32.xlu0 %v4797
  %v4799 = vpop.xlane.xlu0 %4798
  %v4800 = vsel %vm163, %v4796, 0.0
  %4801 = vadd.xlane.f32.xlu0 %v4800
  %v4802 = vpop.xlane.xlu0 %4801
  %v4803 = vrcp.pop %v4799
  %v4804 = vrcp.pop %v4802
  %v4805 = vmul.f32 %v4794, %v4803
  %v4806 = vmul.f32 %v4796, %v4804
  %v4807 = vpack.c.bf16 %v4805, %v4805
  %v4808 = vpack.c.bf16 %v4806, %v4806
  %4809 = vrot.lane.b32.xlu0 %v4019, 72
  %v4810 = vpop.permute.xlu0 %4809
  %v4812 = vsel %vm163, %v4807, 0
  %v4815 = vsel %vm290, %v4810, 0
  %4817 = vmatprep.subr.bf16.mxu0 0
  %4818 = vmatpush1.bf16.msra.mxu0 %v4815
  %4819 = vmatprep.subr.bf16.mxu0 0
  %4820 = vmatpush1.bf16.msra.mxu0 0
  %4821 = vmatprep.subr.bf16.mxu0 0
  %4822 = vmatpush1.bf16.msra.mxu0 0
  %4823 = vmatprep.subr.bf16.mxu0 0
  %4824 = vmatpush1.bf16.msra.mxu0 0
  %4825 = vmatprep.subr.bf16.mxu0 0
  %4826 = vmatpush1.bf16.msra.mxu0 0
  %4827 = vmatprep.subr.bf16.mxu0 0
  %4828 = vmatpush1.bf16.msra.mxu0 0
  %4829 = vmatprep.subr.bf16.mxu0 0
  %4830 = vmatpush1.bf16.msra.mxu0 0
  %4831 = vmatprep.subr.bf16.mxu0 0
  %4832 = vmatpush1.bf16.msra.mxu0 0
  %4833 = vmatprep.subr.bf16.mxu0 0
  %4834 = vmatpush1.bf16.msra.mxu0 0
  %4835 = vmatprep.subr.bf16.mxu0 0
  %4836 = vmatpush1.bf16.msra.mxu0 0
  %4837 = vmatprep.subr.bf16.mxu0 0
  %4838 = vmatpush1.bf16.msra.mxu0 0
  %4839 = vmatprep.subr.bf16.mxu0 0
  %4840 = vmatpush1.bf16.msra.mxu0 0
  %4841 = vmatprep.subr.bf16.mxu0 0
  %4842 = vmatpush1.bf16.msra.mxu0 0
  %4843 = vmatprep.subr.bf16.mxu0 0
  %4844 = vmatpush1.bf16.msra.mxu0 0
  %4845 = vmatprep.subr.bf16.mxu0 0
  %4846 = vmatpush1.bf16.msra.mxu0 0
  %4847 = vmatprep.subr.bf16.mxu0 0
  %4848 = vmatpush1.bf16.msra.mxu0 0
  %4849 = vmatprep.mubr.bf16.mxu0 0
  %4850 = vmatmul.mubr.bf16.gmra.mrb[0].mxu0 %v4812
  %v4851 = vpop.f32.mrb[0].mxu0
  %v4852 = vadd.f32 0.0, %v4851
  %v4853 = vpop.f32.mrb[0].mxu0
  %v4854 = vpop.f32.mrb[0].mxu0
  %v4855 = vpop.f32.mrb[0].mxu0
  %4856 = vdwg.mxu0
  %4857 = vrot.lane.b32.xlu0 %v4020, 72
  %v4858 = vpop.permute.xlu0 %4857
  %v4860 = vsel %vm163, %v4808, 0
  %v4863 = vsel %vm290, %v4858, 0
  %4865 = vmatprep.subr.bf16.mxu0 0
  %4866 = vmatpush1.bf16.msra.mxu0 %v4863
  %4867 = vmatprep.subr.bf16.mxu0 0
  %4868 = vmatpush1.bf16.msra.mxu0 0
  %4869 = vmatprep.subr.bf16.mxu0 0
  %4870 = vmatpush1.bf16.msra.mxu0 0
  %4871 = vmatprep.subr.bf16.mxu0 0
  %4872 = vmatpush1.bf16.msra.mxu0 0
  %4873 = vmatprep.subr.bf16.mxu0 0
  %4874 = vmatpush1.bf16.msra.mxu0 0
  %4875 = vmatprep.subr.bf16.mxu0 0
  %4876 = vmatpush1.bf16.msra.mxu0 0
  %4877 = vmatprep.subr.bf16.mxu0 0
  %4878 = vmatpush1.bf16.msra.mxu0 0
  %4879 = vmatprep.subr.bf16.mxu0 0
  %4880 = vmatpush1.bf16.msra.mxu0 0
  %4881 = vmatprep.subr.bf16.mxu0 0
  %4882 = vmatpush1.bf16.msra.mxu0 0
  %4883 = vmatprep.subr.bf16.mxu0 0
  %4884 = vmatpush1.bf16.msra.mxu0 0
  %4885 = vmatprep.subr.bf16.mxu0 0
  %4886 = vmatpush1.bf16.msra.mxu0 0
  %4887 = vmatprep.subr.bf16.mxu0 0
  %4888 = vmatpush1.bf16.msra.mxu0 0
  %4889 = vmatprep.subr.bf16.mxu0 0
  %4890 = vmatpush1.bf16.msra.mxu0 0
  %4891 = vmatprep.subr.bf16.mxu0 0
  %4892 = vmatpush1.bf16.msra.mxu0 0
  %4893 = vmatprep.subr.bf16.mxu0 0
  %4894 = vmatpush1.bf16.msra.mxu0 0
  %4895 = vmatprep.subr.bf16.mxu0 0
  %4896 = vmatpush1.bf16.msra.mxu0 0
  %4897 = vmatprep.mubr.bf16.mxu0 0
  %4898 = vmatmul.mubr.bf16.gmra.mrb[0].mxu0 %v4860
  %v4899 = vpop.f32.mrb[0].mxu0
  %v4900 = vadd.f32 0.0, %v4899
  %v4901 = vpop.f32.mrb[0].mxu0
  %v4902 = vpop.f32.mrb[0].mxu0
  %v4903 = vpop.f32.mrb[0].mxu0
  %4904 = vdwg.mxu0
  %4907 = vrot.lane.b32.xlu0 %v4408, 8
  %v4908 = vpop.permute.xlu0 %4907
  %4909 = vrot.lane.b32.xlu0 %v4456, 8
  %v4910 = vpop.permute.xlu0 %4909
  %4915 = vrot.lane.b32.xlu0 %v4630, 16
  %v4916 = vpop.permute.xlu0 %4915
  %4917 = vrot.lane.b32.xlu0 %v4678, 16
  %v4918 = vpop.permute.xlu0 %4917
  %4923 = vrot.lane.b32.xlu0 %v4852, 24
  %v4924 = vpop.permute.xlu0 %4923
  %4925 = vrot.lane.b32.xlu0 %v4900, 24
  %v4926 = vpop.permute.xlu0 %4925
  %v4929 = vsel %vm163, %v4183, %v4908
  %v4930 = vsel %vm163, %v4232, %v4910
  %v4931 = vsel %vm1074, %v4929, %v4916
  %v4932 = vsel %vm1074, %v4930, %v4918
  %v4933 = vsel %vm1077, %v4931, %v4924
  %v4934 = vsel %vm1077, %v4932, %v4926
  %s4935 = scalar_lea.vmem %s3, 64
  %v4936 = vld [vmem:[%s4935] sm:$0xf]
  %v4937 = vld [vmem:[%s4935 + $0x4] sm:$0xf]
  %v4938 = vld [vmem:[%s4935 + $0x8] sm:$0xf]
  %v4939 = vld [vmem:[%s4935 + $0xc] sm:$0xf]
  %s4940 = scalar_lea.vmem %s9, 14
  %v4941 = vld [vmem:[%s4940] sm:$0x1]
  %v4942 = vpack.c.bf16 %v4934, %v4933
  %v4944 = vlaneseq
  %v4945 = vshrl.u32 %v4944, 7
  %v4946 = vsub.s32 0, %v4945
  %v4947 = vrot.slane %v4941, %v4946
  %v4953 = vunpack.c.l.b16 %v4936
  %v4954 = vunpack.c.l.b16 %v4937
  %v4955 = vunpack.c.l.b16 %v4938
  %v4956 = vunpack.c.l.b16 %v4939
  %v4957 = vpack.c.b16 %v4954, %v4953
  %v4958 = vpack.c.b16 %v4956, %v4955
  %v4962 = vsel %vm113, %v4942, 0
  %4964 = vmatprep.subr.bf16.mxu0 0
  %4965 = vmatpush1.bf16.msra.mxu0 %v4957
  %4966 = vmatprep.subr.bf16.mxu0 0
  %4967 = vmatpush1.bf16.msra.mxu0 %v4958
  %4968 = vmatprep.subr.bf16.mxu0 0
  %4969 = vmatpush1.bf16.msra.mxu0 0
  %4970 = vmatprep.subr.bf16.mxu0 0
  %4971 = vmatpush1.bf16.msra.mxu0 0
  %4972 = vmatprep.subr.bf16.mxu0 0
  %4973 = vmatpush1.bf16.msra.mxu0 0
  %4974 = vmatprep.subr.bf16.mxu0 0
  %4975 = vmatpush1.bf16.msra.mxu0 0
  %4976 = vmatprep.subr.bf16.mxu0 0
  %4977 = vmatpush1.bf16.msra.mxu0 0
  %4978 = vmatprep.subr.bf16.mxu0 0
  %4979 = vmatpush1.bf16.msra.mxu0 0
  %4980 = vmatprep.subr.bf16.mxu0 0
  %4981 = vmatpush1.bf16.msra.mxu0 0
  %4982 = vmatprep.subr.bf16.mxu0 0
  %4983 = vmatpush1.bf16.msra.mxu0 0
  %4984 = vmatprep.subr.bf16.mxu0 0
  %4985 = vmatpush1.bf16.msra.mxu0 0
  %4986 = vmatprep.subr.bf16.mxu0 0
  %4987 = vmatpush1.bf16.msra.mxu0 0
  %4988 = vmatprep.subr.bf16.mxu0 0
  %4989 = vmatpush1.bf16.msra.mxu0 0
  %4990 = vmatprep.subr.bf16.mxu0 0
  %4991 = vmatpush1.bf16.msra.mxu0 0
  %4992 = vmatprep.subr.bf16.mxu0 0
  %4993 = vmatpush1.bf16.msra.mxu0 0
  %4994 = vmatprep.subr.bf16.mxu0 0
  %4995 = vmatpush1.bf16.msra.mxu0 0
  %4996 = vmatprep.mubr.bf16.mxu0 0
  %4997 = vmatmul.mubr.bf16.gmra.mrb[0].mxu0 %v4962
  %v4998 = vpop.f32.mrb[0].mxu0
  %v4999 = vadd.f32 %v4947, %v4998
  %v5000 = vpop.f32.mrb[0].mxu0
  %v5001 = vpop.f32.mrb[0].mxu0
  %v5002 = vadd.f32 %v4947, %v5001
  %v5003 = vpop.f32.mrb[0].mxu0
  %5004 = vdwg.mxu0
  %v5005 = vadd.f32 %v3875, %v4999
  %v5006 = vadd.f32 %v3876, %v5002
  %s5007 = scalar_lea.vmem %s9, 18
  %v5008 = vld [vmem:[%s5007] sm:$0x1]
  %s5009 = scalar_lea.vmem %s9, 19
  %v5010 = vld [vmem:[%s5009] sm:$0x1]
  %v5011 = vsel %vm113, %v5005, 0.0
  %5012 = vadd.xlane.f32.xlu0 %v5011
  %v5013 = vpop.xlane.xlu0 %5012
  %v5014 = vsel %vm113, %v5006, 0.0
  %5015 = vadd.xlane.f32.xlu0 %v5014
  %v5016 = vpop.xlane.xlu0 %5015
  %v5017 = vmul.f32 %v5013, %v1160
  %v5018 = vmul.f32 %v5016, %v1160
  %v5019 = vsub.f32 %v5005, %v5017
  %v5020 = vsub.f32 %v5006, %v5018
  %v5021 = vmul.f32 %v5019, %v5019
  %v5022 = vmul.f32 %v5020, %v5020
  %v5023 = vsel %vm113, %v5021, 0.0
  %5024 = vadd.xlane.f32.xlu0 %v5023
  %v5025 = vpop.xlane.xlu0 %5024
  %v5026 = vsel %vm113, %v5022, 0.0
  %5027 = vadd.xlane.f32.xlu0 %v5026
  %v5028 = vpop.xlane.xlu0 %5027
  %v5029 = vmul.f32 %v5025, %v1160
  %v5030 = vmul.f32 %v5028, %v1160
  %v5031 = vadd.f32 %v5029, 1e-05
  %v5032 = vadd.f32 %v5030, 1e-05
  %v5033 = vrsqrt.pop %v5031
  %v5034 = vrsqrt.pop %v5032
  %v5035 = vmul.f32 %v5019, %v5033
  %v5036 = vmul.f32 %v5020, %v5034
  %v5038 = vlaneseq
  %v5039 = vshrl.u32 %v5038, 7
  %v5040 = vsub.s32 0, %v5039
  %v5041 = vrot.slane %v5008, %v5040
  %v5043 = vmul.f32 %v5035, %v5041
  %v5044 = vmul.f32 %v5036, %v5041
  %v5046 = vlaneseq
  %v5047 = vshrl.u32 %v5046, 7
  %v5048 = vsub.s32 0, %v5047
  %v5049 = vrot.slane %v5010, %v5048
  %v5051 = vadd.f32 %v5043, %v5049
  %v5052 = vadd.f32 %v5044, %v5049
  %s5053 = scalar_lea.vmem %s4, 32
  %v5054 = vld [vmem:[%s5053] sm:$0xf]
  %v5055 = vld [vmem:[%s5053 + $0x4] sm:$0xf]
  %v5056 = vld [vmem:[%s5053 + $0x8] sm:$0xf]
  %v5057 = vld [vmem:[%s5053 + $0xc] sm:$0xf]
  %s5058 = scalar_lea.vmem %s8, 2
  %v5059 = vld [vmem:[%s5058] sm:$0x1]
  %s5060 = scalar_lea.vmem %s5, 64
  %v5061 = vld [vmem:[%s5060] sm:$0xf]
  %v5062 = vld [vmem:[%s5060 + $0x4] sm:$0xf]
  %v5063 = vld [vmem:[%s5060 + $0x8] sm:$0xf]
  %v5064 = vld [vmem:[%s5060 + $0xc] sm:$0xf]
  %v5065 = vld [vmem:[%s5060 + $0x10] sm:$0xf]
  %v5066 = vld [vmem:[%s5060 + $0x14] sm:$0xf]
  %v5067 = vld [vmem:[%s5060 + $0x18] sm:$0xf]
  %v5068 = vld [vmem:[%s5060 + $0x1c] sm:$0xf]
  %s5069 = scalar_lea.vmem %s9, 15
  %v5070 = vld [vmem:[%s5069] sm:$0x1]
  %v5071 = vpack.c.bf16 %v5052, %v5051
  %v5073 = vlaneseq
  %v5074 = vshrl.u32 %v5073, 7
  %v5075 = vsub.s32 0, %v5074
  %v5076 = vrot.slane %v5059, %v5075
  %v5082 = vunpack.c.l.b16 %v5054
  %v5083 = vunpack.c.l.b16 %v5055
  %v5084 = vunpack.c.l.b16 %v5056
  %v5085 = vunpack.c.l.b16 %v5057
  %v5086 = vpack.c.b16 %v5083, %v5082
  %v5087 = vpack.c.b16 %v5085, %v5084
  %v5091 = vsel %vm113, %v5071, 0
  %5093 = vmatprep.subr.bf16.mxu0 0
  %5094 = vmatpush1.bf16.msra.mxu0 %v5086
  %5095 = vmatprep.subr.bf16.mxu0 0
  %5096 = vmatpush1.bf16.msra.mxu0 %v5087
  %5097 = vmatprep.subr.bf16.mxu0 0
  %5098 = vmatpush1.bf16.msra.mxu0 0
  %5099 = vmatprep.subr.bf16.mxu0 0
  %5100 = vmatpush1.bf16.msra.mxu0 0
  %5101 = vmatprep.subr.bf16.mxu0 0
  %5102 = vmatpush1.bf16.msra.mxu0 0
  %5103 = vmatprep.subr.bf16.mxu0 0
  %5104 = vmatpush1.bf16.msra.mxu0 0
  %5105 = vmatprep.subr.bf16.mxu0 0
  %5106 = vmatpush1.bf16.msra.mxu0 0
  %5107 = vmatprep.subr.bf16.mxu0 0
  %5108 = vmatpush1.bf16.msra.mxu0 0
  %5109 = vmatprep.subr.bf16.mxu0 0
  %5110 = vmatpush1.bf16.msra.mxu0 0
  %5111 = vmatprep.subr.bf16.mxu0 0
  %5112 = vmatpush1.bf16.msra.mxu0 0
  %5113 = vmatprep.subr.bf16.mxu0 0
  %5114 = vmatpush1.bf16.msra.mxu0 0
  %5115 = vmatprep.subr.bf16.mxu0 0
  %5116 = vmatpush1.bf16.msra.mxu0 0
  %5117 = vmatprep.subr.bf16.mxu0 0
  %5118 = vmatpush1.bf16.msra.mxu0 0
  %5119 = vmatprep.subr.bf16.mxu0 0
  %5120 = vmatpush1.bf16.msra.mxu0 0
  %5121 = vmatprep.subr.bf16.mxu0 0
  %5122 = vmatpush1.bf16.msra.mxu0 0
  %5123 = vmatprep.subr.bf16.mxu0 0
  %5124 = vmatpush1.bf16.msra.mxu0 0
  %5125 = vmatprep.mubr.bf16.mxu0 0
  %5126 = vmatmul.mubr.bf16.gmra.mrb[0].mxu0 %v5091
  %v5127 = vpop.f32.mrb[0].mxu0
  %v5128 = vadd.f32 %v5076, %v5127
  %v5129 = vpop.f32.mrb[0].mxu0
  %v5130 = vpop.f32.mrb[0].mxu0
  %v5131 = vadd.f32 %v5076, %v5130
  %v5132 = vpop.f32.mrb[0].mxu0
  %5133 = vdwg.mxu0
  %v5134 = vmul.f32 %v5128, 0.5
  %v5135 = vmul.f32 %v5131, 0.5
  %v5136 = vmul.f32 %v5128, 0.70710677
  %v5137 = vmul.f32 %v5131, 0.70710677
  %v5138 = verf.f32.pop %v5136
  %v5139 = verf.f32.pop %v5137
  %v5140 = vadd.f32 %v5138, 1.0
  %v5141 = vadd.f32 %v5139, 1.0
  %v5142 = vmul.f32 %v5134, %v5140
  %v5143 = vmul.f32 %v5135, %v5141
  %v5144 = vpack.c.bf16 %v5143, %v5142
  %v5146 = vlaneseq
  %v5147 = vshrl.u32 %v5146, 7
  %v5148 = vsub.s32 0, %v5147
  %v5149 = vrot.slane %v5070, %v5148
  %v5159 = vunpack.c.l.b16 %v5061
  %v5160 = vunpack.c.l.b16 %v5062
  %v5161 = vunpack.c.l.b16 %v5063
  %v5162 = vunpack.c.l.b16 %v5064
  %v5163 = vunpack.c.l.b16 %v5065
  %v5164 = vunpack.c.l.b16 %v5066
  %v5165 = vunpack.c.l.b16 %v5067
  %v5166 = vunpack.c.l.b16 %v5068
  %v5167 = vpack.c.b16 %v5160, %v5159
  %v5168 = vpack.c.b16 %v5162, %v5161
  %v5169 = vpack.c.b16 %v5164, %v5163
  %v5170 = vpack.c.b16 %v5166, %v5165
  %v5176 = vsel %vm1316, %v5144, 0
  %5178 = vmatprep.subr.bf16.mxu0 0
  %5179 = vmatpush1.bf16.msra.mxu0 %v5167
  %5180 = vmatprep.subr.bf16.mxu0 0
  %5181 = vmatpush1.bf16.msra.mxu0 %v5168
  %5182 = vmatprep.subr.bf16.mxu0 0
  %5183 = vmatpush1.bf16.msra.mxu0 %v5169
  %5184 = vmatprep.subr.bf16.mxu0 0
  %5185 = vmatpush1.bf16.msra.mxu0 %v5170
  %5186 = vmatprep.subr.bf16.mxu0 0
  %5187 = vmatpush1.bf16.msra.mxu0 0
  %5188 = vmatprep.subr.bf16.mxu0 0
  %5189 = vmatpush1.bf16.msra.mxu0 0
  %5190 = vmatprep.subr.bf16.mxu0 0
  %5191 = vmatpush1.bf16.msra.mxu0 0
  %5192 = vmatprep.subr.bf16.mxu0 0
  %5193 = vmatpush1.bf16.msra.mxu0 0
  %5194 = vmatprep.subr.bf16.mxu0 0
  %5195 = vmatpush1.bf16.msra.mxu0 0
  %5196 = vmatprep.subr.bf16.mxu0 0
  %5197 = vmatpush1.bf16.msra.mxu0 0
  %5198 = vmatprep.subr.bf16.mxu0 0
  %5199 = vmatpush1.bf16.msra.mxu0 0
  %5200 = vmatprep.subr.bf16.mxu0 0
  %5201 = vmatpush1.bf16.msra.mxu0 0
  %5202 = vmatprep.subr.bf16.mxu0 0
  %5203 = vmatpush1.bf16.msra.mxu0 0
  %5204 = vmatprep.subr.bf16.mxu0 0
  %5205 = vmatpush1.bf16.msra.mxu0 0
  %5206 = vmatprep.subr.bf16.mxu0 0
  %5207 = vmatpush1.bf16.msra.mxu0 0
  %5208 = vmatprep.subr.bf16.mxu0 0
  %5209 = vmatpush1.bf16.msra.mxu0 0
  %5210 = vmatprep.mubr.bf16.mxu0 0
  %5211 = vmatmul.mubr.bf16.gmra.mrb[0].mxu0 %v5176
  %v5212 = vpop.f32.mrb[0].mxu0
  %v5213 = vadd.f32 %v5149, %v5212
  %v5214 = vpop.f32.mrb[0].mxu0
  %v5215 = vpop.f32.mrb[0].mxu0
  %v5216 = vadd.f32 %v5149, %v5215
  %v5217 = vpop.f32.mrb[0].mxu0
  %5218 = vdwg.mxu0
  %v5219 = vadd.f32 %v5051, %v5213
  %v5220 = vadd.f32 %v5052, %v5216
  %s5221 = scalar_lea.vmem %s9, 20
  %v5222 = vld [vmem:[%s5221] sm:$0x1]
  %s5223 = scalar_lea.vmem %s9, 21
  %v5224 = vld [vmem:[%s5223] sm:$0x1]
  %v5225 = vsel %vm113, %v5219, 0.0
  %5226 = vadd.xlane.f32.xlu0 %v5225
  %v5227 = vpop.xlane.xlu0 %5226
  %v5228 = vsel %vm113, %v5220, 0.0
  %5229 = vadd.xlane.f32.xlu0 %v5228
  %v5230 = vpop.xlane.xlu0 %5229
  %v5231 = vmul.f32 %v5227, %v1160
  %v5232 = vmul.f32 %v5230, %v1160
  %v5233 = vsub.f32 %v5219, %v5231
  %v5234 = vsub.f32 %v5220, %v5232
  %v5235 = vmul.f32 %v5233, %v5233
  %v5236 = vmul.f32 %v5234, %v5234
  %v5237 = vsel %vm113, %v5235, 0.0
  %5238 = vadd.xlane.f32.xlu0 %v5237
  %v5239 = vpop.xlane.xlu0 %5238
  %v5240 = vsel %vm113, %v5236, 0.0
  %5241 = vadd.xlane.f32.xlu0 %v5240
  %v5242 = vpop.xlane.xlu0 %5241
  %v5243 = vmul.f32 %v5239, %v1160
  %v5244 = vmul.f32 %v5242, %v1160
  %v5245 = vadd.f32 %v5243, 1e-05
  %v5246 = vadd.f32 %v5244, 1e-05
  %v5247 = vrsqrt.pop %v5245
  %v5248 = vrsqrt.pop %v5246
  %v5249 = vmul.f32 %v5233, %v5247
  %v5250 = vmul.f32 %v5234, %v5248
  %v5252 = vlaneseq
  %v5253 = vshrl.u32 %v5252, 7
  %v5254 = vsub.s32 0, %v5253
  %v5255 = vrot.slane %v5222, %v5254
  %v5257 = vmul.f32 %v5249, %v5255
  %v5258 = vmul.f32 %v5250, %v5255
  %v5260 = vlaneseq
  %v5261 = vshrl.u32 %v5260, 7
  %v5262 = vsub.s32 0, %v5261
  %v5263 = vrot.slane %v5224, %v5262
  %v5265 = vadd.f32 %v5257, %v5263
  %v5266 = vadd.f32 %v5258, %v5263
  %s5267 = scalar_lea.vmem %s2, 48
  %v5268 = vld [vmem:[%s5267] sm:$0xf]
  %v5269 = vld [vmem:[%s5267 + $0x4] sm:$0xf]
  %v5270 = vld [vmem:[%s5267 + $0x8] sm:$0xf]
  %v5271 = vld [vmem:[%s5267 + $0xc] sm:$0xf]
  %s5272 = scalar_lea.vmem %s7, 3
  %v5273 = vld [vmem:[%s5272] sm:$0x1]
  %v5274 = vpack.c.bf16 %v5266, %v5265
  %v5276 = vlaneseq
  %v5277 = vshrl.u32 %v5276, 7
  %v5278 = vsub.s32 0, %v5277
  %v5279 = vrot.slane %v5273, %v5278
  %v5285 = vunpack.c.l.b16 %v5268
  %v5286 = vunpack.c.l.b16 %v5269
  %v5287 = vunpack.c.l.b16 %v5270
  %v5288 = vunpack.c.l.b16 %v5271
  %v5289 = vpack.c.b16 %v5286, %v5285
  %v5290 = vpack.c.b16 %v5288, %v5287
  %v5294 = vsel %vm113, %v5274, 0
  %5296 = vmatprep.subr.bf16.mxu0 0
  %5297 = vmatpush1.bf16.msra.mxu0 %v5289
  %5298 = vmatprep.subr.bf16.mxu0 0
  %5299 = vmatpush1.bf16.msra.mxu0 %v5290
  %5300 = vmatprep.subr.bf16.mxu0 0
  %5301 = vmatpush1.bf16.msra.mxu0 0
  %5302 = vmatprep.subr.bf16.mxu0 0
  %5303 = vmatpush1.bf16.msra.mxu0 0
  %5304 = vmatprep.subr.bf16.mxu0 0
  %5305 = vmatpush1.bf16.msra.mxu0 0
  %5306 = vmatprep.subr.bf16.mxu0 0
  %5307 = vmatpush1.bf16.msra.mxu0 0
  %5308 = vmatprep.subr.bf16.mxu0 0
  %5309 = vmatpush1.bf16.msra.mxu0 0
  %5310 = vmatprep.subr.bf16.mxu0 0
  %5311 = vmatpush1.bf16.msra.mxu0 0
  %5312 = vmatprep.subr.bf16.mxu0 0
  %5313 = vmatpush1.bf16.msra.mxu0 0
  %5314 = vmatprep.subr.bf16.mxu0 0
  %5315 = vmatpush1.bf16.msra.mxu0 0
  %5316 = vmatprep.subr.bf16.mxu0 0
  %5317 = vmatpush1.bf16.msra.mxu0 0
  %5318 = vmatprep.subr.bf16.mxu0 0
  %5319 = vmatpush1.bf16.msra.mxu0 0
  %5320 = vmatprep.subr.bf16.mxu0 0
  %5321 = vmatpush1.bf16.msra.mxu0 0
  %5322 = vmatprep.subr.bf16.mxu0 0
  %5323 = vmatpush1.bf16.msra.mxu0 0
  %5324 = vmatprep.subr.bf16.mxu0 0
  %5325 = vmatpush1.bf16.msra.mxu0 0
  %5326 = vmatprep.subr.bf16.mxu0 0
  %5327 = vmatpush1.bf16.msra.mxu0 0
  %5328 = vmatprep.mubr.bf16.mxu0 0
  %5329 = vmatmul.mubr.bf16.gmra.mrb[0].mxu0 %v5294
  %v5330 = vpop.f32.mrb[0].mxu0
  %v5331 = vadd.f32 %v5279, %v5330
  %v5332 = vpop.f32.mrb[0].mxu0
  %v5333 = vpop.f32.mrb[0].mxu0
  %v5334 = vadd.f32 %v5279, %v5333
  %v5335 = vpop.f32.mrb[0].mxu0
  %5336 = vdwg.mxu0
  %v5337 = vpack.c.bf16 %v5331, %v5331
  %v5338 = vpack.c.bf16 %v5334, %v5334
  %5340 = vrot.lane.b32.xlu0 %v5337, 96
  %v5341 = vpop.permute.xlu0 %5340
  %v5343 = vsel %vm163, %v5337, 0
  %v5346 = vsel %vm163, %v5341, 0
  %5348 = vmatprep.subr.bf16.mxu0 0
  %5349 = vmatpush1.bf16.xpose.msra.mxu0 %v5346
  %5350 = vmatprep.subr.bf16.mxu0 0
  %5351 = vmatpush1.bf16.xpose.msra.mxu0 0
  %5352 = vmatprep.subr.bf16.mxu0 0
  %5353 = vmatpush1.bf16.xpose.msra.mxu0 0
  %5354 = vmatprep.subr.bf16.mxu0 0
  %5355 = vmatpush1.bf16.xpose.msra.mxu0 0
  %5356 = vmatprep.subr.bf16.mxu0 0
  %5357 = vmatpush1.bf16.xpose.msra.mxu0 0
  %5358 = vmatprep.subr.bf16.mxu0 0
  %5359 = vmatpush1.bf16.xpose.msra.mxu0 0
  %5360 = vmatprep.subr.bf16.mxu0 0
  %5361 = vmatpush1.bf16.xpose.msra.mxu0 0
  %5362 = vmatprep.subr.bf16.mxu0 0
  %5363 = vmatpush1.bf16.xpose.msra.mxu0 0
  %5364 = vmatprep.subr.bf16.mxu0 0
  %5365 = vmatpush1.bf16.xpose.msra.mxu0 0
  %5366 = vmatprep.subr.bf16.mxu0 0
  %5367 = vmatpush1.bf16.xpose.msra.mxu0 0
  %5368 = vmatprep.subr.bf16.mxu0 0
  %5369 = vmatpush1.bf16.xpose.msra.mxu0 0
  %5370 = vmatprep.subr.bf16.mxu0 0
  %5371 = vmatpush1.bf16.xpose.msra.mxu0 0
  %5372 = vmatprep.subr.bf16.mxu0 0
  %5373 = vmatpush1.bf16.xpose.msra.mxu0 0
  %5374 = vmatprep.subr.bf16.mxu0 0
  %5375 = vmatpush1.bf16.xpose.msra.mxu0 0
  %5376 = vmatprep.subr.bf16.mxu0 0
  %5377 = vmatpush1.bf16.xpose.msra.mxu0 0
  %5378 = vmatprep.subr.bf16.mxu0 0
  %5379 = vmatpush1.bf16.xpose.msra.mxu0 0
  %5380 = vmatprep.mubr.bf16.mxu0 0
  %5381 = vmatmul.mubr.bf16.gmra.mrb[0].mxu0 %v5343
  %v5382 = vpop.f32.mrb[0].mxu0
  %v5383 = vadd.f32 0.0, %v5382
  %v5384 = vpop.f32.mrb[0].mxu0
  %v5385 = vpop.f32.mrb[0].mxu0
  %v5386 = vpop.f32.mrb[0].mxu0
  %5387 = vdwg.mxu0
  %5389 = vrot.lane.b32.xlu0 %v5338, 96
  %v5390 = vpop.permute.xlu0 %5389
  %v5392 = vsel %vm163, %v5338, 0
  %v5395 = vsel %vm163, %v5390, 0
  %5397 = vmatprep.subr.bf16.mxu0 0
  %5398 = vmatpush1.bf16.xpose.msra.mxu0 %v5395
  %5399 = vmatprep.subr.bf16.mxu0 0
  %5400 = vmatpush1.bf16.xpose.msra.mxu0 0
  %5401 = vmatprep.subr.bf16.mxu0 0
  %5402 = vmatpush1.bf16.xpose.msra.mxu0 0
  %5403 = vmatprep.subr.bf16.mxu0 0
  %5404 = vmatpush1.bf16.xpose.msra.mxu0 0
  %5405 = vmatprep.subr.bf16.mxu0 0
  %5406 = vmatpush1.bf16.xpose.msra.mxu0 0
  %5407 = vmatprep.subr.bf16.mxu0 0
  %5408 = vmatpush1.bf16.xpose.msra.mxu0 0
  %5409 = vmatprep.subr.bf16.mxu0 0
  %5410 = vmatpush1.bf16.xpose.msra.mxu0 0
  %5411 = vmatprep.subr.bf16.mxu0 0
  %5412 = vmatpush1.bf16.xpose.msra.mxu0 0
  %5413 = vmatprep.subr.bf16.mxu0 0
  %5414 = vmatpush1.bf16.xpose.msra.mxu0 0
  %5415 = vmatprep.subr.bf16.mxu0 0
  %5416 = vmatpush1.bf16.xpose.msra.mxu0 0
  %5417 = vmatprep.subr.bf16.mxu0 0
  %5418 = vmatpush1.bf16.xpose.msra.mxu0 0
  %5419 = vmatprep.subr.bf16.mxu0 0
  %5420 = vmatpush1.bf16.xpose.msra.mxu0 0
  %5421 = vmatprep.subr.bf16.mxu0 0
  %5422 = vmatpush1.bf16.xpose.msra.mxu0 0
  %5423 = vmatprep.subr.bf16.mxu0 0
  %5424 = vmatpush1.bf16.xpose.msra.mxu0 0
  %5425 = vmatprep.subr.bf16.mxu0 0
  %5426 = vmatpush1.bf16.xpose.msra.mxu0 0
  %5427 = vmatprep.subr.bf16.mxu0 0
  %5428 = vmatpush1.bf16.xpose.msra.mxu0 0
  %5429 = vmatprep.mubr.bf16.mxu0 0
  %5430 = vmatmul.mubr.bf16.gmra.mrb[0].mxu0 %v5392
  %v5431 = vpop.f32.mrb[0].mxu0
  %v5432 = vadd.f32 0.0, %v5431
  %v5433 = vpop.f32.mrb[0].mxu0
  %v5434 = vpop.f32.mrb[0].mxu0
  %v5435 = vpop.f32.mrb[0].mxu0
  %5436 = vdwg.mxu0
  %v5437 = vsel %vm87, %v5383, -1e+09
  %v5438 = vsel %vm88, %v5432, -1e+09
  %v5439 = vsel %vm163, %v5437, -inf
  %5440 = vmax.xlane.f32.xlu0 %v5439
  %v5441 = vpop.xlane.xlu0 %5440
  %v5442 = vsel %vm163, %v5438, -inf
  %5443 = vmax.xlane.f32.xlu0 %v5442
  %v5444 = vpop.xlane.xlu0 %5443
  %v5445 = vsub.f32 %v5437, %v5441
  %v5446 = vsub.f32 %v5438, %v5444
  %v5447 = vmul.f32 %v5445, 1.442695
  %v5448 = vpow.pop %v5447
  %v5449 = vmul.f32 %v5446, 1.442695
  %v5450 = vpow.pop %v5449
  %v5451 = vsel %vm163, %v5448, 0.0
  %5452 = vadd.xlane.f32.xlu0 %v5451
  %v5453 = vpop.xlane.xlu0 %5452
  %v5454 = vsel %vm163, %v5450, 0.0
  %5455 = vadd.xlane.f32.xlu0 %v5454
  %v5456 = vpop.xlane.xlu0 %5455
  %v5457 = vrcp.pop %v5453
  %v5458 = vrcp.pop %v5456
  %v5459 = vmul.f32 %v5448, %v5457
  %v5460 = vmul.f32 %v5450, %v5458
  %v5461 = vpack.c.bf16 %v5459, %v5459
  %v5462 = vpack.c.bf16 %v5460, %v5460
  %5463 = vrot.lane.b32.xlu0 %v5337, 64
  %v5464 = vpop.permute.xlu0 %5463
  %v5466 = vsel %vm163, %v5461, 0
  %v5469 = vsel %vm290, %v5464, 0
  %5471 = vmatprep.subr.bf16.mxu0 0
  %5472 = vmatpush1.bf16.msra.mxu0 %v5469
  %5473 = vmatprep.subr.bf16.mxu0 0
  %5474 = vmatpush1.bf16.msra.mxu0 0
  %5475 = vmatprep.subr.bf16.mxu0 0
  %5476 = vmatpush1.bf16.msra.mxu0 0
  %5477 = vmatprep.subr.bf16.mxu0 0
  %5478 = vmatpush1.bf16.msra.mxu0 0
  %5479 = vmatprep.subr.bf16.mxu0 0
  %5480 = vmatpush1.bf16.msra.mxu0 0
  %5481 = vmatprep.subr.bf16.mxu0 0
  %5482 = vmatpush1.bf16.msra.mxu0 0
  %5483 = vmatprep.subr.bf16.mxu0 0
  %5484 = vmatpush1.bf16.msra.mxu0 0
  %5485 = vmatprep.subr.bf16.mxu0 0
  %5486 = vmatpush1.bf16.msra.mxu0 0
  %5487 = vmatprep.subr.bf16.mxu0 0
  %5488 = vmatpush1.bf16.msra.mxu0 0
  %5489 = vmatprep.subr.bf16.mxu0 0
  %5490 = vmatpush1.bf16.msra.mxu0 0
  %5491 = vmatprep.subr.bf16.mxu0 0
  %5492 = vmatpush1.bf16.msra.mxu0 0
  %5493 = vmatprep.subr.bf16.mxu0 0
  %5494 = vmatpush1.bf16.msra.mxu0 0
  %5495 = vmatprep.subr.bf16.mxu0 0
  %5496 = vmatpush1.bf16.msra.mxu0 0
  %5497 = vmatprep.subr.bf16.mxu0 0
  %5498 = vmatpush1.bf16.msra.mxu0 0
  %5499 = vmatprep.subr.bf16.mxu0 0
  %5500 = vmatpush1.bf16.msra.mxu0 0
  %5501 = vmatprep.subr.bf16.mxu0 0
  %5502 = vmatpush1.bf16.msra.mxu0 0
  %5503 = vmatprep.mubr.bf16.mxu0 0
  %5504 = vmatmul.mubr.bf16.gmra.mrb[0].mxu0 %v5466
  %v5505 = vpop.f32.mrb[0].mxu0
  %v5506 = vadd.f32 0.0, %v5505
  %v5507 = vpop.f32.mrb[0].mxu0
  %v5508 = vpop.f32.mrb[0].mxu0
  %v5509 = vpop.f32.mrb[0].mxu0
  %5510 = vdwg.mxu0
  %5511 = vrot.lane.b32.xlu0 %v5338, 64
  %v5512 = vpop.permute.xlu0 %5511
  %v5514 = vsel %vm163, %v5462, 0
  %v5517 = vsel %vm290, %v5512, 0
  %5519 = vmatprep.subr.bf16.mxu0 0
  %5520 = vmatpush1.bf16.msra.mxu0 %v5517
  %5521 = vmatprep.subr.bf16.mxu0 0
  %5522 = vmatpush1.bf16.msra.mxu0 0
  %5523 = vmatprep.subr.bf16.mxu0 0
  %5524 = vmatpush1.bf16.msra.mxu0 0
  %5525 = vmatprep.subr.bf16.mxu0 0
  %5526 = vmatpush1.bf16.msra.mxu0 0
  %5527 = vmatprep.subr.bf16.mxu0 0
  %5528 = vmatpush1.bf16.msra.mxu0 0
  %5529 = vmatprep.subr.bf16.mxu0 0
  %5530 = vmatpush1.bf16.msra.mxu0 0
  %5531 = vmatprep.subr.bf16.mxu0 0
  %5532 = vmatpush1.bf16.msra.mxu0 0
  %5533 = vmatprep.subr.bf16.mxu0 0
  %5534 = vmatpush1.bf16.msra.mxu0 0
  %5535 = vmatprep.subr.bf16.mxu0 0
  %5536 = vmatpush1.bf16.msra.mxu0 0
  %5537 = vmatprep.subr.bf16.mxu0 0
  %5538 = vmatpush1.bf16.msra.mxu0 0
  %5539 = vmatprep.subr.bf16.mxu0 0
  %5540 = vmatpush1.bf16.msra.mxu0 0
  %5541 = vmatprep.subr.bf16.mxu0 0
  %5542 = vmatpush1.bf16.msra.mxu0 0
  %5543 = vmatprep.subr.bf16.mxu0 0
  %5544 = vmatpush1.bf16.msra.mxu0 0
  %5545 = vmatprep.subr.bf16.mxu0 0
  %5546 = vmatpush1.bf16.msra.mxu0 0
  %5547 = vmatprep.subr.bf16.mxu0 0
  %5548 = vmatpush1.bf16.msra.mxu0 0
  %5549 = vmatprep.subr.bf16.mxu0 0
  %5550 = vmatpush1.bf16.msra.mxu0 0
  %5551 = vmatprep.mubr.bf16.mxu0 0
  %5552 = vmatmul.mubr.bf16.gmra.mrb[0].mxu0 %v5514
  %v5553 = vpop.f32.mrb[0].mxu0
  %v5554 = vadd.f32 0.0, %v5553
  %v5555 = vpop.f32.mrb[0].mxu0
  %v5556 = vpop.f32.mrb[0].mxu0
  %v5557 = vpop.f32.mrb[0].mxu0
  %5558 = vdwg.mxu0
  %5559 = vrot.lane.b32.xlu0 %v5337, 120
  %v5560 = vpop.permute.xlu0 %5559
  %5561 = vrot.lane.b32.xlu0 %v5337, 88
  %v5562 = vpop.permute.xlu0 %5561
  %v5564 = vsel %vm163, %v5560, 0
  %v5567 = vsel %vm163, %v5562, 0
  %5569 = vmatprep.subr.bf16.mxu0 0
  %5570 = vmatpush1.bf16.xpose.msra.mxu0 %v5567
  %5571 = vmatprep.subr.bf16.mxu0 0
  %5572 = vmatpush1.bf16.xpose.msra.mxu0 0
  %5573 = vmatprep.subr.bf16.mxu0 0
  %5574 = vmatpush1.bf16.xpose.msra.mxu0 0
  %5575 = vmatprep.subr.bf16.mxu0 0
  %5576 = vmatpush1.bf16.xpose.msra.mxu0 0
  %5577 = vmatprep.subr.bf16.mxu0 0
  %5578 = vmatpush1.bf16.xpose.msra.mxu0 0
  %5579 = vmatprep.subr.bf16.mxu0 0
  %5580 = vmatpush1.bf16.xpose.msra.mxu0 0
  %5581 = vmatprep.subr.bf16.mxu0 0
  %5582 = vmatpush1.bf16.xpose.msra.mxu0 0
  %5583 = vmatprep.subr.bf16.mxu0 0
  %5584 = vmatpush1.bf16.xpose.msra.mxu0 0
  %5585 = vmatprep.subr.bf16.mxu0 0
  %5586 = vmatpush1.bf16.xpose.msra.mxu0 0
  %5587 = vmatprep.subr.bf16.mxu0 0
  %5588 = vmatpush1.bf16.xpose.msra.mxu0 0
  %5589 = vmatprep.subr.bf16.mxu0 0
  %5590 = vmatpush1.bf16.xpose.msra.mxu0 0
  %5591 = vmatprep.subr.bf16.mxu0 0
  %5592 = vmatpush1.bf16.xpose.msra.mxu0 0
  %5593 = vmatprep.subr.bf16.mxu0 0
  %5594 = vmatpush1.bf16.xpose.msra.mxu0 0
  %5595 = vmatprep.subr.bf16.mxu0 0
  %5596 = vmatpush1.bf16.xpose.msra.mxu0 0
  %5597 = vmatprep.subr.bf16.mxu0 0
  %5598 = vmatpush1.bf16.xpose.msra.mxu0 0
  %5599 = vmatprep.subr.bf16.mxu0 0
  %5600 = vmatpush1.bf16.xpose.msra.mxu0 0
  %5601 = vmatprep.mubr.bf16.mxu0 0
  %5602 = vmatmul.mubr.bf16.gmra.mrb[0].mxu0 %v5564
  %v5603 = vpop.f32.mrb[0].mxu0
  %v5604 = vadd.f32 0.0, %v5603
  %v5605 = vpop.f32.mrb[0].mxu0
  %v5606 = vpop.f32.mrb[0].mxu0
  %v5607 = vpop.f32.mrb[0].mxu0
  %5608 = vdwg.mxu0
  %5609 = vrot.lane.b32.xlu0 %v5338, 120
  %v5610 = vpop.permute.xlu0 %5609
  %5611 = vrot.lane.b32.xlu0 %v5338, 88
  %v5612 = vpop.permute.xlu0 %5611
  %v5614 = vsel %vm163, %v5610, 0
  %v5617 = vsel %vm163, %v5612, 0
  %5619 = vmatprep.subr.bf16.mxu0 0
  %5620 = vmatpush1.bf16.xpose.msra.mxu0 %v5617
  %5621 = vmatprep.subr.bf16.mxu0 0
  %5622 = vmatpush1.bf16.xpose.msra.mxu0 0
  %5623 = vmatprep.subr.bf16.mxu0 0
  %5624 = vmatpush1.bf16.xpose.msra.mxu0 0
  %5625 = vmatprep.subr.bf16.mxu0 0
  %5626 = vmatpush1.bf16.xpose.msra.mxu0 0
  %5627 = vmatprep.subr.bf16.mxu0 0
  %5628 = vmatpush1.bf16.xpose.msra.mxu0 0
  %5629 = vmatprep.subr.bf16.mxu0 0
  %5630 = vmatpush1.bf16.xpose.msra.mxu0 0
  %5631 = vmatprep.subr.bf16.mxu0 0
  %5632 = vmatpush1.bf16.xpose.msra.mxu0 0
  %5633 = vmatprep.subr.bf16.mxu0 0
  %5634 = vmatpush1.bf16.xpose.msra.mxu0 0
  %5635 = vmatprep.subr.bf16.mxu0 0
  %5636 = vmatpush1.bf16.xpose.msra.mxu0 0
  %5637 = vmatprep.subr.bf16.mxu0 0
  %5638 = vmatpush1.bf16.xpose.msra.mxu0 0
  %5639 = vmatprep.subr.bf16.mxu0 0
  %5640 = vmatpush1.bf16.xpose.msra.mxu0 0
  %5641 = vmatprep.subr.bf16.mxu0 0
  %5642 = vmatpush1.bf16.xpose.msra.mxu0 0
  %5643 = vmatprep.subr.bf16.mxu0 0
  %5644 = vmatpush1.bf16.xpose.msra.mxu0 0
  %5645 = vmatprep.subr.bf16.mxu0 0
  %5646 = vmatpush1.bf16.xpose.msra.mxu0 0
  %5647 = vmatprep.subr.bf16.mxu0 0
  %5648 = vmatpush1.bf16.xpose.msra.mxu0 0
  %5649 = vmatprep.subr.bf16.mxu0 0
  %5650 = vmatpush1.bf16.xpose.msra.mxu0 0
  %5651 = vmatprep.mubr.bf16.mxu0 0
  %5652 = vmatmul.mubr.bf16.gmra.mrb[0].mxu0 %v5614
  %v5653 = vpop.f32.mrb[0].mxu0
  %v5654 = vadd.f32 0.0, %v5653
  %v5655 = vpop.f32.mrb[0].mxu0
  %v5656 = vpop.f32.mrb[0].mxu0
  %v5657 = vpop.f32.mrb[0].mxu0
  %5658 = vdwg.mxu0
  %v5659 = vsel %vm87, %v5604, -1e+09
  %v5660 = vsel %vm88, %v5654, -1e+09
  %v5661 = vsel %vm163, %v5659, -inf
  %5662 = vmax.xlane.f32.xlu0 %v5661
  %v5663 = vpop.xlane.xlu0 %5662
  %v5664 = vsel %vm163, %v5660, -inf
  %5665 = vmax.xlane.f32.xlu0 %v5664
  %v5666 = vpop.xlane.xlu0 %5665
  %v5667 = vsub.f32 %v5659, %v5663
  %v5668 = vsub.f32 %v5660, %v5666
  %v5669 = vmul.f32 %v5667, 1.442695
  %v5670 = vpow.pop %v5669
  %v5671 = vmul.f32 %v5668, 1.442695
  %v5672 = vpow.pop %v5671
  %v5673 = vsel %vm163, %v5670, 0.0
  %5674 = vadd.xlane.f32.xlu0 %v5673
  %v5675 = vpop.xlane.xlu0 %5674
  %v5676 = vsel %vm163, %v5672, 0.0
  %5677 = vadd.xlane.f32.xlu0 %v5676
  %v5678 = vpop.xlane.xlu0 %5677
  %v5679 = vrcp.pop %v5675
  %v5680 = vrcp.pop %v5678
  %v5681 = vmul.f32 %v5670, %v5679
  %v5682 = vmul.f32 %v5672, %v5680
  %v5683 = vpack.c.bf16 %v5681, %v5681
  %v5684 = vpack.c.bf16 %v5682, %v5682
  %5685 = vrot.lane.b32.xlu0 %v5337, 56
  %v5686 = vpop.permute.xlu0 %5685
  %v5688 = vsel %vm163, %v5683, 0
  %v5691 = vsel %vm290, %v5686, 0
  %5693 = vmatprep.subr.bf16.mxu0 0
  %5694 = vmatpush1.bf16.msra.mxu0 %v5691
  %5695 = vmatprep.subr.bf16.mxu0 0
  %5696 = vmatpush1.bf16.msra.mxu0 0
  %5697 = vmatprep.subr.bf16.mxu0 0
  %5698 = vmatpush1.bf16.msra.mxu0 0
  %5699 = vmatprep.subr.bf16.mxu0 0
  %5700 = vmatpush1.bf16.msra.mxu0 0
  %5701 = vmatprep.subr.bf16.mxu0 0
  %5702 = vmatpush1.bf16.msra.mxu0 0
  %5703 = vmatprep.subr.bf16.mxu0 0
  %5704 = vmatpush1.bf16.msra.mxu0 0
  %5705 = vmatprep.subr.bf16.mxu0 0
  %5706 = vmatpush1.bf16.msra.mxu0 0
  %5707 = vmatprep.subr.bf16.mxu0 0
  %5708 = vmatpush1.bf16.msra.mxu0 0
  %5709 = vmatprep.subr.bf16.mxu0 0
  %5710 = vmatpush1.bf16.msra.mxu0 0
  %5711 = vmatprep.subr.bf16.mxu0 0
  %5712 = vmatpush1.bf16.msra.mxu0 0
  %5713 = vmatprep.subr.bf16.mxu0 0
  %5714 = vmatpush1.bf16.msra.mxu0 0
  %5715 = vmatprep.subr.bf16.mxu0 0
  %5716 = vmatpush1.bf16.msra.mxu0 0
  %5717 = vmatprep.subr.bf16.mxu0 0
  %5718 = vmatpush1.bf16.msra.mxu0 0
  %5719 = vmatprep.subr.bf16.mxu0 0
  %5720 = vmatpush1.bf16.msra.mxu0 0
  %5721 = vmatprep.subr.bf16.mxu0 0
  %5722 = vmatpush1.bf16.msra.mxu0 0
  %5723 = vmatprep.subr.bf16.mxu0 0
  %5724 = vmatpush1.bf16.msra.mxu0 0
  %5725 = vmatprep.mubr.bf16.mxu0 0
  %5726 = vmatmul.mubr.bf16.gmra.mrb[0].mxu0 %v5688
  %v5727 = vpop.f32.mrb[0].mxu0
  %v5728 = vadd.f32 0.0, %v5727
  %v5729 = vpop.f32.mrb[0].mxu0
  %v5730 = vpop.f32.mrb[0].mxu0
  %v5731 = vpop.f32.mrb[0].mxu0
  %5732 = vdwg.mxu0
  %5733 = vrot.lane.b32.xlu0 %v5338, 56
  %v5734 = vpop.permute.xlu0 %5733
  %v5736 = vsel %vm163, %v5684, 0
  %v5739 = vsel %vm290, %v5734, 0
  %5741 = vmatprep.subr.bf16.mxu0 0
  %5742 = vmatpush1.bf16.msra.mxu0 %v5739
  %5743 = vmatprep.subr.bf16.mxu0 0
  %5744 = vmatpush1.bf16.msra.mxu0 0
  %5745 = vmatprep.subr.bf16.mxu0 0
  %5746 = vmatpush1.bf16.msra.mxu0 0
  %5747 = vmatprep.subr.bf16.mxu0 0
  %5748 = vmatpush1.bf16.msra.mxu0 0
  %5749 = vmatprep.subr.bf16.mxu0 0
  %5750 = vmatpush1.bf16.msra.mxu0 0
  %5751 = vmatprep.subr.bf16.mxu0 0
  %5752 = vmatpush1.bf16.msra.mxu0 0
  %5753 = vmatprep.subr.bf16.mxu0 0
  %5754 = vmatpush1.bf16.msra.mxu0 0
  %5755 = vmatprep.subr.bf16.mxu0 0
  %5756 = vmatpush1.bf16.msra.mxu0 0
  %5757 = vmatprep.subr.bf16.mxu0 0
  %5758 = vmatpush1.bf16.msra.mxu0 0
  %5759 = vmatprep.subr.bf16.mxu0 0
  %5760 = vmatpush1.bf16.msra.mxu0 0
  %5761 = vmatprep.subr.bf16.mxu0 0
  %5762 = vmatpush1.bf16.msra.mxu0 0
  %5763 = vmatprep.subr.bf16.mxu0 0
  %5764 = vmatpush1.bf16.msra.mxu0 0
  %5765 = vmatprep.subr.bf16.mxu0 0
  %5766 = vmatpush1.bf16.msra.mxu0 0
  %5767 = vmatprep.subr.bf16.mxu0 0
  %5768 = vmatpush1.bf16.msra.mxu0 0
  %5769 = vmatprep.subr.bf16.mxu0 0
  %5770 = vmatpush1.bf16.msra.mxu0 0
  %5771 = vmatprep.subr.bf16.mxu0 0
  %5772 = vmatpush1.bf16.msra.mxu0 0
  %5773 = vmatprep.mubr.bf16.mxu0 0
  %5774 = vmatmul.mubr.bf16.gmra.mrb[0].mxu0 %v5736
  %v5775 = vpop.f32.mrb[0].mxu0
  %v5776 = vadd.f32 0.0, %v5775
  %v5777 = vpop.f32.mrb[0].mxu0
  %v5778 = vpop.f32.mrb[0].mxu0
  %v5779 = vpop.f32.mrb[0].mxu0
  %5780 = vdwg.mxu0
  %5781 = vrot.lane.b32.xlu0 %v5337, 112
  %v5782 = vpop.permute.xlu0 %5781
  %5783 = vrot.lane.b32.xlu0 %v5337, 80
  %v5784 = vpop.permute.xlu0 %5783
  %v5786 = vsel %vm163, %v5782, 0
  %v5789 = vsel %vm163, %v5784, 0
  %5791 = vmatprep.subr.bf16.mxu0 0
  %5792 = vmatpush1.bf16.xpose.msra.mxu0 %v5789
  %5793 = vmatprep.subr.bf16.mxu0 0
  %5794 = vmatpush1.bf16.xpose.msra.mxu0 0
  %5795 = vmatprep.subr.bf16.mxu0 0
  %5796 = vmatpush1.bf16.xpose.msra.mxu0 0
  %5797 = vmatprep.subr.bf16.mxu0 0
  %5798 = vmatpush1.bf16.xpose.msra.mxu0 0
  %5799 = vmatprep.subr.bf16.mxu0 0
  %5800 = vmatpush1.bf16.xpose.msra.mxu0 0
  %5801 = vmatprep.subr.bf16.mxu0 0
  %5802 = vmatpush1.bf16.xpose.msra.mxu0 0
  %5803 = vmatprep.subr.bf16.mxu0 0
  %5804 = vmatpush1.bf16.xpose.msra.mxu0 0
  %5805 = vmatprep.subr.bf16.mxu0 0
  %5806 = vmatpush1.bf16.xpose.msra.mxu0 0
  %5807 = vmatprep.subr.bf16.mxu0 0
  %5808 = vmatpush1.bf16.xpose.msra.mxu0 0
  %5809 = vmatprep.subr.bf16.mxu0 0
  %5810 = vmatpush1.bf16.xpose.msra.mxu0 0
  %5811 = vmatprep.subr.bf16.mxu0 0
  %5812 = vmatpush1.bf16.xpose.msra.mxu0 0
  %5813 = vmatprep.subr.bf16.mxu0 0
  %5814 = vmatpush1.bf16.xpose.msra.mxu0 0
  %5815 = vmatprep.subr.bf16.mxu0 0
  %5816 = vmatpush1.bf16.xpose.msra.mxu0 0
  %5817 = vmatprep.subr.bf16.mxu0 0
  %5818 = vmatpush1.bf16.xpose.msra.mxu0 0
  %5819 = vmatprep.subr.bf16.mxu0 0
  %5820 = vmatpush1.bf16.xpose.msra.mxu0 0
  %5821 = vmatprep.subr.bf16.mxu0 0
  %5822 = vmatpush1.bf16.xpose.msra.mxu0 0
  %5823 = vmatprep.mubr.bf16.mxu0 0
  %5824 = vmatmul.mubr.bf16.gmra.mrb[0].mxu0 %v5786
  %v5825 = vpop.f32.mrb[0].mxu0
  %v5826 = vadd.f32 0.0, %v5825
  %v5827 = vpop.f32.mrb[0].mxu0
  %v5828 = vpop.f32.mrb[0].mxu0
  %v5829 = vpop.f32.mrb[0].mxu0
  %5830 = vdwg.mxu0
  %5831 = vrot.lane.b32.xlu0 %v5338, 112
  %v5832 = vpop.permute.xlu0 %5831
  %5833 = vrot.lane.b32.xlu0 %v5338, 80
  %v5834 = vpop.permute.xlu0 %5833
  %v5836 = vsel %vm163, %v5832, 0
  %v5839 = vsel %vm163, %v5834, 0
  %5841 = vmatprep.subr.bf16.mxu0 0
  %5842 = vmatpush1.bf16.xpose.msra.mxu0 %v5839
  %5843 = vmatprep.subr.bf16.mxu0 0
  %5844 = vmatpush1.bf16.xpose.msra.mxu0 0
  %5845 = vmatprep.subr.bf16.mxu0 0
  %5846 = vmatpush1.bf16.xpose.msra.mxu0 0
  %5847 = vmatprep.subr.bf16.mxu0 0
  %5848 = vmatpush1.bf16.xpose.msra.mxu0 0
  %5849 = vmatprep.subr.bf16.mxu0 0
  %5850 = vmatpush1.bf16.xpose.msra.mxu0 0
  %5851 = vmatprep.subr.bf16.mxu0 0
  %5852 = vmatpush1.bf16.xpose.msra.mxu0 0
  %5853 = vmatprep.subr.bf16.mxu0 0
  %5854 = vmatpush1.bf16.xpose.msra.mxu0 0
  %5855 = vmatprep.subr.bf16.mxu0 0
  %5856 = vmatpush1.bf16.xpose.msra.mxu0 0
  %5857 = vmatprep.subr.bf16.mxu0 0
  %5858 = vmatpush1.bf16.xpose.msra.mxu0 0
  %5859 = vmatprep.subr.bf16.mxu0 0
  %5860 = vmatpush1.bf16.xpose.msra.mxu0 0
  %5861 = vmatprep.subr.bf16.mxu0 0
  %5862 = vmatpush1.bf16.xpose.msra.mxu0 0
  %5863 = vmatprep.subr.bf16.mxu0 0
  %5864 = vmatpush1.bf16.xpose.msra.mxu0 0
  %5865 = vmatprep.subr.bf16.mxu0 0
  %5866 = vmatpush1.bf16.xpose.msra.mxu0 0
  %5867 = vmatprep.subr.bf16.mxu0 0
  %5868 = vmatpush1.bf16.xpose.msra.mxu0 0
  %5869 = vmatprep.subr.bf16.mxu0 0
  %5870 = vmatpush1.bf16.xpose.msra.mxu0 0
  %5871 = vmatprep.subr.bf16.mxu0 0
  %5872 = vmatpush1.bf16.xpose.msra.mxu0 0
  %5873 = vmatprep.mubr.bf16.mxu0 0
  %5874 = vmatmul.mubr.bf16.gmra.mrb[0].mxu0 %v5836
  %v5875 = vpop.f32.mrb[0].mxu0
  %v5876 = vadd.f32 0.0, %v5875
  %v5877 = vpop.f32.mrb[0].mxu0
  %v5878 = vpop.f32.mrb[0].mxu0
  %v5879 = vpop.f32.mrb[0].mxu0
  %5880 = vdwg.mxu0
  %v5881 = vsel %vm87, %v5826, -1e+09
  %v5882 = vsel %vm88, %v5876, -1e+09
  %v5883 = vsel %vm163, %v5881, -inf
  %5884 = vmax.xlane.f32.xlu0 %v5883
  %v5885 = vpop.xlane.xlu0 %5884
  %v5886 = vsel %vm163, %v5882, -inf
  %5887 = vmax.xlane.f32.xlu0 %v5886
  %v5888 = vpop.xlane.xlu0 %5887
  %v5889 = vsub.f32 %v5881, %v5885
  %v5890 = vsub.f32 %v5882, %v5888
  %v5891 = vmul.f32 %v5889, 1.442695
  %v5892 = vpow.pop %v5891
  %v5893 = vmul.f32 %v5890, 1.442695
  %v5894 = vpow.pop %v5893
  %v5895 = vsel %vm163, %v5892, 0.0
  %5896 = vadd.xlane.f32.xlu0 %v5895
  %v5897 = vpop.xlane.xlu0 %5896
  %v5898 = vsel %vm163, %v5894, 0.0
  %5899 = vadd.xlane.f32.xlu0 %v5898
  %v5900 = vpop.xlane.xlu0 %5899
  %v5901 = vrcp.pop %v5897
  %v5902 = vrcp.pop %v5900
  %v5903 = vmul.f32 %v5892, %v5901
  %v5904 = vmul.f32 %v5894, %v5902
  %v5905 = vpack.c.bf16 %v5903, %v5903
  %v5906 = vpack.c.bf16 %v5904, %v5904
  %5907 = vrot.lane.b32.xlu0 %v5337, 48
  %v5908 = vpop.permute.xlu0 %5907
  %v5910 = vsel %vm163, %v5905, 0
  %v5913 = vsel %vm290, %v5908, 0
  %5915 = vmatprep.subr.bf16.mxu0 0
  %5916 = vmatpush1.bf16.msra.mxu0 %v5913
  %5917 = vmatprep.subr.bf16.mxu0 0
  %5918 = vmatpush1.bf16.msra.mxu0 0
  %5919 = vmatprep.subr.bf16.mxu0 0
  %5920 = vmatpush1.bf16.msra.mxu0 0
  %5921 = vmatprep.subr.bf16.mxu0 0
  %5922 = vmatpush1.bf16.msra.mxu0 0
  %5923 = vmatprep.subr.bf16.mxu0 0
  %5924 = vmatpush1.bf16.msra.mxu0 0
  %5925 = vmatprep.subr.bf16.mxu0 0
  %5926 = vmatpush1.bf16.msra.mxu0 0
  %5927 = vmatprep.subr.bf16.mxu0 0
  %5928 = vmatpush1.bf16.msra.mxu0 0
  %5929 = vmatprep.subr.bf16.mxu0 0
  %5930 = vmatpush1.bf16.msra.mxu0 0
  %5931 = vmatprep.subr.bf16.mxu0 0
  %5932 = vmatpush1.bf16.msra.mxu0 0
  %5933 = vmatprep.subr.bf16.mxu0 0
  %5934 = vmatpush1.bf16.msra.mxu0 0
  %5935 = vmatprep.subr.bf16.mxu0 0
  %5936 = vmatpush1.bf16.msra.mxu0 0
  %5937 = vmatprep.subr.bf16.mxu0 0
  %5938 = vmatpush1.bf16.msra.mxu0 0
  %5939 = vmatprep.subr.bf16.mxu0 0
  %5940 = vmatpush1.bf16.msra.mxu0 0
  %5941 = vmatprep.subr.bf16.mxu0 0
  %5942 = vmatpush1.bf16.msra.mxu0 0
  %5943 = vmatprep.subr.bf16.mxu0 0
  %5944 = vmatpush1.bf16.msra.mxu0 0
  %5945 = vmatprep.subr.bf16.mxu0 0
  %5946 = vmatpush1.bf16.msra.mxu0 0
  %5947 = vmatprep.mubr.bf16.mxu0 0
  %5948 = vmatmul.mubr.bf16.gmra.mrb[0].mxu0 %v5910
  %v5949 = vpop.f32.mrb[0].mxu0
  %v5950 = vadd.f32 0.0, %v5949
  %v5951 = vpop.f32.mrb[0].mxu0
  %v5952 = vpop.f32.mrb[0].mxu0
  %v5953 = vpop.f32.mrb[0].mxu0
  %5954 = vdwg.mxu0
  %5955 = vrot.lane.b32.xlu0 %v5338, 48
  %v5956 = vpop.permute.xlu0 %5955
  %v5958 = vsel %vm163, %v5906, 0
  %v5961 = vsel %vm290, %v5956, 0
  %5963 = vmatprep.subr.bf16.mxu0 0
  %5964 = vmatpush1.bf16.msra.mxu0 %v5961
  %5965 = vmatprep.subr.bf16.mxu0 0
  %5966 = vmatpush1.bf16.msra.mxu0 0
  %5967 = vmatprep.subr.bf16.mxu0 0
  %5968 = vmatpush1.bf16.msra.mxu0 0
  %5969 = vmatprep.subr.bf16.mxu0 0
  %5970 = vmatpush1.bf16.msra.mxu0 0
  %5971 = vmatprep.subr.bf16.mxu0 0
  %5972 = vmatpush1.bf16.msra.mxu0 0
  %5973 = vmatprep.subr.bf16.mxu0 0
  %5974 = vmatpush1.bf16.msra.mxu0 0
  %5975 = vmatprep.subr.bf16.mxu0 0
  %5976 = vmatpush1.bf16.msra.mxu0 0
  %5977 = vmatprep.subr.bf16.mxu0 0
  %5978 = vmatpush1.bf16.msra.mxu0 0
  %5979 = vmatprep.subr.bf16.mxu0 0
  %5980 = vmatpush1.bf16.msra.mxu0 0
  %5981 = vmatprep.subr.bf16.mxu0 0
  %5982 = vmatpush1.bf16.msra.mxu0 0
  %5983 = vmatprep.subr.bf16.mxu0 0
  %5984 = vmatpush1.bf16.msra.mxu0 0
  %5985 = vmatprep.subr.bf16.mxu0 0
  %5986 = vmatpush1.bf16.msra.mxu0 0
  %5987 = vmatprep.subr.bf16.mxu0 0
  %5988 = vmatpush1.bf16.msra.mxu0 0
  %5989 = vmatprep.subr.bf16.mxu0 0
  %5990 = vmatpush1.bf16.msra.mxu0 0
  %5991 = vmatprep.subr.bf16.mxu0 0
  %5992 = vmatpush1.bf16.msra.mxu0 0
  %5993 = vmatprep.subr.bf16.mxu0 0
  %5994 = vmatpush1.bf16.msra.mxu0 0
  %5995 = vmatprep.mubr.bf16.mxu0 0
  %5996 = vmatmul.mubr.bf16.gmra.mrb[0].mxu0 %v5958
  %v5997 = vpop.f32.mrb[0].mxu0
  %v5998 = vadd.f32 0.0, %v5997
  %v5999 = vpop.f32.mrb[0].mxu0
  %v6000 = vpop.f32.mrb[0].mxu0
  %v6001 = vpop.f32.mrb[0].mxu0
  %6002 = vdwg.mxu0
  %6003 = vrot.lane.b32.xlu0 %v5337, 104
  %v6004 = vpop.permute.xlu0 %6003
  %6005 = vrot.lane.b32.xlu0 %v5337, 72
  %v6006 = vpop.permute.xlu0 %6005
  %v6008 = vsel %vm163, %v6004, 0
  %v6011 = vsel %vm163, %v6006, 0
  %6013 = vmatprep.subr.bf16.mxu0 0
  %6014 = vmatpush1.bf16.xpose.msra.mxu0 %v6011
  %6015 = vmatprep.subr.bf16.mxu0 0
  %6016 = vmatpush1.bf16.xpose.msra.mxu0 0
  %6017 = vmatprep.subr.bf16.mxu0 0
  %6018 = vmatpush1.bf16.xpose.msra.mxu0 0
  %6019 = vmatprep.subr.bf16.mxu0 0
  %6020 = vmatpush1.bf16.xpose.msra.mxu0 0
  %6021 = vmatprep.subr.bf16.mxu0 0
  %6022 = vmatpush1.bf16.xpose.msra.mxu0 0
  %6023 = vmatprep.subr.bf16.mxu0 0
  %6024 = vmatpush1.bf16.xpose.msra.mxu0 0
  %6025 = vmatprep.subr.bf16.mxu0 0
  %6026 = vmatpush1.bf16.xpose.msra.mxu0 0
  %6027 = vmatprep.subr.bf16.mxu0 0
  %6028 = vmatpush1.bf16.xpose.msra.mxu0 0
  %6029 = vmatprep.subr.bf16.mxu0 0
  %6030 = vmatpush1.bf16.xpose.msra.mxu0 0
  %6031 = vmatprep.subr.bf16.mxu0 0
  %6032 = vmatpush1.bf16.xpose.msra.mxu0 0
  %6033 = vmatprep.subr.bf16.mxu0 0
  %6034 = vmatpush1.bf16.xpose.msra.mxu0 0
  %6035 = vmatprep.subr.bf16.mxu0 0
  %6036 = vmatpush1.bf16.xpose.msra.mxu0 0
  %6037 = vmatprep.subr.bf16.mxu0 0
  %6038 = vmatpush1.bf16.xpose.msra.mxu0 0
  %6039 = vmatprep.subr.bf16.mxu0 0
  %6040 = vmatpush1.bf16.xpose.msra.mxu0 0
  %6041 = vmatprep.subr.bf16.mxu0 0
  %6042 = vmatpush1.bf16.xpose.msra.mxu0 0
  %6043 = vmatprep.subr.bf16.mxu0 0
  %6044 = vmatpush1.bf16.xpose.msra.mxu0 0
  %6045 = vmatprep.mubr.bf16.mxu0 0
  %6046 = vmatmul.mubr.bf16.gmra.mrb[0].mxu0 %v6008
  %v6047 = vpop.f32.mrb[0].mxu0
  %v6048 = vadd.f32 0.0, %v6047
  %v6049 = vpop.f32.mrb[0].mxu0
  %v6050 = vpop.f32.mrb[0].mxu0
  %v6051 = vpop.f32.mrb[0].mxu0
  %6052 = vdwg.mxu0
  %6053 = vrot.lane.b32.xlu0 %v5338, 104
  %v6054 = vpop.permute.xlu0 %6053
  %6055 = vrot.lane.b32.xlu0 %v5338, 72
  %v6056 = vpop.permute.xlu0 %6055
  %v6058 = vsel %vm163, %v6054, 0
  %v6061 = vsel %vm163, %v6056, 0
  %6063 = vmatprep.subr.bf16.mxu0 0
  %6064 = vmatpush1.bf16.xpose.msra.mxu0 %v6061
  %6065 = vmatprep.subr.bf16.mxu0 0
  %6066 = vmatpush1.bf16.xpose.msra.mxu0 0
  %6067 = vmatprep.subr.bf16.mxu0 0
  %6068 = vmatpush1.bf16.xpose.msra.mxu0 0
  %6069 = vmatprep.subr.bf16.mxu0 0
  %6070 = vmatpush1.bf16.xpose.msra.mxu0 0
  %6071 = vmatprep.subr.bf16.mxu0 0
  %6072 = vmatpush1.bf16.xpose.msra.mxu0 0
  %6073 = vmatprep.subr.bf16.mxu0 0
  %6074 = vmatpush1.bf16.xpose.msra.mxu0 0
  %6075 = vmatprep.subr.bf16.mxu0 0
  %6076 = vmatpush1.bf16.xpose.msra.mxu0 0
  %6077 = vmatprep.subr.bf16.mxu0 0
  %6078 = vmatpush1.bf16.xpose.msra.mxu0 0
  %6079 = vmatprep.subr.bf16.mxu0 0
  %6080 = vmatpush1.bf16.xpose.msra.mxu0 0
  %6081 = vmatprep.subr.bf16.mxu0 0
  %6082 = vmatpush1.bf16.xpose.msra.mxu0 0
  %6083 = vmatprep.subr.bf16.mxu0 0
  %6084 = vmatpush1.bf16.xpose.msra.mxu0 0
  %6085 = vmatprep.subr.bf16.mxu0 0
  %6086 = vmatpush1.bf16.xpose.msra.mxu0 0
  %6087 = vmatprep.subr.bf16.mxu0 0
  %6088 = vmatpush1.bf16.xpose.msra.mxu0 0
  %6089 = vmatprep.subr.bf16.mxu0 0
  %6090 = vmatpush1.bf16.xpose.msra.mxu0 0
  %6091 = vmatprep.subr.bf16.mxu0 0
  %6092 = vmatpush1.bf16.xpose.msra.mxu0 0
  %6093 = vmatprep.subr.bf16.mxu0 0
  %6094 = vmatpush1.bf16.xpose.msra.mxu0 0
  %6095 = vmatprep.mubr.bf16.mxu0 0
  %6096 = vmatmul.mubr.bf16.gmra.mrb[0].mxu0 %v6058
  %v6097 = vpop.f32.mrb[0].mxu0
  %v6098 = vadd.f32 0.0, %v6097
  %v6099 = vpop.f32.mrb[0].mxu0
  %v6100 = vpop.f32.mrb[0].mxu0
  %v6101 = vpop.f32.mrb[0].mxu0
  %6102 = vdwg.mxu0
  %v6103 = vsel %vm87, %v6048, -1e+09
  %v6104 = vsel %vm88, %v6098, -1e+09
  %v6105 = vsel %vm163, %v6103, -inf
  %6106 = vmax.xlane.f32.xlu0 %v6105
  %v6107 = vpop.xlane.xlu0 %6106
  %v6108 = vsel %vm163, %v6104, -inf
  %6109 = vmax.xlane.f32.xlu0 %v6108
  %v6110 = vpop.xlane.xlu0 %6109
  %v6111 = vsub.f32 %v6103, %v6107
  %v6112 = vsub.f32 %v6104, %v6110
  %v6113 = vmul.f32 %v6111, 1.442695
  %v6114 = vpow.pop %v6113
  %v6115 = vmul.f32 %v6112, 1.442695
  %v6116 = vpow.pop %v6115
  %v6117 = vsel %vm163, %v6114, 0.0
  %6118 = vadd.xlane.f32.xlu0 %v6117
  %v6119 = vpop.xlane.xlu0 %6118
  %v6120 = vsel %vm163, %v6116, 0.0
  %6121 = vadd.xlane.f32.xlu0 %v6120
  %v6122 = vpop.xlane.xlu0 %6121
  %v6123 = vrcp.pop %v6119
  %v6124 = vrcp.pop %v6122
  %v6125 = vmul.f32 %v6114, %v6123
  %v6126 = vmul.f32 %v6116, %v6124
  %v6127 = vpack.c.bf16 %v6125, %v6125
  %v6128 = vpack.c.bf16 %v6126, %v6126
  %6129 = vrot.lane.b32.xlu0 %v5337, 40
  %v6130 = vpop.permute.xlu0 %6129
  %v6132 = vsel %vm163, %v6127, 0
  %v6135 = vsel %vm290, %v6130, 0
  %6137 = vmatprep.subr.bf16.mxu0 0
  %6138 = vmatpush1.bf16.msra.mxu0 %v6135
  %6139 = vmatprep.subr.bf16.mxu0 0
  %6140 = vmatpush1.bf16.msra.mxu0 0
  %6141 = vmatprep.subr.bf16.mxu0 0
  %6142 = vmatpush1.bf16.msra.mxu0 0
  %6143 = vmatprep.subr.bf16.mxu0 0
  %6144 = vmatpush1.bf16.msra.mxu0 0
  %6145 = vmatprep.subr.bf16.mxu0 0
  %6146 = vmatpush1.bf16.msra.mxu0 0
  %6147 = vmatprep.subr.bf16.mxu0 0
  %6148 = vmatpush1.bf16.msra.mxu0 0
  %6149 = vmatprep.subr.bf16.mxu0 0
  %6150 = vmatpush1.bf16.msra.mxu0 0
  %6151 = vmatprep.subr.bf16.mxu0 0
  %6152 = vmatpush1.bf16.msra.mxu0 0
  %6153 = vmatprep.subr.bf16.mxu0 0
  %6154 = vmatpush1.bf16.msra.mxu0 0
  %6155 = vmatprep.subr.bf16.mxu0 0
  %6156 = vmatpush1.bf16.msra.mxu0 0
  %6157 = vmatprep.subr.bf16.mxu0 0
  %6158 = vmatpush1.bf16.msra.mxu0 0
  %6159 = vmatprep.subr.bf16.mxu0 0
  %6160 = vmatpush1.bf16.msra.mxu0 0
  %6161 = vmatprep.subr.bf16.mxu0 0
  %6162 = vmatpush1.bf16.msra.mxu0 0
  %6163 = vmatprep.subr.bf16.mxu0 0
  %6164 = vmatpush1.bf16.msra.mxu0 0
  %6165 = vmatprep.subr.bf16.mxu0 0
  %6166 = vmatpush1.bf16.msra.mxu0 0
  %6167 = vmatprep.subr.bf16.mxu0 0
  %6168 = vmatpush1.bf16.msra.mxu0 0
  %6169 = vmatprep.mubr.bf16.mxu0 0
  %6170 = vmatmul.mubr.bf16.gmra.mrb[0].mxu0 %v6132
  %v6171 = vpop.f32.mrb[0].mxu0
  %v6172 = vadd.f32 0.0, %v6171
  %v6173 = vpop.f32.mrb[0].mxu0
  %v6174 = vpop.f32.mrb[0].mxu0
  %v6175 = vpop.f32.mrb[0].mxu0
  %6176 = vdwg.mxu0
  %6177 = vrot.lane.b32.xlu0 %v5338, 40
  %v6178 = vpop.permute.xlu0 %6177
  %v6180 = vsel %vm163, %v6128, 0
  %v6183 = vsel %vm290, %v6178, 0
  %6185 = vmatprep.subr.bf16.mxu0 0
  %6186 = vmatpush1.bf16.msra.mxu0 %v6183
  %6187 = vmatprep.subr.bf16.mxu0 0
  %6188 = vmatpush1.bf16.msra.mxu0 0
  %6189 = vmatprep.subr.bf16.mxu0 0
  %6190 = vmatpush1.bf16.msra.mxu0 0
  %6191 = vmatprep.subr.bf16.mxu0 0
  %6192 = vmatpush1.bf16.msra.mxu0 0
  %6193 = vmatprep.subr.bf16.mxu0 0
  %6194 = vmatpush1.bf16.msra.mxu0 0
  %6195 = vmatprep.subr.bf16.mxu0 0
  %6196 = vmatpush1.bf16.msra.mxu0 0
  %6197 = vmatprep.subr.bf16.mxu0 0
  %6198 = vmatpush1.bf16.msra.mxu0 0
  %6199 = vmatprep.subr.bf16.mxu0 0
  %6200 = vmatpush1.bf16.msra.mxu0 0
  %6201 = vmatprep.subr.bf16.mxu0 0
  %6202 = vmatpush1.bf16.msra.mxu0 0
  %6203 = vmatprep.subr.bf16.mxu0 0
  %6204 = vmatpush1.bf16.msra.mxu0 0
  %6205 = vmatprep.subr.bf16.mxu0 0
  %6206 = vmatpush1.bf16.msra.mxu0 0
  %6207 = vmatprep.subr.bf16.mxu0 0
  %6208 = vmatpush1.bf16.msra.mxu0 0
  %6209 = vmatprep.subr.bf16.mxu0 0
  %6210 = vmatpush1.bf16.msra.mxu0 0
  %6211 = vmatprep.subr.bf16.mxu0 0
  %6212 = vmatpush1.bf16.msra.mxu0 0
  %6213 = vmatprep.subr.bf16.mxu0 0
  %6214 = vmatpush1.bf16.msra.mxu0 0
  %6215 = vmatprep.subr.bf16.mxu0 0
  %6216 = vmatpush1.bf16.msra.mxu0 0
  %6217 = vmatprep.mubr.bf16.mxu0 0
  %6218 = vmatmul.mubr.bf16.gmra.mrb[0].mxu0 %v6180
  %v6219 = vpop.f32.mrb[0].mxu0
  %v6220 = vadd.f32 0.0, %v6219
  %v6221 = vpop.f32.mrb[0].mxu0
  %v6222 = vpop.f32.mrb[0].mxu0
  %v6223 = vpop.f32.mrb[0].mxu0
  %6224 = vdwg.mxu0
  %6227 = vrot.lane.b32.xlu0 %v5728, 8
  %v6228 = vpop.permute.xlu0 %6227
  %6229 = vrot.lane.b32.xlu0 %v5776, 8
  %v6230 = vpop.permute.xlu0 %6229
  %6235 = vrot.lane.b32.xlu0 %v5950, 16
  %v6236 = vpop.permute.xlu0 %6235
  %6237 = vrot.lane.b32.xlu0 %v5998, 16
  %v6238 = vpop.permute.xlu0 %6237
  %6243 = vrot.lane.b32.xlu0 %v6172, 24
  %v6244 = vpop.permute.xlu0 %6243
  %6245 = vrot.lane.b32.xlu0 %v6220, 24
  %v6246 = vpop.permute.xlu0 %6245
  %v6249 = vsel %vm163, %v5506, %v6228
  %v6250 = vsel %vm163, %v5554, %v6230
  %v6251 = vsel %vm1074, %v6249, %v6236
  %v6252 = vsel %vm1074, %v6250, %v6238
  %v6253 = vsel %vm1077, %v6251, %v6244
  %v6254 = vsel %vm1077, %v6252, %v6246
  %s6255 = scalar_lea.vmem %s3, 80
  %v6256 = vld [vmem:[%s6255] sm:$0xf]
  %v6257 = vld [vmem:[%s6255 + $0x4] sm:$0xf]
  %v6258 = vld [vmem:[%s6255 + $0x8] sm:$0xf]
  %v6259 = vld [vmem:[%s6255 + $0xc] sm:$0xf]
  %s6260 = scalar_lea.vmem %s9, 22
  %v6261 = vld [vmem:[%s6260] sm:$0x1]
  %v6262 = vpack.c.bf16 %v6254, %v6253
  %v6264 = vlaneseq
  %v6265 = vshrl.u32 %v6264, 7
  %v6266 = vsub.s32 0, %v6265
  %v6267 = vrot.slane %v6261, %v6266
  %v6273 = vunpack.c.l.b16 %v6256
  %v6274 = vunpack.c.l.b16 %v6257
  %v6275 = vunpack.c.l.b16 %v6258
  %v6276 = vunpack.c.l.b16 %v6259
  %v6277 = vpack.c.b16 %v6274, %v6273
  %v6278 = vpack.c.b16 %v6276, %v6275
  %v6282 = vsel %vm113, %v6262, 0
  %6284 = vmatprep.subr.bf16.mxu0 0
  %6285 = vmatpush1.bf16.msra.mxu0 %v6277
  %6286 = vmatprep.subr.bf16.mxu0 0
  %6287 = vmatpush1.bf16.msra.mxu0 %v6278
  %6288 = vmatprep.subr.bf16.mxu0 0
  %6289 = vmatpush1.bf16.msra.mxu0 0
  %6290 = vmatprep.subr.bf16.mxu0 0
  %6291 = vmatpush1.bf16.msra.mxu0 0
  %6292 = vmatprep.subr.bf16.mxu0 0
  %6293 = vmatpush1.bf16.msra.mxu0 0
  %6294 = vmatprep.subr.bf16.mxu0 0
  %6295 = vmatpush1.bf16.msra.mxu0 0
  %6296 = vmatprep.subr.bf16.mxu0 0
  %6297 = vmatpush1.bf16.msra.mxu0 0
  %6298 = vmatprep.subr.bf16.mxu0 0
  %6299 = vmatpush1.bf16.msra.mxu0 0
  %6300 = vmatprep.subr.bf16.mxu0 0
  %6301 = vmatpush1.bf16.msra.mxu0 0
  %6302 = vmatprep.subr.bf16.mxu0 0
  %6303 = vmatpush1.bf16.msra.mxu0 0
  %6304 = vmatprep.subr.bf16.mxu0 0
  %6305 = vmatpush1.bf16.msra.mxu0 0
  %6306 = vmatprep.subr.bf16.mxu0 0
  %6307 = vmatpush1.bf16.msra.mxu0 0
  %6308 = vmatprep.subr.bf16.mxu0 0
  %6309 = vmatpush1.bf16.msra.mxu0 0
  %6310 = vmatprep.subr.bf16.mxu0 0
  %6311 = vmatpush1.bf16.msra.mxu0 0
  %6312 = vmatprep.subr.bf16.mxu0 0
  %6313 = vmatpush1.bf16.msra.mxu0 0
  %6314 = vmatprep.subr.bf16.mxu0 0
  %6315 = vmatpush1.bf16.msra.mxu0 0
  %6316 = vmatprep.mubr.bf16.mxu0 0
  %6317 = vmatmul.mubr.bf16.gmra.mrb[0].mxu0 %v6282
  %v6318 = vpop.f32.mrb[0].mxu0
  %v6319 = vadd.f32 %v6267, %v6318
  %v6320 = vpop.f32.mrb[0].mxu0
  %v6321 = vpop.f32.mrb[0].mxu0
  %v6322 = vadd.f32 %v6267, %v6321
  %v6323 = vpop.f32.mrb[0].mxu0
  %6324 = vdwg.mxu0
  %v6325 = vadd.f32 %v5265, %v6319
  %v6326 = vadd.f32 %v5266, %v6322
  %s6327 = scalar_lea.vmem %s9, 26
  %v6328 = vld [vmem:[%s6327] sm:$0x1]
  %s6329 = scalar_lea.vmem %s9, 27
  %v6330 = vld [vmem:[%s6329] sm:$0x1]
  %v6331 = vsel %vm113, %v6325, 0.0
  %6332 = vadd.xlane.f32.xlu0 %v6331
  %v6333 = vpop.xlane.xlu0 %6332
  %v6334 = vsel %vm113, %v6326, 0.0
  %6335 = vadd.xlane.f32.xlu0 %v6334
  %v6336 = vpop.xlane.xlu0 %6335
  %v6337 = vmul.f32 %v6333, %v1160
  %v6338 = vmul.f32 %v6336, %v1160
  %v6339 = vsub.f32 %v6325, %v6337
  %v6340 = vsub.f32 %v6326, %v6338
  %v6341 = vmul.f32 %v6339, %v6339
  %v6342 = vmul.f32 %v6340, %v6340
  %v6343 = vsel %vm113, %v6341, 0.0
  %6344 = vadd.xlane.f32.xlu0 %v6343
  %v6345 = vpop.xlane.xlu0 %6344
  %v6346 = vsel %vm113, %v6342, 0.0
  %6347 = vadd.xlane.f32.xlu0 %v6346
  %v6348 = vpop.xlane.xlu0 %6347
  %v6349 = vmul.f32 %v6345, %v1160
  %v6350 = vmul.f32 %v6348, %v1160
  %v6351 = vadd.f32 %v6349, 1e-05
  %v6352 = vadd.f32 %v6350, 1e-05
  %v6353 = vrsqrt.pop %v6351
  %v6354 = vrsqrt.pop %v6352
  %v6355 = vmul.f32 %v6339, %v6353
  %v6356 = vmul.f32 %v6340, %v6354
  %v6358 = vlaneseq
  %v6359 = vshrl.u32 %v6358, 7
  %v6360 = vsub.s32 0, %v6359
  %v6361 = vrot.slane %v6328, %v6360
  %v6363 = vmul.f32 %v6355, %v6361
  %v6364 = vmul.f32 %v6356, %v6361
  %v6366 = vlaneseq
  %v6367 = vshrl.u32 %v6366, 7
  %v6368 = vsub.s32 0, %v6367
  %v6369 = vrot.slane %v6330, %v6368
  %v6371 = vadd.f32 %v6363, %v6369
  %v6372 = vadd.f32 %v6364, %v6369
  %s6373 = scalar_lea.vmem %s3, 96
  %v6374 = vld [vmem:[%s6373] sm:$0xf]
  %v6375 = vld [vmem:[%s6373 + $0x4] sm:$0xf]
  %v6376 = vld [vmem:[%s6373 + $0x8] sm:$0xf]
  %v6377 = vld [vmem:[%s6373 + $0xc] sm:$0xf]
  %s6378 = scalar_lea.vmem %s9, 23
  %v6379 = vld [vmem:[%s6378] sm:$0x1]
  %v6380 = vpack.c.bf16 %v6372, %v6371
  %v6382 = vlaneseq
  %v6383 = vshrl.u32 %v6382, 7
  %v6384 = vsub.s32 0, %v6383
  %v6385 = vrot.slane %v6379, %v6384
  %v6391 = vunpack.c.l.b16 %v6374
  %v6392 = vunpack.c.l.b16 %v6375
  %v6393 = vunpack.c.l.b16 %v6376
  %v6394 = vunpack.c.l.b16 %v6377
  %v6395 = vpack.c.b16 %v6392, %v6391
  %v6396 = vpack.c.b16 %v6394, %v6393
  %v6400 = vsel %vm113, %v6380, 0
  %6402 = vmatprep.subr.bf16.mxu0 0
  %6403 = vmatpush1.bf16.msra.mxu0 %v6395
  %6404 = vmatprep.subr.bf16.mxu0 0
  %6405 = vmatpush1.bf16.msra.mxu0 %v6396
  %6406 = vmatprep.subr.bf16.mxu0 0
  %6407 = vmatpush1.bf16.msra.mxu0 0
  %6408 = vmatprep.subr.bf16.mxu0 0
  %6409 = vmatpush1.bf16.msra.mxu0 0
  %6410 = vmatprep.subr.bf16.mxu0 0
  %6411 = vmatpush1.bf16.msra.mxu0 0
  %6412 = vmatprep.subr.bf16.mxu0 0
  %6413 = vmatpush1.bf16.msra.mxu0 0
  %6414 = vmatprep.subr.bf16.mxu0 0
  %6415 = vmatpush1.bf16.msra.mxu0 0
  %6416 = vmatprep.subr.bf16.mxu0 0
  %6417 = vmatpush1.bf16.msra.mxu0 0
  %6418 = vmatprep.subr.bf16.mxu0 0
  %6419 = vmatpush1.bf16.msra.mxu0 0
  %6420 = vmatprep.subr.bf16.mxu0 0
  %6421 = vmatpush1.bf16.msra.mxu0 0
  %6422 = vmatprep.subr.bf16.mxu0 0
  %6423 = vmatpush1.bf16.msra.mxu0 0
  %6424 = vmatprep.subr.bf16.mxu0 0
  %6425 = vmatpush1.bf16.msra.mxu0 0
  %6426 = vmatprep.subr.bf16.mxu0 0
  %6427 = vmatpush1.bf16.msra.mxu0 0
  %6428 = vmatprep.subr.bf16.mxu0 0
  %6429 = vmatpush1.bf16.msra.mxu0 0
  %6430 = vmatprep.subr.bf16.mxu0 0
  %6431 = vmatpush1.bf16.msra.mxu0 0
  %6432 = vmatprep.subr.bf16.mxu0 0
  %6433 = vmatpush1.bf16.msra.mxu0 0
  %6434 = vmatprep.mubr.bf16.mxu0 0
  %6435 = vmatmul.mubr.bf16.gmra.mrb[0].mxu0 %v6400
  %v6436 = vpop.f32.mrb[0].mxu0
  %v6437 = vadd.f32 %v6385, %v6436
  %v6438 = vpop.f32.mrb[0].mxu0
  %v6439 = vpop.f32.mrb[0].mxu0
  %v6440 = vadd.f32 %v6385, %v6439
  %v6441 = vpop.f32.mrb[0].mxu0
  %6442 = vdwg.mxu0
  %s6443 = scalar_lea.vmem %s4, 80
  %v6444 = vld [vmem:[%s6443] sm:$0xf]
  %v6445 = vld [vmem:[%s6443 + $0x4] sm:$0xf]
  %v6446 = vld [vmem:[%s6443 + $0x8] sm:$0xf]
  %v6447 = vld [vmem:[%s6443 + $0xc] sm:$0xf]
  %s6448 = scalar_lea.vmem %s8, 5
  %v6449 = vld [vmem:[%s6448] sm:$0x1]
  %v6451 = vlaneseq
  %v6452 = vshrl.u32 %v6451, 7
  %v6453 = vsub.s32 0, %v6452
  %v6454 = vrot.slane %v6449, %v6453
  %v6460 = vunpack.c.l.b16 %v6444
  %v6461 = vunpack.c.l.b16 %v6445
  %v6462 = vunpack.c.l.b16 %v6446
  %v6463 = vunpack.c.l.b16 %v6447
  %v6464 = vpack.c.b16 %v6461, %v6460
  %v6465 = vpack.c.b16 %v6463, %v6462
  %6468 = vmatprep.subr.bf16.mxu0 0
  %6469 = vmatpush1.bf16.msra.mxu0 %v6464
  %6470 = vmatprep.subr.bf16.mxu0 0
  %6471 = vmatpush1.bf16.msra.mxu0 %v6465
  %6472 = vmatprep.subr.bf16.mxu0 0
  %6473 = vmatpush1.bf16.msra.mxu0 0
  %6474 = vmatprep.subr.bf16.mxu0 0
  %6475 = vmatpush1.bf16.msra.mxu0 0
  %6476 = vmatprep.subr.bf16.mxu0 0
  %6477 = vmatpush1.bf16.msra.mxu0 0
  %6478 = vmatprep.subr.bf16.mxu0 0
  %6479 = vmatpush1.bf16.msra.mxu0 0
  %6480 = vmatprep.subr.bf16.mxu0 0
  %6481 = vmatpush1.bf16.msra.mxu0 0
  %6482 = vmatprep.subr.bf16.mxu0 0
  %6483 = vmatpush1.bf16.msra.mxu0 0
  %6484 = vmatprep.subr.bf16.mxu0 0
  %6485 = vmatpush1.bf16.msra.mxu0 0
  %6486 = vmatprep.subr.bf16.mxu0 0
  %6487 = vmatpush1.bf16.msra.mxu0 0
  %6488 = vmatprep.subr.bf16.mxu0 0
  %6489 = vmatpush1.bf16.msra.mxu0 0
  %6490 = vmatprep.subr.bf16.mxu0 0
  %6491 = vmatpush1.bf16.msra.mxu0 0
  %6492 = vmatprep.subr.bf16.mxu0 0
  %6493 = vmatpush1.bf16.msra.mxu0 0
  %6494 = vmatprep.subr.bf16.mxu0 0
  %6495 = vmatpush1.bf16.msra.mxu0 0
  %6496 = vmatprep.subr.bf16.mxu0 0
  %6497 = vmatpush1.bf16.msra.mxu0 0
  %6498 = vmatprep.subr.bf16.mxu0 0
  %6499 = vmatpush1.bf16.msra.mxu0 0
  %6500 = vmatprep.mubr.bf16.mxu0 0
  %6501 = vmatmul.mubr.bf16.gmra.mrb[0].mxu0 %v3974
  %v6502 = vpop.f32.mrb[0].mxu0
  %v6503 = vadd.f32 %v6454, %v6502
  %v6504 = vpop.f32.mrb[0].mxu0
  %v6505 = vpop.f32.mrb[0].mxu0
  %v6506 = vadd.f32 %v6454, %v6505
  %v6507 = vpop.f32.mrb[0].mxu0
  %6508 = vdwg.mxu0
  %v6509 = vpack.c.bf16 %v6437, %v6437
  %v6510 = vpack.c.bf16 %v6440, %v6440
  %v6511 = vpack.c.bf16 %v6503, %v6503
  %v6512 = vpack.c.bf16 %v6506, %v6506
  %v6514 = vsel %vm163, %v6509, 0
  %v6517 = vsel %vm163, %v6511, 0
  %6519 = vmatprep.subr.bf16.mxu0 0
  %6520 = vmatpush1.bf16.xpose.msra.mxu0 %v6517
  %6521 = vmatprep.subr.bf16.mxu0 0
  %6522 = vmatpush1.bf16.xpose.msra.mxu0 0
  %6523 = vmatprep.subr.bf16.mxu0 0
  %6524 = vmatpush1.bf16.xpose.msra.mxu0 0
  %6525 = vmatprep.subr.bf16.mxu0 0
  %6526 = vmatpush1.bf16.xpose.msra.mxu0 0
  %6527 = vmatprep.subr.bf16.mxu0 0
  %6528 = vmatpush1.bf16.xpose.msra.mxu0 0
  %6529 = vmatprep.subr.bf16.mxu0 0
  %6530 = vmatpush1.bf16.xpose.msra.mxu0 0
  %6531 = vmatprep.subr.bf16.mxu0 0
  %6532 = vmatpush1.bf16.xpose.msra.mxu0 0
  %6533 = vmatprep.subr.bf16.mxu0 0
  %6534 = vmatpush1.bf16.xpose.msra.mxu0 0
  %6535 = vmatprep.subr.bf16.mxu0 0
  %6536 = vmatpush1.bf16.xpose.msra.mxu0 0
  %6537 = vmatprep.subr.bf16.mxu0 0
  %6538 = vmatpush1.bf16.xpose.msra.mxu0 0
  %6539 = vmatprep.subr.bf16.mxu0 0
  %6540 = vmatpush1.bf16.xpose.msra.mxu0 0
  %6541 = vmatprep.subr.bf16.mxu0 0
  %6542 = vmatpush1.bf16.xpose.msra.mxu0 0
  %6543 = vmatprep.subr.bf16.mxu0 0
  %6544 = vmatpush1.bf16.xpose.msra.mxu0 0
  %6545 = vmatprep.subr.bf16.mxu0 0
  %6546 = vmatpush1.bf16.xpose.msra.mxu0 0
  %6547 = vmatprep.subr.bf16.mxu0 0
  %6548 = vmatpush1.bf16.xpose.msra.mxu0 0
  %6549 = vmatprep.subr.bf16.mxu0 0
  %6550 = vmatpush1.bf16.xpose.msra.mxu0 0
  %6551 = vmatprep.mubr.bf16.mxu0 0
  %6552 = vmatmul.mubr.bf16.gmra.mrb[0].mxu0 %v6514
  %v6553 = vpop.f32.mrb[0].mxu0
  %v6554 = vadd.f32 0.0, %v6553
  %v6555 = vpop.f32.mrb[0].mxu0
  %v6556 = vpop.f32.mrb[0].mxu0
  %v6557 = vpop.f32.mrb[0].mxu0
  %6558 = vdwg.mxu0
  %v6560 = vsel %vm163, %v6510, 0
  %v6563 = vsel %vm163, %v6512, 0
  %6565 = vmatprep.subr.bf16.mxu0 0
  %6566 = vmatpush1.bf16.xpose.msra.mxu0 %v6563
  %6567 = vmatprep.subr.bf16.mxu0 0
  %6568 = vmatpush1.bf16.xpose.msra.mxu0 0
  %6569 = vmatprep.subr.bf16.mxu0 0
  %6570 = vmatpush1.bf16.xpose.msra.mxu0 0
  %6571 = vmatprep.subr.bf16.mxu0 0
  %6572 = vmatpush1.bf16.xpose.msra.mxu0 0
  %6573 = vmatprep.subr.bf16.mxu0 0
  %6574 = vmatpush1.bf16.xpose.msra.mxu0 0
  %6575 = vmatprep.subr.bf16.mxu0 0
  %6576 = vmatpush1.bf16.xpose.msra.mxu0 0
  %6577 = vmatprep.subr.bf16.mxu0 0
  %6578 = vmatpush1.bf16.xpose.msra.mxu0 0
  %6579 = vmatprep.subr.bf16.mxu0 0
  %6580 = vmatpush1.bf16.xpose.msra.mxu0 0
  %6581 = vmatprep.subr.bf16.mxu0 0
  %6582 = vmatpush1.bf16.xpose.msra.mxu0 0
  %6583 = vmatprep.subr.bf16.mxu0 0
  %6584 = vmatpush1.bf16.xpose.msra.mxu0 0
  %6585 = vmatprep.subr.bf16.mxu0 0
  %6586 = vmatpush1.bf16.xpose.msra.mxu0 0
  %6587 = vmatprep.subr.bf16.mxu0 0
  %6588 = vmatpush1.bf16.xpose.msra.mxu0 0
  %6589 = vmatprep.subr.bf16.mxu0 0
  %6590 = vmatpush1.bf16.xpose.msra.mxu0 0
  %6591 = vmatprep.subr.bf16.mxu0 0
  %6592 = vmatpush1.bf16.xpose.msra.mxu0 0
  %6593 = vmatprep.subr.bf16.mxu0 0
  %6594 = vmatpush1.bf16.xpose.msra.mxu0 0
  %6595 = vmatprep.subr.bf16.mxu0 0
  %6596 = vmatpush1.bf16.xpose.msra.mxu0 0
  %6597 = vmatprep.mubr.bf16.mxu0 0
  %6598 = vmatmul.mubr.bf16.gmra.mrb[0].mxu0 %v6560
  %v6599 = vpop.f32.mrb[0].mxu0
  %v6600 = vadd.f32 0.0, %v6599
  %v6601 = vpop.f32.mrb[0].mxu0
  %v6602 = vpop.f32.mrb[0].mxu0
  %v6603 = vpop.f32.mrb[0].mxu0
  %6604 = vdwg.mxu0
  %v6605 = vsel %vm78, %v6554, -1e+09
  %v6606 = vsel %vm79, %v6600, -1e+09
  %v6607 = vsel %vm163, %v6605, -inf
  %6608 = vmax.xlane.f32.xlu0 %v6607
  %v6609 = vpop.xlane.xlu0 %6608
  %v6610 = vsel %vm163, %v6606, -inf
  %6611 = vmax.xlane.f32.xlu0 %v6610
  %v6612 = vpop.xlane.xlu0 %6611
  %v6613 = vsub.f32 %v6605, %v6609
  %v6614 = vsub.f32 %v6606, %v6612
  %v6615 = vmul.f32 %v6613, 1.442695
  %v6616 = vpow.pop %v6615
  %v6617 = vmul.f32 %v6614, 1.442695
  %v6618 = vpow.pop %v6617
  %v6619 = vsel %vm163, %v6616, 0.0
  %6620 = vadd.xlane.f32.xlu0 %v6619
  %v6621 = vpop.xlane.xlu0 %6620
  %v6622 = vsel %vm163, %v6618, 0.0
  %6623 = vadd.xlane.f32.xlu0 %v6622
  %v6624 = vpop.xlane.xlu0 %6623
  %v6625 = vrcp.pop %v6621
  %v6626 = vrcp.pop %v6624
  %v6627 = vmul.f32 %v6616, %v6625
  %v6628 = vmul.f32 %v6618, %v6626
  %v6629 = vpack.c.bf16 %v6627, %v6627
  %v6630 = vpack.c.bf16 %v6628, %v6628
  %6632 = vrot.lane.b32.xlu0 %v6511, 96
  %v6633 = vpop.permute.xlu0 %6632
  %v6635 = vsel %vm163, %v6629, 0
  %v6638 = vsel %vm290, %v6633, 0
  %6640 = vmatprep.subr.bf16.mxu0 0
  %6641 = vmatpush1.bf16.msra.mxu0 %v6638
  %6642 = vmatprep.subr.bf16.mxu0 0
  %6643 = vmatpush1.bf16.msra.mxu0 0
  %6644 = vmatprep.subr.bf16.mxu0 0
  %6645 = vmatpush1.bf16.msra.mxu0 0
  %6646 = vmatprep.subr.bf16.mxu0 0
  %6647 = vmatpush1.bf16.msra.mxu0 0
  %6648 = vmatprep.subr.bf16.mxu0 0
  %6649 = vmatpush1.bf16.msra.mxu0 0
  %6650 = vmatprep.subr.bf16.mxu0 0
  %6651 = vmatpush1.bf16.msra.mxu0 0
  %6652 = vmatprep.subr.bf16.mxu0 0
  %6653 = vmatpush1.bf16.msra.mxu0 0
  %6654 = vmatprep.subr.bf16.mxu0 0
  %6655 = vmatpush1.bf16.msra.mxu0 0
  %6656 = vmatprep.subr.bf16.mxu0 0
  %6657 = vmatpush1.bf16.msra.mxu0 0
  %6658 = vmatprep.subr.bf16.mxu0 0
  %6659 = vmatpush1.bf16.msra.mxu0 0
  %6660 = vmatprep.subr.bf16.mxu0 0
  %6661 = vmatpush1.bf16.msra.mxu0 0
  %6662 = vmatprep.subr.bf16.mxu0 0
  %6663 = vmatpush1.bf16.msra.mxu0 0
  %6664 = vmatprep.subr.bf16.mxu0 0
  %6665 = vmatpush1.bf16.msra.mxu0 0
  %6666 = vmatprep.subr.bf16.mxu0 0
  %6667 = vmatpush1.bf16.msra.mxu0 0
  %6668 = vmatprep.subr.bf16.mxu0 0
  %6669 = vmatpush1.bf16.msra.mxu0 0
  %6670 = vmatprep.subr.bf16.mxu0 0
  %6671 = vmatpush1.bf16.msra.mxu0 0
  %6672 = vmatprep.mubr.bf16.mxu0 0
  %6673 = vmatmul.mubr.bf16.gmra.mrb[0].mxu0 %v6635
  %v6674 = vpop.f32.mrb[0].mxu0
  %v6675 = vadd.f32 0.0, %v6674
  %v6676 = vpop.f32.mrb[0].mxu0
  %v6677 = vpop.f32.mrb[0].mxu0
  %v6678 = vpop.f32.mrb[0].mxu0
  %6679 = vdwg.mxu0
  %6681 = vrot.lane.b32.xlu0 %v6512, 96
  %v6682 = vpop.permute.xlu0 %6681
  %v6684 = vsel %vm163, %v6630, 0
  %v6687 = vsel %vm290, %v6682, 0
  %6689 = vmatprep.subr.bf16.mxu0 0
  %6690 = vmatpush1.bf16.msra.mxu0 %v6687
  %6691 = vmatprep.subr.bf16.mxu0 0
  %6692 = vmatpush1.bf16.msra.mxu0 0
  %6693 = vmatprep.subr.bf16.mxu0 0
  %6694 = vmatpush1.bf16.msra.mxu0 0
  %6695 = vmatprep.subr.bf16.mxu0 0
  %6696 = vmatpush1.bf16.msra.mxu0 0
  %6697 = vmatprep.subr.bf16.mxu0 0
  %6698 = vmatpush1.bf16.msra.mxu0 0
  %6699 = vmatprep.subr.bf16.mxu0 0
  %6700 = vmatpush1.bf16.msra.mxu0 0
  %6701 = vmatprep.subr.bf16.mxu0 0
  %6702 = vmatpush1.bf16.msra.mxu0 0
  %6703 = vmatprep.subr.bf16.mxu0 0
  %6704 = vmatpush1.bf16.msra.mxu0 0
  %6705 = vmatprep.subr.bf16.mxu0 0
  %6706 = vmatpush1.bf16.msra.mxu0 0
  %6707 = vmatprep.subr.bf16.mxu0 0
  %6708 = vmatpush1.bf16.msra.mxu0 0
  %6709 = vmatprep.subr.bf16.mxu0 0
  %6710 = vmatpush1.bf16.msra.mxu0 0
  %6711 = vmatprep.subr.bf16.mxu0 0
  %6712 = vmatpush1.bf16.msra.mxu0 0
  %6713 = vmatprep.subr.bf16.mxu0 0
  %6714 = vmatpush1.bf16.msra.mxu0 0
  %6715 = vmatprep.subr.bf16.mxu0 0
  %6716 = vmatpush1.bf16.msra.mxu0 0
  %6717 = vmatprep.subr.bf16.mxu0 0
  %6718 = vmatpush1.bf16.msra.mxu0 0
  %6719 = vmatprep.subr.bf16.mxu0 0
  %6720 = vmatpush1.bf16.msra.mxu0 0
  %6721 = vmatprep.mubr.bf16.mxu0 0
  %6722 = vmatmul.mubr.bf16.gmra.mrb[0].mxu0 %v6684
  %v6723 = vpop.f32.mrb[0].mxu0
  %v6724 = vadd.f32 0.0, %v6723
  %v6725 = vpop.f32.mrb[0].mxu0
  %v6726 = vpop.f32.mrb[0].mxu0
  %v6727 = vpop.f32.mrb[0].mxu0
  %6728 = vdwg.mxu0
  %6730 = vrot.lane.b32.xlu0 %v6509, 120
  %v6731 = vpop.permute.xlu0 %6730
  %6732 = vrot.lane.b32.xlu0 %v6511, 120
  %v6733 = vpop.permute.xlu0 %6732
  %v6735 = vsel %vm163, %v6731, 0
  %v6738 = vsel %vm163, %v6733, 0
  %6740 = vmatprep.subr.bf16.mxu0 0
  %6741 = vmatpush1.bf16.xpose.msra.mxu0 %v6738
  %6742 = vmatprep.subr.bf16.mxu0 0
  %6743 = vmatpush1.bf16.xpose.msra.mxu0 0
  %6744 = vmatprep.subr.bf16.mxu0 0
  %6745 = vmatpush1.bf16.xpose.msra.mxu0 0
  %6746 = vmatprep.subr.bf16.mxu0 0
  %6747 = vmatpush1.bf16.xpose.msra.mxu0 0
  %6748 = vmatprep.subr.bf16.mxu0 0
  %6749 = vmatpush1.bf16.xpose.msra.mxu0 0
  %6750 = vmatprep.subr.bf16.mxu0 0
  %6751 = vmatpush1.bf16.xpose.msra.mxu0 0
  %6752 = vmatprep.subr.bf16.mxu0 0
  %6753 = vmatpush1.bf16.xpose.msra.mxu0 0
  %6754 = vmatprep.subr.bf16.mxu0 0
  %6755 = vmatpush1.bf16.xpose.msra.mxu0 0
  %6756 = vmatprep.subr.bf16.mxu0 0
  %6757 = vmatpush1.bf16.xpose.msra.mxu0 0
  %6758 = vmatprep.subr.bf16.mxu0 0
  %6759 = vmatpush1.bf16.xpose.msra.mxu0 0
  %6760 = vmatprep.subr.bf16.mxu0 0
  %6761 = vmatpush1.bf16.xpose.msra.mxu0 0
  %6762 = vmatprep.subr.bf16.mxu0 0
  %6763 = vmatpush1.bf16.xpose.msra.mxu0 0
  %6764 = vmatprep.subr.bf16.mxu0 0
  %6765 = vmatpush1.bf16.xpose.msra.mxu0 0
  %6766 = vmatprep.subr.bf16.mxu0 0
  %6767 = vmatpush1.bf16.xpose.msra.mxu0 0
  %6768 = vmatprep.subr.bf16.mxu0 0
  %6769 = vmatpush1.bf16.xpose.msra.mxu0 0
  %6770 = vmatprep.subr.bf16.mxu0 0
  %6771 = vmatpush1.bf16.xpose.msra.mxu0 0
  %6772 = vmatprep.mubr.bf16.mxu0 0
  %6773 = vmatmul.mubr.bf16.gmra.mrb[0].mxu0 %v6735
  %v6774 = vpop.f32.mrb[0].mxu0
  %v6775 = vadd.f32 0.0, %v6774
  %v6776 = vpop.f32.mrb[0].mxu0
  %v6777 = vpop.f32.mrb[0].mxu0
  %v6778 = vpop.f32.mrb[0].mxu0
  %6779 = vdwg.mxu0
  %6781 = vrot.lane.b32.xlu0 %v6510, 120
  %v6782 = vpop.permute.xlu0 %6781
  %6783 = vrot.lane.b32.xlu0 %v6512, 120
  %v6784 = vpop.permute.xlu0 %6783
  %v6786 = vsel %vm163, %v6782, 0
  %v6789 = vsel %vm163, %v6784, 0
  %6791 = vmatprep.subr.bf16.mxu0 0
  %6792 = vmatpush1.bf16.xpose.msra.mxu0 %v6789
  %6793 = vmatprep.subr.bf16.mxu0 0
  %6794 = vmatpush1.bf16.xpose.msra.mxu0 0
  %6795 = vmatprep.subr.bf16.mxu0 0
  %6796 = vmatpush1.bf16.xpose.msra.mxu0 0
  %6797 = vmatprep.subr.bf16.mxu0 0
  %6798 = vmatpush1.bf16.xpose.msra.mxu0 0
  %6799 = vmatprep.subr.bf16.mxu0 0
  %6800 = vmatpush1.bf16.xpose.msra.mxu0 0
  %6801 = vmatprep.subr.bf16.mxu0 0
  %6802 = vmatpush1.bf16.xpose.msra.mxu0 0
  %6803 = vmatprep.subr.bf16.mxu0 0
  %6804 = vmatpush1.bf16.xpose.msra.mxu0 0
  %6805 = vmatprep.subr.bf16.mxu0 0
  %6806 = vmatpush1.bf16.xpose.msra.mxu0 0
  %6807 = vmatprep.subr.bf16.mxu0 0
  %6808 = vmatpush1.bf16.xpose.msra.mxu0 0
  %6809 = vmatprep.subr.bf16.mxu0 0
  %6810 = vmatpush1.bf16.xpose.msra.mxu0 0
  %6811 = vmatprep.subr.bf16.mxu0 0
  %6812 = vmatpush1.bf16.xpose.msra.mxu0 0
  %6813 = vmatprep.subr.bf16.mxu0 0
  %6814 = vmatpush1.bf16.xpose.msra.mxu0 0
  %6815 = vmatprep.subr.bf16.mxu0 0
  %6816 = vmatpush1.bf16.xpose.msra.mxu0 0
  %6817 = vmatprep.subr.bf16.mxu0 0
  %6818 = vmatpush1.bf16.xpose.msra.mxu0 0
  %6819 = vmatprep.subr.bf16.mxu0 0
  %6820 = vmatpush1.bf16.xpose.msra.mxu0 0
  %6821 = vmatprep.subr.bf16.mxu0 0
  %6822 = vmatpush1.bf16.xpose.msra.mxu0 0
  %6823 = vmatprep.mubr.bf16.mxu0 0
  %6824 = vmatmul.mubr.bf16.gmra.mrb[0].mxu0 %v6786
  %v6825 = vpop.f32.mrb[0].mxu0
  %v6826 = vadd.f32 0.0, %v6825
  %v6827 = vpop.f32.mrb[0].mxu0
  %v6828 = vpop.f32.mrb[0].mxu0
  %v6829 = vpop.f32.mrb[0].mxu0
  %6830 = vdwg.mxu0
  %v6831 = vsel %vm78, %v6775, -1e+09
  %v6832 = vsel %vm79, %v6826, -1e+09
  %v6833 = vsel %vm163, %v6831, -inf
  %6834 = vmax.xlane.f32.xlu0 %v6833
  %v6835 = vpop.xlane.xlu0 %6834
  %v6836 = vsel %vm163, %v6832, -inf
  %6837 = vmax.xlane.f32.xlu0 %v6836
  %v6838 = vpop.xlane.xlu0 %6837
  %v6839 = vsub.f32 %v6831, %v6835
  %v6840 = vsub.f32 %v6832, %v6838
  %v6841 = vmul.f32 %v6839, 1.442695
  %v6842 = vpow.pop %v6841
  %v6843 = vmul.f32 %v6840, 1.442695
  %v6844 = vpow.pop %v6843
  %v6845 = vsel %vm163, %v6842, 0.0
  %6846 = vadd.xlane.f32.xlu0 %v6845
  %v6847 = vpop.xlane.xlu0 %6846
  %v6848 = vsel %vm163, %v6844, 0.0
  %6849 = vadd.xlane.f32.xlu0 %v6848
  %v6850 = vpop.xlane.xlu0 %6849
  %v6851 = vrcp.pop %v6847
  %v6852 = vrcp.pop %v6850
  %v6853 = vmul.f32 %v6842, %v6851
  %v6854 = vmul.f32 %v6844, %v6852
  %v6855 = vpack.c.bf16 %v6853, %v6853
  %v6856 = vpack.c.bf16 %v6854, %v6854
  %6857 = vrot.lane.b32.xlu0 %v6511, 88
  %v6858 = vpop.permute.xlu0 %6857
  %v6860 = vsel %vm163, %v6855, 0
  %v6863 = vsel %vm290, %v6858, 0
  %6865 = vmatprep.subr.bf16.mxu0 0
  %6866 = vmatpush1.bf16.msra.mxu0 %v6863
  %6867 = vmatprep.subr.bf16.mxu0 0
  %6868 = vmatpush1.bf16.msra.mxu0 0
  %6869 = vmatprep.subr.bf16.mxu0 0
  %6870 = vmatpush1.bf16.msra.mxu0 0
  %6871 = vmatprep.subr.bf16.mxu0 0
  %6872 = vmatpush1.bf16.msra.mxu0 0
  %6873 = vmatprep.subr.bf16.mxu0 0
  %6874 = vmatpush1.bf16.msra.mxu0 0
  %6875 = vmatprep.subr.bf16.mxu0 0
  %6876 = vmatpush1.bf16.msra.mxu0 0
  %6877 = vmatprep.subr.bf16.mxu0 0
  %6878 = vmatpush1.bf16.msra.mxu0 0
  %6879 = vmatprep.subr.bf16.mxu0 0
  %6880 = vmatpush1.bf16.msra.mxu0 0
  %6881 = vmatprep.subr.bf16.mxu0 0
  %6882 = vmatpush1.bf16.msra.mxu0 0
  %6883 = vmatprep.subr.bf16.mxu0 0
  %6884 = vmatpush1.bf16.msra.mxu0 0
  %6885 = vmatprep.subr.bf16.mxu0 0
  %6886 = vmatpush1.bf16.msra.mxu0 0
  %6887 = vmatprep.subr.bf16.mxu0 0
  %6888 = vmatpush1.bf16.msra.mxu0 0
  %6889 = vmatprep.subr.bf16.mxu0 0
  %6890 = vmatpush1.bf16.msra.mxu0 0
  %6891 = vmatprep.subr.bf16.mxu0 0
  %6892 = vmatpush1.bf16.msra.mxu0 0
  %6893 = vmatprep.subr.bf16.mxu0 0
  %6894 = vmatpush1.bf16.msra.mxu0 0
  %6895 = vmatprep.subr.bf16.mxu0 0
  %6896 = vmatpush1.bf16.msra.mxu0 0
  %6897 = vmatprep.mubr.bf16.mxu0 0
  %6898 = vmatmul.mubr.bf16.gmra.mrb[0].mxu0 %v6860
  %v6899 = vpop.f32.mrb[0].mxu0
  %v6900 = vadd.f32 0.0, %v6899
  %v6901 = vpop.f32.mrb[0].mxu0
  %v6902 = vpop.f32.mrb[0].mxu0
  %v6903 = vpop.f32.mrb[0].mxu0
  %6904 = vdwg.mxu0
  %6905 = vrot.lane.b32.xlu0 %v6512, 88
  %v6906 = vpop.permute.xlu0 %6905
  %v6908 = vsel %vm163, %v6856, 0
  %v6911 = vsel %vm290, %v6906, 0
  %6913 = vmatprep.subr.bf16.mxu0 0
  %6914 = vmatpush1.bf16.msra.mxu0 %v6911
  %6915 = vmatprep.subr.bf16.mxu0 0
  %6916 = vmatpush1.bf16.msra.mxu0 0
  %6917 = vmatprep.subr.bf16.mxu0 0
  %6918 = vmatpush1.bf16.msra.mxu0 0
  %6919 = vmatprep.subr.bf16.mxu0 0
  %6920 = vmatpush1.bf16.msra.mxu0 0
  %6921 = vmatprep.subr.bf16.mxu0 0
  %6922 = vmatpush1.bf16.msra.mxu0 0
  %6923 = vmatprep.subr.bf16.mxu0 0
  %6924 = vmatpush1.bf16.msra.mxu0 0
  %6925 = vmatprep.subr.bf16.mxu0 0
  %6926 = vmatpush1.bf16.msra.mxu0 0
  %6927 = vmatprep.subr.bf16.mxu0 0
  %6928 = vmatpush1.bf16.msra.mxu0 0
  %6929 = vmatprep.subr.bf16.mxu0 0
  %6930 = vmatpush1.bf16.msra.mxu0 0
  %6931 = vmatprep.subr.bf16.mxu0 0
  %6932 = vmatpush1.bf16.msra.mxu0 0
  %6933 = vmatprep.subr.bf16.mxu0 0
  %6934 = vmatpush1.bf16.msra.mxu0 0
  %6935 = vmatprep.subr.bf16.mxu0 0
  %6936 = vmatpush1.bf16.msra.mxu0 0
  %6937 = vmatprep.subr.bf16.mxu0 0
  %6938 = vmatpush1.bf16.msra.mxu0 0
  %6939 = vmatprep.subr.bf16.mxu0 0
  %6940 = vmatpush1.bf16.msra.mxu0 0
  %6941 = vmatprep.subr.bf16.mxu0 0
  %6942 = vmatpush1.bf16.msra.mxu0 0
  %6943 = vmatprep.subr.bf16.mxu0 0
  %6944 = vmatpush1.bf16.msra.mxu0 0
  %6945 = vmatprep.mubr.bf16.mxu0 0
  %6946 = vmatmul.mubr.bf16.gmra.mrb[0].mxu0 %v6908
  %v6947 = vpop.f32.mrb[0].mxu0
  %v6948 = vadd.f32 0.0, %v6947
  %v6949 = vpop.f32.mrb[0].mxu0
  %v6950 = vpop.f32.mrb[0].mxu0
  %v6951 = vpop.f32.mrb[0].mxu0
  %6952 = vdwg.mxu0
  %6953 = vrot.lane.b32.xlu0 %v6509, 112
  %v6954 = vpop.permute.xlu0 %6953
  %6955 = vrot.lane.b32.xlu0 %v6511, 112
  %v6956 = vpop.permute.xlu0 %6955
  %v6958 = vsel %vm163, %v6954, 0
  %v6961 = vsel %vm163, %v6956, 0
  %6963 = vmatprep.subr.bf16.mxu0 0
  %6964 = vmatpush1.bf16.xpose.msra.mxu0 %v6961
  %6965 = vmatprep.subr.bf16.mxu0 0
  %6966 = vmatpush1.bf16.xpose.msra.mxu0 0
  %6967 = vmatprep.subr.bf16.mxu0 0
  %6968 = vmatpush1.bf16.xpose.msra.mxu0 0
  %6969 = vmatprep.subr.bf16.mxu0 0
  %6970 = vmatpush1.bf16.xpose.msra.mxu0 0
  %6971 = vmatprep.subr.bf16.mxu0 0
  %6972 = vmatpush1.bf16.xpose.msra.mxu0 0
  %6973 = vmatprep.subr.bf16.mxu0 0
  %6974 = vmatpush1.bf16.xpose.msra.mxu0 0
  %6975 = vmatprep.subr.bf16.mxu0 0
  %6976 = vmatpush1.bf16.xpose.msra.mxu0 0
  %6977 = vmatprep.subr.bf16.mxu0 0
  %6978 = vmatpush1.bf16.xpose.msra.mxu0 0
  %6979 = vmatprep.subr.bf16.mxu0 0
  %6980 = vmatpush1.bf16.xpose.msra.mxu0 0
  %6981 = vmatprep.subr.bf16.mxu0 0
  %6982 = vmatpush1.bf16.xpose.msra.mxu0 0
  %6983 = vmatprep.subr.bf16.mxu0 0
  %6984 = vmatpush1.bf16.xpose.msra.mxu0 0
  %6985 = vmatprep.subr.bf16.mxu0 0
  %6986 = vmatpush1.bf16.xpose.msra.mxu0 0
  %6987 = vmatprep.subr.bf16.mxu0 0
  %6988 = vmatpush1.bf16.xpose.msra.mxu0 0
  %6989 = vmatprep.subr.bf16.mxu0 0
  %6990 = vmatpush1.bf16.xpose.msra.mxu0 0
  %6991 = vmatprep.subr.bf16.mxu0 0
  %6992 = vmatpush1.bf16.xpose.msra.mxu0 0
  %6993 = vmatprep.subr.bf16.mxu0 0
  %6994 = vmatpush1.bf16.xpose.msra.mxu0 0
  %6995 = vmatprep.mubr.bf16.mxu0 0
  %6996 = vmatmul.mubr.bf16.gmra.mrb[0].mxu0 %v6958
  %v6997 = vpop.f32.mrb[0].mxu0
  %v6998 = vadd.f32 0.0, %v6997
  %v6999 = vpop.f32.mrb[0].mxu0
  %v7000 = vpop.f32.mrb[0].mxu0
  %v7001 = vpop.f32.mrb[0].mxu0
  %7002 = vdwg.mxu0
  %7003 = vrot.lane.b32.xlu0 %v6510, 112
  %v7004 = vpop.permute.xlu0 %7003
  %7005 = vrot.lane.b32.xlu0 %v6512, 112
  %v7006 = vpop.permute.xlu0 %7005
  %v7008 = vsel %vm163, %v7004, 0
  %v7011 = vsel %vm163, %v7006, 0
  %7013 = vmatprep.subr.bf16.mxu0 0
  %7014 = vmatpush1.bf16.xpose.msra.mxu0 %v7011
  %7015 = vmatprep.subr.bf16.mxu0 0
  %7016 = vmatpush1.bf16.xpose.msra.mxu0 0
  %7017 = vmatprep.subr.bf16.mxu0 0
  %7018 = vmatpush1.bf16.xpose.msra.mxu0 0
  %7019 = vmatprep.subr.bf16.mxu0 0
  %7020 = vmatpush1.bf16.xpose.msra.mxu0 0
  %7021 = vmatprep.subr.bf16.mxu0 0
  %7022 = vmatpush1.bf16.xpose.msra.mxu0 0
  %7023 = vmatprep.subr.bf16.mxu0 0
  %7024 = vmatpush1.bf16.xpose.msra.mxu0 0
  %7025 = vmatprep.subr.bf16.mxu0 0
  %7026 = vmatpush1.bf16.xpose.msra.mxu0 0
  %7027 = vmatprep.subr.bf16.mxu0 0
  %7028 = vmatpush1.bf16.xpose.msra.mxu0 0
  %7029 = vmatprep.subr.bf16.mxu0 0
  %7030 = vmatpush1.bf16.xpose.msra.mxu0 0
  %7031 = vmatprep.subr.bf16.mxu0 0
  %7032 = vmatpush1.bf16.xpose.msra.mxu0 0
  %7033 = vmatprep.subr.bf16.mxu0 0
  %7034 = vmatpush1.bf16.xpose.msra.mxu0 0
  %7035 = vmatprep.subr.bf16.mxu0 0
  %7036 = vmatpush1.bf16.xpose.msra.mxu0 0
  %7037 = vmatprep.subr.bf16.mxu0 0
  %7038 = vmatpush1.bf16.xpose.msra.mxu0 0
  %7039 = vmatprep.subr.bf16.mxu0 0
  %7040 = vmatpush1.bf16.xpose.msra.mxu0 0
  %7041 = vmatprep.subr.bf16.mxu0 0
  %7042 = vmatpush1.bf16.xpose.msra.mxu0 0
  %7043 = vmatprep.subr.bf16.mxu0 0
  %7044 = vmatpush1.bf16.xpose.msra.mxu0 0
  %7045 = vmatprep.mubr.bf16.mxu0 0
  %7046 = vmatmul.mubr.bf16.gmra.mrb[0].mxu0 %v7008
  %v7047 = vpop.f32.mrb[0].mxu0
  %v7048 = vadd.f32 0.0, %v7047
  %v7049 = vpop.f32.mrb[0].mxu0
  %v7050 = vpop.f32.mrb[0].mxu0
  %v7051 = vpop.f32.mrb[0].mxu0
  %7052 = vdwg.mxu0
  %v7053 = vsel %vm78, %v6998, -1e+09
  %v7054 = vsel %vm79, %v7048, -1e+09
  %v7055 = vsel %vm163, %v7053, -inf
  %7056 = vmax.xlane.f32.xlu0 %v7055
  %v7057 = vpop.xlane.xlu0 %7056
  %v7058 = vsel %vm163, %v7054, -inf
  %7059 = vmax.xlane.f32.xlu0 %v7058
  %v7060 = vpop.xlane.xlu0 %7059
  %v7061 = vsub.f32 %v7053, %v7057
  %v7062 = vsub.f32 %v7054, %v7060
  %v7063 = vmul.f32 %v7061, 1.442695
  %v7064 = vpow.pop %v7063
  %v7065 = vmul.f32 %v7062, 1.442695
  %v7066 = vpow.pop %v7065
  %v7067 = vsel %vm163, %v7064, 0.0
  %7068 = vadd.xlane.f32.xlu0 %v7067
  %v7069 = vpop.xlane.xlu0 %7068
  %v7070 = vsel %vm163, %v7066, 0.0
  %7071 = vadd.xlane.f32.xlu0 %v7070
  %v7072 = vpop.xlane.xlu0 %7071
  %v7073 = vrcp.pop %v7069
  %v7074 = vrcp.pop %v7072
  %v7075 = vmul.f32 %v7064, %v7073
  %v7076 = vmul.f32 %v7066, %v7074
  %v7077 = vpack.c.bf16 %v7075, %v7075
  %v7078 = vpack.c.bf16 %v7076, %v7076
  %7079 = vrot.lane.b32.xlu0 %v6511, 80
  %v7080 = vpop.permute.xlu0 %7079
  %v7082 = vsel %vm163, %v7077, 0
  %v7085 = vsel %vm290, %v7080, 0
  %7087 = vmatprep.subr.bf16.mxu0 0
  %7088 = vmatpush1.bf16.msra.mxu0 %v7085
  %7089 = vmatprep.subr.bf16.mxu0 0
  %7090 = vmatpush1.bf16.msra.mxu0 0
  %7091 = vmatprep.subr.bf16.mxu0 0
  %7092 = vmatpush1.bf16.msra.mxu0 0
  %7093 = vmatprep.subr.bf16.mxu0 0
  %7094 = vmatpush1.bf16.msra.mxu0 0
  %7095 = vmatprep.subr.bf16.mxu0 0
  %7096 = vmatpush1.bf16.msra.mxu0 0
  %7097 = vmatprep.subr.bf16.mxu0 0
  %7098 = vmatpush1.bf16.msra.mxu0 0
  %7099 = vmatprep.subr.bf16.mxu0 0
  %7100 = vmatpush1.bf16.msra.mxu0 0
  %7101 = vmatprep.subr.bf16.mxu0 0
  %7102 = vmatpush1.bf16.msra.mxu0 0
  %7103 = vmatprep.subr.bf16.mxu0 0
  %7104 = vmatpush1.bf16.msra.mxu0 0
  %7105 = vmatprep.subr.bf16.mxu0 0
  %7106 = vmatpush1.bf16.msra.mxu0 0
  %7107 = vmatprep.subr.bf16.mxu0 0
  %7108 = vmatpush1.bf16.msra.mxu0 0
  %7109 = vmatprep.subr.bf16.mxu0 0
  %7110 = vmatpush1.bf16.msra.mxu0 0
  %7111 = vmatprep.subr.bf16.mxu0 0
  %7112 = vmatpush1.bf16.msra.mxu0 0
  %7113 = vmatprep.subr.bf16.mxu0 0
  %7114 = vmatpush1.bf16.msra.mxu0 0
  %7115 = vmatprep.subr.bf16.mxu0 0
  %7116 = vmatpush1.bf16.msra.mxu0 0
  %7117 = vmatprep.subr.bf16.mxu0 0
  %7118 = vmatpush1.bf16.msra.mxu0 0
  %7119 = vmatprep.mubr.bf16.mxu0 0
  %7120 = vmatmul.mubr.bf16.gmra.mrb[0].mxu0 %v7082
  %v7121 = vpop.f32.mrb[0].mxu0
  %v7122 = vadd.f32 0.0, %v7121
  %v7123 = vpop.f32.mrb[0].mxu0
  %v7124 = vpop.f32.mrb[0].mxu0
  %v7125 = vpop.f32.mrb[0].mxu0
  %7126 = vdwg.mxu0
  %7127 = vrot.lane.b32.xlu0 %v6512, 80
  %v7128 = vpop.permute.xlu0 %7127
  %v7130 = vsel %vm163, %v7078, 0
  %v7133 = vsel %vm290, %v7128, 0
  %7135 = vmatprep.subr.bf16.mxu0 0
  %7136 = vmatpush1.bf16.msra.mxu0 %v7133
  %7137 = vmatprep.subr.bf16.mxu0 0
  %7138 = vmatpush1.bf16.msra.mxu0 0
  %7139 = vmatprep.subr.bf16.mxu0 0
  %7140 = vmatpush1.bf16.msra.mxu0 0
  %7141 = vmatprep.subr.bf16.mxu0 0
  %7142 = vmatpush1.bf16.msra.mxu0 0
  %7143 = vmatprep.subr.bf16.mxu0 0
  %7144 = vmatpush1.bf16.msra.mxu0 0
  %7145 = vmatprep.subr.bf16.mxu0 0
  %7146 = vmatpush1.bf16.msra.mxu0 0
  %7147 = vmatprep.subr.bf16.mxu0 0
  %7148 = vmatpush1.bf16.msra.mxu0 0
  %7149 = vmatprep.subr.bf16.mxu0 0
  %7150 = vmatpush1.bf16.msra.mxu0 0
  %7151 = vmatprep.subr.bf16.mxu0 0
  %7152 = vmatpush1.bf16.msra.mxu0 0
  %7153 = vmatprep.subr.bf16.mxu0 0
  %7154 = vmatpush1.bf16.msra.mxu0 0
  %7155 = vmatprep.subr.bf16.mxu0 0
  %7156 = vmatpush1.bf16.msra.mxu0 0
  %7157 = vmatprep.subr.bf16.mxu0 0
  %7158 = vmatpush1.bf16.msra.mxu0 0
  %7159 = vmatprep.subr.bf16.mxu0 0
  %7160 = vmatpush1.bf16.msra.mxu0 0
  %7161 = vmatprep.subr.bf16.mxu0 0
  %7162 = vmatpush1.bf16.msra.mxu0 0
  %7163 = vmatprep.subr.bf16.mxu0 0
  %7164 = vmatpush1.bf16.msra.mxu0 0
  %7165 = vmatprep.subr.bf16.mxu0 0
  %7166 = vmatpush1.bf16.msra.mxu0 0
  %7167 = vmatprep.mubr.bf16.mxu0 0
  %7168 = vmatmul.mubr.bf16.gmra.mrb[0].mxu0 %v7130
  %v7169 = vpop.f32.mrb[0].mxu0
  %v7170 = vadd.f32 0.0, %v7169
  %v7171 = vpop.f32.mrb[0].mxu0
  %v7172 = vpop.f32.mrb[0].mxu0
  %v7173 = vpop.f32.mrb[0].mxu0
  %7174 = vdwg.mxu0
  %7175 = vrot.lane.b32.xlu0 %v6509, 104
  %v7176 = vpop.permute.xlu0 %7175
  %7177 = vrot.lane.b32.xlu0 %v6511, 104
  %v7178 = vpop.permute.xlu0 %7177
  %v7180 = vsel %vm163, %v7176, 0
  %v7183 = vsel %vm163, %v7178, 0
  %7185 = vmatprep.subr.bf16.mxu0 0
  %7186 = vmatpush1.bf16.xpose.msra.mxu0 %v7183
  %7187 = vmatprep.subr.bf16.mxu0 0
  %7188 = vmatpush1.bf16.xpose.msra.mxu0 0
  %7189 = vmatprep.subr.bf16.mxu0 0
  %7190 = vmatpush1.bf16.xpose.msra.mxu0 0
  %7191 = vmatprep.subr.bf16.mxu0 0
  %7192 = vmatpush1.bf16.xpose.msra.mxu0 0
  %7193 = vmatprep.subr.bf16.mxu0 0
  %7194 = vmatpush1.bf16.xpose.msra.mxu0 0
  %7195 = vmatprep.subr.bf16.mxu0 0
  %7196 = vmatpush1.bf16.xpose.msra.mxu0 0
  %7197 = vmatprep.subr.bf16.mxu0 0
  %7198 = vmatpush1.bf16.xpose.msra.mxu0 0
  %7199 = vmatprep.subr.bf16.mxu0 0
  %7200 = vmatpush1.bf16.xpose.msra.mxu0 0
  %7201 = vmatprep.subr.bf16.mxu0 0
  %7202 = vmatpush1.bf16.xpose.msra.mxu0 0
  %7203 = vmatprep.subr.bf16.mxu0 0
  %7204 = vmatpush1.bf16.xpose.msra.mxu0 0
  %7205 = vmatprep.subr.bf16.mxu0 0
  %7206 = vmatpush1.bf16.xpose.msra.mxu0 0
  %7207 = vmatprep.subr.bf16.mxu0 0
  %7208 = vmatpush1.bf16.xpose.msra.mxu0 0
  %7209 = vmatprep.subr.bf16.mxu0 0
  %7210 = vmatpush1.bf16.xpose.msra.mxu0 0
  %7211 = vmatprep.subr.bf16.mxu0 0
  %7212 = vmatpush1.bf16.xpose.msra.mxu0 0
  %7213 = vmatprep.subr.bf16.mxu0 0
  %7214 = vmatpush1.bf16.xpose.msra.mxu0 0
  %7215 = vmatprep.subr.bf16.mxu0 0
  %7216 = vmatpush1.bf16.xpose.msra.mxu0 0
  %7217 = vmatprep.mubr.bf16.mxu0 0
  %7218 = vmatmul.mubr.bf16.gmra.mrb[0].mxu0 %v7180
  %v7219 = vpop.f32.mrb[0].mxu0
  %v7220 = vadd.f32 0.0, %v7219
  %v7221 = vpop.f32.mrb[0].mxu0
  %v7222 = vpop.f32.mrb[0].mxu0
  %v7223 = vpop.f32.mrb[0].mxu0
  %7224 = vdwg.mxu0
  %7225 = vrot.lane.b32.xlu0 %v6510, 104
  %v7226 = vpop.permute.xlu0 %7225
  %7227 = vrot.lane.b32.xlu0 %v6512, 104
  %v7228 = vpop.permute.xlu0 %7227
  %v7230 = vsel %vm163, %v7226, 0
  %v7233 = vsel %vm163, %v7228, 0
  %7235 = vmatprep.subr.bf16.mxu0 0
  %7236 = vmatpush1.bf16.xpose.msra.mxu0 %v7233
  %7237 = vmatprep.subr.bf16.mxu0 0
  %7238 = vmatpush1.bf16.xpose.msra.mxu0 0
  %7239 = vmatprep.subr.bf16.mxu0 0
  %7240 = vmatpush1.bf16.xpose.msra.mxu0 0
  %7241 = vmatprep.subr.bf16.mxu0 0
  %7242 = vmatpush1.bf16.xpose.msra.mxu0 0
  %7243 = vmatprep.subr.bf16.mxu0 0
  %7244 = vmatpush1.bf16.xpose.msra.mxu0 0
  %7245 = vmatprep.subr.bf16.mxu0 0
  %7246 = vmatpush1.bf16.xpose.msra.mxu0 0
  %7247 = vmatprep.subr.bf16.mxu0 0
  %7248 = vmatpush1.bf16.xpose.msra.mxu0 0
  %7249 = vmatprep.subr.bf16.mxu0 0
  %7250 = vmatpush1.bf16.xpose.msra.mxu0 0
  %7251 = vmatprep.subr.bf16.mxu0 0
  %7252 = vmatpush1.bf16.xpose.msra.mxu0 0
  %7253 = vmatprep.subr.bf16.mxu0 0
  %7254 = vmatpush1.bf16.xpose.msra.mxu0 0
  %7255 = vmatprep.subr.bf16.mxu0 0
  %7256 = vmatpush1.bf16.xpose.msra.mxu0 0
  %7257 = vmatprep.subr.bf16.mxu0 0
  %7258 = vmatpush1.bf16.xpose.msra.mxu0 0
  %7259 = vmatprep.subr.bf16.mxu0 0
  %7260 = vmatpush1.bf16.xpose.msra.mxu0 0
  %7261 = vmatprep.subr.bf16.mxu0 0
  %7262 = vmatpush1.bf16.xpose.msra.mxu0 0
  %7263 = vmatprep.subr.bf16.mxu0 0
  %7264 = vmatpush1.bf16.xpose.msra.mxu0 0
  %7265 = vmatprep.subr.bf16.mxu0 0
  %7266 = vmatpush1.bf16.xpose.msra.mxu0 0
  %7267 = vmatprep.mubr.bf16.mxu0 0
  %7268 = vmatmul.mubr.bf16.gmra.mrb[0].mxu0 %v7230
  %v7269 = vpop.f32.mrb[0].mxu0
  %v7270 = vadd.f32 0.0, %v7269
  %v7271 = vpop.f32.mrb[0].mxu0
  %v7272 = vpop.f32.mrb[0].mxu0
  %v7273 = vpop.f32.mrb[0].mxu0
  %7274 = vdwg.mxu0
  %v7275 = vsel %vm78, %v7220, -1e+09
  %v7276 = vsel %vm79, %v7270, -1e+09
  %v7277 = vsel %vm163, %v7275, -inf
  %7278 = vmax.xlane.f32.xlu0 %v7277
  %v7279 = vpop.xlane.xlu0 %7278
  %v7280 = vsel %vm163, %v7276, -inf
  %7281 = vmax.xlane.f32.xlu0 %v7280
  %v7282 = vpop.xlane.xlu0 %7281
  %v7283 = vsub.f32 %v7275, %v7279
  %v7284 = vsub.f32 %v7276, %v7282
  %v7285 = vmul.f32 %v7283, 1.442695
  %v7286 = vpow.pop %v7285
  %v7287 = vmul.f32 %v7284, 1.442695
  %v7288 = vpow.pop %v7287
  %v7289 = vsel %vm163, %v7286, 0.0
  %7290 = vadd.xlane.f32.xlu0 %v7289
  %v7291 = vpop.xlane.xlu0 %7290
  %v7292 = vsel %vm163, %v7288, 0.0
  %7293 = vadd.xlane.f32.xlu0 %v7292
  %v7294 = vpop.xlane.xlu0 %7293
  %v7295 = vrcp.pop %v7291
  %v7296 = vrcp.pop %v7294
  %v7297 = vmul.f32 %v7286, %v7295
  %v7298 = vmul.f32 %v7288, %v7296
  %v7299 = vpack.c.bf16 %v7297, %v7297
  %v7300 = vpack.c.bf16 %v7298, %v7298
  %7301 = vrot.lane.b32.xlu0 %v6511, 72
  %v7302 = vpop.permute.xlu0 %7301
  %v7304 = vsel %vm163, %v7299, 0
  %v7307 = vsel %vm290, %v7302, 0
  %7309 = vmatprep.subr.bf16.mxu0 0
  %7310 = vmatpush1.bf16.msra.mxu0 %v7307
  %7311 = vmatprep.subr.bf16.mxu0 0
  %7312 = vmatpush1.bf16.msra.mxu0 0
  %7313 = vmatprep.subr.bf16.mxu0 0
  %7314 = vmatpush1.bf16.msra.mxu0 0
  %7315 = vmatprep.subr.bf16.mxu0 0
  %7316 = vmatpush1.bf16.msra.mxu0 0
  %7317 = vmatprep.subr.bf16.mxu0 0
  %7318 = vmatpush1.bf16.msra.mxu0 0
  %7319 = vmatprep.subr.bf16.mxu0 0
  %7320 = vmatpush1.bf16.msra.mxu0 0
  %7321 = vmatprep.subr.bf16.mxu0 0
  %7322 = vmatpush1.bf16.msra.mxu0 0
  %7323 = vmatprep.subr.bf16.mxu0 0
  %7324 = vmatpush1.bf16.msra.mxu0 0
  %7325 = vmatprep.subr.bf16.mxu0 0
  %7326 = vmatpush1.bf16.msra.mxu0 0
  %7327 = vmatprep.subr.bf16.mxu0 0
  %7328 = vmatpush1.bf16.msra.mxu0 0
  %7329 = vmatprep.subr.bf16.mxu0 0
  %7330 = vmatpush1.bf16.msra.mxu0 0
  %7331 = vmatprep.subr.bf16.mxu0 0
  %7332 = vmatpush1.bf16.msra.mxu0 0
  %7333 = vmatprep.subr.bf16.mxu0 0
  %7334 = vmatpush1.bf16.msra.mxu0 0
  %7335 = vmatprep.subr.bf16.mxu0 0
  %7336 = vmatpush1.bf16.msra.mxu0 0
  %7337 = vmatprep.subr.bf16.mxu0 0
  %7338 = vmatpush1.bf16.msra.mxu0 0
  %7339 = vmatprep.subr.bf16.mxu0 0
  %7340 = vmatpush1.bf16.msra.mxu0 0
  %7341 = vmatprep.mubr.bf16.mxu0 0
  %7342 = vmatmul.mubr.bf16.gmra.mrb[0].mxu0 %v7304
  %v7343 = vpop.f32.mrb[0].mxu0
  %v7344 = vadd.f32 0.0, %v7343
  %v7345 = vpop.f32.mrb[0].mxu0
  %v7346 = vpop.f32.mrb[0].mxu0
  %v7347 = vpop.f32.mrb[0].mxu0
  %7348 = vdwg.mxu0
  %7349 = vrot.lane.b32.xlu0 %v6512, 72
  %v7350 = vpop.permute.xlu0 %7349
  %v7352 = vsel %vm163, %v7300, 0
  %v7355 = vsel %vm290, %v7350, 0
  %7357 = vmatprep.subr.bf16.mxu0 0
  %7358 = vmatpush1.bf16.msra.mxu0 %v7355
  %7359 = vmatprep.subr.bf16.mxu0 0
  %7360 = vmatpush1.bf16.msra.mxu0 0
  %7361 = vmatprep.subr.bf16.mxu0 0
  %7362 = vmatpush1.bf16.msra.mxu0 0
  %7363 = vmatprep.subr.bf16.mxu0 0
  %7364 = vmatpush1.bf16.msra.mxu0 0
  %7365 = vmatprep.subr.bf16.mxu0 0
  %7366 = vmatpush1.bf16.msra.mxu0 0
  %7367 = vmatprep.subr.bf16.mxu0 0
  %7368 = vmatpush1.bf16.msra.mxu0 0
  %7369 = vmatprep.subr.bf16.mxu0 0
  %7370 = vmatpush1.bf16.msra.mxu0 0
  %7371 = vmatprep.subr.bf16.mxu0 0
  %7372 = vmatpush1.bf16.msra.mxu0 0
  %7373 = vmatprep.subr.bf16.mxu0 0
  %7374 = vmatpush1.bf16.msra.mxu0 0
  %7375 = vmatprep.subr.bf16.mxu0 0
  %7376 = vmatpush1.bf16.msra.mxu0 0
  %7377 = vmatprep.subr.bf16.mxu0 0
  %7378 = vmatpush1.bf16.msra.mxu0 0
  %7379 = vmatprep.subr.bf16.mxu0 0
  %7380 = vmatpush1.bf16.msra.mxu0 0
  %7381 = vmatprep.subr.bf16.mxu0 0
  %7382 = vmatpush1.bf16.msra.mxu0 0
  %7383 = vmatprep.subr.bf16.mxu0 0
  %7384 = vmatpush1.bf16.msra.mxu0 0
  %7385 = vmatprep.subr.bf16.mxu0 0
  %7386 = vmatpush1.bf16.msra.mxu0 0
  %7387 = vmatprep.subr.bf16.mxu0 0
  %7388 = vmatpush1.bf16.msra.mxu0 0
  %7389 = vmatprep.mubr.bf16.mxu0 0
  %7390 = vmatmul.mubr.bf16.gmra.mrb[0].mxu0 %v7352
  %v7391 = vpop.f32.mrb[0].mxu0
  %v7392 = vadd.f32 0.0, %v7391
  %v7393 = vpop.f32.mrb[0].mxu0
  %v7394 = vpop.f32.mrb[0].mxu0
  %v7395 = vpop.f32.mrb[0].mxu0
  %7396 = vdwg.mxu0
  %7399 = vrot.lane.b32.xlu0 %v6900, 8
  %v7400 = vpop.permute.xlu0 %7399
  %7401 = vrot.lane.b32.xlu0 %v6948, 8
  %v7402 = vpop.permute.xlu0 %7401
  %7407 = vrot.lane.b32.xlu0 %v7122, 16
  %v7408 = vpop.permute.xlu0 %7407
  %7409 = vrot.lane.b32.xlu0 %v7170, 16
  %v7410 = vpop.permute.xlu0 %7409
  %7415 = vrot.lane.b32.xlu0 %v7344, 24
  %v7416 = vpop.permute.xlu0 %7415
  %7417 = vrot.lane.b32.xlu0 %v7392, 24
  %v7418 = vpop.permute.xlu0 %7417
  %v7421 = vsel %vm163, %v6675, %v7400
  %v7422 = vsel %vm163, %v6724, %v7402
  %v7423 = vsel %vm1074, %v7421, %v7408
  %v7424 = vsel %vm1074, %v7422, %v7410
  %v7425 = vsel %vm1077, %v7423, %v7416
  %v7426 = vsel %vm1077, %v7424, %v7418
  %s7427 = scalar_lea.vmem %s3, 112
  %v7428 = vld [vmem:[%s7427] sm:$0xf]
  %v7429 = vld [vmem:[%s7427 + $0x4] sm:$0xf]
  %v7430 = vld [vmem:[%s7427 + $0x8] sm:$0xf]
  %v7431 = vld [vmem:[%s7427 + $0xc] sm:$0xf]
  %s7432 = scalar_lea.vmem %s9, 24
  %v7433 = vld [vmem:[%s7432] sm:$0x1]
  %v7434 = vpack.c.bf16 %v7426, %v7425
  %v7436 = vlaneseq
  %v7437 = vshrl.u32 %v7436, 7
  %v7438 = vsub.s32 0, %v7437
  %v7439 = vrot.slane %v7433, %v7438
  %v7445 = vunpack.c.l.b16 %v7428
  %v7446 = vunpack.c.l.b16 %v7429
  %v7447 = vunpack.c.l.b16 %v7430
  %v7448 = vunpack.c.l.b16 %v7431
  %v7449 = vpack.c.b16 %v7446, %v7445
  %v7450 = vpack.c.b16 %v7448, %v7447
  %v7454 = vsel %vm113, %v7434, 0
  %7456 = vmatprep.subr.bf16.mxu0 0
  %7457 = vmatpush1.bf16.msra.mxu0 %v7449
  %7458 = vmatprep.subr.bf16.mxu0 0
  %7459 = vmatpush1.bf16.msra.mxu0 %v7450
  %7460 = vmatprep.subr.bf16.mxu0 0
  %7461 = vmatpush1.bf16.msra.mxu0 0
  %7462 = vmatprep.subr.bf16.mxu0 0
  %7463 = vmatpush1.bf16.msra.mxu0 0
  %7464 = vmatprep.subr.bf16.mxu0 0
  %7465 = vmatpush1.bf16.msra.mxu0 0
  %7466 = vmatprep.subr.bf16.mxu0 0
  %7467 = vmatpush1.bf16.msra.mxu0 0
  %7468 = vmatprep.subr.bf16.mxu0 0
  %7469 = vmatpush1.bf16.msra.mxu0 0
  %7470 = vmatprep.subr.bf16.mxu0 0
  %7471 = vmatpush1.bf16.msra.mxu0 0
  %7472 = vmatprep.subr.bf16.mxu0 0
  %7473 = vmatpush1.bf16.msra.mxu0 0
  %7474 = vmatprep.subr.bf16.mxu0 0
  %7475 = vmatpush1.bf16.msra.mxu0 0
  %7476 = vmatprep.subr.bf16.mxu0 0
  %7477 = vmatpush1.bf16.msra.mxu0 0
  %7478 = vmatprep.subr.bf16.mxu0 0
  %7479 = vmatpush1.bf16.msra.mxu0 0
  %7480 = vmatprep.subr.bf16.mxu0 0
  %7481 = vmatpush1.bf16.msra.mxu0 0
  %7482 = vmatprep.subr.bf16.mxu0 0
  %7483 = vmatpush1.bf16.msra.mxu0 0
  %7484 = vmatprep.subr.bf16.mxu0 0
  %7485 = vmatpush1.bf16.msra.mxu0 0
  %7486 = vmatprep.subr.bf16.mxu0 0
  %7487 = vmatpush1.bf16.msra.mxu0 0
  %7488 = vmatprep.mubr.bf16.mxu0 0
  %7489 = vmatmul.mubr.bf16.gmra.mrb[0].mxu0 %v7454
  %v7490 = vpop.f32.mrb[0].mxu0
  %v7491 = vadd.f32 %v7439, %v7490
  %v7492 = vpop.f32.mrb[0].mxu0
  %v7493 = vpop.f32.mrb[0].mxu0
  %v7494 = vadd.f32 %v7439, %v7493
  %v7495 = vpop.f32.mrb[0].mxu0
  %7496 = vdwg.mxu0
  %v7497 = vadd.f32 %v6371, %v7491
  %v7498 = vadd.f32 %v6372, %v7494
  %s7499 = scalar_lea.vmem %s9, 28
  %v7500 = vld [vmem:[%s7499] sm:$0x1]
  %s7501 = scalar_lea.vmem %s9, 29
  %v7502 = vld [vmem:[%s7501] sm:$0x1]
  %v7503 = vsel %vm113, %v7497, 0.0
  %7504 = vadd.xlane.f32.xlu0 %v7503
  %v7505 = vpop.xlane.xlu0 %7504
  %v7506 = vsel %vm113, %v7498, 0.0
  %7507 = vadd.xlane.f32.xlu0 %v7506
  %v7508 = vpop.xlane.xlu0 %7507
  %v7509 = vmul.f32 %v7505, %v1160
  %v7510 = vmul.f32 %v7508, %v1160
  %v7511 = vsub.f32 %v7497, %v7509
  %v7512 = vsub.f32 %v7498, %v7510
  %v7513 = vmul.f32 %v7511, %v7511
  %v7514 = vmul.f32 %v7512, %v7512
  %v7515 = vsel %vm113, %v7513, 0.0
  %7516 = vadd.xlane.f32.xlu0 %v7515
  %v7517 = vpop.xlane.xlu0 %7516
  %v7518 = vsel %vm113, %v7514, 0.0
  %7519 = vadd.xlane.f32.xlu0 %v7518
  %v7520 = vpop.xlane.xlu0 %7519
  %v7521 = vmul.f32 %v7517, %v1160
  %v7522 = vmul.f32 %v7520, %v1160
  %v7523 = vadd.f32 %v7521, 1e-05
  %v7524 = vadd.f32 %v7522, 1e-05
  %v7525 = vrsqrt.pop %v7523
  %v7526 = vrsqrt.pop %v7524
  %v7527 = vmul.f32 %v7511, %v7525
  %v7528 = vmul.f32 %v7512, %v7526
  %v7530 = vlaneseq
  %v7531 = vshrl.u32 %v7530, 7
  %v7532 = vsub.s32 0, %v7531
  %v7533 = vrot.slane %v7500, %v7532
  %v7535 = vmul.f32 %v7527, %v7533
  %v7536 = vmul.f32 %v7528, %v7533
  %v7538 = vlaneseq
  %v7539 = vshrl.u32 %v7538, 7
  %v7540 = vsub.s32 0, %v7539
  %v7541 = vrot.slane %v7502, %v7540
  %v7543 = vadd.f32 %v7535, %v7541
  %v7544 = vadd.f32 %v7536, %v7541
  %s7545 = scalar_lea.vmem %s4, 64
  %v7546 = vld [vmem:[%s7545] sm:$0xf]
  %v7547 = vld [vmem:[%s7545 + $0x4] sm:$0xf]
  %v7548 = vld [vmem:[%s7545 + $0x8] sm:$0xf]
  %v7549 = vld [vmem:[%s7545 + $0xc] sm:$0xf]
  %s7550 = scalar_lea.vmem %s8, 4
  %v7551 = vld [vmem:[%s7550] sm:$0x1]
  %s7552 = scalar_lea.vmem %s5, 96
  %v7553 = vld [vmem:[%s7552] sm:$0xf]
  %v7554 = vld [vmem:[%s7552 + $0x4] sm:$0xf]
  %v7555 = vld [vmem:[%s7552 + $0x8] sm:$0xf]
  %v7556 = vld [vmem:[%s7552 + $0xc] sm:$0xf]
  %v7557 = vld [vmem:[%s7552 + $0x10] sm:$0xf]
  %v7558 = vld [vmem:[%s7552 + $0x14] sm:$0xf]
  %v7559 = vld [vmem:[%s7552 + $0x18] sm:$0xf]
  %v7560 = vld [vmem:[%s7552 + $0x1c] sm:$0xf]
  %s7561 = scalar_lea.vmem %s9, 25
  %v7562 = vld [vmem:[%s7561] sm:$0x1]
  %v7563 = vpack.c.bf16 %v7544, %v7543
  %v7565 = vlaneseq
  %v7566 = vshrl.u32 %v7565, 7
  %v7567 = vsub.s32 0, %v7566
  %v7568 = vrot.slane %v7551, %v7567
  %v7574 = vunpack.c.l.b16 %v7546
  %v7575 = vunpack.c.l.b16 %v7547
  %v7576 = vunpack.c.l.b16 %v7548
  %v7577 = vunpack.c.l.b16 %v7549
  %v7578 = vpack.c.b16 %v7575, %v7574
  %v7579 = vpack.c.b16 %v7577, %v7576
  %v7583 = vsel %vm113, %v7563, 0
  %7585 = vmatprep.subr.bf16.mxu0 0
  %7586 = vmatpush1.bf16.msra.mxu0 %v7578
  %7587 = vmatprep.subr.bf16.mxu0 0
  %7588 = vmatpush1.bf16.msra.mxu0 %v7579
  %7589 = vmatprep.subr.bf16.mxu0 0
  %7590 = vmatpush1.bf16.msra.mxu0 0
  %7591 = vmatprep.subr.bf16.mxu0 0
  %7592 = vmatpush1.bf16.msra.mxu0 0
  %7593 = vmatprep.subr.bf16.mxu0 0
  %7594 = vmatpush1.bf16.msra.mxu0 0
  %7595 = vmatprep.subr.bf16.mxu0 0
  %7596 = vmatpush1.bf16.msra.mxu0 0
  %7597 = vmatprep.subr.bf16.mxu0 0
  %7598 = vmatpush1.bf16.msra.mxu0 0
  %7599 = vmatprep.subr.bf16.mxu0 0
  %7600 = vmatpush1.bf16.msra.mxu0 0
  %7601 = vmatprep.subr.bf16.mxu0 0
  %7602 = vmatpush1.bf16.msra.mxu0 0
  %7603 = vmatprep.subr.bf16.mxu0 0
  %7604 = vmatpush1.bf16.msra.mxu0 0
  %7605 = vmatprep.subr.bf16.mxu0 0
  %7606 = vmatpush1.bf16.msra.mxu0 0
  %7607 = vmatprep.subr.bf16.mxu0 0
  %7608 = vmatpush1.bf16.msra.mxu0 0
  %7609 = vmatprep.subr.bf16.mxu0 0
  %7610 = vmatpush1.bf16.msra.mxu0 0
  %7611 = vmatprep.subr.bf16.mxu0 0
  %7612 = vmatpush1.bf16.msra.mxu0 0
  %7613 = vmatprep.subr.bf16.mxu0 0
  %7614 = vmatpush1.bf16.msra.mxu0 0
  %7615 = vmatprep.subr.bf16.mxu0 0
  %7616 = vmatpush1.bf16.msra.mxu0 0
  %7617 = vmatprep.mubr.bf16.mxu0 0
  %7618 = vmatmul.mubr.bf16.gmra.mrb[0].mxu0 %v7583
  %v7619 = vpop.f32.mrb[0].mxu0
  %v7620 = vadd.f32 %v7568, %v7619
  %v7621 = vpop.f32.mrb[0].mxu0
  %v7622 = vpop.f32.mrb[0].mxu0
  %v7623 = vadd.f32 %v7568, %v7622
  %v7624 = vpop.f32.mrb[0].mxu0
  %7625 = vdwg.mxu0
  %v7626 = vmul.f32 %v7620, 0.5
  %v7627 = vmul.f32 %v7623, 0.5
  %v7628 = vmul.f32 %v7620, 0.70710677
  %v7629 = vmul.f32 %v7623, 0.70710677
  %v7630 = verf.f32.pop %v7628
  %v7631 = verf.f32.pop %v7629
  %v7632 = vadd.f32 %v7630, 1.0
  %v7633 = vadd.f32 %v7631, 1.0
  %v7634 = vmul.f32 %v7626, %v7632
  %v7635 = vmul.f32 %v7627, %v7633
  %v7636 = vpack.c.bf16 %v7635, %v7634
  %v7638 = vlaneseq
  %v7639 = vshrl.u32 %v7638, 7
  %v7640 = vsub.s32 0, %v7639
  %v7641 = vrot.slane %v7562, %v7640
  %v7651 = vunpack.c.l.b16 %v7553
  %v7652 = vunpack.c.l.b16 %v7554
  %v7653 = vunpack.c.l.b16 %v7555
  %v7654 = vunpack.c.l.b16 %v7556
  %v7655 = vunpack.c.l.b16 %v7557
  %v7656 = vunpack.c.l.b16 %v7558
  %v7657 = vunpack.c.l.b16 %v7559
  %v7658 = vunpack.c.l.b16 %v7560
  %v7659 = vpack.c.b16 %v7652, %v7651
  %v7660 = vpack.c.b16 %v7654, %v7653
  %v7661 = vpack.c.b16 %v7656, %v7655
  %v7662 = vpack.c.b16 %v7658, %v7657
  %v7668 = vsel %vm1316, %v7636, 0
  %7670 = vmatprep.subr.bf16.mxu0 0
  %7671 = vmatpush1.bf16.msra.mxu0 %v7659
  %7672 = vmatprep.subr.bf16.mxu0 0
  %7673 = vmatpush1.bf16.msra.mxu0 %v7660
  %7674 = vmatprep.subr.bf16.mxu0 0
  %7675 = vmatpush1.bf16.msra.mxu0 %v7661
  %7676 = vmatprep.subr.bf16.mxu0 0
  %7677 = vmatpush1.bf16.msra.mxu0 %v7662
  %7678 = vmatprep.subr.bf16.mxu0 0
  %7679 = vmatpush1.bf16.msra.mxu0 0
  %7680 = vmatprep.subr.bf16.mxu0 0
  %7681 = vmatpush1.bf16.msra.mxu0 0
  %7682 = vmatprep.subr.bf16.mxu0 0
  %7683 = vmatpush1.bf16.msra.mxu0 0
  %7684 = vmatprep.subr.bf16.mxu0 0
  %7685 = vmatpush1.bf16.msra.mxu0 0
  %7686 = vmatprep.subr.bf16.mxu0 0
  %7687 = vmatpush1.bf16.msra.mxu0 0
  %7688 = vmatprep.subr.bf16.mxu0 0
  %7689 = vmatpush1.bf16.msra.mxu0 0
  %7690 = vmatprep.subr.bf16.mxu0 0
  %7691 = vmatpush1.bf16.msra.mxu0 0
  %7692 = vmatprep.subr.bf16.mxu0 0
  %7693 = vmatpush1.bf16.msra.mxu0 0
  %7694 = vmatprep.subr.bf16.mxu0 0
  %7695 = vmatpush1.bf16.msra.mxu0 0
  %7696 = vmatprep.subr.bf16.mxu0 0
  %7697 = vmatpush1.bf16.msra.mxu0 0
  %7698 = vmatprep.subr.bf16.mxu0 0
  %7699 = vmatpush1.bf16.msra.mxu0 0
  %7700 = vmatprep.subr.bf16.mxu0 0
  %7701 = vmatpush1.bf16.msra.mxu0 0
  %7702 = vmatprep.mubr.bf16.mxu0 0
  %7703 = vmatmul.mubr.bf16.gmra.mrb[0].mxu0 %v7668
  %v7704 = vpop.f32.mrb[0].mxu0
  %v7705 = vadd.f32 %v7641, %v7704
  %v7706 = vpop.f32.mrb[0].mxu0
  %v7707 = vpop.f32.mrb[0].mxu0
  %v7708 = vadd.f32 %v7641, %v7707
  %v7709 = vpop.f32.mrb[0].mxu0
  %7710 = vdwg.mxu0
  %v7711 = vadd.f32 %v7543, %v7705
  %v7712 = vadd.f32 %v7544, %v7708
  %s7713 = scalar_lea.vmem %s9, 30
  %v7714 = vld [vmem:[%s7713] sm:$0x1]
  %s7715 = scalar_lea.vmem %s9, 31
  %v7716 = vld [vmem:[%s7715] sm:$0x1]
  %v7717 = vsel %vm113, %v7711, 0.0
  %7718 = vadd.xlane.f32.xlu0 %v7717
  %v7719 = vpop.xlane.xlu0 %7718
  %v7720 = vsel %vm113, %v7712, 0.0
  %7721 = vadd.xlane.f32.xlu0 %v7720
  %v7722 = vpop.xlane.xlu0 %7721
  %v7723 = vmul.f32 %v7719, %v1160
  %v7724 = vmul.f32 %v7722, %v1160
  %v7725 = vsub.f32 %v7711, %v7723
  %v7726 = vsub.f32 %v7712, %v7724
  %v7727 = vmul.f32 %v7725, %v7725
  %v7728 = vmul.f32 %v7726, %v7726
  %v7729 = vsel %vm113, %v7727, 0.0
  %7730 = vadd.xlane.f32.xlu0 %v7729
  %v7731 = vpop.xlane.xlu0 %7730
  %v7732 = vsel %vm113, %v7728, 0.0
  %7733 = vadd.xlane.f32.xlu0 %v7732
  %v7734 = vpop.xlane.xlu0 %7733
  %v7735 = vmul.f32 %v7731, %v1160
  %v7736 = vmul.f32 %v7734, %v1160
  %v7737 = vadd.f32 %v7735, 1e-05
  %v7738 = vadd.f32 %v7736, 1e-05
  %v7739 = vrsqrt.pop %v7737
  %v7740 = vrsqrt.pop %v7738
  %v7741 = vmul.f32 %v7725, %v7739
  %v7742 = vmul.f32 %v7726, %v7740
  %v7744 = vlaneseq
  %v7745 = vshrl.u32 %v7744, 7
  %v7746 = vsub.s32 0, %v7745
  %v7747 = vrot.slane %v7714, %v7746
  %v7749 = vmul.f32 %v7741, %v7747
  %v7750 = vmul.f32 %v7742, %v7747
  %v7752 = vlaneseq
  %v7753 = vshrl.u32 %v7752, 7
  %v7754 = vsub.s32 0, %v7753
  %v7755 = vrot.slane %v7716, %v7754
  %v7757 = vadd.f32 %v7749, %v7755
  %v7758 = vadd.f32 %v7750, %v7755
  %s7759 = scalar_lea.vmem %s9, 34
  %v7760 = vld [vmem:[%s7759] sm:$0x1]
  %s7761 = scalar_lea.vmem %s9, 35
  %v7762 = vld [vmem:[%s7761] sm:$0x1]
  %v7763 = vsel %vm113, %v7757, 0.0
  %7764 = vadd.xlane.f32.xlu0 %v7763
  %v7765 = vpop.xlane.xlu0 %7764
  %v7766 = vsel %vm113, %v7758, 0.0
  %7767 = vadd.xlane.f32.xlu0 %v7766
  %v7768 = vpop.xlane.xlu0 %7767
  %v7769 = vmul.f32 %v7765, %v1160
  %v7770 = vmul.f32 %v7768, %v1160
  %v7771 = vsub.f32 %v7757, %v7769
  %v7772 = vsub.f32 %v7758, %v7770
  %v7773 = vmul.f32 %v7771, %v7771
  %v7774 = vmul.f32 %v7772, %v7772
  %v7775 = vsel %vm113, %v7773, 0.0
  %7776 = vadd.xlane.f32.xlu0 %v7775
  %v7777 = vpop.xlane.xlu0 %7776
  %v7778 = vsel %vm113, %v7774, 0.0
  %7779 = vadd.xlane.f32.xlu0 %v7778
  %v7780 = vpop.xlane.xlu0 %7779
  %v7781 = vmul.f32 %v7777, %v1160
  %v7782 = vmul.f32 %v7780, %v1160
  %v7783 = vadd.f32 %v7781, 1e-05
  %v7784 = vadd.f32 %v7782, 1e-05
  %v7785 = vrsqrt.pop %v7783
  %v7786 = vrsqrt.pop %v7784
  %v7787 = vmul.f32 %v7771, %v7785
  %v7788 = vmul.f32 %v7772, %v7786
  %v7790 = vlaneseq
  %v7791 = vshrl.u32 %v7790, 7
  %v7792 = vsub.s32 0, %v7791
  %v7793 = vrot.slane %v7760, %v7792
  %v7795 = vmul.f32 %v7787, %v7793
  %v7796 = vmul.f32 %v7788, %v7793
  %v7798 = vlaneseq
  %v7799 = vshrl.u32 %v7798, 7
  %v7800 = vsub.s32 0, %v7799
  %v7801 = vrot.slane %v7762, %v7800
  %v7803 = vadd.f32 %v7795, %v7801
  %v7804 = vadd.f32 %v7796, %v7801
  %v7805 = vld [vmem:[%s6] sm:$0xf]
  %v7806 = vld [vmem:[%s6 + $0x4] sm:$0xf]
  %v7807 = vld [vmem:[%s6 + $0x8] sm:$0xf]
  %v7808 = vld [vmem:[%s6 + $0xc] sm:$0xf]
  %v7809 = vld [vmem:[%s10] sm:$0x1]
  %v7810 = vpack.c.bf16 %v7804, %v7803
  %v7812 = vlaneseq
  %v7813 = vshrl.u32 %v7812, 7
  %v7814 = vsub.s32 0, %v7813
  %v7815 = vrot.slane %v7809, %v7814
  %v7821 = vunpack.c.l.b16 %v7805
  %v7822 = vunpack.c.l.b16 %v7806
  %v7823 = vunpack.c.l.b16 %v7807
  %v7824 = vunpack.c.l.b16 %v7808
  %v7825 = vpack.c.b16 %v7822, %v7821
  %v7826 = vpack.c.b16 %v7824, %v7823
  %v7830 = vsel %vm113, %v7810, 0
  %7832 = vmatprep.subr.bf16.mxu0 0
  %7833 = vmatpush1.bf16.msra.mxu0 %v7825
  %7834 = vmatprep.subr.bf16.mxu0 0
  %7835 = vmatpush1.bf16.msra.mxu0 %v7826
  %7836 = vmatprep.subr.bf16.mxu0 0
  %7837 = vmatpush1.bf16.msra.mxu0 0
  %7838 = vmatprep.subr.bf16.mxu0 0
  %7839 = vmatpush1.bf16.msra.mxu0 0
  %7840 = vmatprep.subr.bf16.mxu0 0
  %7841 = vmatpush1.bf16.msra.mxu0 0
  %7842 = vmatprep.subr.bf16.mxu0 0
  %7843 = vmatpush1.bf16.msra.mxu0 0
  %7844 = vmatprep.subr.bf16.mxu0 0
  %7845 = vmatpush1.bf16.msra.mxu0 0
  %7846 = vmatprep.subr.bf16.mxu0 0
  %7847 = vmatpush1.bf16.msra.mxu0 0
  %7848 = vmatprep.subr.bf16.mxu0 0
  %7849 = vmatpush1.bf16.msra.mxu0 0
  %7850 = vmatprep.subr.bf16.mxu0 0
  %7851 = vmatpush1.bf16.msra.mxu0 0
  %7852 = vmatprep.subr.bf16.mxu0 0
  %7853 = vmatpush1.bf16.msra.mxu0 0
  %7854 = vmatprep.subr.bf16.mxu0 0
  %7855 = vmatpush1.bf16.msra.mxu0 0
  %7856 = vmatprep.subr.bf16.mxu0 0
  %7857 = vmatpush1.bf16.msra.mxu0 0
  %7858 = vmatprep.subr.bf16.mxu0 0
  %7859 = vmatpush1.bf16.msra.mxu0 0
  %7860 = vmatprep.subr.bf16.mxu0 0
  %7861 = vmatpush1.bf16.msra.mxu0 0
  %7862 = vmatprep.subr.bf16.mxu0 0
  %7863 = vmatpush1.bf16.msra.mxu0 0
  %7864 = vmatprep.mubr.bf16.mxu0 0
  %7865 = vmatmul.mubr.bf16.gmra.mrb[0].mxu0 %v7830
  %v7866 = vpop.f32.mrb[0].mxu0
  %v7867 = vadd.f32 %v7815, %v7866
  %v7868 = vpop.f32.mrb[0].mxu0
  %v7869 = vpop.f32.mrb[0].mxu0
  %v7870 = vadd.f32 %v7815, %v7869
  %v7871 = vpop.f32.mrb[0].mxu0
  %7872 = vdwg.mxu0
  %7873 = vst [vmem:[%s11] sm:$0xff] %v7867
  %7874 = vst [vmem:[%s11 + $0x8] sm:$0xff] %v7870
  // Predicated region
  $region46: #{prometheus_forward.1} parent=0 // pred_check
    _
  $region47: #{prometheus_forward.1} parent=0 // pred_check_branch
    %7876 = sbr.rel (0) target = $region49
  $region48: #{prometheus_forward.1} parent=0 // pred_region
    _
  $region49: #{prometheus_forward.1} parent=0 // pred_fallthru
    _
  // Predicated region
  $region50: #{prometheus_forward.1} parent=0 // pred_check
    _
  $region51: #{prometheus_forward.1} parent=0 // pred_check_branch
    %7878 = sbr.rel (0) target = $region53
  $region52: #{prometheus_forward.1} parent=0 // pred_region
    _
  $region53: #{prometheus_forward.1} parent=0 // pred_fallthru
    _

</llo_original>
